<compile_context>
chip_gen: v6e
topology: v6e:2x2x1
jax: 0.10.0
libtpu: 0.0.40
codegen_flags: <defaults>
</compile_context>

<pallas_src>
import functools

import jax
import jax.numpy as jnp
from jax.experimental import pallas as pl
from jax.experimental.pallas import tpu as pltpu

CPAD = 128   # channel lanes carried through the net (real channels: 3 -> 10 -> 20 -> 40)
KPAD = 128   # padded class lanes for the FC output (sliced to num_classes at the end)

# Per-layer geometry for a 32x32 input (last_dim = 40*4*4 implies 32 -> 16 -> 8 -> 4):
#   WPi = padded row stride (W + 2) of layer i's padded-flat input
#   LAi = conv accumulator rows (covers every row the following pool reads)
#   NXi = padded-flat input rows (so every shifted tap slice stays in range)
WP1, LA1 = 34, 1088            # 1088 = 32 * 34
WP2, LA2, NX2 = 18, 288, 328   # 288 = 16 * 18, conv2 reads rows < 288 + 38 <= 328
WP3, LA3, NX3 = 10, 80, 104    # 80  =  8 * 10, conv3 reads rows <  80 + 22 <= 104
PADF1 = WP1 * WP1 + 4          # padded-flat layer-1 rows needed by the host im2col


# ---------------- the fused Pallas kernel ----------------

def _smallcnn_kernel(x_ref, w1_ref, b1_ref, w2_ref, b2_ref, w3_ref, b3_ref,
                     wfc_ref, bfc_ref, out_ref,
                     a1_ref, x2_ref, a2_ref, x3_ref, a3_ref):
    f32, bf16 = jnp.float32, jnp.bfloat16

    # Pad rings / tail rows of the padded-flat buffers must be exactly zero every grid
    # step (scratch is uninitialized and per-core under the "parallel" grid axis).
    x2_ref[...] = jnp.zeros_like(x2_ref)
    x3_ref[...] = jnp.zeros_like(x3_ref)

    # ---- layer 1: host-packed im2col (K=27) -> single MXU matmul + bias + ReLU ----
    mch = LA1 // 4                                            # chunk M to bound live f32
    for m in range(0, LA1, mch):
        d = jnp.dot(x_ref[0, pl.ds(m, mch), :], w1_ref[...],
                    preferred_element_type=f32)               # (mch, 128)
        a1_ref[pl.ds(m, mch), :] = jnp.maximum(d + b1_ref[...], 0.0)

    # ---- fused 2x2 maxpool + compaction into the next padded-flat buffer ----
    # pooled(i, j) = max of 4 corners, gathered with stride-2 row loads and scattered
    # to padded position (i+1, j+1) of the destination (its pad ring stays zero).
    def pool_compact(src_ref, dst_ref, half, wp_src, wp_dst):
        for i in range(half):
            base = 2 * i * wp_src
            blk = jnp.maximum(
                jnp.maximum(src_ref[pl.ds(base, half, stride=2), :],
                            src_ref[pl.ds(base + 1, half, stride=2), :]),
                jnp.maximum(src_ref[pl.ds(base + wp_src, half, stride=2), :],
                            src_ref[pl.ds(base + wp_src + 1, half, stride=2), :]))
            dst_ref[pl.ds((i + 1) * wp_dst + 1, half), :] = blk

    pool_compact(a1_ref, x2_ref, 16, WP1, WP2)

    # ---- layers 2/3: in-kernel im2col (lane-concat of the 9 shifted tap slices) ----
    # One dot per layer with K = 9*128: the MXU accumulates the taps internally
    # (2 taps per 256-deep pass on v6e/v7x), no per-tap casts or VPU adds.
    def conv_relu(src_ref, w_ref, b_ref, wp, la):
        offs = [dh * wp + dw for dh in range(3) for dw in range(3)]
        lhs = jnp.concatenate([src_ref[pl.ds(o, la), :] for o in offs],
                              axis=1).astype(bf16)            # (la, 9*128)
        d = jnp.dot(lhs, w_ref[...], preferred_element_type=f32)
        return jnp.maximum(d + b_ref[...], 0.0)

    a2_ref[...] = conv_relu(x2_ref, w2_ref, b2_ref, WP2, LA2)
    pool_compact(a2_ref, x3_ref, 8, WP2, WP3)
    a3_ref[...] = conv_relu(x3_ref, w3_ref, b3_ref, WP3, LA3)

    # ---- final 2x2 pool -> (1, 2048) feature row -> single FC matmul ----
    rows = []
    for i in range(4):
        base = 2 * i * WP3
        blk = jnp.maximum(
            jnp.maximum(a3_ref[pl.ds(base, 4, stride=2), :],
                        a3_ref[pl.ds(base + 1, 4, stride=2), :]),
            jnp.maximum(a3_ref[pl.ds(base + WP3, 4, stride=2), :],
                        a3_ref[pl.ds(base + WP3 + 1, 4, stride=2), :]))
        rows.extend(blk[j:j + 1, :] for j in range(4))        # slot s = i*4 + j
    feat = jnp.concatenate(rows, axis=1).astype(bf16)          # (1, 16*128)
    res = bfc_ref[...] + jnp.dot(feat, wfc_ref[...], preferred_element_type=f32)
    out_ref[0] = res                                           # (1, KPAD)


# ---------------- parameters ----------------

def init_params(key, num_classes):
    """Deterministic synthetic parameters matching SmallCNN's shapes (HWIO convs)."""
    channels = [3, 10, 20, 40]
    convs = []
    for i in range(3):
        key, k1, k2 = jax.random.split(key, 3)
        cin, cout = channels[i], channels[i + 1]
        bound = 1.0 / (cin * 9) ** 0.5
        w = jax.random.uniform(k1, (3, 3, cin, cout), jnp.float32, -bound, bound)
        b = jax.random.uniform(k2, (cout,), jnp.float32, -bound, bound)
        convs.append((w, b))
    key, k1, k2 = jax.random.split(key, 3)
    last_dim = 40 * 4 * 4
    bound = 1.0 / last_dim ** 0.5
    wfc = jax.random.uniform(k1, (last_dim, num_classes), jnp.float32, -bound, bound)
    bfc = jax.random.uniform(k2, (num_classes,), jnp.float32, -bound, bound)
    return {"convs": convs, "fc": (wfc, bfc)}


def prepare_params(params, num_classes):
    """One-time packing: im2col-shaped conv weights (tap-major rows, 128 output lanes),
    f32 biases, FC weight with the torch NCHW flatten folded in as a (2048, 128) slab,
    everything matmul-side in bf16."""
    assert num_classes <= KPAD
    (w1, b1), (w2, b2), (w3, b3) = params["convs"]
    kp = {}

    # conv1: (3,3,3,10) -> (27, 128); row index = (dh*3 + dw)*3 + cin
    kp["w1"] = (jnp.zeros((27, CPAD), jnp.float32)
                .at[:, :10].set(w1.reshape(27, 10)).astype(jnp.bfloat16))
    kp["b1"] = jnp.zeros((1, CPAD), jnp.float32).at[0, :10].set(b1)

    def pack_conv(w, cin, cout):
        # (3,3,cin,cout) -> (9*128, 128); row index = tap*128 + cin_lane (matches the
        # in-kernel lane-concat im2col order).
        wt = (jnp.zeros((9, CPAD, CPAD), jnp.float32)
              .at[:, :cin, :cout].set(w.reshape(9, cin, cout)))
        return wt.reshape(9 * CPAD, CPAD).astype(jnp.bfloat16)

    kp["w2"] = pack_conv(w2, 10, 20)
    kp["b2"] = jnp.zeros((1, CPAD), jnp.float32).at[0, :20].set(b2)
    kp["w3"] = pack_conv(w3, 20, 40)
    kp["b3"] = jnp.zeros((1, CPAD), jnp.float32).at[0, :40].set(b3)

    # FC: torch flat index j = c*16 + (h*4 + w)  ->  row = slot*128 + channel
    wfc, bfc = params["fc"]
    wr = wfc.reshape(40, 16, num_classes).transpose(1, 0, 2)       # (slot, chan, class)
    kp["wfc"] = (jnp.zeros((16, CPAD, KPAD), jnp.float32)
                 .at[:, :40, :num_classes].set(wr)
                 .reshape(16 * CPAD, KPAD).astype(jnp.bfloat16))
    kp["bfc"] = jnp.zeros((1, KPAD), jnp.float32).at[0, :num_classes].set(bfc)
    return kp


# ---------------- forward ----------------

@functools.partial(jax.jit, static_argnames=("num_classes",))
def small_cnn_forward(x_nchw, kp, num_classes):
    n = x_nchw.shape[0]
    # NCHW -> NHWC -> zero-pad spatial -> padded-flat rows -> host im2col for layer 1.
    xh = jnp.transpose(x_nchw, (0, 2, 3, 1)).astype(jnp.float32)
    xh = jnp.pad(xh, ((0, 0), (1, 1), (1, 1), (0, 0)))              # (n, 34, 34, 3)
    flat = xh.reshape(n, WP1 * WP1, 3)
    flat = jnp.pad(flat, ((0, 0), (0, PADF1 - WP1 * WP1), (0, 0)))  # (n, PADF1, 3)
    taps = [flat[:, dh * WP1 + dw: dh * WP1 + dw + LA1, :]
            for dh in range(3) for dw in range(3)]
    lhs1 = jnp.stack(taps, axis=2).reshape(n, LA1, 27).astype(jnp.bfloat16)

    def const_spec(a):
        nd = a.ndim
        return pl.BlockSpec(a.shape, lambda i, nd=nd: (0,) * nd)

    operands = (lhs1, kp["w1"], kp["b1"], kp["w2"], kp["b2"],
                kp["w3"], kp["b3"], kp["wfc"], kp["bfc"])
    out = pl.pallas_call(
        _smallcnn_kernel,
        out_shape=jax.ShapeDtypeStruct((n, 1, KPAD), jnp.float32),
        grid=(n,),
        in_specs=[pl.BlockSpec((1, LA1, 27), lambda i: (i, 0, 0))]
                 + [const_spec(a) for a in operands[1:]],
        out_specs=pl.BlockSpec((1, 1, KPAD), lambda i: (i, 0, 0)),
        scratch_shapes=[
            pltpu.VMEM((LA1, CPAD), jnp.float32),   # a1 (conv1 + ReLU output)
            pltpu.VMEM((NX2, CPAD), jnp.float32),   # x2 (padded-flat layer-2 input)
            pltpu.VMEM((LA2, CPAD), jnp.float32),   # a2
            pltpu.VMEM((NX3, CPAD), jnp.float32),   # x3
            pltpu.VMEM((LA3, CPAD), jnp.float32),   # a3
        ],
        compiler_params=pltpu.CompilerParams(
            dimension_semantics=("parallel",),       # batch across TCs on v7x
            vmem_limit_bytes=32 * 1024 * 1024),
    )(*operands)
    return out[:, 0, :num_classes]


if __name__ == "__main__":
    num_classes = 10
    key = jax.random.PRNGKey(0)
    kx, kparam = jax.random.split(key)
    # SmallCNN's last_dim = 40*4*4 implies 32x32 spatial input (32 -> 16 -> 8 -> 4).
    x = jax.random.normal(kx, (2, 3, 32, 32), jnp.float32)   # NCHW like PyTorch
    params = init_params(kparam, num_classes)
    kparams = prepare_params(params, num_classes)            # one-time host-side packing
    logits = small_cnn_forward(x, kparams, num_classes=num_classes)
    jax.block_until_ready(logits)
    assert logits.shape == (2, num_classes)
    print("KERNEL_OK")
</pallas_src>

<mosaic_0001>
module attributes {stable_mosaic.version = 11 : i64} {
  func.func @_smallcnn_kernel(%arg0: i32, %arg1: memref<1x1088x27xbf16, #tpu.memory_space<vmem>>, %arg2: memref<27x128xbf16, #tpu.memory_space<vmem>>, %arg3: memref<1x128xf32, #tpu.memory_space<vmem>>, %arg4: memref<1152x128xbf16, #tpu.memory_space<vmem>>, %arg5: memref<1x128xf32, #tpu.memory_space<vmem>>, %arg6: memref<1152x128xbf16, #tpu.memory_space<vmem>>, %arg7: memref<1x128xf32, #tpu.memory_space<vmem>>, %arg8: memref<2048x128xbf16, #tpu.memory_space<vmem>>, %arg9: memref<1x128xf32, #tpu.memory_space<vmem>>, %arg10: memref<1x1x128xf32, #tpu.memory_space<vmem>>, %arg11: memref<1088x128xf32, #tpu.memory_space<vmem>>, %arg12: memref<328x128xf32, #tpu.memory_space<vmem>>, %arg13: memref<288x128xf32, #tpu.memory_space<vmem>>, %arg14: memref<104x128xf32, #tpu.memory_space<vmem>>, %arg15: memref<80x128xf32, #tpu.memory_space<vmem>>) attributes {dimension_semantics = [#tpu.dimension_semantics<parallel>], iteration_bounds = array<i64: 2>, scalar_prefetch = 0 : i64, scratch_operands = 5 : i64, tpu.core_type = #tpu.core_type<tc>, window_params = [{transform_indices = @transform_0, window_bounds = array<i64: 1, 1088, 27>}, {pipeline_mode = #tpu.pipeline_mode<synchronous>, transform_indices = @transform_1, window_bounds = array<i64: 27, 128>}, {pipeline_mode = #tpu.pipeline_mode<synchronous>, transform_indices = @transform_2, window_bounds = array<i64: 1, 128>}, {pipeline_mode = #tpu.pipeline_mode<synchronous>, transform_indices = @transform_3, window_bounds = array<i64: 1152, 128>}, {pipeline_mode = #tpu.pipeline_mode<synchronous>, transform_indices = @transform_4, window_bounds = array<i64: 1, 128>}, {pipeline_mode = #tpu.pipeline_mode<synchronous>, transform_indices = @transform_5, window_bounds = array<i64: 1152, 128>}, {pipeline_mode = #tpu.pipeline_mode<synchronous>, transform_indices = @transform_6, window_bounds = array<i64: 1, 128>}, {pipeline_mode = #tpu.pipeline_mode<synchronous>, transform_indices = @transform_7, window_bounds = array<i64: 2048, 128>}, {pipeline_mode = #tpu.pipeline_mode<synchronous>, transform_indices = @transform_8, window_bounds = array<i64: 1, 128>}, {transform_indices = @transform_9, window_bounds = array<i64: 1, 1, 128>}]} {
    %cst = arith.constant 0.000000e+00 : f32
    %0 = vector.broadcast %cst : f32 to vector<328x128xf32>
    %c0 = arith.constant 0 : index
    %c0_0 = arith.constant 0 : index
    %1 = vector.load %arg12[%c0, %c0_0] : memref<328x128xf32, #tpu.memory_space<vmem>>, vector<328x128xf32>
    tpu.vector_store %arg12[%c0, %c0_0], %0 {strides = array<i32>} : memref<328x128xf32, #tpu.memory_space<vmem>>, vector<328x128xf32>,
    %cst_1 = arith.constant 0.000000e+00 : f32
    %2 = vector.broadcast %cst_1 : f32 to vector<104x128xf32>
    %c0_2 = arith.constant 0 : index
    %c0_3 = arith.constant 0 : index
    %3 = vector.load %arg14[%c0_2, %c0_3] : memref<104x128xf32, #tpu.memory_space<vmem>>, vector<104x128xf32>
    tpu.vector_store %arg14[%c0_2, %c0_3], %2 {strides = array<i32>} : memref<104x128xf32, #tpu.memory_space<vmem>>, vector<104x128xf32>,
    %c0_4 = arith.constant 0 : index
    %c0_5 = arith.constant 0 : index
    %c0_6 = arith.constant 0 : index
    %4 = vector.load %arg1[%c0_4, %c0_5, %c0_6] : memref<1x1088x27xbf16, #tpu.memory_space<vmem>>, vector<1x272x27xbf16>
    %5 = vector.shape_cast %4 : vector<1x272x27xbf16> to vector<272x27xbf16>
    %c0_7 = arith.constant 0 : index
    %c0_8 = arith.constant 0 : index
    %6 = vector.load %arg2[%c0_7, %c0_8] : memref<27x128xbf16, #tpu.memory_space<vmem>>, vector<27x128xbf16>
    %cst_9 = arith.constant dense<0.000000e+00> : vector<272x128xf32>
    %7 = tpu.matmul %5, %6, %cst_9 {dimension_numbers = #tpu.dot_dimension_numbers<[1], [0], [0], [1], [0, 0, 1, 1], [], []>} : vector<272x27xbf16>, vector<27x128xbf16>, vector<272x128xf32> -> vector<272x128xf32>
    %c0_10 = arith.constant 0 : index
    %c0_11 = arith.constant 0 : index
    %8 = vector.load %arg3[%c0_10, %c0_11] : memref<1x128xf32, #tpu.memory_space<vmem>>, vector<1x128xf32>
    %9 = vector.broadcast %8 : vector<1x128xf32> to vector<272x128xf32>
    %10 = arith.addf %7, %9 : vector<272x128xf32>
    %cst_12 = arith.constant 0.000000e+00 : f32
    %11 = vector.broadcast %cst_12 : f32 to vector<272x128xf32>
    %12 = arith.maximumf %10, %11 : vector<272x128xf32>
    %c0_13 = arith.constant 0 : index
    %c0_14 = arith.constant 0 : index
    %13 = vector.load %arg11[%c0_13, %c0_14] : memref<1088x128xf32, #tpu.memory_space<vmem>>, vector<272x128xf32>
    tpu.vector_store %arg11[%c0_13, %c0_14], %12 {strides = array<i32>} : memref<1088x128xf32, #tpu.memory_space<vmem>>, vector<272x128xf32>,
    %c0_15 = arith.constant 0 : index
    %c272 = arith.constant 272 : index
    %c0_16 = arith.constant 0 : index
    %14 = vector.load %arg1[%c0_15, %c272, %c0_16] : memref<1x1088x27xbf16, #tpu.memory_space<vmem>>, vector<1x272x27xbf16>
    %15 = vector.shape_cast %14 : vector<1x272x27xbf16> to vector<272x27xbf16>
    %c0_17 = arith.constant 0 : index
    %c0_18 = arith.constant 0 : index
    %16 = vector.load %arg2[%c0_17, %c0_18] : memref<27x128xbf16, #tpu.memory_space<vmem>>, vector<27x128xbf16>
    %cst_19 = arith.constant dense<0.000000e+00> : vector<272x128xf32>
    %17 = tpu.matmul %15, %16, %cst_19 {dimension_numbers = #tpu.dot_dimension_numbers<[1], [0], [0], [1], [0, 0, 1, 1], [], []>} : vector<272x27xbf16>, vector<27x128xbf16>, vector<272x128xf32> -> vector<272x128xf32>
    %c0_20 = arith.constant 0 : index
    %c0_21 = arith.constant 0 : index
    %18 = vector.load %arg3[%c0_20, %c0_21] : memref<1x128xf32, #tpu.memory_space<vmem>>, vector<1x128xf32>
    %19 = vector.broadcast %18 : vector<1x128xf32> to vector<272x128xf32>
    %20 = arith.addf %17, %19 : vector<272x128xf32>
    %cst_22 = arith.constant 0.000000e+00 : f32
    %21 = vector.broadcast %cst_22 : f32 to vector<272x128xf32>
    %22 = arith.maximumf %20, %21 : vector<272x128xf32>
    %c272_23 = arith.constant 272 : index
    %c0_24 = arith.constant 0 : index
    %23 = vector.load %arg11[%c272_23, %c0_24] : memref<1088x128xf32, #tpu.memory_space<vmem>>, vector<272x128xf32>
    tpu.vector_store %arg11[%c272_23, %c0_24], %22 {strides = array<i32>} : memref<1088x128xf32, #tpu.memory_space<vmem>>, vector<272x128xf32>,
    %c0_25 = arith.constant 0 : index
    %c544 = arith.constant 544 : index
    %c0_26 = arith.constant 0 : index
    %24 = vector.load %arg1[%c0_25, %c544, %c0_26] : memref<1x1088x27xbf16, #tpu.memory_space<vmem>>, vector<1x272x27xbf16>
    %25 = vector.shape_cast %24 : vector<1x272x27xbf16> to vector<272x27xbf16>
    %c0_27 = arith.constant 0 : index
    %c0_28 = arith.constant 0 : index
    %26 = vector.load %arg2[%c0_27, %c0_28] : memref<27x128xbf16, #tpu.memory_space<vmem>>, vector<27x128xbf16>
    %cst_29 = arith.constant dense<0.000000e+00> : vector<272x128xf32>
    %27 = tpu.matmul %25, %26, %cst_29 {dimension_numbers = #tpu.dot_dimension_numbers<[1], [0], [0], [1], [0, 0, 1, 1], [], []>} : vector<272x27xbf16>, vector<27x128xbf16>, vector<272x128xf32> -> vector<272x128xf32>
    %c0_30 = arith.constant 0 : index
    %c0_31 = arith.constant 0 : index
    %28 = vector.load %arg3[%c0_30, %c0_31] : memref<1x128xf32, #tpu.memory_space<vmem>>, vector<1x128xf32>
    %29 = vector.broadcast %28 : vector<1x128xf32> to vector<272x128xf32>
    %30 = arith.addf %27, %29 : vector<272x128xf32>
    %cst_32 = arith.constant 0.000000e+00 : f32
    %31 = vector.broadcast %cst_32 : f32 to vector<272x128xf32>
    %32 = arith.maximumf %30, %31 : vector<272x128xf32>
    %c544_33 = arith.constant 544 : index
    %c0_34 = arith.constant 0 : index
    %33 = vector.load %arg11[%c544_33, %c0_34] : memref<1088x128xf32, #tpu.memory_space<vmem>>, vector<272x128xf32>
    tpu.vector_store %arg11[%c544_33, %c0_34], %32 {strides = array<i32>} : memref<1088x128xf32, #tpu.memory_space<vmem>>, vector<272x128xf32>,
    %c0_35 = arith.constant 0 : index
    %c816 = arith.constant 816 : index
    %c0_36 = arith.constant 0 : index
    %34 = vector.load %arg1[%c0_35, %c816, %c0_36] : memref<1x1088x27xbf16, #tpu.memory_space<vmem>>, vector<1x272x27xbf16>
    %35 = vector.shape_cast %34 : vector<1x272x27xbf16> to vector<272x27xbf16>
    %c0_37 = arith.constant 0 : index
    %c0_38 = arith.constant 0 : index
    %36 = vector.load %arg2[%c0_37, %c0_38] : memref<27x128xbf16, #tpu.memory_space<vmem>>, vector<27x128xbf16>
    %cst_39 = arith.constant dense<0.000000e+00> : vector<272x128xf32>
    %37 = tpu.matmul %35, %36, %cst_39 {dimension_numbers = #tpu.dot_dimension_numbers<[1], [0], [0], [1], [0, 0, 1, 1], [], []>} : vector<272x27xbf16>, vector<27x128xbf16>, vector<272x128xf32> -> vector<272x128xf32>
    %c0_40 = arith.constant 0 : index
    %c0_41 = arith.constant 0 : index
    %38 = vector.load %arg3[%c0_40, %c0_41] : memref<1x128xf32, #tpu.memory_space<vmem>>, vector<1x128xf32>
    %39 = vector.broadcast %38 : vector<1x128xf32> to vector<272x128xf32>
    %40 = arith.addf %37, %39 : vector<272x128xf32>
    %cst_42 = arith.constant 0.000000e+00 : f32
    %41 = vector.broadcast %cst_42 : f32 to vector<272x128xf32>
    %42 = arith.maximumf %40, %41 : vector<272x128xf32>
    %c816_43 = arith.constant 816 : index
    %c0_44 = arith.constant 0 : index
    %43 = vector.load %arg11[%c816_43, %c0_44] : memref<1088x128xf32, #tpu.memory_space<vmem>>, vector<272x128xf32>
    tpu.vector_store %arg11[%c816_43, %c0_44], %42 {strides = array<i32>} : memref<1088x128xf32, #tpu.memory_space<vmem>>, vector<272x128xf32>,
    %c0_45 = arith.constant 0 : index
    %c0_46 = arith.constant 0 : index
    %44 = tpu.strided_load %arg11[%c0_45, %c0_46] {strides = array<i32: 2, 1>} : memref<1088x128xf32, #tpu.memory_space<vmem>>, vector<16x128xf32>
    %c1 = arith.constant 1 : index
    %c0_47 = arith.constant 0 : index
    %45 = tpu.strided_load %arg11[%c1, %c0_47] {strides = array<i32: 2, 1>} : memref<1088x128xf32, #tpu.memory_space<vmem>>, vector<16x128xf32>
    %46 = arith.maximumf %44, %45 : vector<16x128xf32>
    %c34 = arith.constant 34 : index
    %c0_48 = arith.constant 0 : index
    %47 = tpu.strided_load %arg11[%c34, %c0_48] {strides = array<i32: 2, 1>} : memref<1088x128xf32, #tpu.memory_space<vmem>>, vector<16x128xf32>
    %c35 = arith.constant 35 : index
    %c0_49 = arith.constant 0 : index
    %48 = tpu.strided_load %arg11[%c35, %c0_49] {strides = array<i32: 2, 1>} : memref<1088x128xf32, #tpu.memory_space<vmem>>, vector<16x128xf32>
    %49 = arith.maximumf %47, %48 : vector<16x128xf32>
    %50 = arith.maximumf %46, %49 : vector<16x128xf32>
    %c19 = arith.constant 19 : index
    %c0_50 = arith.constant 0 : index
    %51 = vector.load %arg12[%c19, %c0_50] : memref<328x128xf32, #tpu.memory_space<vmem>>, vector<16x128xf32>
    tpu.vector_store %arg12[%c19, %c0_50], %50 {strides = array<i32>} : memref<328x128xf32, #tpu.memory_space<vmem>>, vector<16x128xf32>,
    %c68 = arith.constant 68 : index
    %c0_51 = arith.constant 0 : index
    %52 = tpu.strided_load %arg11[%c68, %c0_51] {strides = array<i32: 2, 1>} : memref<1088x128xf32, #tpu.memory_space<vmem>>, vector<16x128xf32>
    %c69 = arith.constant 69 : index
    %c0_52 = arith.constant 0 : index
    %53 = tpu.strided_load %arg11[%c69, %c0_52] {strides = array<i32: 2, 1>} : memref<1088x128xf32, #tpu.memory_space<vmem>>, vector<16x128xf32>
    %54 = arith.maximumf %52, %53 : vector<16x128xf32>
    %c102 = arith.constant 102 : index
    %c0_53 = arith.constant 0 : index
    %55 = tpu.strided_load %arg11[%c102, %c0_53] {strides = array<i32: 2, 1>} : memref<1088x128xf32, #tpu.memory_space<vmem>>, vector<16x128xf32>
    %c103 = arith.constant 103 : index
    %c0_54 = arith.constant 0 : index
    %56 = tpu.strided_load %arg11[%c103, %c0_54] {strides = array<i32: 2, 1>} : memref<1088x128xf32, #tpu.memory_space<vmem>>, vector<16x128xf32>
    %57 = arith.maximumf %55, %56 : vector<16x128xf32>
    %58 = arith.maximumf %54, %57 : vector<16x128xf32>
    %c37 = arith.constant 37 : index
    %c0_55 = arith.constant 0 : index
    %59 = vector.load %arg12[%c37, %c0_55] : memref<328x128xf32, #tpu.memory_space<vmem>>, vector<16x128xf32>
    tpu.vector_store %arg12[%c37, %c0_55], %58 {strides = array<i32>} : memref<328x128xf32, #tpu.memory_space<vmem>>, vector<16x128xf32>,
    %c136 = arith.constant 136 : index
    %c0_56 = arith.constant 0 : index
    %60 = tpu.strided_load %arg11[%c136, %c0_56] {strides = array<i32: 2, 1>} : memref<1088x128xf32, #tpu.memory_space<vmem>>, vector<16x128xf32>
    %c137 = arith.constant 137 : index
    %c0_57 = arith.constant 0 : index
    %61 = tpu.strided_load %arg11[%c137, %c0_57] {strides = array<i32: 2, 1>} : memref<1088x128xf32, #tpu.memory_space<vmem>>, vector<16x128xf32>
    %62 = arith.maximumf %60, %61 : vector<16x128xf32>
    %c170 = arith.constant 170 : index
    %c0_58 = arith.constant 0 : index
    %63 = tpu.strided_load %arg11[%c170, %c0_58] {strides = array<i32: 2, 1>} : memref<1088x128xf32, #tpu.memory_space<vmem>>, vector<16x128xf32>
    %c171 = arith.constant 171 : index
    %c0_59 = arith.constant 0 : index
    %64 = tpu.strided_load %arg11[%c171, %c0_59] {strides = array<i32: 2, 1>} : memref<1088x128xf32, #tpu.memory_space<vmem>>, vector<16x128xf32>
    %65 = arith.maximumf %63, %64 : vector<16x128xf32>
    %66 = arith.maximumf %62, %65 : vector<16x128xf32>
    %c55 = arith.constant 55 : index
    %c0_60 = arith.constant 0 : index
    %67 = vector.load %arg12[%c55, %c0_60] : memref<328x128xf32, #tpu.memory_space<vmem>>, vector<16x128xf32>
    tpu.vector_store %arg12[%c55, %c0_60], %66 {strides = array<i32>} : memref<328x128xf32, #tpu.memory_space<vmem>>, vector<16x128xf32>,
    %c204 = arith.constant 204 : index
    %c0_61 = arith.constant 0 : index
    %68 = tpu.strided_load %arg11[%c204, %c0_61] {strides = array<i32: 2, 1>} : memref<1088x128xf32, #tpu.memory_space<vmem>>, vector<16x128xf32>
    %c205 = arith.constant 205 : index
    %c0_62 = arith.constant 0 : index
    %69 = tpu.strided_load %arg11[%c205, %c0_62] {strides = array<i32: 2, 1>} : memref<1088x128xf32, #tpu.memory_space<vmem>>, vector<16x128xf32>
    %70 = arith.maximumf %68, %69 : vector<16x128xf32>
    %c238 = arith.constant 238 : index
    %c0_63 = arith.constant 0 : index
    %71 = tpu.strided_load %arg11[%c238, %c0_63] {strides = array<i32: 2, 1>} : memref<1088x128xf32, #tpu.memory_space<vmem>>, vector<16x128xf32>
    %c239 = arith.constant 239 : index
    %c0_64 = arith.constant 0 : index
    %72 = tpu.strided_load %arg11[%c239, %c0_64] {strides = array<i32: 2, 1>} : memref<1088x128xf32, #tpu.memory_space<vmem>>, vector<16x128xf32>
    %73 = arith.maximumf %71, %72 : vector<16x128xf32>
    %74 = arith.maximumf %70, %73 : vector<16x128xf32>
    %c73 = arith.constant 73 : index
    %c0_65 = arith.constant 0 : index
    %75 = vector.load %arg12[%c73, %c0_65] : memref<328x128xf32, #tpu.memory_space<vmem>>, vector<16x128xf32>
    tpu.vector_store %arg12[%c73, %c0_65], %74 {strides = array<i32>} : memref<328x128xf32, #tpu.memory_space<vmem>>, vector<16x128xf32>,
    %c272_66 = arith.constant 272 : index
    %c0_67 = arith.constant 0 : index
    %76 = tpu.strided_load %arg11[%c272_66, %c0_67] {strides = array<i32: 2, 1>} : memref<1088x128xf32, #tpu.memory_space<vmem>>, vector<16x128xf32>
    %c273 = arith.constant 273 : index
    %c0_68 = arith.constant 0 : index
    %77 = tpu.strided_load %arg11[%c273, %c0_68] {strides = array<i32: 2, 1>} : memref<1088x128xf32, #tpu.memory_space<vmem>>, vector<16x128xf32>
    %78 = arith.maximumf %76, %77 : vector<16x128xf32>
    %c306 = arith.constant 306 : index
    %c0_69 = arith.constant 0 : index
    %79 = tpu.strided_load %arg11[%c306, %c0_69] {strides = array<i32: 2, 1>} : memref<1088x128xf32, #tpu.memory_space<vmem>>, vector<16x128xf32>
    %c307 = arith.constant 307 : index
    %c0_70 = arith.constant 0 : index
    %80 = tpu.strided_load %arg11[%c307, %c0_70] {strides = array<i32: 2, 1>} : memref<1088x128xf32, #tpu.memory_space<vmem>>, vector<16x128xf32>
    %81 = arith.maximumf %79, %80 : vector<16x128xf32>
    %82 = arith.maximumf %78, %81 : vector<16x128xf32>
    %c91 = arith.constant 91 : index
    %c0_71 = arith.constant 0 : index
    %83 = vector.load %arg12[%c91, %c0_71] : memref<328x128xf32, #tpu.memory_space<vmem>>, vector<16x128xf32>
    tpu.vector_store %arg12[%c91, %c0_71], %82 {strides = array<i32>} : memref<328x128xf32, #tpu.memory_space<vmem>>, vector<16x128xf32>,
    %c340 = arith.constant 340 : index
    %c0_72 = arith.constant 0 : index
    %84 = tpu.strided_load %arg11[%c340, %c0_72] {strides = array<i32: 2, 1>} : memref<1088x128xf32, #tpu.memory_space<vmem>>, vector<16x128xf32>
    %c341 = arith.constant 341 : index
    %c0_73 = arith.constant 0 : index
    %85 = tpu.strided_load %arg11[%c341, %c0_73] {strides = array<i32: 2, 1>} : memref<1088x128xf32, #tpu.memory_space<vmem>>, vector<16x128xf32>
    %86 = arith.maximumf %84, %85 : vector<16x128xf32>
    %c374 = arith.constant 374 : index
    %c0_74 = arith.constant 0 : index
    %87 = tpu.strided_load %arg11[%c374, %c0_74] {strides = array<i32: 2, 1>} : memref<1088x128xf32, #tpu.memory_space<vmem>>, vector<16x128xf32>
    %c375 = arith.constant 375 : index
    %c0_75 = arith.constant 0 : index
    %88 = tpu.strided_load %arg11[%c375, %c0_75] {strides = array<i32: 2, 1>} : memref<1088x128xf32, #tpu.memory_space<vmem>>, vector<16x128xf32>
    %89 = arith.maximumf %87, %88 : vector<16x128xf32>
    %90 = arith.maximumf %86, %89 : vector<16x128xf32>
    %c109 = arith.constant 109 : index
    %c0_76 = arith.constant 0 : index
    %91 = vector.load %arg12[%c109, %c0_76] : memref<328x128xf32, #tpu.memory_space<vmem>>, vector<16x128xf32>
    tpu.vector_store %arg12[%c109, %c0_76], %90 {strides = array<i32>} : memref<328x128xf32, #tpu.memory_space<vmem>>, vector<16x128xf32>,
    %c408 = arith.constant 408 : index
    %c0_77 = arith.constant 0 : index
    %92 = tpu.strided_load %arg11[%c408, %c0_77] {strides = array<i32: 2, 1>} : memref<1088x128xf32, #tpu.memory_space<vmem>>, vector<16x128xf32>
    %c409 = arith.constant 409 : index
    %c0_78 = arith.constant 0 : index
    %93 = tpu.strided_load %arg11[%c409, %c0_78] {strides = array<i32: 2, 1>} : memref<1088x128xf32, #tpu.memory_space<vmem>>, vector<16x128xf32>
    %94 = arith.maximumf %92, %93 : vector<16x128xf32>
    %c442 = arith.constant 442 : index
    %c0_79 = arith.constant 0 : index
    %95 = tpu.strided_load %arg11[%c442, %c0_79] {strides = array<i32: 2, 1>} : memref<1088x128xf32, #tpu.memory_space<vmem>>, vector<16x128xf32>
    %c443 = arith.constant 443 : index
    %c0_80 = arith.constant 0 : index
    %96 = tpu.strided_load %arg11[%c443, %c0_80] {strides = array<i32: 2, 1>} : memref<1088x128xf32, #tpu.memory_space<vmem>>, vector<16x128xf32>
    %97 = arith.maximumf %95, %96 : vector<16x128xf32>
    %98 = arith.maximumf %94, %97 : vector<16x128xf32>
    %c127 = arith.constant 127 : index
    %c0_81 = arith.constant 0 : index
    %99 = vector.load %arg12[%c127, %c0_81] : memref<328x128xf32, #tpu.memory_space<vmem>>, vector<16x128xf32>
    tpu.vector_store %arg12[%c127, %c0_81], %98 {strides = array<i32>} : memref<328x128xf32, #tpu.memory_space<vmem>>, vector<16x128xf32>,
    %c476 = arith.constant 476 : index
    %c0_82 = arith.constant 0 : index
    %100 = tpu.strided_load %arg11[%c476, %c0_82] {strides = array<i32: 2, 1>} : memref<1088x128xf32, #tpu.memory_space<vmem>>, vector<16x128xf32>
    %c477 = arith.constant 477 : index
    %c0_83 = arith.constant 0 : index
    %101 = tpu.strided_load %arg11[%c477, %c0_83] {strides = array<i32: 2, 1>} : memref<1088x128xf32, #tpu.memory_space<vmem>>, vector<16x128xf32>
    %102 = arith.maximumf %100, %101 : vector<16x128xf32>
    %c510 = arith.constant 510 : index
    %c0_84 = arith.constant 0 : index
    %103 = tpu.strided_load %arg11[%c510, %c0_84] {strides = array<i32: 2, 1>} : memref<1088x128xf32, #tpu.memory_space<vmem>>, vector<16x128xf32>
    %c511 = arith.constant 511 : index
    %c0_85 = arith.constant 0 : index
    %104 = tpu.strided_load %arg11[%c511, %c0_85] {strides = array<i32: 2, 1>} : memref<1088x128xf32, #tpu.memory_space<vmem>>, vector<16x128xf32>
    %105 = arith.maximumf %103, %104 : vector<16x128xf32>
    %106 = arith.maximumf %102, %105 : vector<16x128xf32>
    %c145 = arith.constant 145 : index
    %c0_86 = arith.constant 0 : index
    %107 = vector.load %arg12[%c145, %c0_86] : memref<328x128xf32, #tpu.memory_space<vmem>>, vector<16x128xf32>
    tpu.vector_store %arg12[%c145, %c0_86], %106 {strides = array<i32>} : memref<328x128xf32, #tpu.memory_space<vmem>>, vector<16x128xf32>,
    %c544_87 = arith.constant 544 : index
    %c0_88 = arith.constant 0 : index
    %108 = tpu.strided_load %arg11[%c544_87, %c0_88] {strides = array<i32: 2, 1>} : memref<1088x128xf32, #tpu.memory_space<vmem>>, vector<16x128xf32>
    %c545 = arith.constant 545 : index
    %c0_89 = arith.constant 0 : index
    %109 = tpu.strided_load %arg11[%c545, %c0_89] {strides = array<i32: 2, 1>} : memref<1088x128xf32, #tpu.memory_space<vmem>>, vector<16x128xf32>
    %110 = arith.maximumf %108, %109 : vector<16x128xf32>
    %c578 = arith.constant 578 : index
    %c0_90 = arith.constant 0 : index
    %111 = tpu.strided_load %arg11[%c578, %c0_90] {strides = array<i32: 2, 1>} : memref<1088x128xf32, #tpu.memory_space<vmem>>, vector<16x128xf32>
    %c579 = arith.constant 579 : index
    %c0_91 = arith.constant 0 : index
    %112 = tpu.strided_load %arg11[%c579, %c0_91] {strides = array<i32: 2, 1>} : memref<1088x128xf32, #tpu.memory_space<vmem>>, vector<16x128xf32>
    %113 = arith.maximumf %111, %112 : vector<16x128xf32>
    %114 = arith.maximumf %110, %113 : vector<16x128xf32>
    %c163 = arith.constant 163 : index
    %c0_92 = arith.constant 0 : index
    %115 = vector.load %arg12[%c163, %c0_92] : memref<328x128xf32, #tpu.memory_space<vmem>>, vector<16x128xf32>
    tpu.vector_store %arg12[%c163, %c0_92], %114 {strides = array<i32>} : memref<328x128xf32, #tpu.memory_space<vmem>>, vector<16x128xf32>,
    %c612 = arith.constant 612 : index
    %c0_93 = arith.constant 0 : index
    %116 = tpu.strided_load %arg11[%c612, %c0_93] {strides = array<i32: 2, 1>} : memref<1088x128xf32, #tpu.memory_space<vmem>>, vector<16x128xf32>
    %c613 = arith.constant 613 : index
    %c0_94 = arith.constant 0 : index
    %117 = tpu.strided_load %arg11[%c613, %c0_94] {strides = array<i32: 2, 1>} : memref<1088x128xf32, #tpu.memory_space<vmem>>, vector<16x128xf32>
    %118 = arith.maximumf %116, %117 : vector<16x128xf32>
    %c646 = arith.constant 646 : index
    %c0_95 = arith.constant 0 : index
    %119 = tpu.strided_load %arg11[%c646, %c0_95] {strides = array<i32: 2, 1>} : memref<1088x128xf32, #tpu.memory_space<vmem>>, vector<16x128xf32>
    %c647 = arith.constant 647 : index
    %c0_96 = arith.constant 0 : index
    %120 = tpu.strided_load %arg11[%c647, %c0_96] {strides = array<i32: 2, 1>} : memref<1088x128xf32, #tpu.memory_space<vmem>>, vector<16x128xf32>
    %121 = arith.maximumf %119, %120 : vector<16x128xf32>
    %122 = arith.maximumf %118, %121 : vector<16x128xf32>
    %c181 = arith.constant 181 : index
    %c0_97 = arith.constant 0 : index
    %123 = vector.load %arg12[%c181, %c0_97] : memref<328x128xf32, #tpu.memory_space<vmem>>, vector<16x128xf32>
    tpu.vector_store %arg12[%c181, %c0_97], %122 {strides = array<i32>} : memref<328x128xf32, #tpu.memory_space<vmem>>, vector<16x128xf32>,
    %c680 = arith.constant 680 : index
    %c0_98 = arith.constant 0 : index
    %124 = tpu.strided_load %arg11[%c680, %c0_98] {strides = array<i32: 2, 1>} : memref<1088x128xf32, #tpu.memory_space<vmem>>, vector<16x128xf32>
    %c681 = arith.constant 681 : index
    %c0_99 = arith.constant 0 : index
    %125 = tpu.strided_load %arg11[%c681, %c0_99] {strides = array<i32: 2, 1>} : memref<1088x128xf32, #tpu.memory_space<vmem>>, vector<16x128xf32>
    %126 = arith.maximumf %124, %125 : vector<16x128xf32>
    %c714 = arith.constant 714 : index
    %c0_100 = arith.constant 0 : index
    %127 = tpu.strided_load %arg11[%c714, %c0_100] {strides = array<i32: 2, 1>} : memref<1088x128xf32, #tpu.memory_space<vmem>>, vector<16x128xf32>
    %c715 = arith.constant 715 : index
    %c0_101 = arith.constant 0 : index
    %128 = tpu.strided_load %arg11[%c715, %c0_101] {strides = array<i32: 2, 1>} : memref<1088x128xf32, #tpu.memory_space<vmem>>, vector<16x128xf32>
    %129 = arith.maximumf %127, %128 : vector<16x128xf32>
    %130 = arith.maximumf %126, %129 : vector<16x128xf32>
    %c199 = arith.constant 199 : index
    %c0_102 = arith.constant 0 : index
    %131 = vector.load %arg12[%c199, %c0_102] : memref<328x128xf32, #tpu.memory_space<vmem>>, vector<16x128xf32>
    tpu.vector_store %arg12[%c199, %c0_102], %130 {strides = array<i32>} : memref<328x128xf32, #tpu.memory_space<vmem>>, vector<16x128xf32>,
    %c748 = arith.constant 748 : index
    %c0_103 = arith.constant 0 : index
    %132 = tpu.strided_load %arg11[%c748, %c0_103] {strides = array<i32: 2, 1>} : memref<1088x128xf32, #tpu.memory_space<vmem>>, vector<16x128xf32>
    %c749 = arith.constant 749 : index
    %c0_104 = arith.constant 0 : index
    %133 = tpu.strided_load %arg11[%c749, %c0_104] {strides = array<i32: 2, 1>} : memref<1088x128xf32, #tpu.memory_space<vmem>>, vector<16x128xf32>
    %134 = arith.maximumf %132, %133 : vector<16x128xf32>
    %c782 = arith.constant 782 : index
    %c0_105 = arith.constant 0 : index
    %135 = tpu.strided_load %arg11[%c782, %c0_105] {strides = array<i32: 2, 1>} : memref<1088x128xf32, #tpu.memory_space<vmem>>, vector<16x128xf32>
    %c783 = arith.constant 783 : index
    %c0_106 = arith.constant 0 : index
    %136 = tpu.strided_load %arg11[%c783, %c0_106] {strides = array<i32: 2, 1>} : memref<1088x128xf32, #tpu.memory_space<vmem>>, vector<16x128xf32>
    %137 = arith.maximumf %135, %136 : vector<16x128xf32>
    %138 = arith.maximumf %134, %137 : vector<16x128xf32>
    %c217 = arith.constant 217 : index
    %c0_107 = arith.constant 0 : index
    %139 = vector.load %arg12[%c217, %c0_107] : memref<328x128xf32, #tpu.memory_space<vmem>>, vector<16x128xf32>
    tpu.vector_store %arg12[%c217, %c0_107], %138 {strides = array<i32>} : memref<328x128xf32, #tpu.memory_space<vmem>>, vector<16x128xf32>,
    %c816_108 = arith.constant 816 : index
    %c0_109 = arith.constant 0 : index
    %140 = tpu.strided_load %arg11[%c816_108, %c0_109] {strides = array<i32: 2, 1>} : memref<1088x128xf32, #tpu.memory_space<vmem>>, vector<16x128xf32>
    %c817 = arith.constant 817 : index
    %c0_110 = arith.constant 0 : index
    %141 = tpu.strided_load %arg11[%c817, %c0_110] {strides = array<i32: 2, 1>} : memref<1088x128xf32, #tpu.memory_space<vmem>>, vector<16x128xf32>
    %142 = arith.maximumf %140, %141 : vector<16x128xf32>
    %c850 = arith.constant 850 : index
    %c0_111 = arith.constant 0 : index
    %143 = tpu.strided_load %arg11[%c850, %c0_111] {strides = array<i32: 2, 1>} : memref<1088x128xf32, #tpu.memory_space<vmem>>, vector<16x128xf32>
    %c851 = arith.constant 851 : index
    %c0_112 = arith.constant 0 : index
    %144 = tpu.strided_load %arg11[%c851, %c0_112] {strides = array<i32: 2, 1>} : memref<1088x128xf32, #tpu.memory_space<vmem>>, vector<16x128xf32>
    %145 = arith.maximumf %143, %144 : vector<16x128xf32>
    %146 = arith.maximumf %142, %145 : vector<16x128xf32>
    %c235 = arith.constant 235 : index
    %c0_113 = arith.constant 0 : index
    %147 = vector.load %arg12[%c235, %c0_113] : memref<328x128xf32, #tpu.memory_space<vmem>>, vector<16x128xf32>
    tpu.vector_store %arg12[%c235, %c0_113], %146 {strides = array<i32>} : memref<328x128xf32, #tpu.memory_space<vmem>>, vector<16x128xf32>,
    %c884 = arith.constant 884 : index
    %c0_114 = arith.constant 0 : index
    %148 = tpu.strided_load %arg11[%c884, %c0_114] {strides = array<i32: 2, 1>} : memref<1088x128xf32, #tpu.memory_space<vmem>>, vector<16x128xf32>
    %c885 = arith.constant 885 : index
    %c0_115 = arith.constant 0 : index
    %149 = tpu.strided_load %arg11[%c885, %c0_115] {strides = array<i32: 2, 1>} : memref<1088x128xf32, #tpu.memory_space<vmem>>, vector<16x128xf32>
    %150 = arith.maximumf %148, %149 : vector<16x128xf32>
    %c918 = arith.constant 918 : index
    %c0_116 = arith.constant 0 : index
    %151 = tpu.strided_load %arg11[%c918, %c0_116] {strides = array<i32: 2, 1>} : memref<1088x128xf32, #tpu.memory_space<vmem>>, vector<16x128xf32>
    %c919 = arith.constant 919 : index
    %c0_117 = arith.constant 0 : index
    %152 = tpu.strided_load %arg11[%c919, %c0_117] {strides = array<i32: 2, 1>} : memref<1088x128xf32, #tpu.memory_space<vmem>>, vector<16x128xf32>
    %153 = arith.maximumf %151, %152 : vector<16x128xf32>
    %154 = arith.maximumf %150, %153 : vector<16x128xf32>
    %c253 = arith.constant 253 : index
    %c0_118 = arith.constant 0 : index
    %155 = vector.load %arg12[%c253, %c0_118] : memref<328x128xf32, #tpu.memory_space<vmem>>, vector<16x128xf32>
    tpu.vector_store %arg12[%c253, %c0_118], %154 {strides = array<i32>} : memref<328x128xf32, #tpu.memory_space<vmem>>, vector<16x128xf32>,
    %c952 = arith.constant 952 : index
    %c0_119 = arith.constant 0 : index
    %156 = tpu.strided_load %arg11[%c952, %c0_119] {strides = array<i32: 2, 1>} : memref<1088x128xf32, #tpu.memory_space<vmem>>, vector<16x128xf32>
    %c953 = arith.constant 953 : index
    %c0_120 = arith.constant 0 : index
    %157 = tpu.strided_load %arg11[%c953, %c0_120] {strides = array<i32: 2, 1>} : memref<1088x128xf32, #tpu.memory_space<vmem>>, vector<16x128xf32>
    %158 = arith.maximumf %156, %157 : vector<16x128xf32>
    %c986 = arith.constant 986 : index
    %c0_121 = arith.constant 0 : index
    %159 = tpu.strided_load %arg11[%c986, %c0_121] {strides = array<i32: 2, 1>} : memref<1088x128xf32, #tpu.memory_space<vmem>>, vector<16x128xf32>
    %c987 = arith.constant 987 : index
    %c0_122 = arith.constant 0 : index
    %160 = tpu.strided_load %arg11[%c987, %c0_122] {strides = array<i32: 2, 1>} : memref<1088x128xf32, #tpu.memory_space<vmem>>, vector<16x128xf32>
    %161 = arith.maximumf %159, %160 : vector<16x128xf32>
    %162 = arith.maximumf %158, %161 : vector<16x128xf32>
    %c271 = arith.constant 271 : index
    %c0_123 = arith.constant 0 : index
    %163 = vector.load %arg12[%c271, %c0_123] : memref<328x128xf32, #tpu.memory_space<vmem>>, vector<16x128xf32>
    tpu.vector_store %arg12[%c271, %c0_123], %162 {strides = array<i32>} : memref<328x128xf32, #tpu.memory_space<vmem>>, vector<16x128xf32>,
    %c1020 = arith.constant 1020 : index
    %c0_124 = arith.constant 0 : index
    %164 = tpu.strided_load %arg11[%c1020, %c0_124] {strides = array<i32: 2, 1>} : memref<1088x128xf32, #tpu.memory_space<vmem>>, vector<16x128xf32>
    %c1021 = arith.constant 1021 : index
    %c0_125 = arith.constant 0 : index
    %165 = tpu.strided_load %arg11[%c1021, %c0_125] {strides = array<i32: 2, 1>} : memref<1088x128xf32, #tpu.memory_space<vmem>>, vector<16x128xf32>
    %166 = arith.maximumf %164, %165 : vector<16x128xf32>
    %c1054 = arith.constant 1054 : index
    %c0_126 = arith.constant 0 : index
    %167 = tpu.strided_load %arg11[%c1054, %c0_126] {strides = array<i32: 2, 1>} : memref<1088x128xf32, #tpu.memory_space<vmem>>, vector<16x128xf32>
    %c1055 = arith.constant 1055 : index
    %c0_127 = arith.constant 0 : index
    %168 = tpu.strided_load %arg11[%c1055, %c0_127] {strides = array<i32: 2, 1>} : memref<1088x128xf32, #tpu.memory_space<vmem>>, vector<16x128xf32>
    %169 = arith.maximumf %167, %168 : vector<16x128xf32>
    %170 = arith.maximumf %166, %169 : vector<16x128xf32>
    %c289 = arith.constant 289 : index
    %c0_128 = arith.constant 0 : index
    %171 = vector.load %arg12[%c289, %c0_128] : memref<328x128xf32, #tpu.memory_space<vmem>>, vector<16x128xf32>
    tpu.vector_store %arg12[%c289, %c0_128], %170 {strides = array<i32>} : memref<328x128xf32, #tpu.memory_space<vmem>>, vector<16x128xf32>,
    %c0_129 = arith.constant 0 : index
    %c0_130 = arith.constant 0 : index
    %172 = vector.load %arg12[%c0_129, %c0_130] : memref<328x128xf32, #tpu.memory_space<vmem>>, vector<288x128xf32>
    %c1_131 = arith.constant 1 : index
    %c0_132 = arith.constant 0 : index
    %173 = vector.load %arg12[%c1_131, %c0_132] : memref<328x128xf32, #tpu.memory_space<vmem>>, vector<288x128xf32>
    %c2 = arith.constant 2 : index
    %c0_133 = arith.constant 0 : index
    %174 = vector.load %arg12[%c2, %c0_133] : memref<328x128xf32, #tpu.memory_space<vmem>>, vector<288x128xf32>
    %c18 = arith.constant 18 : index
    %c0_134 = arith.constant 0 : index
    %175 = vector.load %arg12[%c18, %c0_134] : memref<328x128xf32, #tpu.memory_space<vmem>>, vector<288x128xf32>
    %c19_135 = arith.constant 19 : index
    %c0_136 = arith.constant 0 : index
    %176 = vector.load %arg12[%c19_135, %c0_136] : memref<328x128xf32, #tpu.memory_space<vmem>>, vector<288x128xf32>
    %c20 = arith.constant 20 : index
    %c0_137 = arith.constant 0 : index
    %177 = vector.load %arg12[%c20, %c0_137] : memref<328x128xf32, #tpu.memory_space<vmem>>, vector<288x128xf32>
    %c36 = arith.constant 36 : index
    %c0_138 = arith.constant 0 : index
    %178 = vector.load %arg12[%c36, %c0_138] : memref<328x128xf32, #tpu.memory_space<vmem>>, vector<288x128xf32>
    %c37_139 = arith.constant 37 : index
    %c0_140 = arith.constant 0 : index
    %179 = vector.load %arg12[%c37_139, %c0_140] : memref<328x128xf32, #tpu.memory_space<vmem>>, vector<288x128xf32>
    %c38 = arith.constant 38 : index
    %c0_141 = arith.constant 0 : index
    %180 = vector.load %arg12[%c38, %c0_141] : memref<328x128xf32, #tpu.memory_space<vmem>>, vector<288x128xf32>
    %181 = tpu.concatenate %172, %173, %174, %175, %176, %177, %178, %179, %180 in 1 : vector<288x128xf32>, vector<288x128xf32>, vector<288x128xf32>, vector<288x128xf32>, vector<288x128xf32>, vector<288x128xf32>, vector<288x128xf32>, vector<288x128xf32>, vector<288x128xf32> -> vector<288x1152xf32>
    %182 = arith.truncf %181 : vector<288x1152xf32> to vector<288x1152xbf16>
    %c0_142 = arith.constant 0 : index
    %c0_143 = arith.constant 0 : index
    %183 = vector.load %arg4[%c0_142, %c0_143] : memref<1152x128xbf16, #tpu.memory_space<vmem>>, vector<1152x128xbf16>
    %cst_144 = arith.constant dense<0.000000e+00> : vector<288x128xf32>
    %184 = tpu.matmul %182, %183, %cst_144 {dimension_numbers = #tpu.dot_dimension_numbers<[1], [0], [0], [1], [0, 0, 1, 1], [], []>} : vector<288x1152xbf16>, vector<1152x128xbf16>, vector<288x128xf32> -> vector<288x128xf32>
    %c0_145 = arith.constant 0 : index
    %c0_146 = arith.constant 0 : index
    %185 = vector.load %arg5[%c0_145, %c0_146] : memref<1x128xf32, #tpu.memory_space<vmem>>, vector<1x128xf32>
    %186 = vector.broadcast %185 : vector<1x128xf32> to vector<288x128xf32>
    %187 = arith.addf %184, %186 : vector<288x128xf32>
    %cst_147 = arith.constant 0.000000e+00 : f32
    %188 = vector.broadcast %cst_147 : f32 to vector<288x128xf32>
    %189 = arith.maximumf %187, %188 : vector<288x128xf32>
    %c0_148 = arith.constant 0 : index
    %c0_149 = arith.constant 0 : index
    %190 = vector.load %arg13[%c0_148, %c0_149] : memref<288x128xf32, #tpu.memory_space<vmem>>, vector<288x128xf32>
    tpu.vector_store %arg13[%c0_148, %c0_149], %189 {strides = array<i32>} : memref<288x128xf32, #tpu.memory_space<vmem>>, vector<288x128xf32>,
    %c0_150 = arith.constant 0 : index
    %c0_151 = arith.constant 0 : index
    %191 = tpu.strided_load %arg13[%c0_150, %c0_151] {strides = array<i32: 2, 1>} : memref<288x128xf32, #tpu.memory_space<vmem>>, vector<8x128xf32>
    %c1_152 = arith.constant 1 : index
    %c0_153 = arith.constant 0 : index
    %192 = tpu.strided_load %arg13[%c1_152, %c0_153] {strides = array<i32: 2, 1>} : memref<288x128xf32, #tpu.memory_space<vmem>>, vector<8x128xf32>
    %193 = arith.maximumf %191, %192 : vector<8x128xf32>
    %c18_154 = arith.constant 18 : index
    %c0_155 = arith.constant 0 : index
    %194 = tpu.strided_load %arg13[%c18_154, %c0_155] {strides = array<i32: 2, 1>} : memref<288x128xf32, #tpu.memory_space<vmem>>, vector<8x128xf32>
    %c19_156 = arith.constant 19 : index
    %c0_157 = arith.constant 0 : index
    %195 = tpu.strided_load %arg13[%c19_156, %c0_157] {strides = array<i32: 2, 1>} : memref<288x128xf32, #tpu.memory_space<vmem>>, vector<8x128xf32>
    %196 = arith.maximumf %194, %195 : vector<8x128xf32>
    %197 = arith.maximumf %193, %196 : vector<8x128xf32>
    %c11 = arith.constant 11 : index
    %c0_158 = arith.constant 0 : index
    %198 = vector.load %arg14[%c11, %c0_158] : memref<104x128xf32, #tpu.memory_space<vmem>>, vector<8x128xf32>
    tpu.vector_store %arg14[%c11, %c0_158], %197 {strides = array<i32>} : memref<104x128xf32, #tpu.memory_space<vmem>>, vector<8x128xf32>,
    %c36_159 = arith.constant 36 : index
    %c0_160 = arith.constant 0 : index
    %199 = tpu.strided_load %arg13[%c36_159, %c0_160] {strides = array<i32: 2, 1>} : memref<288x128xf32, #tpu.memory_space<vmem>>, vector<8x128xf32>
    %c37_161 = arith.constant 37 : index
    %c0_162 = arith.constant 0 : index
    %200 = tpu.strided_load %arg13[%c37_161, %c0_162] {strides = array<i32: 2, 1>} : memref<288x128xf32, #tpu.memory_space<vmem>>, vector<8x128xf32>
    %201 = arith.maximumf %199, %200 : vector<8x128xf32>
    %c54 = arith.constant 54 : index
    %c0_163 = arith.constant 0 : index
    %202 = tpu.strided_load %arg13[%c54, %c0_163] {strides = array<i32: 2, 1>} : memref<288x128xf32, #tpu.memory_space<vmem>>, vector<8x128xf32>
    %c55_164 = arith.constant 55 : index
    %c0_165 = arith.constant 0 : index
    %203 = tpu.strided_load %arg13[%c55_164, %c0_165] {strides = array<i32: 2, 1>} : memref<288x128xf32, #tpu.memory_space<vmem>>, vector<8x128xf32>
    %204 = arith.maximumf %202, %203 : vector<8x128xf32>
    %205 = arith.maximumf %201, %204 : vector<8x128xf32>
    %c21 = arith.constant 21 : index
    %c0_166 = arith.constant 0 : index
    %206 = vector.load %arg14[%c21, %c0_166] : memref<104x128xf32, #tpu.memory_space<vmem>>, vector<8x128xf32>
    tpu.vector_store %arg14[%c21, %c0_166], %205 {strides = array<i32>} : memref<104x128xf32, #tpu.memory_space<vmem>>, vector<8x128xf32>,
    %c72 = arith.constant 72 : index
    %c0_167 = arith.constant 0 : index
    %207 = tpu.strided_load %arg13[%c72, %c0_167] {strides = array<i32: 2, 1>} : memref<288x128xf32, #tpu.memory_space<vmem>>, vector<8x128xf32>
    %c73_168 = arith.constant 73 : index
    %c0_169 = arith.constant 0 : index
    %208 = tpu.strided_load %arg13[%c73_168, %c0_169] {strides = array<i32: 2, 1>} : memref<288x128xf32, #tpu.memory_space<vmem>>, vector<8x128xf32>
    %209 = arith.maximumf %207, %208 : vector<8x128xf32>
    %c90 = arith.constant 90 : index
    %c0_170 = arith.constant 0 : index
    %210 = tpu.strided_load %arg13[%c90, %c0_170] {strides = array<i32: 2, 1>} : memref<288x128xf32, #tpu.memory_space<vmem>>, vector<8x128xf32>
    %c91_171 = arith.constant 91 : index
    %c0_172 = arith.constant 0 : index
    %211 = tpu.strided_load %arg13[%c91_171, %c0_172] {strides = array<i32: 2, 1>} : memref<288x128xf32, #tpu.memory_space<vmem>>, vector<8x128xf32>
    %212 = arith.maximumf %210, %211 : vector<8x128xf32>
    %213 = arith.maximumf %209, %212 : vector<8x128xf32>
    %c31 = arith.constant 31 : index
    %c0_173 = arith.constant 0 : index
    %214 = vector.load %arg14[%c31, %c0_173] : memref<104x128xf32, #tpu.memory_space<vmem>>, vector<8x128xf32>
    tpu.vector_store %arg14[%c31, %c0_173], %213 {strides = array<i32>} : memref<104x128xf32, #tpu.memory_space<vmem>>, vector<8x128xf32>,
    %c108 = arith.constant 108 : index
    %c0_174 = arith.constant 0 : index
    %215 = tpu.strided_load %arg13[%c108, %c0_174] {strides = array<i32: 2, 1>} : memref<288x128xf32, #tpu.memory_space<vmem>>, vector<8x128xf32>
    %c109_175 = arith.constant 109 : index
    %c0_176 = arith.constant 0 : index
    %216 = tpu.strided_load %arg13[%c109_175, %c0_176] {strides = array<i32: 2, 1>} : memref<288x128xf32, #tpu.memory_space<vmem>>, vector<8x128xf32>
    %217 = arith.maximumf %215, %216 : vector<8x128xf32>
    %c126 = arith.constant 126 : index
    %c0_177 = arith.constant 0 : index
    %218 = tpu.strided_load %arg13[%c126, %c0_177] {strides = array<i32: 2, 1>} : memref<288x128xf32, #tpu.memory_space<vmem>>, vector<8x128xf32>
    %c127_178 = arith.constant 127 : index
    %c0_179 = arith.constant 0 : index
    %219 = tpu.strided_load %arg13[%c127_178, %c0_179] {strides = array<i32: 2, 1>} : memref<288x128xf32, #tpu.memory_space<vmem>>, vector<8x128xf32>
    %220 = arith.maximumf %218, %219 : vector<8x128xf32>
    %221 = arith.maximumf %217, %220 : vector<8x128xf32>
    %c41 = arith.constant 41 : index
    %c0_180 = arith.constant 0 : index
    %222 = vector.load %arg14[%c41, %c0_180] : memref<104x128xf32, #tpu.memory_space<vmem>>, vector<8x128xf32>
    tpu.vector_store %arg14[%c41, %c0_180], %221 {strides = array<i32>} : memref<104x128xf32, #tpu.memory_space<vmem>>, vector<8x128xf32>,
    %c144 = arith.constant 144 : index
    %c0_181 = arith.constant 0 : index
    %223 = tpu.strided_load %arg13[%c144, %c0_181] {strides = array<i32: 2, 1>} : memref<288x128xf32, #tpu.memory_space<vmem>>, vector<8x128xf32>
    %c145_182 = arith.constant 145 : index
    %c0_183 = arith.constant 0 : index
    %224 = tpu.strided_load %arg13[%c145_182, %c0_183] {strides = array<i32: 2, 1>} : memref<288x128xf32, #tpu.memory_space<vmem>>, vector<8x128xf32>
    %225 = arith.maximumf %223, %224 : vector<8x128xf32>
    %c162 = arith.constant 162 : index
    %c0_184 = arith.constant 0 : index
    %226 = tpu.strided_load %arg13[%c162, %c0_184] {strides = array<i32: 2, 1>} : memref<288x128xf32, #tpu.memory_space<vmem>>, vector<8x128xf32>
    %c163_185 = arith.constant 163 : index
    %c0_186 = arith.constant 0 : index
    %227 = tpu.strided_load %arg13[%c163_185, %c0_186] {strides = array<i32: 2, 1>} : memref<288x128xf32, #tpu.memory_space<vmem>>, vector<8x128xf32>
    %228 = arith.maximumf %226, %227 : vector<8x128xf32>
    %229 = arith.maximumf %225, %228 : vector<8x128xf32>
    %c51 = arith.constant 51 : index
    %c0_187 = arith.constant 0 : index
    %230 = vector.load %arg14[%c51, %c0_187] : memref<104x128xf32, #tpu.memory_space<vmem>>, vector<8x128xf32>
    tpu.vector_store %arg14[%c51, %c0_187], %229 {strides = array<i32>} : memref<104x128xf32, #tpu.memory_space<vmem>>, vector<8x128xf32>,
    %c180 = arith.constant 180 : index
    %c0_188 = arith.constant 0 : index
    %231 = tpu.strided_load %arg13[%c180, %c0_188] {strides = array<i32: 2, 1>} : memref<288x128xf32, #tpu.memory_space<vmem>>, vector<8x128xf32>
    %c181_189 = arith.constant 181 : index
    %c0_190 = arith.constant 0 : index
    %232 = tpu.strided_load %arg13[%c181_189, %c0_190] {strides = array<i32: 2, 1>} : memref<288x128xf32, #tpu.memory_space<vmem>>, vector<8x128xf32>
    %233 = arith.maximumf %231, %232 : vector<8x128xf32>
    %c198 = arith.constant 198 : index
    %c0_191 = arith.constant 0 : index
    %234 = tpu.strided_load %arg13[%c198, %c0_191] {strides = array<i32: 2, 1>} : memref<288x128xf32, #tpu.memory_space<vmem>>, vector<8x128xf32>
    %c199_192 = arith.constant 199 : index
    %c0_193 = arith.constant 0 : index
    %235 = tpu.strided_load %arg13[%c199_192, %c0_193] {strides = array<i32: 2, 1>} : memref<288x128xf32, #tpu.memory_space<vmem>>, vector<8x128xf32>
    %236 = arith.maximumf %234, %235 : vector<8x128xf32>
    %237 = arith.maximumf %233, %236 : vector<8x128xf32>
    %c61 = arith.constant 61 : index
    %c0_194 = arith.constant 0 : index
    %238 = vector.load %arg14[%c61, %c0_194] : memref<104x128xf32, #tpu.memory_space<vmem>>, vector<8x128xf32>
    tpu.vector_store %arg14[%c61, %c0_194], %237 {strides = array<i32>} : memref<104x128xf32, #tpu.memory_space<vmem>>, vector<8x128xf32>,
    %c216 = arith.constant 216 : index
    %c0_195 = arith.constant 0 : index
    %239 = tpu.strided_load %arg13[%c216, %c0_195] {strides = array<i32: 2, 1>} : memref<288x128xf32, #tpu.memory_space<vmem>>, vector<8x128xf32>
    %c217_196 = arith.constant 217 : index
    %c0_197 = arith.constant 0 : index
    %240 = tpu.strided_load %arg13[%c217_196, %c0_197] {strides = array<i32: 2, 1>} : memref<288x128xf32, #tpu.memory_space<vmem>>, vector<8x128xf32>
    %241 = arith.maximumf %239, %240 : vector<8x128xf32>
    %c234 = arith.constant 234 : index
    %c0_198 = arith.constant 0 : index
    %242 = tpu.strided_load %arg13[%c234, %c0_198] {strides = array<i32: 2, 1>} : memref<288x128xf32, #tpu.memory_space<vmem>>, vector<8x128xf32>
    %c235_199 = arith.constant 235 : index
    %c0_200 = arith.constant 0 : index
    %243 = tpu.strided_load %arg13[%c235_199, %c0_200] {strides = array<i32: 2, 1>} : memref<288x128xf32, #tpu.memory_space<vmem>>, vector<8x128xf32>
    %244 = arith.maximumf %242, %243 : vector<8x128xf32>
    %245 = arith.maximumf %241, %244 : vector<8x128xf32>
    %c71 = arith.constant 71 : index
    %c0_201 = arith.constant 0 : index
    %246 = vector.load %arg14[%c71, %c0_201] : memref<104x128xf32, #tpu.memory_space<vmem>>, vector<8x128xf32>
    tpu.vector_store %arg14[%c71, %c0_201], %245 {strides = array<i32>} : memref<104x128xf32, #tpu.memory_space<vmem>>, vector<8x128xf32>,
    %c252 = arith.constant 252 : index
    %c0_202 = arith.constant 0 : index
    %247 = tpu.strided_load %arg13[%c252, %c0_202] {strides = array<i32: 2, 1>} : memref<288x128xf32, #tpu.memory_space<vmem>>, vector<8x128xf32>
    %c253_203 = arith.constant 253 : index
    %c0_204 = arith.constant 0 : index
    %248 = tpu.strided_load %arg13[%c253_203, %c0_204] {strides = array<i32: 2, 1>} : memref<288x128xf32, #tpu.memory_space<vmem>>, vector<8x128xf32>
    %249 = arith.maximumf %247, %248 : vector<8x128xf32>
    %c270 = arith.constant 270 : index
    %c0_205 = arith.constant 0 : index
    %250 = tpu.strided_load %arg13[%c270, %c0_205] {strides = array<i32: 2, 1>} : memref<288x128xf32, #tpu.memory_space<vmem>>, vector<8x128xf32>
    %c271_206 = arith.constant 271 : index
    %c0_207 = arith.constant 0 : index
    %251 = tpu.strided_load %arg13[%c271_206, %c0_207] {strides = array<i32: 2, 1>} : memref<288x128xf32, #tpu.memory_space<vmem>>, vector<8x128xf32>
    %252 = arith.maximumf %250, %251 : vector<8x128xf32>
    %253 = arith.maximumf %249, %252 : vector<8x128xf32>
    %c81 = arith.constant 81 : index
    %c0_208 = arith.constant 0 : index
    %254 = vector.load %arg14[%c81, %c0_208] : memref<104x128xf32, #tpu.memory_space<vmem>>, vector<8x128xf32>
    tpu.vector_store %arg14[%c81, %c0_208], %253 {strides = array<i32>} : memref<104x128xf32, #tpu.memory_space<vmem>>, vector<8x128xf32>,
    %c0_209 = arith.constant 0 : index
    %c0_210 = arith.constant 0 : index
    %255 = vector.load %arg14[%c0_209, %c0_210] : memref<104x128xf32, #tpu.memory_space<vmem>>, vector<80x128xf32>
    %c1_211 = arith.constant 1 : index
    %c0_212 = arith.constant 0 : index
    %256 = vector.load %arg14[%c1_211, %c0_212] : memref<104x128xf32, #tpu.memory_space<vmem>>, vector<80x128xf32>
    %c2_213 = arith.constant 2 : index
    %c0_214 = arith.constant 0 : index
    %257 = vector.load %arg14[%c2_213, %c0_214] : memref<104x128xf32, #tpu.memory_space<vmem>>, vector<80x128xf32>
    %c10 = arith.constant 10 : index
    %c0_215 = arith.constant 0 : index
    %258 = vector.load %arg14[%c10, %c0_215] : memref<104x128xf32, #tpu.memory_space<vmem>>, vector<80x128xf32>
    %c11_216 = arith.constant 11 : index
    %c0_217 = arith.constant 0 : index
    %259 = vector.load %arg14[%c11_216, %c0_217] : memref<104x128xf32, #tpu.memory_space<vmem>>, vector<80x128xf32>
    %c12 = arith.constant 12 : index
    %c0_218 = arith.constant 0 : index
    %260 = vector.load %arg14[%c12, %c0_218] : memref<104x128xf32, #tpu.memory_space<vmem>>, vector<80x128xf32>
    %c20_219 = arith.constant 20 : index
    %c0_220 = arith.constant 0 : index
    %261 = vector.load %arg14[%c20_219, %c0_220] : memref<104x128xf32, #tpu.memory_space<vmem>>, vector<80x128xf32>
    %c21_221 = arith.constant 21 : index
    %c0_222 = arith.constant 0 : index
    %262 = vector.load %arg14[%c21_221, %c0_222] : memref<104x128xf32, #tpu.memory_space<vmem>>, vector<80x128xf32>
    %c22 = arith.constant 22 : index
    %c0_223 = arith.constant 0 : index
    %263 = vector.load %arg14[%c22, %c0_223] : memref<104x128xf32, #tpu.memory_space<vmem>>, vector<80x128xf32>
    %264 = tpu.concatenate %255, %256, %257, %258, %259, %260, %261, %262, %263 in 1 : vector<80x128xf32>, vector<80x128xf32>, vector<80x128xf32>, vector<80x128xf32>, vector<80x128xf32>, vector<80x128xf32>, vector<80x128xf32>, vector<80x128xf32>, vector<80x128xf32> -> vector<80x1152xf32>
    %265 = arith.truncf %264 : vector<80x1152xf32> to vector<80x1152xbf16>
    %c0_224 = arith.constant 0 : index
    %c0_225 = arith.constant 0 : index
    %266 = vector.load %arg6[%c0_224, %c0_225] : memref<1152x128xbf16, #tpu.memory_space<vmem>>, vector<1152x128xbf16>
    %cst_226 = arith.constant dense<0.000000e+00> : vector<80x128xf32>
    %267 = tpu.matmul %265, %266, %cst_226 {dimension_numbers = #tpu.dot_dimension_numbers<[1], [0], [0], [1], [0, 0, 1, 1], [], []>} : vector<80x1152xbf16>, vector<1152x128xbf16>, vector<80x128xf32> -> vector<80x128xf32>
    %c0_227 = arith.constant 0 : index
    %c0_228 = arith.constant 0 : index
    %268 = vector.load %arg7[%c0_227, %c0_228] : memref<1x128xf32, #tpu.memory_space<vmem>>, vector<1x128xf32>
    %269 = vector.broadcast %268 : vector<1x128xf32> to vector<80x128xf32>
    %270 = arith.addf %267, %269 : vector<80x128xf32>
    %cst_229 = arith.constant 0.000000e+00 : f32
    %271 = vector.broadcast %cst_229 : f32 to vector<80x128xf32>
    %272 = arith.maximumf %270, %271 : vector<80x128xf32>
    %c0_230 = arith.constant 0 : index
    %c0_231 = arith.constant 0 : index
    %273 = vector.load %arg15[%c0_230, %c0_231] : memref<80x128xf32, #tpu.memory_space<vmem>>, vector<80x128xf32>
    tpu.vector_store %arg15[%c0_230, %c0_231], %272 {strides = array<i32>} : memref<80x128xf32, #tpu.memory_space<vmem>>, vector<80x128xf32>,
    %c0_232 = arith.constant 0 : index
    %c0_233 = arith.constant 0 : index
    %274 = tpu.strided_load %arg15[%c0_232, %c0_233] {strides = array<i32: 2, 1>} : memref<80x128xf32, #tpu.memory_space<vmem>>, vector<4x128xf32>
    %c1_234 = arith.constant 1 : index
    %c0_235 = arith.constant 0 : index
    %275 = tpu.strided_load %arg15[%c1_234, %c0_235] {strides = array<i32: 2, 1>} : memref<80x128xf32, #tpu.memory_space<vmem>>, vector<4x128xf32>
    %276 = arith.maximumf %274, %275 : vector<4x128xf32>
    %c10_236 = arith.constant 10 : index
    %c0_237 = arith.constant 0 : index
    %277 = tpu.strided_load %arg15[%c10_236, %c0_237] {strides = array<i32: 2, 1>} : memref<80x128xf32, #tpu.memory_space<vmem>>, vector<4x128xf32>
    %c11_238 = arith.constant 11 : index
    %c0_239 = arith.constant 0 : index
    %278 = tpu.strided_load %arg15[%c11_238, %c0_239] {strides = array<i32: 2, 1>} : memref<80x128xf32, #tpu.memory_space<vmem>>, vector<4x128xf32>
    %279 = arith.maximumf %277, %278 : vector<4x128xf32>
    %280 = arith.maximumf %276, %279 : vector<4x128xf32>
    %281 = vector.extract_strided_slice %280 {offsets = [0, 0], sizes = [1, 128], strides = [1, 1]} : vector<4x128xf32> to vector<1x128xf32>
    %282 = vector.extract_strided_slice %280 {offsets = [1, 0], sizes = [1, 128], strides = [1, 1]} : vector<4x128xf32> to vector<1x128xf32>
    %283 = vector.extract_strided_slice %280 {offsets = [2, 0], sizes = [1, 128], strides = [1, 1]} : vector<4x128xf32> to vector<1x128xf32>
    %284 = vector.extract_strided_slice %280 {offsets = [3, 0], sizes = [1, 128], strides = [1, 1]} : vector<4x128xf32> to vector<1x128xf32>
    %c20_240 = arith.constant 20 : index
    %c0_241 = arith.constant 0 : index
    %285 = tpu.strided_load %arg15[%c20_240, %c0_241] {strides = array<i32: 2, 1>} : memref<80x128xf32, #tpu.memory_space<vmem>>, vector<4x128xf32>
    %c21_242 = arith.constant 21 : index
    %c0_243 = arith.constant 0 : index
    %286 = tpu.strided_load %arg15[%c21_242, %c0_243] {strides = array<i32: 2, 1>} : memref<80x128xf32, #tpu.memory_space<vmem>>, vector<4x128xf32>
    %287 = arith.maximumf %285, %286 : vector<4x128xf32>
    %c30 = arith.constant 30 : index
    %c0_244 = arith.constant 0 : index
    %288 = tpu.strided_load %arg15[%c30, %c0_244] {strides = array<i32: 2, 1>} : memref<80x128xf32, #tpu.memory_space<vmem>>, vector<4x128xf32>
    %c31_245 = arith.constant 31 : index
    %c0_246 = arith.constant 0 : index
    %289 = tpu.strided_load %arg15[%c31_245, %c0_246] {strides = array<i32: 2, 1>} : memref<80x128xf32, #tpu.memory_space<vmem>>, vector<4x128xf32>
    %290 = arith.maximumf %288, %289 : vector<4x128xf32>
    %291 = arith.maximumf %287, %290 : vector<4x128xf32>
    %292 = vector.extract_strided_slice %291 {offsets = [0, 0], sizes = [1, 128], strides = [1, 1]} : vector<4x128xf32> to vector<1x128xf32>
    %293 = vector.extract_strided_slice %291 {offsets = [1, 0], sizes = [1, 128], strides = [1, 1]} : vector<4x128xf32> to vector<1x128xf32>
    %294 = vector.extract_strided_slice %291 {offsets = [2, 0], sizes = [1, 128], strides = [1, 1]} : vector<4x128xf32> to vector<1x128xf32>
    %295 = vector.extract_strided_slice %291 {offsets = [3, 0], sizes = [1, 128], strides = [1, 1]} : vector<4x128xf32> to vector<1x128xf32>
    %c40 = arith.constant 40 : index
    %c0_247 = arith.constant 0 : index
    %296 = tpu.strided_load %arg15[%c40, %c0_247] {strides = array<i32: 2, 1>} : memref<80x128xf32, #tpu.memory_space<vmem>>, vector<4x128xf32>
    %c41_248 = arith.constant 41 : index
    %c0_249 = arith.constant 0 : index
    %297 = tpu.strided_load %arg15[%c41_248, %c0_249] {strides = array<i32: 2, 1>} : memref<80x128xf32, #tpu.memory_space<vmem>>, vector<4x128xf32>
    %298 = arith.maximumf %296, %297 : vector<4x128xf32>
    %c50 = arith.constant 50 : index
    %c0_250 = arith.constant 0 : index
    %299 = tpu.strided_load %arg15[%c50, %c0_250] {strides = array<i32: 2, 1>} : memref<80x128xf32, #tpu.memory_space<vmem>>, vector<4x128xf32>
    %c51_251 = arith.constant 51 : index
    %c0_252 = arith.constant 0 : index
    %300 = tpu.strided_load %arg15[%c51_251, %c0_252] {strides = array<i32: 2, 1>} : memref<80x128xf32, #tpu.memory_space<vmem>>, vector<4x128xf32>
    %301 = arith.maximumf %299, %300 : vector<4x128xf32>
    %302 = arith.maximumf %298, %301 : vector<4x128xf32>
    %303 = vector.extract_strided_slice %302 {offsets = [0, 0], sizes = [1, 128], strides = [1, 1]} : vector<4x128xf32> to vector<1x128xf32>
    %304 = vector.extract_strided_slice %302 {offsets = [1, 0], sizes = [1, 128], strides = [1, 1]} : vector<4x128xf32> to vector<1x128xf32>
    %305 = vector.extract_strided_slice %302 {offsets = [2, 0], sizes = [1, 128], strides = [1, 1]} : vector<4x128xf32> to vector<1x128xf32>
    %306 = vector.extract_strided_slice %302 {offsets = [3, 0], sizes = [1, 128], strides = [1, 1]} : vector<4x128xf32> to vector<1x128xf32>
    %c60 = arith.constant 60 : index
    %c0_253 = arith.constant 0 : index
    %307 = tpu.strided_load %arg15[%c60, %c0_253] {strides = array<i32: 2, 1>} : memref<80x128xf32, #tpu.memory_space<vmem>>, vector<4x128xf32>
    %c61_254 = arith.constant 61 : index
    %c0_255 = arith.constant 0 : index
    %308 = tpu.strided_load %arg15[%c61_254, %c0_255] {strides = array<i32: 2, 1>} : memref<80x128xf32, #tpu.memory_space<vmem>>, vector<4x128xf32>
    %309 = arith.maximumf %307, %308 : vector<4x128xf32>
    %c70 = arith.constant 70 : index
    %c0_256 = arith.constant 0 : index
    %310 = tpu.strided_load %arg15[%c70, %c0_256] {strides = array<i32: 2, 1>} : memref<80x128xf32, #tpu.memory_space<vmem>>, vector<4x128xf32>
    %c71_257 = arith.constant 71 : index
    %c0_258 = arith.constant 0 : index
    %311 = tpu.strided_load %arg15[%c71_257, %c0_258] {strides = array<i32: 2, 1>} : memref<80x128xf32, #tpu.memory_space<vmem>>, vector<4x128xf32>
    %312 = arith.maximumf %310, %311 : vector<4x128xf32>
    %313 = arith.maximumf %309, %312 : vector<4x128xf32>
    %314 = vector.extract_strided_slice %313 {offsets = [0, 0], sizes = [1, 128], strides = [1, 1]} : vector<4x128xf32> to vector<1x128xf32>
    %315 = vector.extract_strided_slice %313 {offsets = [1, 0], sizes = [1, 128], strides = [1, 1]} : vector<4x128xf32> to vector<1x128xf32>
    %316 = vector.extract_strided_slice %313 {offsets = [2, 0], sizes = [1, 128], strides = [1, 1]} : vector<4x128xf32> to vector<1x128xf32>
    %317 = vector.extract_strided_slice %313 {offsets = [3, 0], sizes = [1, 128], strides = [1, 1]} : vector<4x128xf32> to vector<1x128xf32>
    %318 = tpu.concatenate %281, %282, %283, %284, %292, %293, %294, %295, %303, %304, %305, %306, %314, %315, %316, %317 in 1 : vector<1x128xf32>, vector<1x128xf32>, vector<1x128xf32>, vector<1x128xf32>, vector<1x128xf32>, vector<1x128xf32>, vector<1x128xf32>, vector<1x128xf32>, vector<1x128xf32>, vector<1x128xf32>, vector<1x128xf32>, vector<1x128xf32>, vector<1x128xf32>, vector<1x128xf32>, vector<1x128xf32>, vector<1x128xf32> -> vector<1x2048xf32>
    %319 = arith.truncf %318 : vector<1x2048xf32> to vector<1x2048xbf16>
    %c0_259 = arith.constant 0 : index
    %c0_260 = arith.constant 0 : index
    %320 = vector.load %arg9[%c0_259, %c0_260] : memref<1x128xf32, #tpu.memory_space<vmem>>, vector<1x128xf32>
    %c0_261 = arith.constant 0 : index
    %c0_262 = arith.constant 0 : index
    %321 = vector.load %arg8[%c0_261, %c0_262] : memref<2048x128xbf16, #tpu.memory_space<vmem>>, vector<2048x128xbf16>
    %cst_263 = arith.constant dense<0.000000e+00> : vector<1x128xf32>
    %322 = tpu.matmul %319, %321, %cst_263 {dimension_numbers = #tpu.dot_dimension_numbers<[1], [0], [0], [1], [0, 0, 1, 1], [], []>} : vector<1x2048xbf16>, vector<2048x128xbf16>, vector<1x128xf32> -> vector<1x128xf32>
    %323 = arith.addf %320, %322 : vector<1x128xf32>
    %c0_264 = arith.constant 0 : index
    %c0_265 = arith.constant 0 : index
    %c0_266 = arith.constant 0 : index
    %324 = vector.load %arg10[%c0_264, %c0_265, %c0_266] : memref<1x1x128xf32, #tpu.memory_space<vmem>>, vector<1x1x128xf32>
    %325 = vector.shape_cast %324 : vector<1x1x128xf32> to vector<1x128xf32>
    %326 = vector.shape_cast %323 : vector<1x128xf32> to vector<1x1x128xf32>
    tpu.vector_store %arg10[%c0_264, %c0_265, %c0_266], %326 {strides = array<i32>} : memref<1x1x128xf32, #tpu.memory_space<vmem>>, vector<1x1x128xf32>,
    return
  }
  func.func @transform_0(%arg0: i32) -> (i32, i32, i32) {
    %c0_i32 = arith.constant 0 : i32
    %c0_i32_0 = arith.constant 0 : i32
    %c0_i32_1 = arith.constant 0 : i32
    return %arg0, %c0_i32, %c0_i32_0 : i32, i32, i32
  }
  func.func @transform_1(%arg0: i32) -> (i32, i32) {
    %c0_i32 = arith.constant 0 : i32
    %c0_i32_0 = arith.constant 0 : i32
    %c0_i32_1 = arith.constant 0 : i32
    return %c0_i32, %c0_i32_0 : i32, i32
  }
  func.func @transform_2(%arg0: i32) -> (i32, i32) {
    %c0_i32 = arith.constant 0 : i32
    %c0_i32_0 = arith.constant 0 : i32
    %c0_i32_1 = arith.constant 0 : i32
    return %c0_i32, %c0_i32_0 : i32, i32
  }
  func.func @transform_3(%arg0: i32) -> (i32, i32) {
    %c0_i32 = arith.constant 0 : i32
    %c0_i32_0 = arith.constant 0 : i32
    %c0_i32_1 = arith.constant 0 : i32
    return %c0_i32, %c0_i32_0 : i32, i32
  }
  func.func @transform_4(%arg0: i32) -> (i32, i32) {
    %c0_i32 = arith.constant 0 : i32
    %c0_i32_0 = arith.constant 0 : i32
    %c0_i32_1 = arith.constant 0 : i32
    return %c0_i32, %c0_i32_0 : i32, i32
  }
  func.func @transform_5(%arg0: i32) -> (i32, i32) {
    %c0_i32 = arith.constant 0 : i32
    %c0_i32_0 = arith.constant 0 : i32
    %c0_i32_1 = arith.constant 0 : i32
    return %c0_i32, %c0_i32_0 : i32, i32
  }
  func.func @transform_6(%arg0: i32) -> (i32, i32) {
    %c0_i32 = arith.constant 0 : i32
    %c0_i32_0 = arith.constant 0 : i32
    %c0_i32_1 = arith.constant 0 : i32
    return %c0_i32, %c0_i32_0 : i32, i32
  }
  func.func @transform_7(%arg0: i32) -> (i32, i32) {
    %c0_i32 = arith.constant 0 : i32
    %c0_i32_0 = arith.constant 0 : i32
    %c0_i32_1 = arith.constant 0 : i32
    return %c0_i32, %c0_i32_0 : i32, i32
  }
  func.func @transform_8(%arg0: i32) -> (i32, i32) {
    %c0_i32 = arith.constant 0 : i32
    %c0_i32_0 = arith.constant 0 : i32
    %c0_i32_1 = arith.constant 0 : i32
    return %c0_i32, %c0_i32_0 : i32, i32
  }
  func.func @transform_9(%arg0: i32) -> (i32, i32, i32) {
    %c0_i32 = arith.constant 0 : i32
    %c0_i32_0 = arith.constant 0 : i32
    %c0_i32_1 = arith.constant 0 : i32
    return %arg0, %c0_i32, %c0_i32_0 : i32, i32, i32
  }
}

</mosaic_0001>

<llo_original>
// kernel: small_cnn_forward.1
$region0: #{small_cnn_forward.1}
  #allocation0 [shape = 'u32[]', space=smem, size = 0x4, offset = 0x4, fixed_abs, tag = 'smem constant byte address 0x4 - core index']
  #allocation1 [shape = 'u32[144,128]{1,0:T(1,128)}', space=vmem, size = 0x12000, scoped, tag = 'internal scratch']
  #allocation2 [shape = 'f32[1088,128]{1,0:T(8,128)}', space=vmem, size = 0x88000, scoped, tag = 'scratch operand']
  #allocation3 [shape = 'f32[328,128]{1,0:T(8,128)}', space=vmem, size = 0x29000, scoped, tag = 'scratch operand']
  #allocation4 [shape = 'f32[288,128]{1,0:T(8,128)}', space=vmem, size = 0x24000, scoped, tag = 'scratch operand']
  #allocation5 [shape = 'f32[104,128]{1,0:T(8,128)}', space=vmem, size = 0xd000, scoped, tag = 'scratch operand']
  #allocation6 [shape = 'f32[80,128]{1,0:T(8,128)}', space=vmem, size = 0xa000, scoped, tag = 'scratch operand']
  %s0 = inlined_call_operand.vmem [shape: bf16[2,1088,27], index: 0, kind: input, shape index: {}]
  %s1 = inlined_call_operand.vmem [shape: bf16[27,128], index: 1, kind: input, shape index: {}]
  %s2 = inlined_call_operand.vmem [shape: f32[1,128], index: 2, kind: input, shape index: {}]
  %s3 = inlined_call_operand.vmem [shape: bf16[1152,128], index: 3, kind: input, shape index: {}]
  %s4 = inlined_call_operand.vmem [shape: f32[1,128], index: 4, kind: input, shape index: {}]
  %s5 = inlined_call_operand.vmem [shape: bf16[1152,128], index: 5, kind: input, shape index: {}]
  %s6 = inlined_call_operand.vmem [shape: f32[1,128], index: 6, kind: input, shape index: {}]
  %s7 = inlined_call_operand.vmem [shape: bf16[2048,128], index: 7, kind: input, shape index: {}]
  %s8 = inlined_call_operand.vmem [shape: f32[1,128], index: 8, kind: input, shape index: {}]
  %s9 = inlined_call_operand.hbm [shape: f32[2,1,128], index: 9, kind: output, shape index: {}]
  %s10 = sld [smem:[#allocation0]]
  $region69: #{small_cnn_forward.1} parent=0
    _
  %s12 = ssub.s32 1, %s10
  %s13 = scalar_select 0, %s12, %s10
  $region1: #{small_cnn_forward.1} parent=0
    #allocation7 [shape = 'u8[1024]{0}', space=vmem, size = 0x400, scoped, tag = 'output window, operand 0']
    #allocation8 [shape = 's32[2]{0}', space=sflag, size = 0x8, scoped, tag = 'scoped memory for small_cnn_forward.1']
    %14 = vsyncpa [#allocation8], 0
    %s15 = scalar_lea.sflag [#allocation8], 1
    %16 = vsyncpa %s15, 0
    loop: start=0, step=1, limit=4
    $region2: #{small_cnn_forward.1} parent=1 // loop_pre_header
      _
    $region3: #{small_cnn_forward.1} parent=1 // loop_header
      %s18 = sphi 0, %s22
      %p19 = scmp.ge.s32.totalorder %s18, 4
      %s28 = sphi 0, %s30
      %s31 = sphi 0, %s28
      %s32 = sphi 0, %s31
      %s48 = sphi 0, %s32
      %s52 = sphi 0, %s52
      %s54 = sphi 0, %s52
      %s55 = sphi 0, %s54
      %s69 = sphi 0, %s55
      %s73 = sphi 0, %s73
      %s75 = sphi 0, %s73
      %s76 = sphi 0, %s75
      %s90 = sphi 0, %s76
      %s94 = sphi 0, %s94
      %s96 = sphi 0, %s94
      %s97 = sphi 0, %s96
      %s111 = sphi 0, %s97
      %s115 = sphi 0, %s115
      %s117 = sphi 0, %s115
      %s118 = sphi 0, %s117
      %s132 = sphi 0, %s118
      %s136 = sphi 0, %s136
      %s138 = sphi 0, %s136
      %s139 = sphi 0, %s138
      %s153 = sphi 0, %s139
      %s157 = sphi 0, %s157
      %s159 = sphi 0, %s157
      %s160 = sphi 0, %s159
      %s174 = sphi 0, %s160
      %s178 = sphi 0, %s178
      %s180 = sphi 0, %s178
      %s181 = sphi 0, %s180
      %s195 = sphi 0, %s181
      %s199 = sphi 0, %s199
      %s201 = sphi 0, %s199
      %s202 = sphi 0, %s201
      %s216 = sphi 0, %s202
      %s222 = sphi 0, %s224
      %s225 = sphi 0, %s222
      %s226 = sphi 0, %s225
      %s242 = sphi 0, %s226
    $region4: #{small_cnn_forward.1} parent=1 // loop_header_branch
      %21 = sbr.rel (%p19) target = $region8
    $region5: #{small_cnn_forward.1} parent=1 // loop_body
      %s23 = ssub.s32 %s18, 1
      %s24 = ssub.s32 %s18, 2
      %s25 = sadd.s32 %s18, 1
      %s26 = ssub.s32 %s18, %s25
      %p27 = scmp.eq.s32.totalorder %s26, 0
      %s29 = sadd.s32 %s28, 1
      %s30 = scalar_select %p27, %s28, %s29
      %p33 = pneg %p27
      %p34 = scmp.eq.s32.totalorder %s18, 1
      %p35 = por %p33, %p34
      %p36 = scmp.ne.s32.totalorder %s28, %s31
      %p37 = scmp.eq.s32.totalorder %s18, 0
      %p38 = por %p36, %p37
      %p39 = scmp.ne.s32.totalorder %s28, %s31
      %p40 = scmp.eq.s32.totalorder %s23, 1
      %p41 = por %p39, %p40
      %p42 = scmp.ne.s32.totalorder %s31, %s32
      %p43 = scmp.eq.s32.totalorder %s23, 0
      %p44 = por %p42, %p43
      %p45 = scmp.ne.s32.totalorder %s31, %s32
      %p46 = scmp.eq.s32.totalorder %s24, 1
      %p47 = por %p45, %p46
      %p49 = scmp.ne.s32.totalorder %s32, %s48
      %p50 = scmp.eq.s32.totalorder %s24, 0
      %p51 = por %p49, %p50
      %s53 = sadd.s32 %s52, 1
      %p56 = scmp.eq.s32.totalorder %s18, 1
      %p57 = scmp.ne.s32.totalorder %s52, %s54
      %p58 = scmp.eq.s32.totalorder %s18, 0
      %p59 = por %p57, %p58
      %p60 = scmp.ne.s32.totalorder %s52, %s54
      %p61 = scmp.eq.s32.totalorder %s23, 1
      %p62 = por %p60, %p61
      %p63 = scmp.ne.s32.totalorder %s54, %s55
      %p64 = scmp.eq.s32.totalorder %s23, 0
      %p65 = por %p63, %p64
      %p66 = scmp.ne.s32.totalorder %s54, %s55
      %p67 = scmp.eq.s32.totalorder %s24, 1
      %p68 = por %p66, %p67
      %p70 = scmp.ne.s32.totalorder %s55, %s69
      %p71 = scmp.eq.s32.totalorder %s24, 0
      %p72 = por %p70, %p71
      %s74 = sadd.s32 %s73, 1
      %p77 = scmp.eq.s32.totalorder %s18, 1
      %p78 = scmp.ne.s32.totalorder %s73, %s75
      %p79 = scmp.eq.s32.totalorder %s18, 0
      %p80 = por %p78, %p79
      %p81 = scmp.ne.s32.totalorder %s73, %s75
      %p82 = scmp.eq.s32.totalorder %s23, 1
      %p83 = por %p81, %p82
      %p84 = scmp.ne.s32.totalorder %s75, %s76
      %p85 = scmp.eq.s32.totalorder %s23, 0
      %p86 = por %p84, %p85
      %p87 = scmp.ne.s32.totalorder %s75, %s76
      %p88 = scmp.eq.s32.totalorder %s24, 1
      %p89 = por %p87, %p88
      %p91 = scmp.ne.s32.totalorder %s76, %s90
      %p92 = scmp.eq.s32.totalorder %s24, 0
      %p93 = por %p91, %p92
      %s95 = sadd.s32 %s94, 1
      %p98 = scmp.eq.s32.totalorder %s18, 1
      %p99 = scmp.ne.s32.totalorder %s94, %s96
      %p100 = scmp.eq.s32.totalorder %s18, 0
      %p101 = por %p99, %p100
      %p102 = scmp.ne.s32.totalorder %s94, %s96
      %p103 = scmp.eq.s32.totalorder %s23, 1
      %p104 = por %p102, %p103
      %p105 = scmp.ne.s32.totalorder %s96, %s97
      %p106 = scmp.eq.s32.totalorder %s23, 0
      %p107 = por %p105, %p106
      %p108 = scmp.ne.s32.totalorder %s96, %s97
      %p109 = scmp.eq.s32.totalorder %s24, 1
      %p110 = por %p108, %p109
      %p112 = scmp.ne.s32.totalorder %s97, %s111
      %p113 = scmp.eq.s32.totalorder %s24, 0
      %p114 = por %p112, %p113
      %s116 = sadd.s32 %s115, 1
      %p119 = scmp.eq.s32.totalorder %s18, 1
      %p120 = scmp.ne.s32.totalorder %s115, %s117
      %p121 = scmp.eq.s32.totalorder %s18, 0
      %p122 = por %p120, %p121
      %p123 = scmp.ne.s32.totalorder %s115, %s117
      %p124 = scmp.eq.s32.totalorder %s23, 1
      %p125 = por %p123, %p124
      %p126 = scmp.ne.s32.totalorder %s117, %s118
      %p127 = scmp.eq.s32.totalorder %s23, 0
      %p128 = por %p126, %p127
      %p129 = scmp.ne.s32.totalorder %s117, %s118
      %p130 = scmp.eq.s32.totalorder %s24, 1
      %p131 = por %p129, %p130
      %p133 = scmp.ne.s32.totalorder %s118, %s132
      %p134 = scmp.eq.s32.totalorder %s24, 0
      %p135 = por %p133, %p134
      %s137 = sadd.s32 %s136, 1
      %p140 = scmp.eq.s32.totalorder %s18, 1
      %p141 = scmp.ne.s32.totalorder %s136, %s138
      %p142 = scmp.eq.s32.totalorder %s18, 0
      %p143 = por %p141, %p142
      %p144 = scmp.ne.s32.totalorder %s136, %s138
      %p145 = scmp.eq.s32.totalorder %s23, 1
      %p146 = por %p144, %p145
      %p147 = scmp.ne.s32.totalorder %s138, %s139
      %p148 = scmp.eq.s32.totalorder %s23, 0
      %p149 = por %p147, %p148
      %p150 = scmp.ne.s32.totalorder %s138, %s139
      %p151 = scmp.eq.s32.totalorder %s24, 1
      %p152 = por %p150, %p151
      %p154 = scmp.ne.s32.totalorder %s139, %s153
      %p155 = scmp.eq.s32.totalorder %s24, 0
      %p156 = por %p154, %p155
      %s158 = sadd.s32 %s157, 1
      %p161 = scmp.eq.s32.totalorder %s18, 1
      %p162 = scmp.ne.s32.totalorder %s157, %s159
      %p163 = scmp.eq.s32.totalorder %s18, 0
      %p164 = por %p162, %p163
      %p165 = scmp.ne.s32.totalorder %s157, %s159
      %p166 = scmp.eq.s32.totalorder %s23, 1
      %p167 = por %p165, %p166
      %p168 = scmp.ne.s32.totalorder %s159, %s160
      %p169 = scmp.eq.s32.totalorder %s23, 0
      %p170 = por %p168, %p169
      %p171 = scmp.ne.s32.totalorder %s159, %s160
      %p172 = scmp.eq.s32.totalorder %s24, 1
      %p173 = por %p171, %p172
      %p175 = scmp.ne.s32.totalorder %s160, %s174
      %p176 = scmp.eq.s32.totalorder %s24, 0
      %p177 = por %p175, %p176
      %s179 = sadd.s32 %s178, 1
      %p182 = scmp.eq.s32.totalorder %s18, 1
      %p183 = scmp.ne.s32.totalorder %s178, %s180
      %p184 = scmp.eq.s32.totalorder %s18, 0
      %p185 = por %p183, %p184
      %p186 = scmp.ne.s32.totalorder %s178, %s180
      %p187 = scmp.eq.s32.totalorder %s23, 1
      %p188 = por %p186, %p187
      %p189 = scmp.ne.s32.totalorder %s180, %s181
      %p190 = scmp.eq.s32.totalorder %s23, 0
      %p191 = por %p189, %p190
      %p192 = scmp.ne.s32.totalorder %s180, %s181
      %p193 = scmp.eq.s32.totalorder %s24, 1
      %p194 = por %p192, %p193
      %p196 = scmp.ne.s32.totalorder %s181, %s195
      %p197 = scmp.eq.s32.totalorder %s24, 0
      %p198 = por %p196, %p197
      %s200 = sadd.s32 %s199, 1
      %p203 = scmp.eq.s32.totalorder %s18, 1
      %p204 = scmp.ne.s32.totalorder %s199, %s201
      %p205 = scmp.eq.s32.totalorder %s18, 0
      %p206 = por %p204, %p205
      %p207 = scmp.ne.s32.totalorder %s199, %s201
      %p208 = scmp.eq.s32.totalorder %s23, 1
      %p209 = por %p207, %p208
      %p210 = scmp.ne.s32.totalorder %s201, %s202
      %p211 = scmp.eq.s32.totalorder %s23, 0
      %p212 = por %p210, %p211
      %p213 = scmp.ne.s32.totalorder %s201, %s202
      %p214 = scmp.eq.s32.totalorder %s24, 1
      %p215 = por %p213, %p214
      %p217 = scmp.ne.s32.totalorder %s202, %s216
      %p218 = scmp.eq.s32.totalorder %s24, 0
      %p219 = por %p217, %p218
      %s220 = ssub.s32 %s18, %s25
      %p221 = scmp.eq.s32.totalorder %s220, 0
      %s223 = sadd.s32 %s222, 1
      %s224 = scalar_select %p221, %s222, %s223
      %p227 = pneg %p221
      %p228 = scmp.eq.s32.totalorder %s18, 1
      %p229 = por %p227, %p228
      %p230 = scmp.ne.s32.totalorder %s222, %s225
      %p231 = scmp.eq.s32.totalorder %s18, 0
      %p232 = por %p230, %p231
      %p233 = scmp.ne.s32.totalorder %s222, %s225
      %p234 = scmp.eq.s32.totalorder %s23, 1
      %p235 = por %p233, %p234
      %p236 = scmp.ne.s32.totalorder %s225, %s226
      %p237 = scmp.eq.s32.totalorder %s23, 0
      %p238 = por %p236, %p237
      %p239 = scmp.ne.s32.totalorder %s225, %s226
      %p240 = scmp.eq.s32.totalorder %s24, 1
      %p241 = por %p239, %p240
      %p243 = scmp.ne.s32.totalorder %s226, %s242
      %p244 = scmp.eq.s32.totalorder %s24, 0
      %p245 = por %p243, %p244
      %p246 = scmp.le.s32.totalorder 1, %s18
      %p247 = scmp.lt.s32.totalorder %s18, 3
      %p248 = pnand %p246, %p247
      %p249 = pneg %p248
      // Predicated region
      $region9: #{small_cnn_forward.1} parent=5 // pred_check
        _
      $region10: #{small_cnn_forward.1} parent=5 // pred_check_branch
        %251 = sbr.rel (%p248) target = $region12
      $region11: #{small_cnn_forward.1} parent=5 // pred_region
        %s252 = ssub.s32 %s18, 1
        // Predicated region
        $region13: #{small_cnn_forward.1} parent=11 // pred_check
          %p253 = pneg %p65
        $region14: #{small_cnn_forward.1} parent=11 // pred_check_branch
          %255 = sbr.rel (%p253) target = $region16
        $region15: #{small_cnn_forward.1} parent=11 // pred_region
          _
        $region16: #{small_cnn_forward.1} parent=11 // pred_fallthru
          _
        // Predicated region
        $region17: #{small_cnn_forward.1} parent=11 // pred_check
          %p256 = pneg %p86
        $region18: #{small_cnn_forward.1} parent=11 // pred_check_branch
          %258 = sbr.rel (%p256) target = $region20
        $region19: #{small_cnn_forward.1} parent=11 // pred_region
          _
        $region20: #{small_cnn_forward.1} parent=11 // pred_fallthru
          _
        // Predicated region
        $region21: #{small_cnn_forward.1} parent=11 // pred_check
          %p259 = pneg %p107
        $region22: #{small_cnn_forward.1} parent=11 // pred_check_branch
          %261 = sbr.rel (%p259) target = $region24
        $region23: #{small_cnn_forward.1} parent=11 // pred_region
          _
        $region24: #{small_cnn_forward.1} parent=11 // pred_fallthru
          _
        // Predicated region
        $region25: #{small_cnn_forward.1} parent=11 // pred_check
          %p262 = pneg %p128
        $region26: #{small_cnn_forward.1} parent=11 // pred_check_branch
          %264 = sbr.rel (%p262) target = $region28
        $region27: #{small_cnn_forward.1} parent=11 // pred_region
          _
        $region28: #{small_cnn_forward.1} parent=11 // pred_fallthru
          _
        // Predicated region
        $region29: #{small_cnn_forward.1} parent=11 // pred_check
          %p265 = pneg %p149
        $region30: #{small_cnn_forward.1} parent=11 // pred_check_branch
          %267 = sbr.rel (%p265) target = $region32
        $region31: #{small_cnn_forward.1} parent=11 // pred_region
          _
        $region32: #{small_cnn_forward.1} parent=11 // pred_fallthru
          _
        // Predicated region
        $region33: #{small_cnn_forward.1} parent=11 // pred_check
          %p268 = pneg %p170
        $region34: #{small_cnn_forward.1} parent=11 // pred_check_branch
          %270 = sbr.rel (%p268) target = $region36
        $region35: #{small_cnn_forward.1} parent=11 // pred_region
          _
        $region36: #{small_cnn_forward.1} parent=11 // pred_fallthru
          _
        // Predicated region
        $region37: #{small_cnn_forward.1} parent=11 // pred_check
          %p271 = pneg %p191
        $region38: #{small_cnn_forward.1} parent=11 // pred_check_branch
          %273 = sbr.rel (%p271) target = $region40
        $region39: #{small_cnn_forward.1} parent=11 // pred_region
          _
        $region40: #{small_cnn_forward.1} parent=11 // pred_fallthru
          _
        // Predicated region
        $region41: #{small_cnn_forward.1} parent=11 // pred_check
          %p274 = pneg %p212
        $region42: #{small_cnn_forward.1} parent=11 // pred_check_branch
          %276 = sbr.rel (%p274) target = $region44
        $region43: #{small_cnn_forward.1} parent=11 // pred_region
          _
        $region44: #{small_cnn_forward.1} parent=11 // pred_fallthru
          _
      $region12: #{small_cnn_forward.1} parent=5 // pred_fallthru
        _
      %p277 = scmp.lt.s32.totalorder %s18, 2
      // Predicated region
      $region45: #{small_cnn_forward.1} parent=5 // pred_check
        %p278 = pneg %p277
      $region46: #{small_cnn_forward.1} parent=5 // pred_check_branch
        %280 = sbr.rel (%p278) target = $region48
      $region47: #{small_cnn_forward.1} parent=5 // pred_region
        // Predicated region
        $region49: #{small_cnn_forward.1} parent=47 // pred_check
          %p281 = pneg %p38
        $region50: #{small_cnn_forward.1} parent=47 // pred_check_branch
          %283 = sbr.rel (%p281) target = $region52
        $region51: #{small_cnn_forward.1} parent=47 // pred_region
          %p284 = scmp.lt.s32.totalorder %s18, 1
          %s285 = scalar_select %p284, %s18, 1
          %s286 = smul.addr %s285, 136
          %s287 = smul.addr %s286, 4
          %s288 = scalar_lea.vmem %s0, %s287
        $region52: #{small_cnn_forward.1} parent=47 // pred_fallthru
          _
      $region48: #{small_cnn_forward.1} parent=5 // pred_fallthru
        _
      %p289 = scmp.le.s32.totalorder 1, %s18
      %p290 = scmp.lt.s32.totalorder %s18, 3
      %p291 = pnand %p289, %p290
      %p292 = pneg %p291
      // Predicated region
      $region53: #{small_cnn_forward.1} parent=5 // pred_check
        _
      $region54: #{small_cnn_forward.1} parent=5 // pred_check_branch
        %294 = sbr.rel (%p291) target = $region56
      $region55: #{small_cnn_forward.1} parent=5 // pred_region
        %s295 = ssub.s32 %s18, 1
        %p296 = scmp.lt.s32.totalorder %s23, 1
        %s297 = scalar_select %p296, %s23, 1
        %s298 = smul.addr %s297, 136
        %s299 = smul.addr %s298, 4
        %s300 = scalar_lea.vmem %s0, %s299
        %p301 = pneg %p44
        %p302 = pneg %p41
        %p303 = pneg %p65
        %p304 = pneg %p62
        %p305 = pneg %p86
        %p306 = pneg %p83
        %p307 = pneg %p107
        %p308 = pneg %p104
        %p309 = pneg %p128
        %p310 = pneg %p125
        %p311 = pneg %p149
        %p312 = pneg %p146
        %p313 = pneg %p170
        %p314 = pneg %p167
        %p315 = pneg %p191
        %p316 = pneg %p188
        %p317 = pneg %p212
        %p318 = pneg %p209
        %p319 = pneg %p238
        %p320 = pneg %p235
        %s321 = sand.u32 %s225, 1
        %s322 = scalar_lea.sflag [#allocation8], %s321
        %s323 = sand.u32 %s225, 1
        %s324 = scalar_lea.vmem [#allocation7], %s323
        %p325 = scmp.lt.s32.totalorder %s23, 1
        %s326 = scalar_select %p325, %s23, 1
        %s327 = smul.addr %s326, 136
        %s328 = smul.addr %s327, 4
        %s329 = scalar_lea.vmem %s0, %s328
        %331 = vst [vmem:[#allocation3] sm:$0xff] 0.0
        %332 = vst [vmem:[#allocation3 + $0x8] sm:$0xff] 0.0
        %333 = vst [vmem:[#allocation3 + $0x10] sm:$0xff] 0.0
        %334 = vst [vmem:[#allocation3 + $0x18] sm:$0xff] 0.0
        %335 = vst [vmem:[#allocation3 + $0x20] sm:$0xff] 0.0
        %336 = vst [vmem:[#allocation3 + $0x28] sm:$0xff] 0.0
        %337 = vst [vmem:[#allocation3 + $0x30] sm:$0xff] 0.0
        %338 = vst [vmem:[#allocation3 + $0x38] sm:$0xff] 0.0
        %339 = vst [vmem:[#allocation3 + $0x40] sm:$0xff] 0.0
        %340 = vst [vmem:[#allocation3 + $0x48] sm:$0xff] 0.0
        %341 = vst [vmem:[#allocation3 + $0x50] sm:$0xff] 0.0
        %342 = vst [vmem:[#allocation3 + $0x58] sm:$0xff] 0.0
        %343 = vst [vmem:[#allocation3 + $0x60] sm:$0xff] 0.0
        %344 = vst [vmem:[#allocation3 + $0x68] sm:$0xff] 0.0
        %345 = vst [vmem:[#allocation3 + $0x70] sm:$0xff] 0.0
        %346 = vst [vmem:[#allocation3 + $0x78] sm:$0xff] 0.0
        %347 = vst [vmem:[#allocation3 + $0x80] sm:$0xff] 0.0
        %348 = vst [vmem:[#allocation3 + $0x88] sm:$0xff] 0.0
        %349 = vst [vmem:[#allocation3 + $0x90] sm:$0xff] 0.0
        %350 = vst [vmem:[#allocation3 + $0x98] sm:$0xff] 0.0
        %351 = vst [vmem:[#allocation3 + $0xa0] sm:$0xff] 0.0
        %352 = vst [vmem:[#allocation3 + $0xa8] sm:$0xff] 0.0
        %353 = vst [vmem:[#allocation3 + $0xb0] sm:$0xff] 0.0
        %354 = vst [vmem:[#allocation3 + $0xb8] sm:$0xff] 0.0
        %355 = vst [vmem:[#allocation3 + $0xc0] sm:$0xff] 0.0
        %356 = vst [vmem:[#allocation3 + $0xc8] sm:$0xff] 0.0
        %357 = vst [vmem:[#allocation3 + $0xd0] sm:$0xff] 0.0
        %358 = vst [vmem:[#allocation3 + $0xd8] sm:$0xff] 0.0
        %359 = vst [vmem:[#allocation3 + $0xe0] sm:$0xff] 0.0
        %360 = vst [vmem:[#allocation3 + $0xe8] sm:$0xff] 0.0
        %361 = vst [vmem:[#allocation3 + $0xf0] sm:$0xff] 0.0
        %362 = vst [vmem:[#allocation3 + $0xf8] sm:$0xff] 0.0
        %363 = vst [vmem:[#allocation3 + $0x100] sm:$0xff] 0.0
        %364 = vst [vmem:[#allocation3 + $0x108] sm:$0xff] 0.0
        %365 = vst [vmem:[#allocation3 + $0x110] sm:$0xff] 0.0
        %366 = vst [vmem:[#allocation3 + $0x118] sm:$0xff] 0.0
        %367 = vst [vmem:[#allocation3 + $0x120] sm:$0xff] 0.0
        %368 = vst [vmem:[#allocation3 + $0x128] sm:$0xff] 0.0
        %369 = vst [vmem:[#allocation3 + $0x130] sm:$0xff] 0.0
        %370 = vst [vmem:[#allocation3 + $0x138] sm:$0xff] 0.0
        %371 = vst [vmem:[#allocation3 + $0x140] sm:$0xff] 0.0
        %372 = vst [vmem:[#allocation5] sm:$0xff] 0.0
        %373 = vst [vmem:[#allocation5 + $0x8] sm:$0xff] 0.0
        %374 = vst [vmem:[#allocation5 + $0x10] sm:$0xff] 0.0
        %375 = vst [vmem:[#allocation5 + $0x18] sm:$0xff] 0.0
        %376 = vst [vmem:[#allocation5 + $0x20] sm:$0xff] 0.0
        %377 = vst [vmem:[#allocation5 + $0x28] sm:$0xff] 0.0
        %378 = vst [vmem:[#allocation5 + $0x30] sm:$0xff] 0.0
        %379 = vst [vmem:[#allocation5 + $0x38] sm:$0xff] 0.0
        %380 = vst [vmem:[#allocation5 + $0x40] sm:$0xff] 0.0
        %381 = vst [vmem:[#allocation5 + $0x48] sm:$0xff] 0.0
        %382 = vst [vmem:[#allocation5 + $0x50] sm:$0xff] 0.0
        %383 = vst [vmem:[#allocation5 + $0x58] sm:$0xff] 0.0
        %384 = vst [vmem:[#allocation5 + $0x60] sm:$0xff] 0.0
        %v385 = vld [vmem:[%s329] sm:$0xf]
        %v386 = vld [vmem:[%s329 + $0x4] sm:$0xf]
        %v387 = vld [vmem:[%s329 + $0x8] sm:$0xf]
        %v388 = vld [vmem:[%s329 + $0xc] sm:$0xf]
        %v389 = vld [vmem:[%s329 + $0x10] sm:$0xf]
        %v390 = vld [vmem:[%s329 + $0x14] sm:$0xf]
        %v391 = vld [vmem:[%s329 + $0x18] sm:$0xf]
        %v392 = vld [vmem:[%s329 + $0x1c] sm:$0xf]
        %v393 = vld [vmem:[%s329 + $0x20] sm:$0xf]
        %v394 = vld [vmem:[%s329 + $0x24] sm:$0xf]
        %v395 = vld [vmem:[%s329 + $0x28] sm:$0xf]
        %v396 = vld [vmem:[%s329 + $0x2c] sm:$0xf]
        %v397 = vld [vmem:[%s329 + $0x30] sm:$0xf]
        %v398 = vld [vmem:[%s329 + $0x34] sm:$0xf]
        %v399 = vld [vmem:[%s329 + $0x38] sm:$0xf]
        %v400 = vld [vmem:[%s329 + $0x3c] sm:$0xf]
        %v401 = vld [vmem:[%s329 + $0x40] sm:$0xf]
        %v402 = vld [vmem:[%s329 + $0x44] sm:$0xf]
        %v403 = vld [vmem:[%s329 + $0x48] sm:$0xf]
        %v404 = vld [vmem:[%s329 + $0x4c] sm:$0xf]
        %v405 = vld [vmem:[%s329 + $0x50] sm:$0xf]
        %v406 = vld [vmem:[%s329 + $0x54] sm:$0xf]
        %v407 = vld [vmem:[%s329 + $0x58] sm:$0xf]
        %v408 = vld [vmem:[%s329 + $0x5c] sm:$0xf]
        %v409 = vld [vmem:[%s329 + $0x60] sm:$0xf]
        %v410 = vld [vmem:[%s329 + $0x64] sm:$0xf]
        %v411 = vld [vmem:[%s329 + $0x68] sm:$0xf]
        %v412 = vld [vmem:[%s329 + $0x6c] sm:$0xf]
        %v413 = vld [vmem:[%s329 + $0x70] sm:$0xf]
        %v414 = vld [vmem:[%s329 + $0x74] sm:$0xf]
        %v415 = vld [vmem:[%s329 + $0x78] sm:$0xf]
        %v416 = vld [vmem:[%s329 + $0x7c] sm:$0xf]
        %v417 = vld [vmem:[%s329 + $0x80] sm:$0xf]
        %v418 = vld [vmem:[%s329 + $0x84] sm:$0xf]
        %v419 = vld [vmem:[%s1] sm:$0xf]
        %v420 = vld [vmem:[%s1 + $0x4] sm:$0xf]
        %v421 = vld [vmem:[%s1 + $0x8] sm:$0xf]
        %v422 = vld [vmem:[%s1 + $0xc] sm:$0x3]
        %v423 = vld [vmem:[%s2] sm:$0x1]
        %v425 = vlaneseq
        %v426 = vshrl.u32 %v425, 7
        %v427 = vsub.s32 0, %v426
        %v428 = vrot.slane %v423, %v427
        %v464 = vunpack.c.l.b16 %v385
        %v465 = vunpack.c.l.b16 %v386
        %v466 = vunpack.c.l.b16 %v387
        %v467 = vunpack.c.l.b16 %v388
        %v468 = vunpack.c.l.b16 %v389
        %v469 = vunpack.c.l.b16 %v390
        %v470 = vunpack.c.l.b16 %v391
        %v471 = vunpack.c.l.b16 %v392
        %v472 = vunpack.c.l.b16 %v393
        %v473 = vunpack.c.l.b16 %v394
        %v474 = vunpack.c.l.b16 %v395
        %v475 = vunpack.c.l.b16 %v396
        %v476 = vunpack.c.l.b16 %v397
        %v477 = vunpack.c.l.b16 %v398
        %v478 = vunpack.c.l.b16 %v399
        %v479 = vunpack.c.l.b16 %v400
        %v480 = vunpack.c.l.b16 %v401
        %v481 = vunpack.c.l.b16 %v402
        %v482 = vunpack.c.l.b16 %v403
        %v483 = vunpack.c.l.b16 %v404
        %v484 = vunpack.c.l.b16 %v405
        %v485 = vunpack.c.l.b16 %v406
        %v486 = vunpack.c.l.b16 %v407
        %v487 = vunpack.c.l.b16 %v408
        %v488 = vunpack.c.l.b16 %v409
        %v489 = vunpack.c.l.b16 %v410
        %v490 = vunpack.c.l.b16 %v411
        %v491 = vunpack.c.l.b16 %v412
        %v492 = vunpack.c.l.b16 %v413
        %v493 = vunpack.c.l.b16 %v414
        %v494 = vunpack.c.l.b16 %v415
        %v495 = vunpack.c.l.b16 %v416
        %v496 = vunpack.c.l.b16 %v417
        %v497 = vunpack.c.l.b16 %v418
        %v498 = vpack.c.b16 %v465, %v464
        %v499 = vpack.c.b16 %v467, %v466
        %v500 = vpack.c.b16 %v469, %v468
        %v501 = vpack.c.b16 %v471, %v470
        %v502 = vpack.c.b16 %v473, %v472
        %v503 = vpack.c.b16 %v475, %v474
        %v504 = vpack.c.b16 %v477, %v476
        %v505 = vpack.c.b16 %v479, %v478
        %v506 = vpack.c.b16 %v481, %v480
        %v507 = vpack.c.b16 %v483, %v482
        %v508 = vpack.c.b16 %v485, %v484
        %v509 = vpack.c.b16 %v487, %v486
        %v510 = vpack.c.b16 %v489, %v488
        %v511 = vpack.c.b16 %v491, %v490
        %v512 = vpack.c.b16 %v493, %v492
        %v513 = vpack.c.b16 %v495, %v494
        %v514 = vpack.c.b16 %v497, %v496
        %v519 = vunpack.c.l.b16 %v419
        %v520 = vunpack.c.l.b16 %v420
        %v521 = vunpack.c.l.b16 %v421
        %v522 = vunpack.c.l.b16 %v422
        %v523 = vpack.c.b16 %v520, %v519
        %v524 = vpack.c.b16 %v522, %v521
        %vm526 = vcmask 220160
        %v528 = vsel %vm526, %v498, 0
        %v531 = vsel %vm526, %v499, 0
        %v534 = vsel %vm526, %v500, 0
        %v537 = vsel %vm526, %v501, 0
        %v540 = vsel %vm526, %v502, 0
        %v543 = vsel %vm526, %v503, 0
        %v546 = vsel %vm526, %v504, 0
        %v549 = vsel %vm526, %v505, 0
        %v552 = vsel %vm526, %v506, 0
        %v555 = vsel %vm526, %v507, 0
        %v558 = vsel %vm526, %v508, 0
        %v561 = vsel %vm526, %v509, 0
        %v564 = vsel %vm526, %v510, 0
        %v567 = vsel %vm526, %v511, 0
        %v570 = vsel %vm526, %v512, 0
        %v573 = vsel %vm526, %v513, 0
        %v576 = vsel %vm526, %v514, 0
        %vm578 = vcmask 1044480
        %vm579 = vcmask 1045504
        %v580 = vsel %vm578, 4294967295, 65535
        %v581 = vsel %vm579, %v580, 0
        %v583 = vand.u32 %v524, %v581
        %585 = vmatprep.subr.bf16.mxu0 0
        %586 = vmatpush1.bf16.msra.mxu0 0
        %587 = vmatprep.subr.bf16.mxu0 0
        %588 = vmatpush1.bf16.msra.mxu0 0
        %589 = vmatprep.subr.bf16.mxu0 0
        %590 = vmatpush1.bf16.msra.mxu0 0
        %591 = vmatprep.subr.bf16.mxu0 0
        %592 = vmatpush1.bf16.msra.mxu0 0
        %593 = vmatprep.subr.bf16.mxu0 0
        %594 = vmatpush1.bf16.msra.mxu0 0
        %595 = vmatprep.subr.bf16.mxu0 0
        %596 = vmatpush1.bf16.msra.mxu0 0
        %597 = vmatprep.subr.bf16.mxu0 0
        %598 = vmatpush1.bf16.msra.mxu0 %v583
        %599 = vmatprep.subr.bf16.mxu0 0
        %600 = vmatpush1.bf16.msra.mxu0 %v523
        %601 = vmatprep.subr.bf16.mxu0 0
        %602 = vmatpush2.bf16.msra.mxu0 0
        %603 = vmatprep.subr.bf16.mxu0 0
        %604 = vmatpush2.bf16.msra.mxu0 0
        %605 = vmatprep.subr.bf16.mxu0 0
        %606 = vmatpush2.bf16.msra.mxu0 0
        %607 = vmatprep.subr.bf16.mxu0 0
        %608 = vmatpush2.bf16.msra.mxu0 0
        %609 = vmatprep.subr.bf16.mxu0 0
        %610 = vmatpush2.bf16.msra.mxu0 0
        %611 = vmatprep.subr.bf16.mxu0 0
        %612 = vmatpush2.bf16.msra.mxu0 0
        %613 = vmatprep.subr.bf16.mxu0 0
        %614 = vmatpush2.bf16.msra.mxu0 0
        %615 = vmatprep.subr.bf16.mxu0 0
        %616 = vmatpush2.bf16.msra.mxu0 0
        %617 = vmatprep.mubr.bf16.mxu0 0
        %618 = vmatmul.mubr.bf16.gmra.mxu0 %v528
        %v619 = vpop.f32.mrf.mxu0
        %v620 = vadd.f32 %v428, %v619
        %v621 = vpop.f32.mrf.mxu0
        %v622 = vpop.f32.mrf.mxu0
        %v623 = vadd.f32 %v428, %v622
        %v624 = vpop.f32.mrf.mxu0
        %625 = vmatprep.mubr.bf16.mxu0 0
        %626 = vmatmul.mubr.bf16.gmra.mxu0 %v531
        %v627 = vpop.f32.mrf.mxu0
        %v628 = vadd.f32 %v428, %v627
        %v629 = vpop.f32.mrf.mxu0
        %v630 = vpop.f32.mrf.mxu0
        %v631 = vadd.f32 %v428, %v630
        %v632 = vpop.f32.mrf.mxu0
        %633 = vmatprep.mubr.bf16.mxu0 0
        %634 = vmatmul.mubr.bf16.gmra.mxu0 %v534
        %v635 = vpop.f32.mrf.mxu0
        %v636 = vadd.f32 %v428, %v635
        %v637 = vpop.f32.mrf.mxu0
        %v638 = vpop.f32.mrf.mxu0
        %v639 = vadd.f32 %v428, %v638
        %v640 = vpop.f32.mrf.mxu0
        %641 = vmatprep.mubr.bf16.mxu0 0
        %642 = vmatmul.mubr.bf16.gmra.mxu0 %v537
        %v643 = vpop.f32.mrf.mxu0
        %v644 = vadd.f32 %v428, %v643
        %v645 = vpop.f32.mrf.mxu0
        %v646 = vpop.f32.mrf.mxu0
        %v647 = vadd.f32 %v428, %v646
        %v648 = vpop.f32.mrf.mxu0
        %649 = vmatprep.mubr.bf16.mxu0 0
        %650 = vmatmul.mubr.bf16.gmra.mxu0 %v540
        %v651 = vpop.f32.mrf.mxu0
        %v652 = vadd.f32 %v428, %v651
        %v653 = vpop.f32.mrf.mxu0
        %v654 = vpop.f32.mrf.mxu0
        %v655 = vadd.f32 %v428, %v654
        %v656 = vpop.f32.mrf.mxu0
        %657 = vmatprep.mubr.bf16.mxu0 0
        %658 = vmatmul.mubr.bf16.gmra.mxu0 %v543
        %v659 = vpop.f32.mrf.mxu0
        %v660 = vadd.f32 %v428, %v659
        %v661 = vpop.f32.mrf.mxu0
        %v662 = vpop.f32.mrf.mxu0
        %v663 = vadd.f32 %v428, %v662
        %v664 = vpop.f32.mrf.mxu0
        %665 = vmatprep.mubr.bf16.mxu0 0
        %666 = vmatmul.mubr.bf16.gmra.mxu0 %v546
        %v667 = vpop.f32.mrf.mxu0
        %v668 = vadd.f32 %v428, %v667
        %v669 = vpop.f32.mrf.mxu0
        %v670 = vpop.f32.mrf.mxu0
        %v671 = vadd.f32 %v428, %v670
        %v672 = vpop.f32.mrf.mxu0
        %673 = vmatprep.mubr.bf16.mxu0 0
        %674 = vmatmul.mubr.bf16.gmra.mxu0 %v549
        %v675 = vpop.f32.mrf.mxu0
        %v676 = vadd.f32 %v428, %v675
        %v677 = vpop.f32.mrf.mxu0
        %v678 = vpop.f32.mrf.mxu0
        %v679 = vadd.f32 %v428, %v678
        %v680 = vpop.f32.mrf.mxu0
        %681 = vmatprep.mubr.bf16.mxu0 0
        %682 = vmatmul.mubr.bf16.gmra.mxu0 %v552
        %v683 = vpop.f32.mrf.mxu0
        %v684 = vadd.f32 %v428, %v683
        %v685 = vpop.f32.mrf.mxu0
        %v686 = vpop.f32.mrf.mxu0
        %v687 = vadd.f32 %v428, %v686
        %v688 = vpop.f32.mrf.mxu0
        %689 = vmatprep.mubr.bf16.mxu0 0
        %690 = vmatmul.mubr.bf16.gmra.mxu0 %v555
        %v691 = vpop.f32.mrf.mxu0
        %v692 = vadd.f32 %v428, %v691
        %v693 = vpop.f32.mrf.mxu0
        %v694 = vpop.f32.mrf.mxu0
        %v695 = vadd.f32 %v428, %v694
        %v696 = vpop.f32.mrf.mxu0
        %697 = vmatprep.mubr.bf16.mxu0 0
        %698 = vmatmul.mubr.bf16.gmra.mxu0 %v558
        %v699 = vpop.f32.mrf.mxu0
        %v700 = vadd.f32 %v428, %v699
        %v701 = vpop.f32.mrf.mxu0
        %v702 = vpop.f32.mrf.mxu0
        %v703 = vadd.f32 %v428, %v702
        %v704 = vpop.f32.mrf.mxu0
        %705 = vmatprep.mubr.bf16.mxu0 0
        %706 = vmatmul.mubr.bf16.gmra.mxu0 %v561
        %v707 = vpop.f32.mrf.mxu0
        %v708 = vadd.f32 %v428, %v707
        %v709 = vpop.f32.mrf.mxu0
        %v710 = vpop.f32.mrf.mxu0
        %v711 = vadd.f32 %v428, %v710
        %v712 = vpop.f32.mrf.mxu0
        %713 = vmatprep.mubr.bf16.mxu0 0
        %714 = vmatmul.mubr.bf16.gmra.mxu0 %v564
        %v715 = vpop.f32.mrf.mxu0
        %v716 = vadd.f32 %v428, %v715
        %v717 = vpop.f32.mrf.mxu0
        %v718 = vpop.f32.mrf.mxu0
        %v719 = vadd.f32 %v428, %v718
        %v720 = vpop.f32.mrf.mxu0
        %721 = vmatprep.mubr.bf16.mxu0 0
        %722 = vmatmul.mubr.bf16.gmra.mxu0 %v567
        %v723 = vpop.f32.mrf.mxu0
        %v724 = vadd.f32 %v428, %v723
        %v725 = vpop.f32.mrf.mxu0
        %v726 = vpop.f32.mrf.mxu0
        %v727 = vadd.f32 %v428, %v726
        %v728 = vpop.f32.mrf.mxu0
        %729 = vmatprep.mubr.bf16.mxu0 0
        %730 = vmatmul.mubr.bf16.gmra.mxu0 %v570
        %v731 = vpop.f32.mrf.mxu0
        %v732 = vadd.f32 %v428, %v731
        %v733 = vpop.f32.mrf.mxu0
        %v734 = vpop.f32.mrf.mxu0
        %v735 = vadd.f32 %v428, %v734
        %v736 = vpop.f32.mrf.mxu0
        %737 = vmatprep.mubr.bf16.mxu0 0
        %738 = vmatmul.mubr.bf16.gmra.mxu0 %v573
        %v739 = vpop.f32.mrf.mxu0
        %v740 = vadd.f32 %v428, %v739
        %v741 = vpop.f32.mrf.mxu0
        %v742 = vpop.f32.mrf.mxu0
        %v743 = vadd.f32 %v428, %v742
        %v744 = vpop.f32.mrf.mxu0
        %745 = vmatprep.mubr.bf16.mxu0 0
        %746 = vmatmul.mubr.bf16.gmra.mxu0 %v576
        %v747 = vpop.f32.mrf.mxu0
        %v748 = vadd.f32 %v428, %v747
        %v749 = vpop.f32.mrf.mxu0
        %v750 = vpop.f32.mrf.mxu0
        %v751 = vadd.f32 %v428, %v750
        %v752 = vpop.f32.mrf.mxu0
        %753 = vdwg.mxu0
        %v754 = vmax.f32 %v620, 0.0
        %v755 = vmax.f32 %v623, 0.0
        %v756 = vmax.f32 %v628, 0.0
        %v757 = vmax.f32 %v631, 0.0
        %v758 = vmax.f32 %v636, 0.0
        %v759 = vmax.f32 %v639, 0.0
        %v760 = vmax.f32 %v644, 0.0
        %v761 = vmax.f32 %v647, 0.0
        %v762 = vmax.f32 %v652, 0.0
        %v763 = vmax.f32 %v655, 0.0
        %v764 = vmax.f32 %v660, 0.0
        %v765 = vmax.f32 %v663, 0.0
        %v766 = vmax.f32 %v668, 0.0
        %v767 = vmax.f32 %v671, 0.0
        %v768 = vmax.f32 %v676, 0.0
        %v769 = vmax.f32 %v679, 0.0
        %v770 = vmax.f32 %v684, 0.0
        %v771 = vmax.f32 %v687, 0.0
        %v772 = vmax.f32 %v692, 0.0
        %v773 = vmax.f32 %v695, 0.0
        %v774 = vmax.f32 %v700, 0.0
        %v775 = vmax.f32 %v703, 0.0
        %v776 = vmax.f32 %v708, 0.0
        %v777 = vmax.f32 %v711, 0.0
        %v778 = vmax.f32 %v716, 0.0
        %v779 = vmax.f32 %v719, 0.0
        %v780 = vmax.f32 %v724, 0.0
        %v781 = vmax.f32 %v727, 0.0
        %v782 = vmax.f32 %v732, 0.0
        %v783 = vmax.f32 %v735, 0.0
        %v784 = vmax.f32 %v740, 0.0
        %v785 = vmax.f32 %v743, 0.0
        %v786 = vmax.f32 %v748, 0.0
        %v787 = vmax.f32 %v751, 0.0
        %788 = vst [vmem:[#allocation2] sm:$0xff] %v754
        %789 = vst [vmem:[#allocation2 + $0x8] sm:$0xff] %v755
        %790 = vst [vmem:[#allocation2 + $0x10] sm:$0xff] %v756
        %791 = vst [vmem:[#allocation2 + $0x18] sm:$0xff] %v757
        %792 = vst [vmem:[#allocation2 + $0x20] sm:$0xff] %v758
        %793 = vst [vmem:[#allocation2 + $0x28] sm:$0xff] %v759
        %794 = vst [vmem:[#allocation2 + $0x30] sm:$0xff] %v760
        %795 = vst [vmem:[#allocation2 + $0x38] sm:$0xff] %v761
        %796 = vst [vmem:[#allocation2 + $0x40] sm:$0xff] %v762
        %797 = vst [vmem:[#allocation2 + $0x48] sm:$0xff] %v763
        %798 = vst [vmem:[#allocation2 + $0x50] sm:$0xff] %v764
        %799 = vst [vmem:[#allocation2 + $0x58] sm:$0xff] %v765
        %800 = vst [vmem:[#allocation2 + $0x60] sm:$0xff] %v766
        %801 = vst [vmem:[#allocation2 + $0x68] sm:$0xff] %v767
        %802 = vst [vmem:[#allocation2 + $0x70] sm:$0xff] %v768
        %803 = vst [vmem:[#allocation2 + $0x78] sm:$0xff] %v769
        %804 = vst [vmem:[#allocation2 + $0x80] sm:$0xff] %v770
        %805 = vst [vmem:[#allocation2 + $0x88] sm:$0xff] %v771
        %806 = vst [vmem:[#allocation2 + $0x90] sm:$0xff] %v772
        %807 = vst [vmem:[#allocation2 + $0x98] sm:$0xff] %v773
        %808 = vst [vmem:[#allocation2 + $0xa0] sm:$0xff] %v774
        %809 = vst [vmem:[#allocation2 + $0xa8] sm:$0xff] %v775
        %810 = vst [vmem:[#allocation2 + $0xb0] sm:$0xff] %v776
        %811 = vst [vmem:[#allocation2 + $0xb8] sm:$0xff] %v777
        %812 = vst [vmem:[#allocation2 + $0xc0] sm:$0xff] %v778
        %813 = vst [vmem:[#allocation2 + $0xc8] sm:$0xff] %v779
        %814 = vst [vmem:[#allocation2 + $0xd0] sm:$0xff] %v780
        %815 = vst [vmem:[#allocation2 + $0xd8] sm:$0xff] %v781
        %816 = vst [vmem:[#allocation2 + $0xe0] sm:$0xff] %v782
        %817 = vst [vmem:[#allocation2 + $0xe8] sm:$0xff] %v783
        %818 = vst [vmem:[#allocation2 + $0xf0] sm:$0xff] %v784
        %819 = vst [vmem:[#allocation2 + $0xf8] sm:$0xff] %v785
        %820 = vst [vmem:[#allocation2 + $0x100] sm:$0xff] %v786
        %821 = vst [vmem:[#allocation2 + $0x108] sm:$0xff] %v787
        %v822 = vld [vmem:[%s329 + $0x88] sm:$0xf]
        %v823 = vld [vmem:[%s329 + $0x8c] sm:$0xf]
        %v824 = vld [vmem:[%s329 + $0x90] sm:$0xf]
        %v825 = vld [vmem:[%s329 + $0x94] sm:$0xf]
        %v826 = vld [vmem:[%s329 + $0x98] sm:$0xf]
        %v827 = vld [vmem:[%s329 + $0x9c] sm:$0xf]
        %v828 = vld [vmem:[%s329 + $0xa0] sm:$0xf]
        %v829 = vld [vmem:[%s329 + $0xa4] sm:$0xf]
        %v830 = vld [vmem:[%s329 + $0xa8] sm:$0xf]
        %v831 = vld [vmem:[%s329 + $0xac] sm:$0xf]
        %v832 = vld [vmem:[%s329 + $0xb0] sm:$0xf]
        %v833 = vld [vmem:[%s329 + $0xb4] sm:$0xf]
        %v834 = vld [vmem:[%s329 + $0xb8] sm:$0xf]
        %v835 = vld [vmem:[%s329 + $0xbc] sm:$0xf]
        %v836 = vld [vmem:[%s329 + $0xc0] sm:$0xf]
        %v837 = vld [vmem:[%s329 + $0xc4] sm:$0xf]
        %v838 = vld [vmem:[%s329 + $0xc8] sm:$0xf]
        %v839 = vld [vmem:[%s329 + $0xcc] sm:$0xf]
        %v840 = vld [vmem:[%s329 + $0xd0] sm:$0xf]
        %v841 = vld [vmem:[%s329 + $0xd4] sm:$0xf]
        %v842 = vld [vmem:[%s329 + $0xd8] sm:$0xf]
        %v843 = vld [vmem:[%s329 + $0xdc] sm:$0xf]
        %v844 = vld [vmem:[%s329 + $0xe0] sm:$0xf]
        %v845 = vld [vmem:[%s329 + $0xe4] sm:$0xf]
        %v846 = vld [vmem:[%s329 + $0xe8] sm:$0xf]
        %v847 = vld [vmem:[%s329 + $0xec] sm:$0xf]
        %v848 = vld [vmem:[%s329 + $0xf0] sm:$0xf]
        %v849 = vld [vmem:[%s329 + $0xf4] sm:$0xf]
        %v850 = vld [vmem:[%s329 + $0xf8] sm:$0xf]
        %v851 = vld [vmem:[%s329 + $0xfc] sm:$0xf]
        %v852 = vld [vmem:[%s329 + $0x100] sm:$0xf]
        %v853 = vld [vmem:[%s329 + $0x104] sm:$0xf]
        %v854 = vld [vmem:[%s329 + $0x108] sm:$0xf]
        %v855 = vld [vmem:[%s329 + $0x10c] sm:$0xf]
        %v856 = vld [vmem:[%s1] sm:$0xf]
        %v857 = vld [vmem:[%s1 + $0x4] sm:$0xf]
        %v858 = vld [vmem:[%s1 + $0x8] sm:$0xf]
        %v859 = vld [vmem:[%s1 + $0xc] sm:$0x3]
        %v860 = vld [vmem:[%s2] sm:$0x1]
        %v862 = vlaneseq
        %v863 = vshrl.u32 %v862, 7
        %v864 = vsub.s32 0, %v863
        %v865 = vrot.slane %v860, %v864
        %v901 = vunpack.c.l.b16 %v822
        %v902 = vunpack.c.l.b16 %v823
        %v903 = vunpack.c.l.b16 %v824
        %v904 = vunpack.c.l.b16 %v825
        %v905 = vunpack.c.l.b16 %v826
        %v906 = vunpack.c.l.b16 %v827
        %v907 = vunpack.c.l.b16 %v828
        %v908 = vunpack.c.l.b16 %v829
        %v909 = vunpack.c.l.b16 %v830
        %v910 = vunpack.c.l.b16 %v831
        %v911 = vunpack.c.l.b16 %v832
        %v912 = vunpack.c.l.b16 %v833
        %v913 = vunpack.c.l.b16 %v834
        %v914 = vunpack.c.l.b16 %v835
        %v915 = vunpack.c.l.b16 %v836
        %v916 = vunpack.c.l.b16 %v837
        %v917 = vunpack.c.l.b16 %v838
        %v918 = vunpack.c.l.b16 %v839
        %v919 = vunpack.c.l.b16 %v840
        %v920 = vunpack.c.l.b16 %v841
        %v921 = vunpack.c.l.b16 %v842
        %v922 = vunpack.c.l.b16 %v843
        %v923 = vunpack.c.l.b16 %v844
        %v924 = vunpack.c.l.b16 %v845
        %v925 = vunpack.c.l.b16 %v846
        %v926 = vunpack.c.l.b16 %v847
        %v927 = vunpack.c.l.b16 %v848
        %v928 = vunpack.c.l.b16 %v849
        %v929 = vunpack.c.l.b16 %v850
        %v930 = vunpack.c.l.b16 %v851
        %v931 = vunpack.c.l.b16 %v852
        %v932 = vunpack.c.l.b16 %v853
        %v933 = vunpack.c.l.b16 %v854
        %v934 = vunpack.c.l.b16 %v855
        %v935 = vpack.c.b16 %v902, %v901
        %v936 = vpack.c.b16 %v904, %v903
        %v937 = vpack.c.b16 %v906, %v905
        %v938 = vpack.c.b16 %v908, %v907
        %v939 = vpack.c.b16 %v910, %v909
        %v940 = vpack.c.b16 %v912, %v911
        %v941 = vpack.c.b16 %v914, %v913
        %v942 = vpack.c.b16 %v916, %v915
        %v943 = vpack.c.b16 %v918, %v917
        %v944 = vpack.c.b16 %v920, %v919
        %v945 = vpack.c.b16 %v922, %v921
        %v946 = vpack.c.b16 %v924, %v923
        %v947 = vpack.c.b16 %v926, %v925
        %v948 = vpack.c.b16 %v928, %v927
        %v949 = vpack.c.b16 %v930, %v929
        %v950 = vpack.c.b16 %v932, %v931
        %v951 = vpack.c.b16 %v934, %v933
        %v956 = vunpack.c.l.b16 %v856
        %v957 = vunpack.c.l.b16 %v857
        %v958 = vunpack.c.l.b16 %v858
        %v959 = vunpack.c.l.b16 %v859
        %v960 = vpack.c.b16 %v957, %v956
        %v961 = vpack.c.b16 %v959, %v958
        %v964 = vsel %vm526, %v935, 0
        %v967 = vsel %vm526, %v936, 0
        %v970 = vsel %vm526, %v937, 0
        %v973 = vsel %vm526, %v938, 0
        %v976 = vsel %vm526, %v939, 0
        %v979 = vsel %vm526, %v940, 0
        %v982 = vsel %vm526, %v941, 0
        %v985 = vsel %vm526, %v942, 0
        %v988 = vsel %vm526, %v943, 0
        %v991 = vsel %vm526, %v944, 0
        %v994 = vsel %vm526, %v945, 0
        %v997 = vsel %vm526, %v946, 0
        %v1000 = vsel %vm526, %v947, 0
        %v1003 = vsel %vm526, %v948, 0
        %v1006 = vsel %vm526, %v949, 0
        %v1009 = vsel %vm526, %v950, 0
        %v1012 = vsel %vm526, %v951, 0
        %v1015 = vand.u32 %v961, %v581
        %1017 = vmatprep.subr.bf16.mxu0 0
        %1018 = vmatpush1.bf16.msra.mxu0 0
        %1019 = vmatprep.subr.bf16.mxu0 0
        %1020 = vmatpush1.bf16.msra.mxu0 0
        %1021 = vmatprep.subr.bf16.mxu0 0
        %1022 = vmatpush1.bf16.msra.mxu0 0
        %1023 = vmatprep.subr.bf16.mxu0 0
        %1024 = vmatpush1.bf16.msra.mxu0 0
        %1025 = vmatprep.subr.bf16.mxu0 0
        %1026 = vmatpush1.bf16.msra.mxu0 0
        %1027 = vmatprep.subr.bf16.mxu0 0
        %1028 = vmatpush1.bf16.msra.mxu0 0
        %1029 = vmatprep.subr.bf16.mxu0 0
        %1030 = vmatpush1.bf16.msra.mxu0 %v1015
        %1031 = vmatprep.subr.bf16.mxu0 0
        %1032 = vmatpush1.bf16.msra.mxu0 %v960
        %1033 = vmatprep.subr.bf16.mxu0 0
        %1034 = vmatpush2.bf16.msra.mxu0 0
        %1035 = vmatprep.subr.bf16.mxu0 0
        %1036 = vmatpush2.bf16.msra.mxu0 0
        %1037 = vmatprep.subr.bf16.mxu0 0
        %1038 = vmatpush2.bf16.msra.mxu0 0
        %1039 = vmatprep.subr.bf16.mxu0 0
        %1040 = vmatpush2.bf16.msra.mxu0 0
        %1041 = vmatprep.subr.bf16.mxu0 0
        %1042 = vmatpush2.bf16.msra.mxu0 0
        %1043 = vmatprep.subr.bf16.mxu0 0
        %1044 = vmatpush2.bf16.msra.mxu0 0
        %1045 = vmatprep.subr.bf16.mxu0 0
        %1046 = vmatpush2.bf16.msra.mxu0 0
        %1047 = vmatprep.subr.bf16.mxu0 0
        %1048 = vmatpush2.bf16.msra.mxu0 0
        %1049 = vmatprep.mubr.bf16.mxu0 0
        %1050 = vmatmul.mubr.bf16.gmra.mxu0 %v964
        %v1051 = vpop.f32.mrf.mxu0
        %v1052 = vadd.f32 %v865, %v1051
        %v1053 = vpop.f32.mrf.mxu0
        %v1054 = vpop.f32.mrf.mxu0
        %v1055 = vadd.f32 %v865, %v1054
        %v1056 = vpop.f32.mrf.mxu0
        %1057 = vmatprep.mubr.bf16.mxu0 0
        %1058 = vmatmul.mubr.bf16.gmra.mxu0 %v967
        %v1059 = vpop.f32.mrf.mxu0
        %v1060 = vadd.f32 %v865, %v1059
        %v1061 = vpop.f32.mrf.mxu0
        %v1062 = vpop.f32.mrf.mxu0
        %v1063 = vadd.f32 %v865, %v1062
        %v1064 = vpop.f32.mrf.mxu0
        %1065 = vmatprep.mubr.bf16.mxu0 0
        %1066 = vmatmul.mubr.bf16.gmra.mxu0 %v970
        %v1067 = vpop.f32.mrf.mxu0
        %v1068 = vadd.f32 %v865, %v1067
        %v1069 = vpop.f32.mrf.mxu0
        %v1070 = vpop.f32.mrf.mxu0
        %v1071 = vadd.f32 %v865, %v1070
        %v1072 = vpop.f32.mrf.mxu0
        %1073 = vmatprep.mubr.bf16.mxu0 0
        %1074 = vmatmul.mubr.bf16.gmra.mxu0 %v973
        %v1075 = vpop.f32.mrf.mxu0
        %v1076 = vadd.f32 %v865, %v1075
        %v1077 = vpop.f32.mrf.mxu0
        %v1078 = vpop.f32.mrf.mxu0
        %v1079 = vadd.f32 %v865, %v1078
        %v1080 = vpop.f32.mrf.mxu0
        %1081 = vmatprep.mubr.bf16.mxu0 0
        %1082 = vmatmul.mubr.bf16.gmra.mxu0 %v976
        %v1083 = vpop.f32.mrf.mxu0
        %v1084 = vadd.f32 %v865, %v1083
        %v1085 = vpop.f32.mrf.mxu0
        %v1086 = vpop.f32.mrf.mxu0
        %v1087 = vadd.f32 %v865, %v1086
        %v1088 = vpop.f32.mrf.mxu0
        %1089 = vmatprep.mubr.bf16.mxu0 0
        %1090 = vmatmul.mubr.bf16.gmra.mxu0 %v979
        %v1091 = vpop.f32.mrf.mxu0
        %v1092 = vadd.f32 %v865, %v1091
        %v1093 = vpop.f32.mrf.mxu0
        %v1094 = vpop.f32.mrf.mxu0
        %v1095 = vadd.f32 %v865, %v1094
        %v1096 = vpop.f32.mrf.mxu0
        %1097 = vmatprep.mubr.bf16.mxu0 0
        %1098 = vmatmul.mubr.bf16.gmra.mxu0 %v982
        %v1099 = vpop.f32.mrf.mxu0
        %v1100 = vadd.f32 %v865, %v1099
        %v1101 = vpop.f32.mrf.mxu0
        %v1102 = vpop.f32.mrf.mxu0
        %v1103 = vadd.f32 %v865, %v1102
        %v1104 = vpop.f32.mrf.mxu0
        %1105 = vmatprep.mubr.bf16.mxu0 0
        %1106 = vmatmul.mubr.bf16.gmra.mxu0 %v985
        %v1107 = vpop.f32.mrf.mxu0
        %v1108 = vadd.f32 %v865, %v1107
        %v1109 = vpop.f32.mrf.mxu0
        %v1110 = vpop.f32.mrf.mxu0
        %v1111 = vadd.f32 %v865, %v1110
        %v1112 = vpop.f32.mrf.mxu0
        %1113 = vmatprep.mubr.bf16.mxu0 0
        %1114 = vmatmul.mubr.bf16.gmra.mxu0 %v988
        %v1115 = vpop.f32.mrf.mxu0
        %v1116 = vadd.f32 %v865, %v1115
        %v1117 = vpop.f32.mrf.mxu0
        %v1118 = vpop.f32.mrf.mxu0
        %v1119 = vadd.f32 %v865, %v1118
        %v1120 = vpop.f32.mrf.mxu0
        %1121 = vmatprep.mubr.bf16.mxu0 0
        %1122 = vmatmul.mubr.bf16.gmra.mxu0 %v991
        %v1123 = vpop.f32.mrf.mxu0
        %v1124 = vadd.f32 %v865, %v1123
        %v1125 = vpop.f32.mrf.mxu0
        %v1126 = vpop.f32.mrf.mxu0
        %v1127 = vadd.f32 %v865, %v1126
        %v1128 = vpop.f32.mrf.mxu0
        %1129 = vmatprep.mubr.bf16.mxu0 0
        %1130 = vmatmul.mubr.bf16.gmra.mxu0 %v994
        %v1131 = vpop.f32.mrf.mxu0
        %v1132 = vadd.f32 %v865, %v1131
        %v1133 = vpop.f32.mrf.mxu0
        %v1134 = vpop.f32.mrf.mxu0
        %v1135 = vadd.f32 %v865, %v1134
        %v1136 = vpop.f32.mrf.mxu0
        %1137 = vmatprep.mubr.bf16.mxu0 0
        %1138 = vmatmul.mubr.bf16.gmra.mxu0 %v997
        %v1139 = vpop.f32.mrf.mxu0
        %v1140 = vadd.f32 %v865, %v1139
        %v1141 = vpop.f32.mrf.mxu0
        %v1142 = vpop.f32.mrf.mxu0
        %v1143 = vadd.f32 %v865, %v1142
        %v1144 = vpop.f32.mrf.mxu0
        %1145 = vmatprep.mubr.bf16.mxu0 0
        %1146 = vmatmul.mubr.bf16.gmra.mxu0 %v1000
        %v1147 = vpop.f32.mrf.mxu0
        %v1148 = vadd.f32 %v865, %v1147
        %v1149 = vpop.f32.mrf.mxu0
        %v1150 = vpop.f32.mrf.mxu0
        %v1151 = vadd.f32 %v865, %v1150
        %v1152 = vpop.f32.mrf.mxu0
        %1153 = vmatprep.mubr.bf16.mxu0 0
        %1154 = vmatmul.mubr.bf16.gmra.mxu0 %v1003
        %v1155 = vpop.f32.mrf.mxu0
        %v1156 = vadd.f32 %v865, %v1155
        %v1157 = vpop.f32.mrf.mxu0
        %v1158 = vpop.f32.mrf.mxu0
        %v1159 = vadd.f32 %v865, %v1158
        %v1160 = vpop.f32.mrf.mxu0
        %1161 = vmatprep.mubr.bf16.mxu0 0
        %1162 = vmatmul.mubr.bf16.gmra.mxu0 %v1006
        %v1163 = vpop.f32.mrf.mxu0
        %v1164 = vadd.f32 %v865, %v1163
        %v1165 = vpop.f32.mrf.mxu0
        %v1166 = vpop.f32.mrf.mxu0
        %v1167 = vadd.f32 %v865, %v1166
        %v1168 = vpop.f32.mrf.mxu0
        %1169 = vmatprep.mubr.bf16.mxu0 0
        %1170 = vmatmul.mubr.bf16.gmra.mxu0 %v1009
        %v1171 = vpop.f32.mrf.mxu0
        %v1172 = vadd.f32 %v865, %v1171
        %v1173 = vpop.f32.mrf.mxu0
        %v1174 = vpop.f32.mrf.mxu0
        %v1175 = vadd.f32 %v865, %v1174
        %v1176 = vpop.f32.mrf.mxu0
        %1177 = vmatprep.mubr.bf16.mxu0 0
        %1178 = vmatmul.mubr.bf16.gmra.mxu0 %v1012
        %v1179 = vpop.f32.mrf.mxu0
        %v1180 = vadd.f32 %v865, %v1179
        %v1181 = vpop.f32.mrf.mxu0
        %v1182 = vpop.f32.mrf.mxu0
        %v1183 = vadd.f32 %v865, %v1182
        %v1184 = vpop.f32.mrf.mxu0
        %1185 = vdwg.mxu0
        %v1186 = vmax.f32 %v1052, 0.0
        %v1187 = vmax.f32 %v1055, 0.0
        %v1188 = vmax.f32 %v1060, 0.0
        %v1189 = vmax.f32 %v1063, 0.0
        %v1190 = vmax.f32 %v1068, 0.0
        %v1191 = vmax.f32 %v1071, 0.0
        %v1192 = vmax.f32 %v1076, 0.0
        %v1193 = vmax.f32 %v1079, 0.0
        %v1194 = vmax.f32 %v1084, 0.0
        %v1195 = vmax.f32 %v1087, 0.0
        %v1196 = vmax.f32 %v1092, 0.0
        %v1197 = vmax.f32 %v1095, 0.0
        %v1198 = vmax.f32 %v1100, 0.0
        %v1199 = vmax.f32 %v1103, 0.0
        %v1200 = vmax.f32 %v1108, 0.0
        %v1201 = vmax.f32 %v1111, 0.0
        %v1202 = vmax.f32 %v1116, 0.0
        %v1203 = vmax.f32 %v1119, 0.0
        %v1204 = vmax.f32 %v1124, 0.0
        %v1205 = vmax.f32 %v1127, 0.0
        %v1206 = vmax.f32 %v1132, 0.0
        %v1207 = vmax.f32 %v1135, 0.0
        %v1208 = vmax.f32 %v1140, 0.0
        %v1209 = vmax.f32 %v1143, 0.0
        %v1210 = vmax.f32 %v1148, 0.0
        %v1211 = vmax.f32 %v1151, 0.0
        %v1212 = vmax.f32 %v1156, 0.0
        %v1213 = vmax.f32 %v1159, 0.0
        %v1214 = vmax.f32 %v1164, 0.0
        %v1215 = vmax.f32 %v1167, 0.0
        %v1216 = vmax.f32 %v1172, 0.0
        %v1217 = vmax.f32 %v1175, 0.0
        %v1218 = vmax.f32 %v1180, 0.0
        %v1219 = vmax.f32 %v1183, 0.0
        %1220 = vst [vmem:[#allocation2 + $0x110] sm:$0xff] %v1186
        %1221 = vst [vmem:[#allocation2 + $0x118] sm:$0xff] %v1187
        %1222 = vst [vmem:[#allocation2 + $0x120] sm:$0xff] %v1188
        %1223 = vst [vmem:[#allocation2 + $0x128] sm:$0xff] %v1189
        %1224 = vst [vmem:[#allocation2 + $0x130] sm:$0xff] %v1190
        %1225 = vst [vmem:[#allocation2 + $0x138] sm:$0xff] %v1191
        %1226 = vst [vmem:[#allocation2 + $0x140] sm:$0xff] %v1192
        %1227 = vst [vmem:[#allocation2 + $0x148] sm:$0xff] %v1193
        %1228 = vst [vmem:[#allocation2 + $0x150] sm:$0xff] %v1194
        %1229 = vst [vmem:[#allocation2 + $0x158] sm:$0xff] %v1195
        %1230 = vst [vmem:[#allocation2 + $0x160] sm:$0xff] %v1196
        %1231 = vst [vmem:[#allocation2 + $0x168] sm:$0xff] %v1197
        %1232 = vst [vmem:[#allocation2 + $0x170] sm:$0xff] %v1198
        %1233 = vst [vmem:[#allocation2 + $0x178] sm:$0xff] %v1199
        %1234 = vst [vmem:[#allocation2 + $0x180] sm:$0xff] %v1200
        %1235 = vst [vmem:[#allocation2 + $0x188] sm:$0xff] %v1201
        %1236 = vst [vmem:[#allocation2 + $0x190] sm:$0xff] %v1202
        %1237 = vst [vmem:[#allocation2 + $0x198] sm:$0xff] %v1203
        %1238 = vst [vmem:[#allocation2 + $0x1a0] sm:$0xff] %v1204
        %1239 = vst [vmem:[#allocation2 + $0x1a8] sm:$0xff] %v1205
        %1240 = vst [vmem:[#allocation2 + $0x1b0] sm:$0xff] %v1206
        %1241 = vst [vmem:[#allocation2 + $0x1b8] sm:$0xff] %v1207
        %1242 = vst [vmem:[#allocation2 + $0x1c0] sm:$0xff] %v1208
        %1243 = vst [vmem:[#allocation2 + $0x1c8] sm:$0xff] %v1209
        %1244 = vst [vmem:[#allocation2 + $0x1d0] sm:$0xff] %v1210
        %1245 = vst [vmem:[#allocation2 + $0x1d8] sm:$0xff] %v1211
        %1246 = vst [vmem:[#allocation2 + $0x1e0] sm:$0xff] %v1212
        %1247 = vst [vmem:[#allocation2 + $0x1e8] sm:$0xff] %v1213
        %1248 = vst [vmem:[#allocation2 + $0x1f0] sm:$0xff] %v1214
        %1249 = vst [vmem:[#allocation2 + $0x1f8] sm:$0xff] %v1215
        %1250 = vst [vmem:[#allocation2 + $0x200] sm:$0xff] %v1216
        %1251 = vst [vmem:[#allocation2 + $0x208] sm:$0xff] %v1217
        %1252 = vst [vmem:[#allocation2 + $0x210] sm:$0xff] %v1218
        %1253 = vst [vmem:[#allocation2 + $0x218] sm:$0xff] %v1219
        %v1254 = vld [vmem:[%s329 + $0x110] sm:$0xf]
        %v1255 = vld [vmem:[%s329 + $0x114] sm:$0xf]
        %v1256 = vld [vmem:[%s329 + $0x118] sm:$0xf]
        %v1257 = vld [vmem:[%s329 + $0x11c] sm:$0xf]
        %v1258 = vld [vmem:[%s329 + $0x120] sm:$0xf]
        %v1259 = vld [vmem:[%s329 + $0x124] sm:$0xf]
        %v1260 = vld [vmem:[%s329 + $0x128] sm:$0xf]
        %v1261 = vld [vmem:[%s329 + $0x12c] sm:$0xf]
        %v1262 = vld [vmem:[%s329 + $0x130] sm:$0xf]
        %v1263 = vld [vmem:[%s329 + $0x134] sm:$0xf]
        %v1264 = vld [vmem:[%s329 + $0x138] sm:$0xf]
        %v1265 = vld [vmem:[%s329 + $0x13c] sm:$0xf]
        %v1266 = vld [vmem:[%s329 + $0x140] sm:$0xf]
        %v1267 = vld [vmem:[%s329 + $0x144] sm:$0xf]
        %v1268 = vld [vmem:[%s329 + $0x148] sm:$0xf]
        %v1269 = vld [vmem:[%s329 + $0x14c] sm:$0xf]
        %v1270 = vld [vmem:[%s329 + $0x150] sm:$0xf]
        %v1271 = vld [vmem:[%s329 + $0x154] sm:$0xf]
        %v1272 = vld [vmem:[%s329 + $0x158] sm:$0xf]
        %v1273 = vld [vmem:[%s329 + $0x15c] sm:$0xf]
        %v1274 = vld [vmem:[%s329 + $0x160] sm:$0xf]
        %v1275 = vld [vmem:[%s329 + $0x164] sm:$0xf]
        %v1276 = vld [vmem:[%s329 + $0x168] sm:$0xf]
        %v1277 = vld [vmem:[%s329 + $0x16c] sm:$0xf]
        %v1278 = vld [vmem:[%s329 + $0x170] sm:$0xf]
        %v1279 = vld [vmem:[%s329 + $0x174] sm:$0xf]
        %v1280 = vld [vmem:[%s329 + $0x178] sm:$0xf]
        %v1281 = vld [vmem:[%s329 + $0x17c] sm:$0xf]
        %v1282 = vld [vmem:[%s329 + $0x180] sm:$0xf]
        %v1283 = vld [vmem:[%s329 + $0x184] sm:$0xf]
        %v1284 = vld [vmem:[%s329 + $0x188] sm:$0xf]
        %v1285 = vld [vmem:[%s329 + $0x18c] sm:$0xf]
        %v1286 = vld [vmem:[%s329 + $0x190] sm:$0xf]
        %v1287 = vld [vmem:[%s329 + $0x194] sm:$0xf]
        %v1288 = vld [vmem:[%s1] sm:$0xf]
        %v1289 = vld [vmem:[%s1 + $0x4] sm:$0xf]
        %v1290 = vld [vmem:[%s1 + $0x8] sm:$0xf]
        %v1291 = vld [vmem:[%s1 + $0xc] sm:$0x3]
        %v1292 = vld [vmem:[%s2] sm:$0x1]
        %v1294 = vlaneseq
        %v1295 = vshrl.u32 %v1294, 7
        %v1296 = vsub.s32 0, %v1295
        %v1297 = vrot.slane %v1292, %v1296
        %v1333 = vunpack.c.l.b16 %v1254
        %v1334 = vunpack.c.l.b16 %v1255
        %v1335 = vunpack.c.l.b16 %v1256
        %v1336 = vunpack.c.l.b16 %v1257
        %v1337 = vunpack.c.l.b16 %v1258
        %v1338 = vunpack.c.l.b16 %v1259
        %v1339 = vunpack.c.l.b16 %v1260
        %v1340 = vunpack.c.l.b16 %v1261
        %v1341 = vunpack.c.l.b16 %v1262
        %v1342 = vunpack.c.l.b16 %v1263
        %v1343 = vunpack.c.l.b16 %v1264
        %v1344 = vunpack.c.l.b16 %v1265
        %v1345 = vunpack.c.l.b16 %v1266
        %v1346 = vunpack.c.l.b16 %v1267
        %v1347 = vunpack.c.l.b16 %v1268
        %v1348 = vunpack.c.l.b16 %v1269
        %v1349 = vunpack.c.l.b16 %v1270
        %v1350 = vunpack.c.l.b16 %v1271
        %v1351 = vunpack.c.l.b16 %v1272
        %v1352 = vunpack.c.l.b16 %v1273
        %v1353 = vunpack.c.l.b16 %v1274
        %v1354 = vunpack.c.l.b16 %v1275
        %v1355 = vunpack.c.l.b16 %v1276
        %v1356 = vunpack.c.l.b16 %v1277
        %v1357 = vunpack.c.l.b16 %v1278
        %v1358 = vunpack.c.l.b16 %v1279
        %v1359 = vunpack.c.l.b16 %v1280
        %v1360 = vunpack.c.l.b16 %v1281
        %v1361 = vunpack.c.l.b16 %v1282
        %v1362 = vunpack.c.l.b16 %v1283
        %v1363 = vunpack.c.l.b16 %v1284
        %v1364 = vunpack.c.l.b16 %v1285
        %v1365 = vunpack.c.l.b16 %v1286
        %v1366 = vunpack.c.l.b16 %v1287
        %v1367 = vpack.c.b16 %v1334, %v1333
        %v1368 = vpack.c.b16 %v1336, %v1335
        %v1369 = vpack.c.b16 %v1338, %v1337
        %v1370 = vpack.c.b16 %v1340, %v1339
        %v1371 = vpack.c.b16 %v1342, %v1341
        %v1372 = vpack.c.b16 %v1344, %v1343
        %v1373 = vpack.c.b16 %v1346, %v1345
        %v1374 = vpack.c.b16 %v1348, %v1347
        %v1375 = vpack.c.b16 %v1350, %v1349
        %v1376 = vpack.c.b16 %v1352, %v1351
        %v1377 = vpack.c.b16 %v1354, %v1353
        %v1378 = vpack.c.b16 %v1356, %v1355
        %v1379 = vpack.c.b16 %v1358, %v1357
        %v1380 = vpack.c.b16 %v1360, %v1359
        %v1381 = vpack.c.b16 %v1362, %v1361
        %v1382 = vpack.c.b16 %v1364, %v1363
        %v1383 = vpack.c.b16 %v1366, %v1365
        %v1388 = vunpack.c.l.b16 %v1288
        %v1389 = vunpack.c.l.b16 %v1289
        %v1390 = vunpack.c.l.b16 %v1290
        %v1391 = vunpack.c.l.b16 %v1291
        %v1392 = vpack.c.b16 %v1389, %v1388
        %v1393 = vpack.c.b16 %v1391, %v1390
        %v1396 = vsel %vm526, %v1367, 0
        %v1399 = vsel %vm526, %v1368, 0
        %v1402 = vsel %vm526, %v1369, 0
        %v1405 = vsel %vm526, %v1370, 0
        %v1408 = vsel %vm526, %v1371, 0
        %v1411 = vsel %vm526, %v1372, 0
        %v1414 = vsel %vm526, %v1373, 0
        %v1417 = vsel %vm526, %v1374, 0
        %v1420 = vsel %vm526, %v1375, 0
        %v1423 = vsel %vm526, %v1376, 0
        %v1426 = vsel %vm526, %v1377, 0
        %v1429 = vsel %vm526, %v1378, 0
        %v1432 = vsel %vm526, %v1379, 0
        %v1435 = vsel %vm526, %v1380, 0
        %v1438 = vsel %vm526, %v1381, 0
        %v1441 = vsel %vm526, %v1382, 0
        %v1444 = vsel %vm526, %v1383, 0
        %v1447 = vand.u32 %v1393, %v581
        %1449 = vmatprep.subr.bf16.mxu0 0
        %1450 = vmatpush1.bf16.msra.mxu0 0
        %1451 = vmatprep.subr.bf16.mxu0 0
        %1452 = vmatpush1.bf16.msra.mxu0 0
        %1453 = vmatprep.subr.bf16.mxu0 0
        %1454 = vmatpush1.bf16.msra.mxu0 0
        %1455 = vmatprep.subr.bf16.mxu0 0
        %1456 = vmatpush1.bf16.msra.mxu0 0
        %1457 = vmatprep.subr.bf16.mxu0 0
        %1458 = vmatpush1.bf16.msra.mxu0 0
        %1459 = vmatprep.subr.bf16.mxu0 0
        %1460 = vmatpush1.bf16.msra.mxu0 0
        %1461 = vmatprep.subr.bf16.mxu0 0
        %1462 = vmatpush1.bf16.msra.mxu0 %v1447
        %1463 = vmatprep.subr.bf16.mxu0 0
        %1464 = vmatpush1.bf16.msra.mxu0 %v1392
        %1465 = vmatprep.subr.bf16.mxu0 0
        %1466 = vmatpush2.bf16.msra.mxu0 0
        %1467 = vmatprep.subr.bf16.mxu0 0
        %1468 = vmatpush2.bf16.msra.mxu0 0
        %1469 = vmatprep.subr.bf16.mxu0 0
        %1470 = vmatpush2.bf16.msra.mxu0 0
        %1471 = vmatprep.subr.bf16.mxu0 0
        %1472 = vmatpush2.bf16.msra.mxu0 0
        %1473 = vmatprep.subr.bf16.mxu0 0
        %1474 = vmatpush2.bf16.msra.mxu0 0
        %1475 = vmatprep.subr.bf16.mxu0 0
        %1476 = vmatpush2.bf16.msra.mxu0 0
        %1477 = vmatprep.subr.bf16.mxu0 0
        %1478 = vmatpush2.bf16.msra.mxu0 0
        %1479 = vmatprep.subr.bf16.mxu0 0
        %1480 = vmatpush2.bf16.msra.mxu0 0
        %1481 = vmatprep.mubr.bf16.mxu0 0
        %1482 = vmatmul.mubr.bf16.gmra.mxu0 %v1396
        %v1483 = vpop.f32.mrf.mxu0
        %v1484 = vadd.f32 %v1297, %v1483
        %v1485 = vpop.f32.mrf.mxu0
        %v1486 = vpop.f32.mrf.mxu0
        %v1487 = vadd.f32 %v1297, %v1486
        %v1488 = vpop.f32.mrf.mxu0
        %1489 = vmatprep.mubr.bf16.mxu0 0
        %1490 = vmatmul.mubr.bf16.gmra.mxu0 %v1399
        %v1491 = vpop.f32.mrf.mxu0
        %v1492 = vadd.f32 %v1297, %v1491
        %v1493 = vpop.f32.mrf.mxu0
        %v1494 = vpop.f32.mrf.mxu0
        %v1495 = vadd.f32 %v1297, %v1494
        %v1496 = vpop.f32.mrf.mxu0
        %1497 = vmatprep.mubr.bf16.mxu0 0
        %1498 = vmatmul.mubr.bf16.gmra.mxu0 %v1402
        %v1499 = vpop.f32.mrf.mxu0
        %v1500 = vadd.f32 %v1297, %v1499
        %v1501 = vpop.f32.mrf.mxu0
        %v1502 = vpop.f32.mrf.mxu0
        %v1503 = vadd.f32 %v1297, %v1502
        %v1504 = vpop.f32.mrf.mxu0
        %1505 = vmatprep.mubr.bf16.mxu0 0
        %1506 = vmatmul.mubr.bf16.gmra.mxu0 %v1405
        %v1507 = vpop.f32.mrf.mxu0
        %v1508 = vadd.f32 %v1297, %v1507
        %v1509 = vpop.f32.mrf.mxu0
        %v1510 = vpop.f32.mrf.mxu0
        %v1511 = vadd.f32 %v1297, %v1510
        %v1512 = vpop.f32.mrf.mxu0
        %1513 = vmatprep.mubr.bf16.mxu0 0
        %1514 = vmatmul.mubr.bf16.gmra.mxu0 %v1408
        %v1515 = vpop.f32.mrf.mxu0
        %v1516 = vadd.f32 %v1297, %v1515
        %v1517 = vpop.f32.mrf.mxu0
        %v1518 = vpop.f32.mrf.mxu0
        %v1519 = vadd.f32 %v1297, %v1518
        %v1520 = vpop.f32.mrf.mxu0
        %1521 = vmatprep.mubr.bf16.mxu0 0
        %1522 = vmatmul.mubr.bf16.gmra.mxu0 %v1411
        %v1523 = vpop.f32.mrf.mxu0
        %v1524 = vadd.f32 %v1297, %v1523
        %v1525 = vpop.f32.mrf.mxu0
        %v1526 = vpop.f32.mrf.mxu0
        %v1527 = vadd.f32 %v1297, %v1526
        %v1528 = vpop.f32.mrf.mxu0
        %1529 = vmatprep.mubr.bf16.mxu0 0
        %1530 = vmatmul.mubr.bf16.gmra.mxu0 %v1414
        %v1531 = vpop.f32.mrf.mxu0
        %v1532 = vadd.f32 %v1297, %v1531
        %v1533 = vpop.f32.mrf.mxu0
        %v1534 = vpop.f32.mrf.mxu0
        %v1535 = vadd.f32 %v1297, %v1534
        %v1536 = vpop.f32.mrf.mxu0
        %1537 = vmatprep.mubr.bf16.mxu0 0
        %1538 = vmatmul.mubr.bf16.gmra.mxu0 %v1417
        %v1539 = vpop.f32.mrf.mxu0
        %v1540 = vadd.f32 %v1297, %v1539
        %v1541 = vpop.f32.mrf.mxu0
        %v1542 = vpop.f32.mrf.mxu0
        %v1543 = vadd.f32 %v1297, %v1542
        %v1544 = vpop.f32.mrf.mxu0
        %1545 = vmatprep.mubr.bf16.mxu0 0
        %1546 = vmatmul.mubr.bf16.gmra.mxu0 %v1420
        %v1547 = vpop.f32.mrf.mxu0
        %v1548 = vadd.f32 %v1297, %v1547
        %v1549 = vpop.f32.mrf.mxu0
        %v1550 = vpop.f32.mrf.mxu0
        %v1551 = vadd.f32 %v1297, %v1550
        %v1552 = vpop.f32.mrf.mxu0
        %1553 = vmatprep.mubr.bf16.mxu0 0
        %1554 = vmatmul.mubr.bf16.gmra.mxu0 %v1423
        %v1555 = vpop.f32.mrf.mxu0
        %v1556 = vadd.f32 %v1297, %v1555
        %v1557 = vpop.f32.mrf.mxu0
        %v1558 = vpop.f32.mrf.mxu0
        %v1559 = vadd.f32 %v1297, %v1558
        %v1560 = vpop.f32.mrf.mxu0
        %1561 = vmatprep.mubr.bf16.mxu0 0
        %1562 = vmatmul.mubr.bf16.gmra.mxu0 %v1426
        %v1563 = vpop.f32.mrf.mxu0
        %v1564 = vadd.f32 %v1297, %v1563
        %v1565 = vpop.f32.mrf.mxu0
        %v1566 = vpop.f32.mrf.mxu0
        %v1567 = vadd.f32 %v1297, %v1566
        %v1568 = vpop.f32.mrf.mxu0
        %1569 = vmatprep.mubr.bf16.mxu0 0
        %1570 = vmatmul.mubr.bf16.gmra.mxu0 %v1429
        %v1571 = vpop.f32.mrf.mxu0
        %v1572 = vadd.f32 %v1297, %v1571
        %v1573 = vpop.f32.mrf.mxu0
        %v1574 = vpop.f32.mrf.mxu0
        %v1575 = vadd.f32 %v1297, %v1574
        %v1576 = vpop.f32.mrf.mxu0
        %1577 = vmatprep.mubr.bf16.mxu0 0
        %1578 = vmatmul.mubr.bf16.gmra.mxu0 %v1432
        %v1579 = vpop.f32.mrf.mxu0
        %v1580 = vadd.f32 %v1297, %v1579
        %v1581 = vpop.f32.mrf.mxu0
        %v1582 = vpop.f32.mrf.mxu0
        %v1583 = vadd.f32 %v1297, %v1582
        %v1584 = vpop.f32.mrf.mxu0
        %1585 = vmatprep.mubr.bf16.mxu0 0
        %1586 = vmatmul.mubr.bf16.gmra.mxu0 %v1435
        %v1587 = vpop.f32.mrf.mxu0
        %v1588 = vadd.f32 %v1297, %v1587
        %v1589 = vpop.f32.mrf.mxu0
        %v1590 = vpop.f32.mrf.mxu0
        %v1591 = vadd.f32 %v1297, %v1590
        %v1592 = vpop.f32.mrf.mxu0
        %1593 = vmatprep.mubr.bf16.mxu0 0
        %1594 = vmatmul.mubr.bf16.gmra.mxu0 %v1438
        %v1595 = vpop.f32.mrf.mxu0
        %v1596 = vadd.f32 %v1297, %v1595
        %v1597 = vpop.f32.mrf.mxu0
        %v1598 = vpop.f32.mrf.mxu0
        %v1599 = vadd.f32 %v1297, %v1598
        %v1600 = vpop.f32.mrf.mxu0
        %1601 = vmatprep.mubr.bf16.mxu0 0
        %1602 = vmatmul.mubr.bf16.gmra.mxu0 %v1441
        %v1603 = vpop.f32.mrf.mxu0
        %v1604 = vadd.f32 %v1297, %v1603
        %v1605 = vpop.f32.mrf.mxu0
        %v1606 = vpop.f32.mrf.mxu0
        %v1607 = vadd.f32 %v1297, %v1606
        %v1608 = vpop.f32.mrf.mxu0
        %1609 = vmatprep.mubr.bf16.mxu0 0
        %1610 = vmatmul.mubr.bf16.gmra.mxu0 %v1444
        %v1611 = vpop.f32.mrf.mxu0
        %v1612 = vadd.f32 %v1297, %v1611
        %v1613 = vpop.f32.mrf.mxu0
        %v1614 = vpop.f32.mrf.mxu0
        %v1615 = vadd.f32 %v1297, %v1614
        %v1616 = vpop.f32.mrf.mxu0
        %1617 = vdwg.mxu0
        %v1618 = vmax.f32 %v1484, 0.0
        %v1619 = vmax.f32 %v1487, 0.0
        %v1620 = vmax.f32 %v1492, 0.0
        %v1621 = vmax.f32 %v1495, 0.0
        %v1622 = vmax.f32 %v1500, 0.0
        %v1623 = vmax.f32 %v1503, 0.0
        %v1624 = vmax.f32 %v1508, 0.0
        %v1625 = vmax.f32 %v1511, 0.0
        %v1626 = vmax.f32 %v1516, 0.0
        %v1627 = vmax.f32 %v1519, 0.0
        %v1628 = vmax.f32 %v1524, 0.0
        %v1629 = vmax.f32 %v1527, 0.0
        %v1630 = vmax.f32 %v1532, 0.0
        %v1631 = vmax.f32 %v1535, 0.0
        %v1632 = vmax.f32 %v1540, 0.0
        %v1633 = vmax.f32 %v1543, 0.0
        %v1634 = vmax.f32 %v1548, 0.0
        %v1635 = vmax.f32 %v1551, 0.0
        %v1636 = vmax.f32 %v1556, 0.0
        %v1637 = vmax.f32 %v1559, 0.0
        %v1638 = vmax.f32 %v1564, 0.0
        %v1639 = vmax.f32 %v1567, 0.0
        %v1640 = vmax.f32 %v1572, 0.0
        %v1641 = vmax.f32 %v1575, 0.0
        %v1642 = vmax.f32 %v1580, 0.0
        %v1643 = vmax.f32 %v1583, 0.0
        %v1644 = vmax.f32 %v1588, 0.0
        %v1645 = vmax.f32 %v1591, 0.0
        %v1646 = vmax.f32 %v1596, 0.0
        %v1647 = vmax.f32 %v1599, 0.0
        %v1648 = vmax.f32 %v1604, 0.0
        %v1649 = vmax.f32 %v1607, 0.0
        %v1650 = vmax.f32 %v1612, 0.0
        %v1651 = vmax.f32 %v1615, 0.0
        %1652 = vst [vmem:[#allocation2 + $0x220] sm:$0xff] %v1618
        %1653 = vst [vmem:[#allocation2 + $0x228] sm:$0xff] %v1619
        %1654 = vst [vmem:[#allocation2 + $0x230] sm:$0xff] %v1620
        %1655 = vst [vmem:[#allocation2 + $0x238] sm:$0xff] %v1621
        %1656 = vst [vmem:[#allocation2 + $0x240] sm:$0xff] %v1622
        %1657 = vst [vmem:[#allocation2 + $0x248] sm:$0xff] %v1623
        %1658 = vst [vmem:[#allocation2 + $0x250] sm:$0xff] %v1624
        %1659 = vst [vmem:[#allocation2 + $0x258] sm:$0xff] %v1625
        %1660 = vst [vmem:[#allocation2 + $0x260] sm:$0xff] %v1626
        %1661 = vst [vmem:[#allocation2 + $0x268] sm:$0xff] %v1627
        %1662 = vst [vmem:[#allocation2 + $0x270] sm:$0xff] %v1628
        %1663 = vst [vmem:[#allocation2 + $0x278] sm:$0xff] %v1629
        %1664 = vst [vmem:[#allocation2 + $0x280] sm:$0xff] %v1630
        %1665 = vst [vmem:[#allocation2 + $0x288] sm:$0xff] %v1631
        %1666 = vst [vmem:[#allocation2 + $0x290] sm:$0xff] %v1632
        %1667 = vst [vmem:[#allocation2 + $0x298] sm:$0xff] %v1633
        %1668 = vst [vmem:[#allocation2 + $0x2a0] sm:$0xff] %v1634
        %1669 = vst [vmem:[#allocation2 + $0x2a8] sm:$0xff] %v1635
        %1670 = vst [vmem:[#allocation2 + $0x2b0] sm:$0xff] %v1636
        %1671 = vst [vmem:[#allocation2 + $0x2b8] sm:$0xff] %v1637
        %1672 = vst [vmem:[#allocation2 + $0x2c0] sm:$0xff] %v1638
        %1673 = vst [vmem:[#allocation2 + $0x2c8] sm:$0xff] %v1639
        %1674 = vst [vmem:[#allocation2 + $0x2d0] sm:$0xff] %v1640
        %1675 = vst [vmem:[#allocation2 + $0x2d8] sm:$0xff] %v1641
        %1676 = vst [vmem:[#allocation2 + $0x2e0] sm:$0xff] %v1642
        %1677 = vst [vmem:[#allocation2 + $0x2e8] sm:$0xff] %v1643
        %1678 = vst [vmem:[#allocation2 + $0x2f0] sm:$0xff] %v1644
        %1679 = vst [vmem:[#allocation2 + $0x2f8] sm:$0xff] %v1645
        %1680 = vst [vmem:[#allocation2 + $0x300] sm:$0xff] %v1646
        %1681 = vst [vmem:[#allocation2 + $0x308] sm:$0xff] %v1647
        %1682 = vst [vmem:[#allocation2 + $0x310] sm:$0xff] %v1648
        %1683 = vst [vmem:[#allocation2 + $0x318] sm:$0xff] %v1649
        %1684 = vst [vmem:[#allocation2 + $0x320] sm:$0xff] %v1650
        %1685 = vst [vmem:[#allocation2 + $0x328] sm:$0xff] %v1651
        %v1686 = vld [vmem:[%s329 + $0x198] sm:$0xf]
        %v1687 = vld [vmem:[%s329 + $0x19c] sm:$0xf]
        %v1688 = vld [vmem:[%s329 + $0x1a0] sm:$0xf]
        %v1689 = vld [vmem:[%s329 + $0x1a4] sm:$0xf]
        %v1690 = vld [vmem:[%s329 + $0x1a8] sm:$0xf]
        %v1691 = vld [vmem:[%s329 + $0x1ac] sm:$0xf]
        %v1692 = vld [vmem:[%s329 + $0x1b0] sm:$0xf]
        %v1693 = vld [vmem:[%s329 + $0x1b4] sm:$0xf]
        %v1694 = vld [vmem:[%s329 + $0x1b8] sm:$0xf]
        %v1695 = vld [vmem:[%s329 + $0x1bc] sm:$0xf]
        %v1696 = vld [vmem:[%s329 + $0x1c0] sm:$0xf]
        %v1697 = vld [vmem:[%s329 + $0x1c4] sm:$0xf]
        %v1698 = vld [vmem:[%s329 + $0x1c8] sm:$0xf]
        %v1699 = vld [vmem:[%s329 + $0x1cc] sm:$0xf]
        %v1700 = vld [vmem:[%s329 + $0x1d0] sm:$0xf]
        %v1701 = vld [vmem:[%s329 + $0x1d4] sm:$0xf]
        %v1702 = vld [vmem:[%s329 + $0x1d8] sm:$0xf]
        %v1703 = vld [vmem:[%s329 + $0x1dc] sm:$0xf]
        %v1704 = vld [vmem:[%s329 + $0x1e0] sm:$0xf]
        %v1705 = vld [vmem:[%s329 + $0x1e4] sm:$0xf]
        %v1706 = vld [vmem:[%s329 + $0x1e8] sm:$0xf]
        %v1707 = vld [vmem:[%s329 + $0x1ec] sm:$0xf]
        %v1708 = vld [vmem:[%s329 + $0x1f0] sm:$0xf]
        %v1709 = vld [vmem:[%s329 + $0x1f4] sm:$0xf]
        %v1710 = vld [vmem:[%s329 + $0x1f8] sm:$0xf]
        %v1711 = vld [vmem:[%s329 + $0x1fc] sm:$0xf]
        %v1712 = vld [vmem:[%s329 + $0x200] sm:$0xf]
        %v1713 = vld [vmem:[%s329 + $0x204] sm:$0xf]
        %v1714 = vld [vmem:[%s329 + $0x208] sm:$0xf]
        %v1715 = vld [vmem:[%s329 + $0x20c] sm:$0xf]
        %v1716 = vld [vmem:[%s329 + $0x210] sm:$0xf]
        %v1717 = vld [vmem:[%s329 + $0x214] sm:$0xf]
        %v1718 = vld [vmem:[%s329 + $0x218] sm:$0xf]
        %v1719 = vld [vmem:[%s329 + $0x21c] sm:$0xf]
        %v1720 = vld [vmem:[%s1] sm:$0xf]
        %v1721 = vld [vmem:[%s1 + $0x4] sm:$0xf]
        %v1722 = vld [vmem:[%s1 + $0x8] sm:$0xf]
        %v1723 = vld [vmem:[%s1 + $0xc] sm:$0x3]
        %v1724 = vld [vmem:[%s2] sm:$0x1]
        %v1726 = vlaneseq
        %v1727 = vshrl.u32 %v1726, 7
        %v1728 = vsub.s32 0, %v1727
        %v1729 = vrot.slane %v1724, %v1728
        %v1765 = vunpack.c.l.b16 %v1686
        %v1766 = vunpack.c.l.b16 %v1687
        %v1767 = vunpack.c.l.b16 %v1688
        %v1768 = vunpack.c.l.b16 %v1689
        %v1769 = vunpack.c.l.b16 %v1690
        %v1770 = vunpack.c.l.b16 %v1691
        %v1771 = vunpack.c.l.b16 %v1692
        %v1772 = vunpack.c.l.b16 %v1693
        %v1773 = vunpack.c.l.b16 %v1694
        %v1774 = vunpack.c.l.b16 %v1695
        %v1775 = vunpack.c.l.b16 %v1696
        %v1776 = vunpack.c.l.b16 %v1697
        %v1777 = vunpack.c.l.b16 %v1698
        %v1778 = vunpack.c.l.b16 %v1699
        %v1779 = vunpack.c.l.b16 %v1700
        %v1780 = vunpack.c.l.b16 %v1701
        %v1781 = vunpack.c.l.b16 %v1702
        %v1782 = vunpack.c.l.b16 %v1703
        %v1783 = vunpack.c.l.b16 %v1704
        %v1784 = vunpack.c.l.b16 %v1705
        %v1785 = vunpack.c.l.b16 %v1706
        %v1786 = vunpack.c.l.b16 %v1707
        %v1787 = vunpack.c.l.b16 %v1708
        %v1788 = vunpack.c.l.b16 %v1709
        %v1789 = vunpack.c.l.b16 %v1710
        %v1790 = vunpack.c.l.b16 %v1711
        %v1791 = vunpack.c.l.b16 %v1712
        %v1792 = vunpack.c.l.b16 %v1713
        %v1793 = vunpack.c.l.b16 %v1714
        %v1794 = vunpack.c.l.b16 %v1715
        %v1795 = vunpack.c.l.b16 %v1716
        %v1796 = vunpack.c.l.b16 %v1717
        %v1797 = vunpack.c.l.b16 %v1718
        %v1798 = vunpack.c.l.b16 %v1719
        %v1799 = vpack.c.b16 %v1766, %v1765
        %v1800 = vpack.c.b16 %v1768, %v1767
        %v1801 = vpack.c.b16 %v1770, %v1769
        %v1802 = vpack.c.b16 %v1772, %v1771
        %v1803 = vpack.c.b16 %v1774, %v1773
        %v1804 = vpack.c.b16 %v1776, %v1775
        %v1805 = vpack.c.b16 %v1778, %v1777
        %v1806 = vpack.c.b16 %v1780, %v1779
        %v1807 = vpack.c.b16 %v1782, %v1781
        %v1808 = vpack.c.b16 %v1784, %v1783
        %v1809 = vpack.c.b16 %v1786, %v1785
        %v1810 = vpack.c.b16 %v1788, %v1787
        %v1811 = vpack.c.b16 %v1790, %v1789
        %v1812 = vpack.c.b16 %v1792, %v1791
        %v1813 = vpack.c.b16 %v1794, %v1793
        %v1814 = vpack.c.b16 %v1796, %v1795
        %v1815 = vpack.c.b16 %v1798, %v1797
        %v1820 = vunpack.c.l.b16 %v1720
        %v1821 = vunpack.c.l.b16 %v1721
        %v1822 = vunpack.c.l.b16 %v1722
        %v1823 = vunpack.c.l.b16 %v1723
        %v1824 = vpack.c.b16 %v1821, %v1820
        %v1825 = vpack.c.b16 %v1823, %v1822
        %v1828 = vsel %vm526, %v1799, 0
        %v1831 = vsel %vm526, %v1800, 0
        %v1834 = vsel %vm526, %v1801, 0
        %v1837 = vsel %vm526, %v1802, 0
        %v1840 = vsel %vm526, %v1803, 0
        %v1843 = vsel %vm526, %v1804, 0
        %v1846 = vsel %vm526, %v1805, 0
        %v1849 = vsel %vm526, %v1806, 0
        %v1852 = vsel %vm526, %v1807, 0
        %v1855 = vsel %vm526, %v1808, 0
        %v1858 = vsel %vm526, %v1809, 0
        %v1861 = vsel %vm526, %v1810, 0
        %v1864 = vsel %vm526, %v1811, 0
        %v1867 = vsel %vm526, %v1812, 0
        %v1870 = vsel %vm526, %v1813, 0
        %v1873 = vsel %vm526, %v1814, 0
        %v1876 = vsel %vm526, %v1815, 0
        %v1879 = vand.u32 %v1825, %v581
        %1881 = vmatprep.subr.bf16.mxu0 0
        %1882 = vmatpush1.bf16.msra.mxu0 0
        %1883 = vmatprep.subr.bf16.mxu0 0
        %1884 = vmatpush1.bf16.msra.mxu0 0
        %1885 = vmatprep.subr.bf16.mxu0 0
        %1886 = vmatpush1.bf16.msra.mxu0 0
        %1887 = vmatprep.subr.bf16.mxu0 0
        %1888 = vmatpush1.bf16.msra.mxu0 0
        %1889 = vmatprep.subr.bf16.mxu0 0
        %1890 = vmatpush1.bf16.msra.mxu0 0
        %1891 = vmatprep.subr.bf16.mxu0 0
        %1892 = vmatpush1.bf16.msra.mxu0 0
        %1893 = vmatprep.subr.bf16.mxu0 0
        %1894 = vmatpush1.bf16.msra.mxu0 %v1879
        %1895 = vmatprep.subr.bf16.mxu0 0
        %1896 = vmatpush1.bf16.msra.mxu0 %v1824
        %1897 = vmatprep.subr.bf16.mxu0 0
        %1898 = vmatpush2.bf16.msra.mxu0 0
        %1899 = vmatprep.subr.bf16.mxu0 0
        %1900 = vmatpush2.bf16.msra.mxu0 0
        %1901 = vmatprep.subr.bf16.mxu0 0
        %1902 = vmatpush2.bf16.msra.mxu0 0
        %1903 = vmatprep.subr.bf16.mxu0 0
        %1904 = vmatpush2.bf16.msra.mxu0 0
        %1905 = vmatprep.subr.bf16.mxu0 0
        %1906 = vmatpush2.bf16.msra.mxu0 0
        %1907 = vmatprep.subr.bf16.mxu0 0
        %1908 = vmatpush2.bf16.msra.mxu0 0
        %1909 = vmatprep.subr.bf16.mxu0 0
        %1910 = vmatpush2.bf16.msra.mxu0 0
        %1911 = vmatprep.subr.bf16.mxu0 0
        %1912 = vmatpush2.bf16.msra.mxu0 0
        %1913 = vmatprep.mubr.bf16.mxu0 0
        %1914 = vmatmul.mubr.bf16.gmra.mxu0 %v1828
        %v1915 = vpop.f32.mrf.mxu0
        %v1916 = vadd.f32 %v1729, %v1915
        %v1917 = vpop.f32.mrf.mxu0
        %v1918 = vpop.f32.mrf.mxu0
        %v1919 = vadd.f32 %v1729, %v1918
        %v1920 = vpop.f32.mrf.mxu0
        %1921 = vmatprep.mubr.bf16.mxu0 0
        %1922 = vmatmul.mubr.bf16.gmra.mxu0 %v1831
        %v1923 = vpop.f32.mrf.mxu0
        %v1924 = vadd.f32 %v1729, %v1923
        %v1925 = vpop.f32.mrf.mxu0
        %v1926 = vpop.f32.mrf.mxu0
        %v1927 = vadd.f32 %v1729, %v1926
        %v1928 = vpop.f32.mrf.mxu0
        %1929 = vmatprep.mubr.bf16.mxu0 0
        %1930 = vmatmul.mubr.bf16.gmra.mxu0 %v1834
        %v1931 = vpop.f32.mrf.mxu0
        %v1932 = vadd.f32 %v1729, %v1931
        %v1933 = vpop.f32.mrf.mxu0
        %v1934 = vpop.f32.mrf.mxu0
        %v1935 = vadd.f32 %v1729, %v1934
        %v1936 = vpop.f32.mrf.mxu0
        %1937 = vmatprep.mubr.bf16.mxu0 0
        %1938 = vmatmul.mubr.bf16.gmra.mxu0 %v1837
        %v1939 = vpop.f32.mrf.mxu0
        %v1940 = vadd.f32 %v1729, %v1939
        %v1941 = vpop.f32.mrf.mxu0
        %v1942 = vpop.f32.mrf.mxu0
        %v1943 = vadd.f32 %v1729, %v1942
        %v1944 = vpop.f32.mrf.mxu0
        %1945 = vmatprep.mubr.bf16.mxu0 0
        %1946 = vmatmul.mubr.bf16.gmra.mxu0 %v1840
        %v1947 = vpop.f32.mrf.mxu0
        %v1948 = vadd.f32 %v1729, %v1947
        %v1949 = vpop.f32.mrf.mxu0
        %v1950 = vpop.f32.mrf.mxu0
        %v1951 = vadd.f32 %v1729, %v1950
        %v1952 = vpop.f32.mrf.mxu0
        %1953 = vmatprep.mubr.bf16.mxu0 0
        %1954 = vmatmul.mubr.bf16.gmra.mxu0 %v1843
        %v1955 = vpop.f32.mrf.mxu0
        %v1956 = vadd.f32 %v1729, %v1955
        %v1957 = vpop.f32.mrf.mxu0
        %v1958 = vpop.f32.mrf.mxu0
        %v1959 = vadd.f32 %v1729, %v1958
        %v1960 = vpop.f32.mrf.mxu0
        %1961 = vmatprep.mubr.bf16.mxu0 0
        %1962 = vmatmul.mubr.bf16.gmra.mxu0 %v1846
        %v1963 = vpop.f32.mrf.mxu0
        %v1964 = vadd.f32 %v1729, %v1963
        %v1965 = vpop.f32.mrf.mxu0
        %v1966 = vpop.f32.mrf.mxu0
        %v1967 = vadd.f32 %v1729, %v1966
        %v1968 = vpop.f32.mrf.mxu0
        %1969 = vmatprep.mubr.bf16.mxu0 0
        %1970 = vmatmul.mubr.bf16.gmra.mxu0 %v1849
        %v1971 = vpop.f32.mrf.mxu0
        %v1972 = vadd.f32 %v1729, %v1971
        %v1973 = vpop.f32.mrf.mxu0
        %v1974 = vpop.f32.mrf.mxu0
        %v1975 = vadd.f32 %v1729, %v1974
        %v1976 = vpop.f32.mrf.mxu0
        %1977 = vmatprep.mubr.bf16.mxu0 0
        %1978 = vmatmul.mubr.bf16.gmra.mxu0 %v1852
        %v1979 = vpop.f32.mrf.mxu0
        %v1980 = vadd.f32 %v1729, %v1979
        %v1981 = vpop.f32.mrf.mxu0
        %v1982 = vpop.f32.mrf.mxu0
        %v1983 = vadd.f32 %v1729, %v1982
        %v1984 = vpop.f32.mrf.mxu0
        %1985 = vmatprep.mubr.bf16.mxu0 0
        %1986 = vmatmul.mubr.bf16.gmra.mxu0 %v1855
        %v1987 = vpop.f32.mrf.mxu0
        %v1988 = vadd.f32 %v1729, %v1987
        %v1989 = vpop.f32.mrf.mxu0
        %v1990 = vpop.f32.mrf.mxu0
        %v1991 = vadd.f32 %v1729, %v1990
        %v1992 = vpop.f32.mrf.mxu0
        %1993 = vmatprep.mubr.bf16.mxu0 0
        %1994 = vmatmul.mubr.bf16.gmra.mxu0 %v1858
        %v1995 = vpop.f32.mrf.mxu0
        %v1996 = vadd.f32 %v1729, %v1995
        %v1997 = vpop.f32.mrf.mxu0
        %v1998 = vpop.f32.mrf.mxu0
        %v1999 = vadd.f32 %v1729, %v1998
        %v2000 = vpop.f32.mrf.mxu0
        %2001 = vmatprep.mubr.bf16.mxu0 0
        %2002 = vmatmul.mubr.bf16.gmra.mxu0 %v1861
        %v2003 = vpop.f32.mrf.mxu0
        %v2004 = vadd.f32 %v1729, %v2003
        %v2005 = vpop.f32.mrf.mxu0
        %v2006 = vpop.f32.mrf.mxu0
        %v2007 = vadd.f32 %v1729, %v2006
        %v2008 = vpop.f32.mrf.mxu0
        %2009 = vmatprep.mubr.bf16.mxu0 0
        %2010 = vmatmul.mubr.bf16.gmra.mxu0 %v1864
        %v2011 = vpop.f32.mrf.mxu0
        %v2012 = vadd.f32 %v1729, %v2011
        %v2013 = vpop.f32.mrf.mxu0
        %v2014 = vpop.f32.mrf.mxu0
        %v2015 = vadd.f32 %v1729, %v2014
        %v2016 = vpop.f32.mrf.mxu0
        %2017 = vmatprep.mubr.bf16.mxu0 0
        %2018 = vmatmul.mubr.bf16.gmra.mxu0 %v1867
        %v2019 = vpop.f32.mrf.mxu0
        %v2020 = vadd.f32 %v1729, %v2019
        %v2021 = vpop.f32.mrf.mxu0
        %v2022 = vpop.f32.mrf.mxu0
        %v2023 = vadd.f32 %v1729, %v2022
        %v2024 = vpop.f32.mrf.mxu0
        %2025 = vmatprep.mubr.bf16.mxu0 0
        %2026 = vmatmul.mubr.bf16.gmra.mxu0 %v1870
        %v2027 = vpop.f32.mrf.mxu0
        %v2028 = vadd.f32 %v1729, %v2027
        %v2029 = vpop.f32.mrf.mxu0
        %v2030 = vpop.f32.mrf.mxu0
        %v2031 = vadd.f32 %v1729, %v2030
        %v2032 = vpop.f32.mrf.mxu0
        %2033 = vmatprep.mubr.bf16.mxu0 0
        %2034 = vmatmul.mubr.bf16.gmra.mxu0 %v1873
        %v2035 = vpop.f32.mrf.mxu0
        %v2036 = vadd.f32 %v1729, %v2035
        %v2037 = vpop.f32.mrf.mxu0
        %v2038 = vpop.f32.mrf.mxu0
        %v2039 = vadd.f32 %v1729, %v2038
        %v2040 = vpop.f32.mrf.mxu0
        %2041 = vmatprep.mubr.bf16.mxu0 0
        %2042 = vmatmul.mubr.bf16.gmra.mxu0 %v1876
        %v2043 = vpop.f32.mrf.mxu0
        %v2044 = vadd.f32 %v1729, %v2043
        %v2045 = vpop.f32.mrf.mxu0
        %v2046 = vpop.f32.mrf.mxu0
        %v2047 = vadd.f32 %v1729, %v2046
        %v2048 = vpop.f32.mrf.mxu0
        %2049 = vdwg.mxu0
        %v2050 = vmax.f32 %v1916, 0.0
        %v2051 = vmax.f32 %v1919, 0.0
        %v2052 = vmax.f32 %v1924, 0.0
        %v2053 = vmax.f32 %v1927, 0.0
        %v2054 = vmax.f32 %v1932, 0.0
        %v2055 = vmax.f32 %v1935, 0.0
        %v2056 = vmax.f32 %v1940, 0.0
        %v2057 = vmax.f32 %v1943, 0.0
        %v2058 = vmax.f32 %v1948, 0.0
        %v2059 = vmax.f32 %v1951, 0.0
        %v2060 = vmax.f32 %v1956, 0.0
        %v2061 = vmax.f32 %v1959, 0.0
        %v2062 = vmax.f32 %v1964, 0.0
        %v2063 = vmax.f32 %v1967, 0.0
        %v2064 = vmax.f32 %v1972, 0.0
        %v2065 = vmax.f32 %v1975, 0.0
        %v2066 = vmax.f32 %v1980, 0.0
        %v2067 = vmax.f32 %v1983, 0.0
        %v2068 = vmax.f32 %v1988, 0.0
        %v2069 = vmax.f32 %v1991, 0.0
        %v2070 = vmax.f32 %v1996, 0.0
        %v2071 = vmax.f32 %v1999, 0.0
        %v2072 = vmax.f32 %v2004, 0.0
        %v2073 = vmax.f32 %v2007, 0.0
        %v2074 = vmax.f32 %v2012, 0.0
        %v2075 = vmax.f32 %v2015, 0.0
        %v2076 = vmax.f32 %v2020, 0.0
        %v2077 = vmax.f32 %v2023, 0.0
        %v2078 = vmax.f32 %v2028, 0.0
        %v2079 = vmax.f32 %v2031, 0.0
        %v2080 = vmax.f32 %v2036, 0.0
        %v2081 = vmax.f32 %v2039, 0.0
        %v2082 = vmax.f32 %v2044, 0.0
        %v2083 = vmax.f32 %v2047, 0.0
        %2084 = vst [vmem:[#allocation2 + $0x330] sm:$0xff] %v2050
        %2085 = vst [vmem:[#allocation2 + $0x338] sm:$0xff] %v2051
        %2086 = vst [vmem:[#allocation2 + $0x340] sm:$0xff] %v2052
        %2087 = vst [vmem:[#allocation2 + $0x348] sm:$0xff] %v2053
        %2088 = vst [vmem:[#allocation2 + $0x350] sm:$0xff] %v2054
        %2089 = vst [vmem:[#allocation2 + $0x358] sm:$0xff] %v2055
        %2090 = vst [vmem:[#allocation2 + $0x360] sm:$0xff] %v2056
        %2091 = vst [vmem:[#allocation2 + $0x368] sm:$0xff] %v2057
        %2092 = vst [vmem:[#allocation2 + $0x370] sm:$0xff] %v2058
        %2093 = vst [vmem:[#allocation2 + $0x378] sm:$0xff] %v2059
        %2094 = vst [vmem:[#allocation2 + $0x380] sm:$0xff] %v2060
        %2095 = vst [vmem:[#allocation2 + $0x388] sm:$0xff] %v2061
        %2096 = vst [vmem:[#allocation2 + $0x390] sm:$0xff] %v2062
        %2097 = vst [vmem:[#allocation2 + $0x398] sm:$0xff] %v2063
        %2098 = vst [vmem:[#allocation2 + $0x3a0] sm:$0xff] %v2064
        %2099 = vst [vmem:[#allocation2 + $0x3a8] sm:$0xff] %v2065
        %2100 = vst [vmem:[#allocation2 + $0x3b0] sm:$0xff] %v2066
        %2101 = vst [vmem:[#allocation2 + $0x3b8] sm:$0xff] %v2067
        %2102 = vst [vmem:[#allocation2 + $0x3c0] sm:$0xff] %v2068
        %2103 = vst [vmem:[#allocation2 + $0x3c8] sm:$0xff] %v2069
        %2104 = vst [vmem:[#allocation2 + $0x3d0] sm:$0xff] %v2070
        %2105 = vst [vmem:[#allocation2 + $0x3d8] sm:$0xff] %v2071
        %2106 = vst [vmem:[#allocation2 + $0x3e0] sm:$0xff] %v2072
        %2107 = vst [vmem:[#allocation2 + $0x3e8] sm:$0xff] %v2073
        %2108 = vst [vmem:[#allocation2 + $0x3f0] sm:$0xff] %v2074
        %2109 = vst [vmem:[#allocation2 + $0x3f8] sm:$0xff] %v2075
        %2110 = vst [vmem:[#allocation2 + $0x400] sm:$0xff] %v2076
        %2111 = vst [vmem:[#allocation2 + $0x408] sm:$0xff] %v2077
        %2112 = vst [vmem:[#allocation2 + $0x410] sm:$0xff] %v2078
        %2113 = vst [vmem:[#allocation2 + $0x418] sm:$0xff] %v2079
        %2114 = vst [vmem:[#allocation2 + $0x420] sm:$0xff] %v2080
        %2115 = vst [vmem:[#allocation2 + $0x428] sm:$0xff] %v2081
        %2116 = vst [vmem:[#allocation2 + $0x430] sm:$0xff] %v2082
        %2117 = vst [vmem:[#allocation2 + $0x438] sm:$0xff] %v2083
        %v2118 = vld [vmem:[#allocation2] ss:$2 sm:$0xff]
        %s2119 = scalar_lea.vmem [#allocation2], 16
        %v2120 = vld [vmem:[%s2119] ss:$2 sm:$0xff]
        %s2121 = scalar_lea.vmem [#allocation2], 1
        %v2122 = vld [vmem:[%s2121] ss:$2 sm:$0xff]
        %s2123 = scalar_lea.vmem [#allocation2], 17
        %v2124 = vld [vmem:[%s2123] ss:$2 sm:$0xff]
        %v2125 = vmax.f32 %v2118, %v2122
        %v2126 = vmax.f32 %v2120, %v2124
        %s2127 = scalar_lea.vmem [#allocation2], 34
        %v2128 = vld [vmem:[%s2127] ss:$2 sm:$0xff]
        %s2129 = scalar_lea.vmem [#allocation2], 50
        %v2130 = vld [vmem:[%s2129] ss:$2 sm:$0xff]
        %s2131 = scalar_lea.vmem [#allocation2], 35
        %v2132 = vld [vmem:[%s2131] ss:$2 sm:$0xff]
        %s2133 = scalar_lea.vmem [#allocation2], 51
        %v2134 = vld [vmem:[%s2133] ss:$2 sm:$0xff]
        %v2135 = vmax.f32 %v2128, %v2132
        %v2136 = vmax.f32 %v2130, %v2134
        %v2137 = vmax.f32 %v2125, %v2135
        %v2138 = vmax.f32 %v2126, %v2136
        %2139 = vst [vmem:[#allocation3 + $0x13] sm:$0xff] %v2137
        %2140 = vst [vmem:[#allocation3 + $0x1b] sm:$0xff] %v2138
        %s2141 = scalar_lea.vmem [#allocation2], 68
        %v2142 = vld [vmem:[%s2141] ss:$2 sm:$0xff]
        %s2143 = scalar_lea.vmem [#allocation2], 84
        %v2144 = vld [vmem:[%s2143] ss:$2 sm:$0xff]
        %s2145 = scalar_lea.vmem [#allocation2], 69
        %v2146 = vld [vmem:[%s2145] ss:$2 sm:$0xff]
        %s2147 = scalar_lea.vmem [#allocation2], 85
        %v2148 = vld [vmem:[%s2147] ss:$2 sm:$0xff]
        %v2149 = vmax.f32 %v2142, %v2146
        %v2150 = vmax.f32 %v2144, %v2148
        %s2151 = scalar_lea.vmem [#allocation2], 102
        %v2152 = vld [vmem:[%s2151] ss:$2 sm:$0xff]
        %s2153 = scalar_lea.vmem [#allocation2], 118
        %v2154 = vld [vmem:[%s2153] ss:$2 sm:$0xff]
        %s2155 = scalar_lea.vmem [#allocation2], 103
        %v2156 = vld [vmem:[%s2155] ss:$2 sm:$0xff]
        %s2157 = scalar_lea.vmem [#allocation2], 119
        %v2158 = vld [vmem:[%s2157] ss:$2 sm:$0xff]
        %v2159 = vmax.f32 %v2152, %v2156
        %v2160 = vmax.f32 %v2154, %v2158
        %v2161 = vmax.f32 %v2149, %v2159
        %v2162 = vmax.f32 %v2150, %v2160
        %2163 = vst [vmem:[#allocation3 + $0x25] sm:$0xff] %v2161
        %2164 = vst [vmem:[#allocation3 + $0x2d] sm:$0xff] %v2162
        %s2165 = scalar_lea.vmem [#allocation2], 136
        %v2166 = vld [vmem:[%s2165] ss:$2 sm:$0xff]
        %s2167 = scalar_lea.vmem [#allocation2], 152
        %v2168 = vld [vmem:[%s2167] ss:$2 sm:$0xff]
        %s2169 = scalar_lea.vmem [#allocation2], 137
        %v2170 = vld [vmem:[%s2169] ss:$2 sm:$0xff]
        %s2171 = scalar_lea.vmem [#allocation2], 153
        %v2172 = vld [vmem:[%s2171] ss:$2 sm:$0xff]
        %v2173 = vmax.f32 %v2166, %v2170
        %v2174 = vmax.f32 %v2168, %v2172
        %s2175 = scalar_lea.vmem [#allocation2], 170
        %v2176 = vld [vmem:[%s2175] ss:$2 sm:$0xff]
        %s2177 = scalar_lea.vmem [#allocation2], 186
        %v2178 = vld [vmem:[%s2177] ss:$2 sm:$0xff]
        %s2179 = scalar_lea.vmem [#allocation2], 171
        %v2180 = vld [vmem:[%s2179] ss:$2 sm:$0xff]
        %s2181 = scalar_lea.vmem [#allocation2], 187
        %v2182 = vld [vmem:[%s2181] ss:$2 sm:$0xff]
        %v2183 = vmax.f32 %v2176, %v2180
        %v2184 = vmax.f32 %v2178, %v2182
        %v2185 = vmax.f32 %v2173, %v2183
        %v2186 = vmax.f32 %v2174, %v2184
        %2187 = vst [vmem:[#allocation3 + $0x37] sm:$0xff] %v2185
        %2188 = vst [vmem:[#allocation3 + $0x3f] sm:$0xff] %v2186
        %s2189 = scalar_lea.vmem [#allocation2], 204
        %v2190 = vld [vmem:[%s2189] ss:$2 sm:$0xff]
        %s2191 = scalar_lea.vmem [#allocation2], 220
        %v2192 = vld [vmem:[%s2191] ss:$2 sm:$0xff]
        %s2193 = scalar_lea.vmem [#allocation2], 205
        %v2194 = vld [vmem:[%s2193] ss:$2 sm:$0xff]
        %s2195 = scalar_lea.vmem [#allocation2], 221
        %v2196 = vld [vmem:[%s2195] ss:$2 sm:$0xff]
        %v2197 = vmax.f32 %v2190, %v2194
        %v2198 = vmax.f32 %v2192, %v2196
        %s2199 = scalar_lea.vmem [#allocation2], 238
        %v2200 = vld [vmem:[%s2199] ss:$2 sm:$0xff]
        %s2201 = scalar_lea.vmem [#allocation2], 254
        %v2202 = vld [vmem:[%s2201] ss:$2 sm:$0xff]
        %s2203 = scalar_lea.vmem [#allocation2], 239
        %v2204 = vld [vmem:[%s2203] ss:$2 sm:$0xff]
        %s2205 = scalar_lea.vmem [#allocation2], 255
        %v2206 = vld [vmem:[%s2205] ss:$2 sm:$0xff]
        %v2207 = vmax.f32 %v2200, %v2204
        %v2208 = vmax.f32 %v2202, %v2206
        %v2209 = vmax.f32 %v2197, %v2207
        %v2210 = vmax.f32 %v2198, %v2208
        %2211 = vst [vmem:[#allocation3 + $0x49] sm:$0xff] %v2209
        %2212 = vst [vmem:[#allocation3 + $0x51] sm:$0xff] %v2210
        %s2213 = scalar_lea.vmem [#allocation2], 272
        %v2214 = vld [vmem:[%s2213] ss:$2 sm:$0xff]
        %s2215 = scalar_lea.vmem [#allocation2], 288
        %v2216 = vld [vmem:[%s2215] ss:$2 sm:$0xff]
        %s2217 = scalar_lea.vmem [#allocation2], 273
        %v2218 = vld [vmem:[%s2217] ss:$2 sm:$0xff]
        %s2219 = scalar_lea.vmem [#allocation2], 289
        %v2220 = vld [vmem:[%s2219] ss:$2 sm:$0xff]
        %v2221 = vmax.f32 %v2214, %v2218
        %v2222 = vmax.f32 %v2216, %v2220
        %s2223 = scalar_lea.vmem [#allocation2], 306
        %v2224 = vld [vmem:[%s2223] ss:$2 sm:$0xff]
        %s2225 = scalar_lea.vmem [#allocation2], 322
        %v2226 = vld [vmem:[%s2225] ss:$2 sm:$0xff]
        %s2227 = scalar_lea.vmem [#allocation2], 307
        %v2228 = vld [vmem:[%s2227] ss:$2 sm:$0xff]
        %s2229 = scalar_lea.vmem [#allocation2], 323
        %v2230 = vld [vmem:[%s2229] ss:$2 sm:$0xff]
        %v2231 = vmax.f32 %v2224, %v2228
        %v2232 = vmax.f32 %v2226, %v2230
        %v2233 = vmax.f32 %v2221, %v2231
        %v2234 = vmax.f32 %v2222, %v2232
        %2235 = vst [vmem:[#allocation3 + $0x5b] sm:$0xff] %v2233
        %2236 = vst [vmem:[#allocation3 + $0x63] sm:$0xff] %v2234
        %s2237 = scalar_lea.vmem [#allocation2], 340
        %v2238 = vld [vmem:[%s2237] ss:$2 sm:$0xff]
        %s2239 = scalar_lea.vmem [#allocation2], 356
        %v2240 = vld [vmem:[%s2239] ss:$2 sm:$0xff]
        %s2241 = scalar_lea.vmem [#allocation2], 341
        %v2242 = vld [vmem:[%s2241] ss:$2 sm:$0xff]
        %s2243 = scalar_lea.vmem [#allocation2], 357
        %v2244 = vld [vmem:[%s2243] ss:$2 sm:$0xff]
        %v2245 = vmax.f32 %v2238, %v2242
        %v2246 = vmax.f32 %v2240, %v2244
        %s2247 = scalar_lea.vmem [#allocation2], 374
        %v2248 = vld [vmem:[%s2247] ss:$2 sm:$0xff]
        %s2249 = scalar_lea.vmem [#allocation2], 390
        %v2250 = vld [vmem:[%s2249] ss:$2 sm:$0xff]
        %s2251 = scalar_lea.vmem [#allocation2], 375
        %v2252 = vld [vmem:[%s2251] ss:$2 sm:$0xff]
        %s2253 = scalar_lea.vmem [#allocation2], 391
        %v2254 = vld [vmem:[%s2253] ss:$2 sm:$0xff]
        %v2255 = vmax.f32 %v2248, %v2252
        %v2256 = vmax.f32 %v2250, %v2254
        %v2257 = vmax.f32 %v2245, %v2255
        %v2258 = vmax.f32 %v2246, %v2256
        %2259 = vst [vmem:[#allocation3 + $0x6d] sm:$0xff] %v2257
        %2260 = vst [vmem:[#allocation3 + $0x75] sm:$0xff] %v2258
        %s2261 = scalar_lea.vmem [#allocation2], 408
        %v2262 = vld [vmem:[%s2261] ss:$2 sm:$0xff]
        %s2263 = scalar_lea.vmem [#allocation2], 424
        %v2264 = vld [vmem:[%s2263] ss:$2 sm:$0xff]
        %s2265 = scalar_lea.vmem [#allocation2], 409
        %v2266 = vld [vmem:[%s2265] ss:$2 sm:$0xff]
        %s2267 = scalar_lea.vmem [#allocation2], 425
        %v2268 = vld [vmem:[%s2267] ss:$2 sm:$0xff]
        %v2269 = vmax.f32 %v2262, %v2266
        %v2270 = vmax.f32 %v2264, %v2268
        %s2271 = scalar_lea.vmem [#allocation2], 442
        %v2272 = vld [vmem:[%s2271] ss:$2 sm:$0xff]
        %s2273 = scalar_lea.vmem [#allocation2], 458
        %v2274 = vld [vmem:[%s2273] ss:$2 sm:$0xff]
        %s2275 = scalar_lea.vmem [#allocation2], 443
        %v2276 = vld [vmem:[%s2275] ss:$2 sm:$0xff]
        %s2277 = scalar_lea.vmem [#allocation2], 459
        %v2278 = vld [vmem:[%s2277] ss:$2 sm:$0xff]
        %v2279 = vmax.f32 %v2272, %v2276
        %v2280 = vmax.f32 %v2274, %v2278
        %v2281 = vmax.f32 %v2269, %v2279
        %v2282 = vmax.f32 %v2270, %v2280
        %2283 = vst [vmem:[#allocation3 + $0x7f] sm:$0xff] %v2281
        %2284 = vst [vmem:[#allocation3 + $0x87] sm:$0xff] %v2282
        %s2285 = scalar_lea.vmem [#allocation2], 476
        %v2286 = vld [vmem:[%s2285] ss:$2 sm:$0xff]
        %s2287 = scalar_lea.vmem [#allocation2], 492
        %v2288 = vld [vmem:[%s2287] ss:$2 sm:$0xff]
        %s2289 = scalar_lea.vmem [#allocation2], 477
        %v2290 = vld [vmem:[%s2289] ss:$2 sm:$0xff]
        %s2291 = scalar_lea.vmem [#allocation2], 493
        %v2292 = vld [vmem:[%s2291] ss:$2 sm:$0xff]
        %v2293 = vmax.f32 %v2286, %v2290
        %v2294 = vmax.f32 %v2288, %v2292
        %s2295 = scalar_lea.vmem [#allocation2], 510
        %v2296 = vld [vmem:[%s2295] ss:$2 sm:$0xff]
        %s2297 = scalar_lea.vmem [#allocation2], 526
        %v2298 = vld [vmem:[%s2297] ss:$2 sm:$0xff]
        %s2299 = scalar_lea.vmem [#allocation2], 511
        %v2300 = vld [vmem:[%s2299] ss:$2 sm:$0xff]
        %s2301 = scalar_lea.vmem [#allocation2], 527
        %v2302 = vld [vmem:[%s2301] ss:$2 sm:$0xff]
        %v2303 = vmax.f32 %v2296, %v2300
        %v2304 = vmax.f32 %v2298, %v2302
        %v2305 = vmax.f32 %v2293, %v2303
        %v2306 = vmax.f32 %v2294, %v2304
        %2307 = vst [vmem:[#allocation3 + $0x91] sm:$0xff] %v2305
        %2308 = vst [vmem:[#allocation3 + $0x99] sm:$0xff] %v2306
        %s2309 = scalar_lea.vmem [#allocation2], 544
        %v2310 = vld [vmem:[%s2309] ss:$2 sm:$0xff]
        %s2311 = scalar_lea.vmem [#allocation2], 560
        %v2312 = vld [vmem:[%s2311] ss:$2 sm:$0xff]
        %s2313 = scalar_lea.vmem [#allocation2], 545
        %v2314 = vld [vmem:[%s2313] ss:$2 sm:$0xff]
        %s2315 = scalar_lea.vmem [#allocation2], 561
        %v2316 = vld [vmem:[%s2315] ss:$2 sm:$0xff]
        %v2317 = vmax.f32 %v2310, %v2314
        %v2318 = vmax.f32 %v2312, %v2316
        %s2319 = scalar_lea.vmem [#allocation2], 578
        %v2320 = vld [vmem:[%s2319] ss:$2 sm:$0xff]
        %s2321 = scalar_lea.vmem [#allocation2], 594
        %v2322 = vld [vmem:[%s2321] ss:$2 sm:$0xff]
        %s2323 = scalar_lea.vmem [#allocation2], 579
        %v2324 = vld [vmem:[%s2323] ss:$2 sm:$0xff]
        %s2325 = scalar_lea.vmem [#allocation2], 595
        %v2326 = vld [vmem:[%s2325] ss:$2 sm:$0xff]
        %v2327 = vmax.f32 %v2320, %v2324
        %v2328 = vmax.f32 %v2322, %v2326
        %v2329 = vmax.f32 %v2317, %v2327
        %v2330 = vmax.f32 %v2318, %v2328
        %2331 = vst [vmem:[#allocation3 + $0xa3] sm:$0xff] %v2329
        %2332 = vst [vmem:[#allocation3 + $0xab] sm:$0xff] %v2330
        %s2333 = scalar_lea.vmem [#allocation2], 612
        %v2334 = vld [vmem:[%s2333] ss:$2 sm:$0xff]
        %s2335 = scalar_lea.vmem [#allocation2], 628
        %v2336 = vld [vmem:[%s2335] ss:$2 sm:$0xff]
        %s2337 = scalar_lea.vmem [#allocation2], 613
        %v2338 = vld [vmem:[%s2337] ss:$2 sm:$0xff]
        %s2339 = scalar_lea.vmem [#allocation2], 629
        %v2340 = vld [vmem:[%s2339] ss:$2 sm:$0xff]
        %v2341 = vmax.f32 %v2334, %v2338
        %v2342 = vmax.f32 %v2336, %v2340
        %s2343 = scalar_lea.vmem [#allocation2], 646
        %v2344 = vld [vmem:[%s2343] ss:$2 sm:$0xff]
        %s2345 = scalar_lea.vmem [#allocation2], 662
        %v2346 = vld [vmem:[%s2345] ss:$2 sm:$0xff]
        %s2347 = scalar_lea.vmem [#allocation2], 647
        %v2348 = vld [vmem:[%s2347] ss:$2 sm:$0xff]
        %s2349 = scalar_lea.vmem [#allocation2], 663
        %v2350 = vld [vmem:[%s2349] ss:$2 sm:$0xff]
        %v2351 = vmax.f32 %v2344, %v2348
        %v2352 = vmax.f32 %v2346, %v2350
        %v2353 = vmax.f32 %v2341, %v2351
        %v2354 = vmax.f32 %v2342, %v2352
        %2355 = vst [vmem:[#allocation3 + $0xb5] sm:$0xff] %v2353
        %2356 = vst [vmem:[#allocation3 + $0xbd] sm:$0xff] %v2354
        %s2357 = scalar_lea.vmem [#allocation2], 680
        %v2358 = vld [vmem:[%s2357] ss:$2 sm:$0xff]
        %s2359 = scalar_lea.vmem [#allocation2], 696
        %v2360 = vld [vmem:[%s2359] ss:$2 sm:$0xff]
        %s2361 = scalar_lea.vmem [#allocation2], 681
        %v2362 = vld [vmem:[%s2361] ss:$2 sm:$0xff]
        %s2363 = scalar_lea.vmem [#allocation2], 697
        %v2364 = vld [vmem:[%s2363] ss:$2 sm:$0xff]
        %v2365 = vmax.f32 %v2358, %v2362
        %v2366 = vmax.f32 %v2360, %v2364
        %s2367 = scalar_lea.vmem [#allocation2], 714
        %v2368 = vld [vmem:[%s2367] ss:$2 sm:$0xff]
        %s2369 = scalar_lea.vmem [#allocation2], 730
        %v2370 = vld [vmem:[%s2369] ss:$2 sm:$0xff]
        %s2371 = scalar_lea.vmem [#allocation2], 715
        %v2372 = vld [vmem:[%s2371] ss:$2 sm:$0xff]
        %s2373 = scalar_lea.vmem [#allocation2], 731
        %v2374 = vld [vmem:[%s2373] ss:$2 sm:$0xff]
        %v2375 = vmax.f32 %v2368, %v2372
        %v2376 = vmax.f32 %v2370, %v2374
        %v2377 = vmax.f32 %v2365, %v2375
        %v2378 = vmax.f32 %v2366, %v2376
        %2379 = vst [vmem:[#allocation3 + $0xc7] sm:$0xff] %v2377
        %2380 = vst [vmem:[#allocation3 + $0xcf] sm:$0xff] %v2378
        %s2381 = scalar_lea.vmem [#allocation2], 748
        %v2382 = vld [vmem:[%s2381] ss:$2 sm:$0xff]
        %s2383 = scalar_lea.vmem [#allocation2], 764
        %v2384 = vld [vmem:[%s2383] ss:$2 sm:$0xff]
        %s2385 = scalar_lea.vmem [#allocation2], 749
        %v2386 = vld [vmem:[%s2385] ss:$2 sm:$0xff]
        %s2387 = scalar_lea.vmem [#allocation2], 765
        %v2388 = vld [vmem:[%s2387] ss:$2 sm:$0xff]
        %v2389 = vmax.f32 %v2382, %v2386
        %v2390 = vmax.f32 %v2384, %v2388
        %s2391 = scalar_lea.vmem [#allocation2], 782
        %v2392 = vld [vmem:[%s2391] ss:$2 sm:$0xff]
        %s2393 = scalar_lea.vmem [#allocation2], 798
        %v2394 = vld [vmem:[%s2393] ss:$2 sm:$0xff]
        %s2395 = scalar_lea.vmem [#allocation2], 783
        %v2396 = vld [vmem:[%s2395] ss:$2 sm:$0xff]
        %s2397 = scalar_lea.vmem [#allocation2], 799
        %v2398 = vld [vmem:[%s2397] ss:$2 sm:$0xff]
        %v2399 = vmax.f32 %v2392, %v2396
        %v2400 = vmax.f32 %v2394, %v2398
        %v2401 = vmax.f32 %v2389, %v2399
        %v2402 = vmax.f32 %v2390, %v2400
        %2403 = vst [vmem:[#allocation3 + $0xd9] sm:$0xff] %v2401
        %2404 = vst [vmem:[#allocation3 + $0xe1] sm:$0xff] %v2402
        %s2405 = scalar_lea.vmem [#allocation2], 816
        %v2406 = vld [vmem:[%s2405] ss:$2 sm:$0xff]
        %s2407 = scalar_lea.vmem [#allocation2], 832
        %v2408 = vld [vmem:[%s2407] ss:$2 sm:$0xff]
        %s2409 = scalar_lea.vmem [#allocation2], 817
        %v2410 = vld [vmem:[%s2409] ss:$2 sm:$0xff]
        %s2411 = scalar_lea.vmem [#allocation2], 833
        %v2412 = vld [vmem:[%s2411] ss:$2 sm:$0xff]
        %v2413 = vmax.f32 %v2406, %v2410
        %v2414 = vmax.f32 %v2408, %v2412
        %s2415 = scalar_lea.vmem [#allocation2], 850
        %v2416 = vld [vmem:[%s2415] ss:$2 sm:$0xff]
        %s2417 = scalar_lea.vmem [#allocation2], 866
        %v2418 = vld [vmem:[%s2417] ss:$2 sm:$0xff]
        %s2419 = scalar_lea.vmem [#allocation2], 851
        %v2420 = vld [vmem:[%s2419] ss:$2 sm:$0xff]
        %s2421 = scalar_lea.vmem [#allocation2], 867
        %v2422 = vld [vmem:[%s2421] ss:$2 sm:$0xff]
        %v2423 = vmax.f32 %v2416, %v2420
        %v2424 = vmax.f32 %v2418, %v2422
        %v2425 = vmax.f32 %v2413, %v2423
        %v2426 = vmax.f32 %v2414, %v2424
        %2427 = vst [vmem:[#allocation3 + $0xeb] sm:$0xff] %v2425
        %2428 = vst [vmem:[#allocation3 + $0xf3] sm:$0xff] %v2426
        %s2429 = scalar_lea.vmem [#allocation2], 884
        %v2430 = vld [vmem:[%s2429] ss:$2 sm:$0xff]
        %s2431 = scalar_lea.vmem [#allocation2], 900
        %v2432 = vld [vmem:[%s2431] ss:$2 sm:$0xff]
        %s2433 = scalar_lea.vmem [#allocation2], 885
        %v2434 = vld [vmem:[%s2433] ss:$2 sm:$0xff]
        %s2435 = scalar_lea.vmem [#allocation2], 901
        %v2436 = vld [vmem:[%s2435] ss:$2 sm:$0xff]
        %v2437 = vmax.f32 %v2430, %v2434
        %v2438 = vmax.f32 %v2432, %v2436
        %s2439 = scalar_lea.vmem [#allocation2], 918
        %v2440 = vld [vmem:[%s2439] ss:$2 sm:$0xff]
        %s2441 = scalar_lea.vmem [#allocation2], 934
        %v2442 = vld [vmem:[%s2441] ss:$2 sm:$0xff]
        %s2443 = scalar_lea.vmem [#allocation2], 919
        %v2444 = vld [vmem:[%s2443] ss:$2 sm:$0xff]
        %s2445 = scalar_lea.vmem [#allocation2], 935
        %v2446 = vld [vmem:[%s2445] ss:$2 sm:$0xff]
        %v2447 = vmax.f32 %v2440, %v2444
        %v2448 = vmax.f32 %v2442, %v2446
        %v2449 = vmax.f32 %v2437, %v2447
        %v2450 = vmax.f32 %v2438, %v2448
        %2451 = vst [vmem:[#allocation3 + $0xfd] sm:$0xff] %v2449
        %2452 = vst [vmem:[#allocation3 + $0x105] sm:$0xff] %v2450
        %s2453 = scalar_lea.vmem [#allocation2], 952
        %v2454 = vld [vmem:[%s2453] ss:$2 sm:$0xff]
        %s2455 = scalar_lea.vmem [#allocation2], 968
        %v2456 = vld [vmem:[%s2455] ss:$2 sm:$0xff]
        %s2457 = scalar_lea.vmem [#allocation2], 953
        %v2458 = vld [vmem:[%s2457] ss:$2 sm:$0xff]
        %s2459 = scalar_lea.vmem [#allocation2], 969
        %v2460 = vld [vmem:[%s2459] ss:$2 sm:$0xff]
        %v2461 = vmax.f32 %v2454, %v2458
        %v2462 = vmax.f32 %v2456, %v2460
        %s2463 = scalar_lea.vmem [#allocation2], 986
        %v2464 = vld [vmem:[%s2463] ss:$2 sm:$0xff]
        %s2465 = scalar_lea.vmem [#allocation2], 1002
        %v2466 = vld [vmem:[%s2465] ss:$2 sm:$0xff]
        %s2467 = scalar_lea.vmem [#allocation2], 987
        %v2468 = vld [vmem:[%s2467] ss:$2 sm:$0xff]
        %s2469 = scalar_lea.vmem [#allocation2], 1003
        %v2470 = vld [vmem:[%s2469] ss:$2 sm:$0xff]
        %v2471 = vmax.f32 %v2464, %v2468
        %v2472 = vmax.f32 %v2466, %v2470
        %v2473 = vmax.f32 %v2461, %v2471
        %v2474 = vmax.f32 %v2462, %v2472
        %2475 = vst [vmem:[#allocation3 + $0x10f] sm:$0xff] %v2473
        %2476 = vst [vmem:[#allocation3 + $0x117] sm:$0xff] %v2474
        %s2477 = scalar_lea.vmem [#allocation2], 1020
        %v2478 = vld [vmem:[%s2477] ss:$2 sm:$0xff]
        %s2479 = scalar_lea.vmem [#allocation2], 1036
        %v2480 = vld [vmem:[%s2479] ss:$2 sm:$0xff]
        %s2481 = scalar_lea.vmem [#allocation2], 1021
        %v2482 = vld [vmem:[%s2481] ss:$2 sm:$0xff]
        %s2483 = scalar_lea.vmem [#allocation2], 1037
        %v2484 = vld [vmem:[%s2483] ss:$2 sm:$0xff]
        %v2485 = vmax.f32 %v2478, %v2482
        %v2486 = vmax.f32 %v2480, %v2484
        %s2487 = scalar_lea.vmem [#allocation2], 1054
        %v2488 = vld [vmem:[%s2487] ss:$2 sm:$0xff]
        %s2489 = scalar_lea.vmem [#allocation2], 1070
        %v2490 = vld [vmem:[%s2489] ss:$2 sm:$0xff]
        %s2491 = scalar_lea.vmem [#allocation2], 1055
        %v2492 = vld [vmem:[%s2491] ss:$2 sm:$0xff]
        %s2493 = scalar_lea.vmem [#allocation2], 1071
        %v2494 = vld [vmem:[%s2493] ss:$2 sm:$0xff]
        %v2495 = vmax.f32 %v2488, %v2492
        %v2496 = vmax.f32 %v2490, %v2494
        %v2497 = vmax.f32 %v2485, %v2495
        %v2498 = vmax.f32 %v2486, %v2496
        %2499 = vst [vmem:[#allocation3 + $0x121] sm:$0xff] %v2497
        %2500 = vst [vmem:[#allocation3 + $0x129] sm:$0xff] %v2498
        %v2501 = vld [vmem:[#allocation3] sm:$0xff]
        %v2502 = vld [vmem:[#allocation3 + $0x8] sm:$0xff]
        %v2503 = vld [vmem:[#allocation3 + $0x10] sm:$0xff]
        %v2504 = vld [vmem:[#allocation3 + $0x18] sm:$0xff]
        %v2505 = vld [vmem:[#allocation3 + $0x20] sm:$0xff]
        %v2506 = vld [vmem:[#allocation3 + $0x28] sm:$0xff]
        %v2507 = vld [vmem:[#allocation3 + $0x30] sm:$0xff]
        %v2508 = vld [vmem:[#allocation3 + $0x38] sm:$0xff]
        %v2509 = vld [vmem:[#allocation3 + $0x40] sm:$0xff]
        %v2510 = vld [vmem:[#allocation3 + $0x48] sm:$0xff]
        %v2511 = vld [vmem:[#allocation3 + $0x50] sm:$0xff]
        %v2512 = vld [vmem:[#allocation3 + $0x58] sm:$0xff]
        %v2513 = vld [vmem:[#allocation3 + $0x60] sm:$0xff]
        %v2514 = vld [vmem:[#allocation3 + $0x68] sm:$0xff]
        %v2515 = vld [vmem:[#allocation3 + $0x70] sm:$0xff]
        %v2516 = vld [vmem:[#allocation3 + $0x78] sm:$0xff]
        %v2517 = vld [vmem:[#allocation3 + $0x80] sm:$0xff]
        %v2518 = vld [vmem:[#allocation3 + $0x88] sm:$0xff]
        %v2519 = vld [vmem:[#allocation3 + $0x90] sm:$0xff]
        %v2520 = vld [vmem:[#allocation3 + $0x98] sm:$0xff]
        %v2521 = vld [vmem:[#allocation3 + $0xa0] sm:$0xff]
        %v2522 = vld [vmem:[#allocation3 + $0xa8] sm:$0xff]
        %v2523 = vld [vmem:[#allocation3 + $0xb0] sm:$0xff]
        %v2524 = vld [vmem:[#allocation3 + $0xb8] sm:$0xff]
        %v2525 = vld [vmem:[#allocation3 + $0xc0] sm:$0xff]
        %v2526 = vld [vmem:[#allocation3 + $0xc8] sm:$0xff]
        %v2527 = vld [vmem:[#allocation3 + $0xd0] sm:$0xff]
        %v2528 = vld [vmem:[#allocation3 + $0xd8] sm:$0xff]
        %v2529 = vld [vmem:[#allocation3 + $0xe0] sm:$0xff]
        %v2530 = vld [vmem:[#allocation3 + $0xe8] sm:$0xff]
        %v2531 = vld [vmem:[#allocation3 + $0xf0] sm:$0xff]
        %v2532 = vld [vmem:[#allocation3 + $0xf8] sm:$0xff]
        %v2533 = vld [vmem:[#allocation3 + $0x100] sm:$0xff]
        %v2534 = vld [vmem:[#allocation3 + $0x108] sm:$0xff]
        %v2535 = vld [vmem:[#allocation3 + $0x110] sm:$0xff]
        %v2536 = vld [vmem:[#allocation3 + $0x118] sm:$0xff]
        %v2537 = vld [vmem:[#allocation3 + $0x1] sm:$0xff]
        %v2538 = vld [vmem:[#allocation3 + $0x9] sm:$0xff]
        %v2539 = vld [vmem:[#allocation3 + $0x11] sm:$0xff]
        %v2540 = vld [vmem:[#allocation3 + $0x19] sm:$0xff]
        %v2541 = vld [vmem:[#allocation3 + $0x21] sm:$0xff]
        %v2542 = vld [vmem:[#allocation3 + $0x29] sm:$0xff]
        %v2543 = vld [vmem:[#allocation3 + $0x31] sm:$0xff]
        %v2544 = vld [vmem:[#allocation3 + $0x39] sm:$0xff]
        %v2545 = vld [vmem:[#allocation3 + $0x41] sm:$0xff]
        %v2546 = vld [vmem:[#allocation3 + $0x49] sm:$0xff]
        %v2547 = vld [vmem:[#allocation3 + $0x51] sm:$0xff]
        %v2548 = vld [vmem:[#allocation3 + $0x59] sm:$0xff]
        %v2549 = vld [vmem:[#allocation3 + $0x61] sm:$0xff]
        %v2550 = vld [vmem:[#allocation3 + $0x69] sm:$0xff]
        %v2551 = vld [vmem:[#allocation3 + $0x71] sm:$0xff]
        %v2552 = vld [vmem:[#allocation3 + $0x79] sm:$0xff]
        %v2553 = vld [vmem:[#allocation3 + $0x81] sm:$0xff]
        %v2554 = vld [vmem:[#allocation3 + $0x89] sm:$0xff]
        %v2555 = vld [vmem:[#allocation3 + $0x91] sm:$0xff]
        %v2556 = vld [vmem:[#allocation3 + $0x99] sm:$0xff]
        %v2557 = vld [vmem:[#allocation3 + $0xa1] sm:$0xff]
        %v2558 = vld [vmem:[#allocation3 + $0xa9] sm:$0xff]
        %v2559 = vld [vmem:[#allocation3 + $0xb1] sm:$0xff]
        %v2560 = vld [vmem:[#allocation3 + $0xb9] sm:$0xff]
        %v2561 = vld [vmem:[#allocation3 + $0xc1] sm:$0xff]
        %v2562 = vld [vmem:[#allocation3 + $0xc9] sm:$0xff]
        %v2563 = vld [vmem:[#allocation3 + $0xd1] sm:$0xff]
        %v2564 = vld [vmem:[#allocation3 + $0xd9] sm:$0xff]
        %v2565 = vld [vmem:[#allocation3 + $0xe1] sm:$0xff]
        %v2566 = vld [vmem:[#allocation3 + $0xe9] sm:$0xff]
        %v2567 = vld [vmem:[#allocation3 + $0xf1] sm:$0xff]
        %v2568 = vld [vmem:[#allocation3 + $0xf9] sm:$0xff]
        %v2569 = vld [vmem:[#allocation3 + $0x101] sm:$0xff]
        %v2570 = vld [vmem:[#allocation3 + $0x109] sm:$0xff]
        %v2571 = vld [vmem:[#allocation3 + $0x111] sm:$0xff]
        %v2572 = vld [vmem:[#allocation3 + $0x119] sm:$0xff]
        %v2573 = vld [vmem:[#allocation3 + $0x2] sm:$0xff]
        %v2574 = vld [vmem:[#allocation3 + $0xa] sm:$0xff]
        %v2575 = vld [vmem:[#allocation3 + $0x12] sm:$0xff]
        %v2576 = vld [vmem:[#allocation3 + $0x1a] sm:$0xff]
        %v2577 = vld [vmem:[#allocation3 + $0x22] sm:$0xff]
        %v2578 = vld [vmem:[#allocation3 + $0x2a] sm:$0xff]
        %v2579 = vld [vmem:[#allocation3 + $0x32] sm:$0xff]
        %v2580 = vld [vmem:[#allocation3 + $0x3a] sm:$0xff]
        %v2581 = vld [vmem:[#allocation3 + $0x42] sm:$0xff]
        %v2582 = vld [vmem:[#allocation3 + $0x4a] sm:$0xff]
        %v2583 = vld [vmem:[#allocation3 + $0x52] sm:$0xff]
        %v2584 = vld [vmem:[#allocation3 + $0x5a] sm:$0xff]
        %v2585 = vld [vmem:[#allocation3 + $0x62] sm:$0xff]
        %v2586 = vld [vmem:[#allocation3 + $0x6a] sm:$0xff]
        %v2587 = vld [vmem:[#allocation3 + $0x72] sm:$0xff]
        %v2588 = vld [vmem:[#allocation3 + $0x7a] sm:$0xff]
        %v2589 = vld [vmem:[#allocation3 + $0x82] sm:$0xff]
        %v2590 = vld [vmem:[#allocation3 + $0x8a] sm:$0xff]
        %v2591 = vld [vmem:[#allocation3 + $0x92] sm:$0xff]
        %v2592 = vld [vmem:[#allocation3 + $0x9a] sm:$0xff]
        %v2593 = vld [vmem:[#allocation3 + $0xa2] sm:$0xff]
        %v2594 = vld [vmem:[#allocation3 + $0xaa] sm:$0xff]
        %v2595 = vld [vmem:[#allocation3 + $0xb2] sm:$0xff]
        %v2596 = vld [vmem:[#allocation3 + $0xba] sm:$0xff]
        %v2597 = vld [vmem:[#allocation3 + $0xc2] sm:$0xff]
        %v2598 = vld [vmem:[#allocation3 + $0xca] sm:$0xff]
        %v2599 = vld [vmem:[#allocation3 + $0xd2] sm:$0xff]
        %v2600 = vld [vmem:[#allocation3 + $0xda] sm:$0xff]
        %v2601 = vld [vmem:[#allocation3 + $0xe2] sm:$0xff]
        %v2602 = vld [vmem:[#allocation3 + $0xea] sm:$0xff]
        %v2603 = vld [vmem:[#allocation3 + $0xf2] sm:$0xff]
        %v2604 = vld [vmem:[#allocation3 + $0xfa] sm:$0xff]
        %v2605 = vld [vmem:[#allocation3 + $0x102] sm:$0xff]
        %v2606 = vld [vmem:[#allocation3 + $0x10a] sm:$0xff]
        %v2607 = vld [vmem:[#allocation3 + $0x112] sm:$0xff]
        %v2608 = vld [vmem:[#allocation3 + $0x11a] sm:$0xff]
        %v2609 = vld [vmem:[#allocation3 + $0x122] sm:$0xff]
        %v2610 = vld [vmem:[#allocation3 + $0x12a] sm:$0xff]
        %v2611 = vld [vmem:[#allocation3 + $0x13] sm:$0xff]
        %v2612 = vld [vmem:[#allocation3 + $0x1b] sm:$0xff]
        %v2613 = vld [vmem:[#allocation3 + $0x23] sm:$0xff]
        %v2614 = vld [vmem:[#allocation3 + $0x2b] sm:$0xff]
        %v2615 = vld [vmem:[#allocation3 + $0x33] sm:$0xff]
        %v2616 = vld [vmem:[#allocation3 + $0x3b] sm:$0xff]
        %v2617 = vld [vmem:[#allocation3 + $0x43] sm:$0xff]
        %v2618 = vld [vmem:[#allocation3 + $0x4b] sm:$0xff]
        %v2619 = vld [vmem:[#allocation3 + $0x53] sm:$0xff]
        %v2620 = vld [vmem:[#allocation3 + $0x5b] sm:$0xff]
        %v2621 = vld [vmem:[#allocation3 + $0x63] sm:$0xff]
        %v2622 = vld [vmem:[#allocation3 + $0x6b] sm:$0xff]
        %v2623 = vld [vmem:[#allocation3 + $0x73] sm:$0xff]
        %v2624 = vld [vmem:[#allocation3 + $0x7b] sm:$0xff]
        %v2625 = vld [vmem:[#allocation3 + $0x83] sm:$0xff]
        %v2626 = vld [vmem:[#allocation3 + $0x8b] sm:$0xff]
        %v2627 = vld [vmem:[#allocation3 + $0x93] sm:$0xff]
        %v2628 = vld [vmem:[#allocation3 + $0x9b] sm:$0xff]
        %v2629 = vld [vmem:[#allocation3 + $0xa3] sm:$0xff]
        %v2630 = vld [vmem:[#allocation3 + $0xab] sm:$0xff]
        %v2631 = vld [vmem:[#allocation3 + $0xb3] sm:$0xff]
        %v2632 = vld [vmem:[#allocation3 + $0xbb] sm:$0xff]
        %v2633 = vld [vmem:[#allocation3 + $0xc3] sm:$0xff]
        %v2634 = vld [vmem:[#allocation3 + $0xcb] sm:$0xff]
        %v2635 = vld [vmem:[#allocation3 + $0xd3] sm:$0xff]
        %v2636 = vld [vmem:[#allocation3 + $0xdb] sm:$0xff]
        %v2637 = vld [vmem:[#allocation3 + $0xe3] sm:$0xff]
        %v2638 = vld [vmem:[#allocation3 + $0xeb] sm:$0xff]
        %v2639 = vld [vmem:[#allocation3 + $0xf3] sm:$0xff]
        %v2640 = vld [vmem:[#allocation3 + $0xfb] sm:$0xff]
        %v2641 = vld [vmem:[#allocation3 + $0x103] sm:$0xff]
        %v2642 = vld [vmem:[#allocation3 + $0x10b] sm:$0xff]
        %v2643 = vld [vmem:[#allocation3 + $0x113] sm:$0xff]
        %v2644 = vld [vmem:[#allocation3 + $0x11b] sm:$0xff]
        %v2645 = vld [vmem:[#allocation3 + $0x123] sm:$0xff]
        %v2646 = vld [vmem:[#allocation3 + $0x12b] sm:$0xff]
        %v2647 = vld [vmem:[#allocation3 + $0x14] sm:$0xff]
        %v2648 = vld [vmem:[#allocation3 + $0x1c] sm:$0xff]
        %v2649 = vld [vmem:[#allocation3 + $0x24] sm:$0xff]
        %v2650 = vld [vmem:[#allocation3 + $0x2c] sm:$0xff]
        %v2651 = vld [vmem:[#allocation3 + $0x34] sm:$0xff]
        %v2652 = vld [vmem:[#allocation3 + $0x3c] sm:$0xff]
        %v2653 = vld [vmem:[#allocation3 + $0x44] sm:$0xff]
        %v2654 = vld [vmem:[#allocation3 + $0x4c] sm:$0xff]
        %v2655 = vld [vmem:[#allocation3 + $0x54] sm:$0xff]
        %v2656 = vld [vmem:[#allocation3 + $0x5c] sm:$0xff]
        %v2657 = vld [vmem:[#allocation3 + $0x64] sm:$0xff]
        %v2658 = vld [vmem:[#allocation3 + $0x6c] sm:$0xff]
        %v2659 = vld [vmem:[#allocation3 + $0x74] sm:$0xff]
        %v2660 = vld [vmem:[#allocation3 + $0x7c] sm:$0xff]
        %v2661 = vld [vmem:[#allocation3 + $0x84] sm:$0xff]
        %v2662 = vld [vmem:[#allocation3 + $0x8c] sm:$0xff]
        %v2663 = vld [vmem:[#allocation3 + $0x94] sm:$0xff]
        %v2664 = vld [vmem:[#allocation3 + $0x9c] sm:$0xff]
        %v2665 = vld [vmem:[#allocation3 + $0xa4] sm:$0xff]
        %v2666 = vld [vmem:[#allocation3 + $0xac] sm:$0xff]
        %v2667 = vld [vmem:[#allocation3 + $0xb4] sm:$0xff]
        %v2668 = vld [vmem:[#allocation3 + $0xbc] sm:$0xff]
        %v2669 = vld [vmem:[#allocation3 + $0xc4] sm:$0xff]
        %v2670 = vld [vmem:[#allocation3 + $0xcc] sm:$0xff]
        %v2671 = vld [vmem:[#allocation3 + $0xd4] sm:$0xff]
        %v2672 = vld [vmem:[#allocation3 + $0xdc] sm:$0xff]
        %v2673 = vld [vmem:[#allocation3 + $0xe4] sm:$0xff]
        %v2674 = vld [vmem:[#allocation3 + $0xec] sm:$0xff]
        %v2675 = vld [vmem:[#allocation3 + $0xf4] sm:$0xff]
        %v2676 = vld [vmem:[#allocation3 + $0xfc] sm:$0xff]
        %v2677 = vld [vmem:[#allocation3 + $0x104] sm:$0xff]
        %v2678 = vld [vmem:[#allocation3 + $0x10c] sm:$0xff]
        %v2679 = vld [vmem:[#allocation3 + $0x114] sm:$0xff]
        %v2680 = vld [vmem:[#allocation3 + $0x11c] sm:$0xff]
        %v2681 = vld [vmem:[#allocation3 + $0x124] sm:$0xff]
        %v2682 = vld [vmem:[#allocation3 + $0x12c] sm:$0xff]
        %v2683 = vld [vmem:[#allocation3 + $0x134] sm:$0xff]
        %v2684 = vld [vmem:[#allocation3 + $0x13c] sm:$0xff]
        %v2685 = vld [vmem:[#allocation3 + $0x25] sm:$0xff]
        %v2686 = vld [vmem:[#allocation3 + $0x2d] sm:$0xff]
        %v2687 = vld [vmem:[#allocation3 + $0x35] sm:$0xff]
        %v2688 = vld [vmem:[#allocation3 + $0x3d] sm:$0xff]
        %v2689 = vld [vmem:[#allocation3 + $0x45] sm:$0xff]
        %v2690 = vld [vmem:[#allocation3 + $0x4d] sm:$0xff]
        %v2691 = vld [vmem:[#allocation3 + $0x55] sm:$0xff]
        %v2692 = vld [vmem:[#allocation3 + $0x5d] sm:$0xff]
        %v2693 = vld [vmem:[#allocation3 + $0x65] sm:$0xff]
        %v2694 = vld [vmem:[#allocation3 + $0x6d] sm:$0xff]
        %v2695 = vld [vmem:[#allocation3 + $0x75] sm:$0xff]
        %v2696 = vld [vmem:[#allocation3 + $0x7d] sm:$0xff]
        %v2697 = vld [vmem:[#allocation3 + $0x85] sm:$0xff]
        %v2698 = vld [vmem:[#allocation3 + $0x8d] sm:$0xff]
        %v2699 = vld [vmem:[#allocation3 + $0x95] sm:$0xff]
        %v2700 = vld [vmem:[#allocation3 + $0x9d] sm:$0xff]
        %v2701 = vld [vmem:[#allocation3 + $0xa5] sm:$0xff]
        %v2702 = vld [vmem:[#allocation3 + $0xad] sm:$0xff]
        %v2703 = vld [vmem:[#allocation3 + $0xb5] sm:$0xff]
        %v2704 = vld [vmem:[#allocation3 + $0xbd] sm:$0xff]
        %v2705 = vld [vmem:[#allocation3 + $0xc5] sm:$0xff]
        %v2706 = vld [vmem:[#allocation3 + $0xcd] sm:$0xff]
        %v2707 = vld [vmem:[#allocation3 + $0xd5] sm:$0xff]
        %v2708 = vld [vmem:[#allocation3 + $0xdd] sm:$0xff]
        %v2709 = vld [vmem:[#allocation3 + $0xe5] sm:$0xff]
        %v2710 = vld [vmem:[#allocation3 + $0xed] sm:$0xff]
        %v2711 = vld [vmem:[#allocation3 + $0xf5] sm:$0xff]
        %v2712 = vld [vmem:[#allocation3 + $0xfd] sm:$0xff]
        %v2713 = vld [vmem:[#allocation3 + $0x105] sm:$0xff]
        %v2714 = vld [vmem:[#allocation3 + $0x10d] sm:$0xff]
        %v2715 = vld [vmem:[#allocation3 + $0x115] sm:$0xff]
        %v2716 = vld [vmem:[#allocation3 + $0x11d] sm:$0xff]
        %v2717 = vld [vmem:[#allocation3 + $0x125] sm:$0xff]
        %v2718 = vld [vmem:[#allocation3 + $0x12d] sm:$0xff]
        %v2719 = vld [vmem:[#allocation3 + $0x135] sm:$0xff]
        %v2720 = vld [vmem:[#allocation3 + $0x13d] sm:$0xff]
        %v2721 = vld [vmem:[#allocation3 + $0x26] sm:$0xff]
        %v2722 = vld [vmem:[#allocation3 + $0x2e] sm:$0xff]
        %v2723 = vld [vmem:[#allocation3 + $0x36] sm:$0xff]
        %v2724 = vld [vmem:[#allocation3 + $0x3e] sm:$0xff]
        %v2725 = vld [vmem:[#allocation3 + $0x46] sm:$0xff]
        %v2726 = vld [vmem:[#allocation3 + $0x4e] sm:$0xff]
        %v2727 = vld [vmem:[#allocation3 + $0x56] sm:$0xff]
        %v2728 = vld [vmem:[#allocation3 + $0x5e] sm:$0xff]
        %v2729 = vld [vmem:[#allocation3 + $0x66] sm:$0xff]
        %v2730 = vld [vmem:[#allocation3 + $0x6e] sm:$0xff]
        %v2731 = vld [vmem:[#allocation3 + $0x76] sm:$0xff]
        %v2732 = vld [vmem:[#allocation3 + $0x7e] sm:$0xff]
        %v2733 = vld [vmem:[#allocation3 + $0x86] sm:$0xff]
        %v2734 = vld [vmem:[#allocation3 + $0x8e] sm:$0xff]
        %v2735 = vld [vmem:[#allocation3 + $0x96] sm:$0xff]
        %v2736 = vld [vmem:[#allocation3 + $0x9e] sm:$0xff]
        %v2737 = vld [vmem:[#allocation3 + $0xa6] sm:$0xff]
        %v2738 = vld [vmem:[#allocation3 + $0xae] sm:$0xff]
        %v2739 = vld [vmem:[#allocation3 + $0xb6] sm:$0xff]
        %v2740 = vld [vmem:[#allocation3 + $0xbe] sm:$0xff]
        %v2741 = vld [vmem:[#allocation3 + $0xc6] sm:$0xff]
        %v2742 = vld [vmem:[#allocation3 + $0xce] sm:$0xff]
        %v2743 = vld [vmem:[#allocation3 + $0xd6] sm:$0xff]
        %v2744 = vld [vmem:[#allocation3 + $0xde] sm:$0xff]
        %v2745 = vld [vmem:[#allocation3 + $0xe6] sm:$0xff]
        %v2746 = vld [vmem:[#allocation3 + $0xee] sm:$0xff]
        %v2747 = vld [vmem:[#allocation3 + $0xf6] sm:$0xff]
        %v2748 = vld [vmem:[#allocation3 + $0xfe] sm:$0xff]
        %v2749 = vld [vmem:[#allocation3 + $0x106] sm:$0xff]
        %v2750 = vld [vmem:[#allocation3 + $0x10e] sm:$0xff]
        %v2751 = vld [vmem:[#allocation3 + $0x116] sm:$0xff]
        %v2752 = vld [vmem:[#allocation3 + $0x11e] sm:$0xff]
        %v2753 = vld [vmem:[#allocation3 + $0x126] sm:$0xff]
        %v2754 = vld [vmem:[#allocation3 + $0x12e] sm:$0xff]
        %v2755 = vld [vmem:[#allocation3 + $0x136] sm:$0xff]
        %v2756 = vld [vmem:[#allocation3 + $0x13e] sm:$0xff]
        %v2757 = vpack.c.bf16 %v2502, %v2501
        %v2758 = vpack.c.bf16 %v2538, %v2537
        %v2759 = vpack.c.bf16 %v2574, %v2573
        %v2760 = vpack.c.bf16 %v2576, %v2575
        %v2761 = vpack.c.bf16 %v2612, %v2611
        %v2762 = vpack.c.bf16 %v2648, %v2647
        %v2763 = vpack.c.bf16 %v2650, %v2649
        %v2764 = vpack.c.bf16 %v2686, %v2685
        %v2765 = vpack.c.bf16 %v2722, %v2721
        %v2766 = vpack.c.bf16 %v2504, %v2503
        %v2767 = vpack.c.bf16 %v2540, %v2539
        %v2768 = vpack.c.bf16 %v2578, %v2577
        %v2769 = vpack.c.bf16 %v2614, %v2613
        %v2770 = vpack.c.bf16 %v2652, %v2651
        %v2771 = vpack.c.bf16 %v2688, %v2687
        %v2772 = vpack.c.bf16 %v2724, %v2723
        %v2773 = vpack.c.bf16 %v2506, %v2505
        %v2774 = vpack.c.bf16 %v2542, %v2541
        %v2775 = vpack.c.bf16 %v2580, %v2579
        %v2776 = vpack.c.bf16 %v2616, %v2615
        %v2777 = vpack.c.bf16 %v2654, %v2653
        %v2778 = vpack.c.bf16 %v2690, %v2689
        %v2779 = vpack.c.bf16 %v2726, %v2725
        %v2780 = vpack.c.bf16 %v2508, %v2507
        %v2781 = vpack.c.bf16 %v2544, %v2543
        %v2782 = vpack.c.bf16 %v2582, %v2581
        %v2783 = vpack.c.bf16 %v2618, %v2617
        %v2784 = vpack.c.bf16 %v2656, %v2655
        %v2785 = vpack.c.bf16 %v2692, %v2691
        %v2786 = vpack.c.bf16 %v2728, %v2727
        %v2787 = vpack.c.bf16 %v2510, %v2509
        %v2788 = vpack.c.bf16 %v2546, %v2545
        %v2789 = vpack.c.bf16 %v2584, %v2583
        %v2790 = vpack.c.bf16 %v2620, %v2619
        %v2791 = vpack.c.bf16 %v2658, %v2657
        %v2792 = vpack.c.bf16 %v2694, %v2693
        %v2793 = vpack.c.bf16 %v2730, %v2729
        %v2794 = vpack.c.bf16 %v2512, %v2511
        %v2795 = vpack.c.bf16 %v2548, %v2547
        %v2796 = vpack.c.bf16 %v2586, %v2585
        %v2797 = vpack.c.bf16 %v2622, %v2621
        %v2798 = vpack.c.bf16 %v2660, %v2659
        %v2799 = vpack.c.bf16 %v2696, %v2695
        %v2800 = vpack.c.bf16 %v2732, %v2731
        %v2801 = vpack.c.bf16 %v2514, %v2513
        %v2802 = vpack.c.bf16 %v2550, %v2549
        %v2803 = vpack.c.bf16 %v2588, %v2587
        %v2804 = vpack.c.bf16 %v2624, %v2623
        %v2805 = vpack.c.bf16 %v2662, %v2661
        %v2806 = vpack.c.bf16 %v2698, %v2697
        %v2807 = vpack.c.bf16 %v2734, %v2733
        %v2808 = vpack.c.bf16 %v2516, %v2515
        %v2809 = vpack.c.bf16 %v2552, %v2551
        %v2810 = vpack.c.bf16 %v2590, %v2589
        %v2811 = vpack.c.bf16 %v2626, %v2625
        %v2812 = vpack.c.bf16 %v2664, %v2663
        %v2813 = vpack.c.bf16 %v2700, %v2699
        %v2814 = vpack.c.bf16 %v2736, %v2735
        %v2815 = vpack.c.bf16 %v2518, %v2517
        %v2816 = vpack.c.bf16 %v2554, %v2553
        %v2817 = vpack.c.bf16 %v2592, %v2591
        %v2818 = vpack.c.bf16 %v2628, %v2627
        %v2819 = vpack.c.bf16 %v2666, %v2665
        %v2820 = vpack.c.bf16 %v2702, %v2701
        %v2821 = vpack.c.bf16 %v2738, %v2737
        %v2822 = vpack.c.bf16 %v2520, %v2519
        %v2823 = vpack.c.bf16 %v2556, %v2555
        %v2824 = vpack.c.bf16 %v2594, %v2593
        %v2825 = vpack.c.bf16 %v2630, %v2629
        %v2826 = vpack.c.bf16 %v2668, %v2667
        %v2827 = vpack.c.bf16 %v2704, %v2703
        %v2828 = vpack.c.bf16 %v2740, %v2739
        %v2829 = vpack.c.bf16 %v2522, %v2521
        %v2830 = vpack.c.bf16 %v2558, %v2557
        %v2831 = vpack.c.bf16 %v2596, %v2595
        %v2832 = vpack.c.bf16 %v2632, %v2631
        %v2833 = vpack.c.bf16 %v2670, %v2669
        %v2834 = vpack.c.bf16 %v2706, %v2705
        %v2835 = vpack.c.bf16 %v2742, %v2741
        %v2836 = vpack.c.bf16 %v2524, %v2523
        %v2837 = vpack.c.bf16 %v2560, %v2559
        %v2838 = vpack.c.bf16 %v2598, %v2597
        %v2839 = vpack.c.bf16 %v2634, %v2633
        %v2840 = vpack.c.bf16 %v2672, %v2671
        %v2841 = vpack.c.bf16 %v2708, %v2707
        %v2842 = vpack.c.bf16 %v2744, %v2743
        %v2843 = vpack.c.bf16 %v2526, %v2525
        %v2844 = vpack.c.bf16 %v2562, %v2561
        %v2845 = vpack.c.bf16 %v2600, %v2599
        %v2846 = vpack.c.bf16 %v2636, %v2635
        %v2847 = vpack.c.bf16 %v2674, %v2673
        %v2848 = vpack.c.bf16 %v2710, %v2709
        %v2849 = vpack.c.bf16 %v2746, %v2745
        %v2850 = vpack.c.bf16 %v2528, %v2527
        %v2851 = vpack.c.bf16 %v2564, %v2563
        %v2852 = vpack.c.bf16 %v2602, %v2601
        %v2853 = vpack.c.bf16 %v2638, %v2637
        %v2854 = vpack.c.bf16 %v2676, %v2675
        %v2855 = vpack.c.bf16 %v2712, %v2711
        %v2856 = vpack.c.bf16 %v2748, %v2747
        %v2857 = vpack.c.bf16 %v2530, %v2529
        %v2858 = vpack.c.bf16 %v2566, %v2565
        %v2859 = vpack.c.bf16 %v2604, %v2603
        %v2860 = vpack.c.bf16 %v2640, %v2639
        %v2861 = vpack.c.bf16 %v2678, %v2677
        %v2862 = vpack.c.bf16 %v2714, %v2713
        %v2863 = vpack.c.bf16 %v2750, %v2749
        %v2864 = vpack.c.bf16 %v2532, %v2531
        %v2865 = vpack.c.bf16 %v2568, %v2567
        %v2866 = vpack.c.bf16 %v2606, %v2605
        %v2867 = vpack.c.bf16 %v2642, %v2641
        %v2868 = vpack.c.bf16 %v2680, %v2679
        %v2869 = vpack.c.bf16 %v2716, %v2715
        %v2870 = vpack.c.bf16 %v2752, %v2751
        %v2871 = vpack.c.bf16 %v2534, %v2533
        %v2872 = vpack.c.bf16 %v2570, %v2569
        %v2873 = vpack.c.bf16 %v2608, %v2607
        %v2874 = vpack.c.bf16 %v2644, %v2643
        %v2875 = vpack.c.bf16 %v2682, %v2681
        %v2876 = vpack.c.bf16 %v2718, %v2717
        %v2877 = vpack.c.bf16 %v2754, %v2753
        %v2878 = vpack.c.bf16 %v2536, %v2535
        %v2879 = vpack.c.bf16 %v2572, %v2571
        %v2880 = vpack.c.bf16 %v2610, %v2609
        %v2881 = vpack.c.bf16 %v2646, %v2645
        %v2882 = vpack.c.bf16 %v2684, %v2683
        %v2883 = vpack.c.bf16 %v2720, %v2719
        %v2884 = vpack.c.bf16 %v2756, %v2755
        %v2885 = vld [vmem:[%s3] sm:$0xf]
        %v2886 = vld [vmem:[%s3 + $0x4] sm:$0xf]
        %v2887 = vld [vmem:[%s3 + $0x8] sm:$0xf]
        %v2888 = vld [vmem:[%s3 + $0xc] sm:$0xf]
        %v2889 = vld [vmem:[%s3 + $0x10] sm:$0xf]
        %v2890 = vld [vmem:[%s3 + $0x14] sm:$0xf]
        %v2891 = vld [vmem:[%s3 + $0x18] sm:$0xf]
        %v2892 = vld [vmem:[%s3 + $0x1c] sm:$0xf]
        %v2893 = vld [vmem:[%s3 + $0x20] sm:$0xf]
        %v2894 = vld [vmem:[%s3 + $0x24] sm:$0xf]
        %v2895 = vld [vmem:[%s3 + $0x28] sm:$0xf]
        %v2896 = vld [vmem:[%s3 + $0x2c] sm:$0xf]
        %v2897 = vld [vmem:[%s3 + $0x30] sm:$0xf]
        %v2898 = vld [vmem:[%s3 + $0x34] sm:$0xf]
        %v2899 = vld [vmem:[%s3 + $0x38] sm:$0xf]
        %v2900 = vld [vmem:[%s3 + $0x3c] sm:$0xf]
        %v2901 = vld [vmem:[%s3 + $0x40] sm:$0xf]
        %v2902 = vld [vmem:[%s3 + $0x44] sm:$0xf]
        %v2903 = vld [vmem:[%s3 + $0x48] sm:$0xf]
        %v2904 = vld [vmem:[%s3 + $0x4c] sm:$0xf]
        %v2905 = vld [vmem:[%s3 + $0x50] sm:$0xf]
        %v2906 = vld [vmem:[%s3 + $0x54] sm:$0xf]
        %v2907 = vld [vmem:[%s3 + $0x58] sm:$0xf]
        %v2908 = vld [vmem:[%s3 + $0x5c] sm:$0xf]
        %v2909 = vld [vmem:[%s3 + $0x60] sm:$0xf]
        %v2910 = vld [vmem:[%s3 + $0x64] sm:$0xf]
        %v2911 = vld [vmem:[%s3 + $0x68] sm:$0xf]
        %v2912 = vld [vmem:[%s3 + $0x6c] sm:$0xf]
        %v2913 = vld [vmem:[%s3 + $0x70] sm:$0xf]
        %v2914 = vld [vmem:[%s3 + $0x74] sm:$0xf]
        %v2915 = vld [vmem:[%s3 + $0x78] sm:$0xf]
        %v2916 = vld [vmem:[%s3 + $0x7c] sm:$0xf]
        %v2917 = vld [vmem:[%s3 + $0x80] sm:$0xf]
        %v2918 = vld [vmem:[%s3 + $0x84] sm:$0xf]
        %v2919 = vld [vmem:[%s3 + $0x88] sm:$0xf]
        %v2920 = vld [vmem:[%s3 + $0x8c] sm:$0xf]
        %v2921 = vld [vmem:[%s3 + $0x90] sm:$0xf]
        %v2922 = vld [vmem:[%s3 + $0x94] sm:$0xf]
        %v2923 = vld [vmem:[%s3 + $0x98] sm:$0xf]
        %v2924 = vld [vmem:[%s3 + $0x9c] sm:$0xf]
        %v2925 = vld [vmem:[%s3 + $0xa0] sm:$0xf]
        %v2926 = vld [vmem:[%s3 + $0xa4] sm:$0xf]
        %v2927 = vld [vmem:[%s3 + $0xa8] sm:$0xf]
        %v2928 = vld [vmem:[%s3 + $0xac] sm:$0xf]
        %v2929 = vld [vmem:[%s3 + $0xb0] sm:$0xf]
        %v2930 = vld [vmem:[%s3 + $0xb4] sm:$0xf]
        %v2931 = vld [vmem:[%s3 + $0xb8] sm:$0xf]
        %v2932 = vld [vmem:[%s3 + $0xbc] sm:$0xf]
        %v2933 = vld [vmem:[%s3 + $0xc0] sm:$0xf]
        %v2934 = vld [vmem:[%s3 + $0xc4] sm:$0xf]
        %v2935 = vld [vmem:[%s3 + $0xc8] sm:$0xf]
        %v2936 = vld [vmem:[%s3 + $0xcc] sm:$0xf]
        %v2937 = vld [vmem:[%s3 + $0xd0] sm:$0xf]
        %v2938 = vld [vmem:[%s3 + $0xd4] sm:$0xf]
        %v2939 = vld [vmem:[%s3 + $0xd8] sm:$0xf]
        %v2940 = vld [vmem:[%s3 + $0xdc] sm:$0xf]
        %v2941 = vld [vmem:[%s3 + $0xe0] sm:$0xf]
        %v2942 = vld [vmem:[%s3 + $0xe4] sm:$0xf]
        %v2943 = vld [vmem:[%s3 + $0xe8] sm:$0xf]
        %v2944 = vld [vmem:[%s3 + $0xec] sm:$0xf]
        %v2945 = vld [vmem:[%s3 + $0xf0] sm:$0xf]
        %v2946 = vld [vmem:[%s3 + $0xf4] sm:$0xf]
        %v2947 = vld [vmem:[%s3 + $0xf8] sm:$0xf]
        %v2948 = vld [vmem:[%s3 + $0xfc] sm:$0xf]
        %v2949 = vld [vmem:[%s3 + $0x100] sm:$0xf]
        %v2950 = vld [vmem:[%s3 + $0x104] sm:$0xf]
        %v2951 = vld [vmem:[%s3 + $0x108] sm:$0xf]
        %v2952 = vld [vmem:[%s3 + $0x10c] sm:$0xf]
        %v2953 = vld [vmem:[%s3 + $0x110] sm:$0xf]
        %v2954 = vld [vmem:[%s3 + $0x114] sm:$0xf]
        %v2955 = vld [vmem:[%s3 + $0x118] sm:$0xf]
        %v2956 = vld [vmem:[%s3 + $0x11c] sm:$0xf]
        %v2957 = vld [vmem:[%s3 + $0x120] sm:$0xf]
        %v2958 = vld [vmem:[%s3 + $0x124] sm:$0xf]
        %v2959 = vld [vmem:[%s3 + $0x128] sm:$0xf]
        %v2960 = vld [vmem:[%s3 + $0x12c] sm:$0xf]
        %v2961 = vld [vmem:[%s3 + $0x130] sm:$0xf]
        %v2962 = vld [vmem:[%s3 + $0x134] sm:$0xf]
        %v2963 = vld [vmem:[%s3 + $0x138] sm:$0xf]
        %v2964 = vld [vmem:[%s3 + $0x13c] sm:$0xf]
        %v2965 = vld [vmem:[%s3 + $0x140] sm:$0xf]
        %v2966 = vld [vmem:[%s3 + $0x144] sm:$0xf]
        %v2967 = vld [vmem:[%s3 + $0x148] sm:$0xf]
        %v2968 = vld [vmem:[%s3 + $0x14c] sm:$0xf]
        %v2969 = vld [vmem:[%s3 + $0x150] sm:$0xf]
        %v2970 = vld [vmem:[%s3 + $0x154] sm:$0xf]
        %v2971 = vld [vmem:[%s3 + $0x158] sm:$0xf]
        %v2972 = vld [vmem:[%s3 + $0x15c] sm:$0xf]
        %v2973 = vld [vmem:[%s3 + $0x160] sm:$0xf]
        %v2974 = vld [vmem:[%s3 + $0x164] sm:$0xf]
        %v2975 = vld [vmem:[%s3 + $0x168] sm:$0xf]
        %v2976 = vld [vmem:[%s3 + $0x16c] sm:$0xf]
        %v2977 = vld [vmem:[%s3 + $0x170] sm:$0xf]
        %v2978 = vld [vmem:[%s3 + $0x174] sm:$0xf]
        %v2979 = vld [vmem:[%s3 + $0x178] sm:$0xf]
        %v2980 = vld [vmem:[%s3 + $0x17c] sm:$0xf]
        %v2981 = vld [vmem:[%s3 + $0x180] sm:$0xf]
        %v2982 = vld [vmem:[%s3 + $0x184] sm:$0xf]
        %v2983 = vld [vmem:[%s3 + $0x188] sm:$0xf]
        %v2984 = vld [vmem:[%s3 + $0x18c] sm:$0xf]
        %v2985 = vld [vmem:[%s3 + $0x190] sm:$0xf]
        %v2986 = vld [vmem:[%s3 + $0x194] sm:$0xf]
        %v2987 = vld [vmem:[%s3 + $0x198] sm:$0xf]
        %v2988 = vld [vmem:[%s3 + $0x19c] sm:$0xf]
        %v2989 = vld [vmem:[%s3 + $0x1a0] sm:$0xf]
        %v2990 = vld [vmem:[%s3 + $0x1a4] sm:$0xf]
        %v2991 = vld [vmem:[%s3 + $0x1a8] sm:$0xf]
        %v2992 = vld [vmem:[%s3 + $0x1ac] sm:$0xf]
        %v2993 = vld [vmem:[%s3 + $0x1b0] sm:$0xf]
        %v2994 = vld [vmem:[%s3 + $0x1b4] sm:$0xf]
        %v2995 = vld [vmem:[%s3 + $0x1b8] sm:$0xf]
        %v2996 = vld [vmem:[%s3 + $0x1bc] sm:$0xf]
        %v2997 = vld [vmem:[%s3 + $0x1c0] sm:$0xf]
        %v2998 = vld [vmem:[%s3 + $0x1c4] sm:$0xf]
        %v2999 = vld [vmem:[%s3 + $0x1c8] sm:$0xf]
        %v3000 = vld [vmem:[%s3 + $0x1cc] sm:$0xf]
        %v3001 = vld [vmem:[%s3 + $0x1d0] sm:$0xf]
        %v3002 = vld [vmem:[%s3 + $0x1d4] sm:$0xf]
        %v3003 = vld [vmem:[%s3 + $0x1d8] sm:$0xf]
        %v3004 = vld [vmem:[%s3 + $0x1dc] sm:$0xf]
        %v3005 = vld [vmem:[%s3 + $0x1e0] sm:$0xf]
        %v3006 = vld [vmem:[%s3 + $0x1e4] sm:$0xf]
        %v3007 = vld [vmem:[%s3 + $0x1e8] sm:$0xf]
        %v3008 = vld [vmem:[%s3 + $0x1ec] sm:$0xf]
        %v3009 = vld [vmem:[%s3 + $0x1f0] sm:$0xf]
        %v3010 = vld [vmem:[%s3 + $0x1f4] sm:$0xf]
        %v3011 = vld [vmem:[%s3 + $0x1f8] sm:$0xf]
        %v3012 = vld [vmem:[%s3 + $0x1fc] sm:$0xf]
        %v3013 = vld [vmem:[%s3 + $0x200] sm:$0xf]
        %v3014 = vld [vmem:[%s3 + $0x204] sm:$0xf]
        %v3015 = vld [vmem:[%s3 + $0x208] sm:$0xf]
        %v3016 = vld [vmem:[%s3 + $0x20c] sm:$0xf]
        %v3017 = vld [vmem:[%s3 + $0x210] sm:$0xf]
        %v3018 = vld [vmem:[%s3 + $0x214] sm:$0xf]
        %v3019 = vld [vmem:[%s3 + $0x218] sm:$0xf]
        %v3020 = vld [vmem:[%s3 + $0x21c] sm:$0xf]
        %v3021 = vld [vmem:[%s3 + $0x220] sm:$0xf]
        %v3022 = vld [vmem:[%s3 + $0x224] sm:$0xf]
        %v3023 = vld [vmem:[%s3 + $0x228] sm:$0xf]
        %v3024 = vld [vmem:[%s3 + $0x22c] sm:$0xf]
        %v3025 = vld [vmem:[%s3 + $0x230] sm:$0xf]
        %v3026 = vld [vmem:[%s3 + $0x234] sm:$0xf]
        %v3027 = vld [vmem:[%s3 + $0x238] sm:$0xf]
        %v3028 = vld [vmem:[%s3 + $0x23c] sm:$0xf]
        %v3029 = vld [vmem:[%s4] sm:$0x1]
        %v3031 = vlaneseq
        %v3032 = vshrl.u32 %v3031, 7
        %v3033 = vsub.s32 0, %v3032
        %v3034 = vrot.slane %v3029, %v3033
        %v3180 = vunpack.c.l.b16 %v2885
        %v3181 = vunpack.c.l.b16 %v2886
        %v3182 = vunpack.c.l.b16 %v2887
        %v3183 = vunpack.c.l.b16 %v2888
        %v3184 = vunpack.c.l.b16 %v2889
        %v3185 = vunpack.c.l.b16 %v2890
        %v3186 = vunpack.c.l.b16 %v2891
        %v3187 = vunpack.c.l.b16 %v2892
        %v3188 = vunpack.c.l.b16 %v2893
        %v3189 = vunpack.c.l.b16 %v2894
        %v3190 = vunpack.c.l.b16 %v2895
        %v3191 = vunpack.c.l.b16 %v2896
        %v3192 = vunpack.c.l.b16 %v2897
        %v3193 = vunpack.c.l.b16 %v2898
        %v3194 = vunpack.c.l.b16 %v2899
        %v3195 = vunpack.c.l.b16 %v2900
        %v3196 = vunpack.c.l.b16 %v2901
        %v3197 = vunpack.c.l.b16 %v2902
        %v3198 = vunpack.c.l.b16 %v2903
        %v3199 = vunpack.c.l.b16 %v2904
        %v3200 = vunpack.c.l.b16 %v2905
        %v3201 = vunpack.c.l.b16 %v2906
        %v3202 = vunpack.c.l.b16 %v2907
        %v3203 = vunpack.c.l.b16 %v2908
        %v3204 = vunpack.c.l.b16 %v2909
        %v3205 = vunpack.c.l.b16 %v2910
        %v3206 = vunpack.c.l.b16 %v2911
        %v3207 = vunpack.c.l.b16 %v2912
        %v3208 = vunpack.c.l.b16 %v2913
        %v3209 = vunpack.c.l.b16 %v2914
        %v3210 = vunpack.c.l.b16 %v2915
        %v3211 = vunpack.c.l.b16 %v2916
        %v3212 = vunpack.c.l.b16 %v2917
        %v3213 = vunpack.c.l.b16 %v2918
        %v3214 = vunpack.c.l.b16 %v2919
        %v3215 = vunpack.c.l.b16 %v2920
        %v3216 = vunpack.c.l.b16 %v2921
        %v3217 = vunpack.c.l.b16 %v2922
        %v3218 = vunpack.c.l.b16 %v2923
        %v3219 = vunpack.c.l.b16 %v2924
        %v3220 = vunpack.c.l.b16 %v2925
        %v3221 = vunpack.c.l.b16 %v2926
        %v3222 = vunpack.c.l.b16 %v2927
        %v3223 = vunpack.c.l.b16 %v2928
        %v3224 = vunpack.c.l.b16 %v2929
        %v3225 = vunpack.c.l.b16 %v2930
        %v3226 = vunpack.c.l.b16 %v2931
        %v3227 = vunpack.c.l.b16 %v2932
        %v3228 = vunpack.c.l.b16 %v2933
        %v3229 = vunpack.c.l.b16 %v2934
        %v3230 = vunpack.c.l.b16 %v2935
        %v3231 = vunpack.c.l.b16 %v2936
        %v3232 = vunpack.c.l.b16 %v2937
        %v3233 = vunpack.c.l.b16 %v2938
        %v3234 = vunpack.c.l.b16 %v2939
        %v3235 = vunpack.c.l.b16 %v2940
        %v3236 = vunpack.c.l.b16 %v2941
        %v3237 = vunpack.c.l.b16 %v2942
        %v3238 = vunpack.c.l.b16 %v2943
        %v3239 = vunpack.c.l.b16 %v2944
        %v3240 = vunpack.c.l.b16 %v2945
        %v3241 = vunpack.c.l.b16 %v2946
        %v3242 = vunpack.c.l.b16 %v2947
        %v3243 = vunpack.c.l.b16 %v2948
        %v3244 = vunpack.c.l.b16 %v2949
        %v3245 = vunpack.c.l.b16 %v2950
        %v3246 = vunpack.c.l.b16 %v2951
        %v3247 = vunpack.c.l.b16 %v2952
        %v3248 = vunpack.c.l.b16 %v2953
        %v3249 = vunpack.c.l.b16 %v2954
        %v3250 = vunpack.c.l.b16 %v2955
        %v3251 = vunpack.c.l.b16 %v2956
        %v3252 = vunpack.c.l.b16 %v2957
        %v3253 = vunpack.c.l.b16 %v2958
        %v3254 = vunpack.c.l.b16 %v2959
        %v3255 = vunpack.c.l.b16 %v2960
        %v3256 = vunpack.c.l.b16 %v2961
        %v3257 = vunpack.c.l.b16 %v2962
        %v3258 = vunpack.c.l.b16 %v2963
        %v3259 = vunpack.c.l.b16 %v2964
        %v3260 = vunpack.c.l.b16 %v2965
        %v3261 = vunpack.c.l.b16 %v2966
        %v3262 = vunpack.c.l.b16 %v2967
        %v3263 = vunpack.c.l.b16 %v2968
        %v3264 = vunpack.c.l.b16 %v2969
        %v3265 = vunpack.c.l.b16 %v2970
        %v3266 = vunpack.c.l.b16 %v2971
        %v3267 = vunpack.c.l.b16 %v2972
        %v3268 = vunpack.c.l.b16 %v2973
        %v3269 = vunpack.c.l.b16 %v2974
        %v3270 = vunpack.c.l.b16 %v2975
        %v3271 = vunpack.c.l.b16 %v2976
        %v3272 = vunpack.c.l.b16 %v2977
        %v3273 = vunpack.c.l.b16 %v2978
        %v3274 = vunpack.c.l.b16 %v2979
        %v3275 = vunpack.c.l.b16 %v2980
        %v3276 = vunpack.c.l.b16 %v2981
        %v3277 = vunpack.c.l.b16 %v2982
        %v3278 = vunpack.c.l.b16 %v2983
        %v3279 = vunpack.c.l.b16 %v2984
        %v3280 = vunpack.c.l.b16 %v2985
        %v3281 = vunpack.c.l.b16 %v2986
        %v3282 = vunpack.c.l.b16 %v2987
        %v3283 = vunpack.c.l.b16 %v2988
        %v3284 = vunpack.c.l.b16 %v2989
        %v3285 = vunpack.c.l.b16 %v2990
        %v3286 = vunpack.c.l.b16 %v2991
        %v3287 = vunpack.c.l.b16 %v2992
        %v3288 = vunpack.c.l.b16 %v2993
        %v3289 = vunpack.c.l.b16 %v2994
        %v3290 = vunpack.c.l.b16 %v2995
        %v3291 = vunpack.c.l.b16 %v2996
        %v3292 = vunpack.c.l.b16 %v2997
        %v3293 = vunpack.c.l.b16 %v2998
        %v3294 = vunpack.c.l.b16 %v2999
        %v3295 = vunpack.c.l.b16 %v3000
        %v3296 = vunpack.c.l.b16 %v3001
        %v3297 = vunpack.c.l.b16 %v3002
        %v3298 = vunpack.c.l.b16 %v3003
        %v3299 = vunpack.c.l.b16 %v3004
        %v3300 = vunpack.c.l.b16 %v3005
        %v3301 = vunpack.c.l.b16 %v3006
        %v3302 = vunpack.c.l.b16 %v3007
        %v3303 = vunpack.c.l.b16 %v3008
        %v3304 = vunpack.c.l.b16 %v3009
        %v3305 = vunpack.c.l.b16 %v3010
        %v3306 = vunpack.c.l.b16 %v3011
        %v3307 = vunpack.c.l.b16 %v3012
        %v3308 = vunpack.c.l.b16 %v3013
        %v3309 = vunpack.c.l.b16 %v3014
        %v3310 = vunpack.c.l.b16 %v3015
        %v3311 = vunpack.c.l.b16 %v3016
        %v3312 = vunpack.c.l.b16 %v3017
        %v3313 = vunpack.c.l.b16 %v3018
        %v3314 = vunpack.c.l.b16 %v3019
        %v3315 = vunpack.c.l.b16 %v3020
        %v3316 = vunpack.c.l.b16 %v3021
        %v3317 = vunpack.c.l.b16 %v3022
        %v3318 = vunpack.c.l.b16 %v3023
        %v3319 = vunpack.c.l.b16 %v3024
        %v3320 = vunpack.c.l.b16 %v3025
        %v3321 = vunpack.c.l.b16 %v3026
        %v3322 = vunpack.c.l.b16 %v3027
        %v3323 = vunpack.c.l.b16 %v3028
        %v3324 = vpack.c.b16 %v3181, %v3180
        %v3325 = vpack.c.b16 %v3183, %v3182
        %v3326 = vpack.c.b16 %v3185, %v3184
        %v3327 = vpack.c.b16 %v3187, %v3186
        %v3328 = vpack.c.b16 %v3189, %v3188
        %v3329 = vpack.c.b16 %v3191, %v3190
        %v3330 = vpack.c.b16 %v3193, %v3192
        %v3331 = vpack.c.b16 %v3195, %v3194
        %v3332 = vpack.c.b16 %v3197, %v3196
        %v3333 = vpack.c.b16 %v3199, %v3198
        %v3334 = vpack.c.b16 %v3201, %v3200
        %v3335 = vpack.c.b16 %v3203, %v3202
        %v3336 = vpack.c.b16 %v3205, %v3204
        %v3337 = vpack.c.b16 %v3207, %v3206
        %v3338 = vpack.c.b16 %v3209, %v3208
        %v3339 = vpack.c.b16 %v3211, %v3210
        %v3340 = vpack.c.b16 %v3213, %v3212
        %v3341 = vpack.c.b16 %v3215, %v3214
        %v3342 = vpack.c.b16 %v3217, %v3216
        %v3343 = vpack.c.b16 %v3219, %v3218
        %v3344 = vpack.c.b16 %v3221, %v3220
        %v3345 = vpack.c.b16 %v3223, %v3222
        %v3346 = vpack.c.b16 %v3225, %v3224
        %v3347 = vpack.c.b16 %v3227, %v3226
        %v3348 = vpack.c.b16 %v3229, %v3228
        %v3349 = vpack.c.b16 %v3231, %v3230
        %v3350 = vpack.c.b16 %v3233, %v3232
        %v3351 = vpack.c.b16 %v3235, %v3234
        %v3352 = vpack.c.b16 %v3237, %v3236
        %v3353 = vpack.c.b16 %v3239, %v3238
        %v3354 = vpack.c.b16 %v3241, %v3240
        %v3355 = vpack.c.b16 %v3243, %v3242
        %v3356 = vpack.c.b16 %v3245, %v3244
        %v3357 = vpack.c.b16 %v3247, %v3246
        %v3358 = vpack.c.b16 %v3249, %v3248
        %v3359 = vpack.c.b16 %v3251, %v3250
        %v3360 = vpack.c.b16 %v3253, %v3252
        %v3361 = vpack.c.b16 %v3255, %v3254
        %v3362 = vpack.c.b16 %v3257, %v3256
        %v3363 = vpack.c.b16 %v3259, %v3258
        %v3364 = vpack.c.b16 %v3261, %v3260
        %v3365 = vpack.c.b16 %v3263, %v3262
        %v3366 = vpack.c.b16 %v3265, %v3264
        %v3367 = vpack.c.b16 %v3267, %v3266
        %v3368 = vpack.c.b16 %v3269, %v3268
        %v3369 = vpack.c.b16 %v3271, %v3270
        %v3370 = vpack.c.b16 %v3273, %v3272
        %v3371 = vpack.c.b16 %v3275, %v3274
        %v3372 = vpack.c.b16 %v3277, %v3276
        %v3373 = vpack.c.b16 %v3279, %v3278
        %v3374 = vpack.c.b16 %v3281, %v3280
        %v3375 = vpack.c.b16 %v3283, %v3282
        %v3376 = vpack.c.b16 %v3285, %v3284
        %v3377 = vpack.c.b16 %v3287, %v3286
        %v3378 = vpack.c.b16 %v3289, %v3288
        %v3379 = vpack.c.b16 %v3291, %v3290
        %v3380 = vpack.c.b16 %v3293, %v3292
        %v3381 = vpack.c.b16 %v3295, %v3294
        %v3382 = vpack.c.b16 %v3297, %v3296
        %v3383 = vpack.c.b16 %v3299, %v3298
        %v3384 = vpack.c.b16 %v3301, %v3300
        %v3385 = vpack.c.b16 %v3303, %v3302
        %v3386 = vpack.c.b16 %v3305, %v3304
        %v3387 = vpack.c.b16 %v3307, %v3306
        %v3388 = vpack.c.b16 %v3309, %v3308
        %v3389 = vpack.c.b16 %v3311, %v3310
        %v3390 = vpack.c.b16 %v3313, %v3312
        %v3391 = vpack.c.b16 %v3315, %v3314
        %v3392 = vpack.c.b16 %v3317, %v3316
        %v3393 = vpack.c.b16 %v3319, %v3318
        %v3394 = vpack.c.b16 %v3321, %v3320
        %v3395 = vpack.c.b16 %v3323, %v3322
        %3468 = vmatprep.subr.bf16.mxu0 0
        %3469 = vmatpush1.bf16.msra.mxu0 %v3331
        %3470 = vmatprep.subr.bf16.mxu0 0
        %3471 = vmatpush1.bf16.msra.mxu0 %v3330
        %3472 = vmatprep.subr.bf16.mxu0 0
        %3473 = vmatpush1.bf16.msra.mxu0 %v3329
        %3474 = vmatprep.subr.bf16.mxu0 0
        %3475 = vmatpush1.bf16.msra.mxu0 %v3328
        %3476 = vmatprep.subr.bf16.mxu0 0
        %3477 = vmatpush1.bf16.msra.mxu0 %v3327
        %3478 = vmatprep.subr.bf16.mxu0 0
        %3479 = vmatpush1.bf16.msra.mxu0 %v3326
        %3480 = vmatprep.subr.bf16.mxu0 0
        %3481 = vmatpush1.bf16.msra.mxu0 %v3325
        %3482 = vmatprep.subr.bf16.mxu0 0
        %3483 = vmatpush1.bf16.msra.mxu0 %v3324
        %3484 = vmatprep.subr.bf16.mxu0 0
        %3485 = vmatpush2.bf16.msra.mxu0 %v3339
        %3486 = vmatprep.subr.bf16.mxu0 0
        %3487 = vmatpush2.bf16.msra.mxu0 %v3338
        %3488 = vmatprep.subr.bf16.mxu0 0
        %3489 = vmatpush2.bf16.msra.mxu0 %v3337
        %3490 = vmatprep.subr.bf16.mxu0 0
        %3491 = vmatpush2.bf16.msra.mxu0 %v3336
        %3492 = vmatprep.subr.bf16.mxu0 0
        %3493 = vmatpush2.bf16.msra.mxu0 %v3335
        %3494 = vmatprep.subr.bf16.mxu0 0
        %3495 = vmatpush2.bf16.msra.mxu0 %v3334
        %3496 = vmatprep.subr.bf16.mxu0 0
        %3497 = vmatpush2.bf16.msra.mxu0 %v3333
        %3498 = vmatprep.subr.bf16.mxu0 0
        %3499 = vmatpush2.bf16.msra.mxu0 %v3332
        %3500 = vmatprep.mubr.bf16.mxu0 %v2758
        %3501 = vmatmul.mubr.bf16.gmra.mxu0 %v2757
        %v3502 = vpop.f32.mrf.mxu0
        %v3503 = vadd.f32 %v3034, %v3502
        %v3504 = vpop.f32.mrf.mxu0
        %v3505 = vpop.f32.mrf.mxu0
        %v3506 = vadd.f32 %v3034, %v3505
        %v3507 = vpop.f32.mrf.mxu0
        %3508 = vmatprep.mubr.bf16.mxu0 %v2767
        %3509 = vmatmul.mubr.bf16.gmra.mxu0 %v2766
        %v3510 = vpop.f32.mrf.mxu0
        %v3511 = vadd.f32 %v3034, %v3510
        %v3512 = vpop.f32.mrf.mxu0
        %v3513 = vpop.f32.mrf.mxu0
        %v3514 = vadd.f32 %v3034, %v3513
        %v3515 = vpop.f32.mrf.mxu0
        %3516 = vmatprep.mubr.bf16.mxu0 %v2774
        %3517 = vmatmul.mubr.bf16.gmra.mxu0 %v2773
        %v3518 = vpop.f32.mrf.mxu0
        %v3519 = vadd.f32 %v3034, %v3518
        %v3520 = vpop.f32.mrf.mxu0
        %v3521 = vpop.f32.mrf.mxu0
        %v3522 = vadd.f32 %v3034, %v3521
        %v3523 = vpop.f32.mrf.mxu0
        %3524 = vmatprep.mubr.bf16.mxu0 %v2781
        %3525 = vmatmul.mubr.bf16.gmra.mxu0 %v2780
        %v3526 = vpop.f32.mrf.mxu0
        %v3527 = vadd.f32 %v3034, %v3526
        %v3528 = vpop.f32.mrf.mxu0
        %v3529 = vpop.f32.mrf.mxu0
        %v3530 = vadd.f32 %v3034, %v3529
        %v3531 = vpop.f32.mrf.mxu0
        %3532 = vmatprep.mubr.bf16.mxu0 %v2788
        %3533 = vmatmul.mubr.bf16.gmra.mxu0 %v2787
        %v3534 = vpop.f32.mrf.mxu0
        %v3535 = vadd.f32 %v3034, %v3534
        %v3536 = vpop.f32.mrf.mxu0
        %v3537 = vpop.f32.mrf.mxu0
        %v3538 = vadd.f32 %v3034, %v3537
        %v3539 = vpop.f32.mrf.mxu0
        %3540 = vmatprep.mubr.bf16.mxu0 %v2795
        %3541 = vmatmul.mubr.bf16.gmra.mxu0 %v2794
        %v3542 = vpop.f32.mrf.mxu0
        %v3543 = vadd.f32 %v3034, %v3542
        %v3544 = vpop.f32.mrf.mxu0
        %v3545 = vpop.f32.mrf.mxu0
        %v3546 = vadd.f32 %v3034, %v3545
        %v3547 = vpop.f32.mrf.mxu0
        %3548 = vmatprep.mubr.bf16.mxu0 %v2802
        %3549 = vmatmul.mubr.bf16.gmra.mxu0 %v2801
        %v3550 = vpop.f32.mrf.mxu0
        %v3551 = vadd.f32 %v3034, %v3550
        %v3552 = vpop.f32.mrf.mxu0
        %v3553 = vpop.f32.mrf.mxu0
        %v3554 = vadd.f32 %v3034, %v3553
        %v3555 = vpop.f32.mrf.mxu0
        %3556 = vmatprep.mubr.bf16.mxu0 %v2809
        %3557 = vmatmul.mubr.bf16.gmra.mxu0 %v2808
        %v3558 = vpop.f32.mrf.mxu0
        %v3559 = vadd.f32 %v3034, %v3558
        %v3560 = vpop.f32.mrf.mxu0
        %v3561 = vpop.f32.mrf.mxu0
        %v3562 = vadd.f32 %v3034, %v3561
        %v3563 = vpop.f32.mrf.mxu0
        %3564 = vmatprep.mubr.bf16.mxu0 %v2816
        %3565 = vmatmul.mubr.bf16.gmra.mxu0 %v2815
        %v3566 = vpop.f32.mrf.mxu0
        %v3567 = vadd.f32 %v3034, %v3566
        %v3568 = vpop.f32.mrf.mxu0
        %v3569 = vpop.f32.mrf.mxu0
        %v3570 = vadd.f32 %v3034, %v3569
        %v3571 = vpop.f32.mrf.mxu0
        %3572 = vmatprep.mubr.bf16.mxu0 %v2823
        %3573 = vmatmul.mubr.bf16.gmra.mxu0 %v2822
        %v3574 = vpop.f32.mrf.mxu0
        %v3575 = vadd.f32 %v3034, %v3574
        %v3576 = vpop.f32.mrf.mxu0
        %v3577 = vpop.f32.mrf.mxu0
        %v3578 = vadd.f32 %v3034, %v3577
        %v3579 = vpop.f32.mrf.mxu0
        %3580 = vmatprep.mubr.bf16.mxu0 %v2830
        %3581 = vmatmul.mubr.bf16.gmra.mxu0 %v2829
        %v3582 = vpop.f32.mrf.mxu0
        %v3583 = vadd.f32 %v3034, %v3582
        %v3584 = vpop.f32.mrf.mxu0
        %v3585 = vpop.f32.mrf.mxu0
        %v3586 = vadd.f32 %v3034, %v3585
        %v3587 = vpop.f32.mrf.mxu0
        %3588 = vmatprep.mubr.bf16.mxu0 %v2837
        %3589 = vmatmul.mubr.bf16.gmra.mxu0 %v2836
        %v3590 = vpop.f32.mrf.mxu0
        %v3591 = vadd.f32 %v3034, %v3590
        %v3592 = vpop.f32.mrf.mxu0
        %v3593 = vpop.f32.mrf.mxu0
        %v3594 = vadd.f32 %v3034, %v3593
        %v3595 = vpop.f32.mrf.mxu0
        %3596 = vmatprep.mubr.bf16.mxu0 %v2844
        %3597 = vmatmul.mubr.bf16.gmra.mxu0 %v2843
        %v3598 = vpop.f32.mrf.mxu0
        %v3599 = vadd.f32 %v3034, %v3598
        %v3600 = vpop.f32.mrf.mxu0
        %v3601 = vpop.f32.mrf.mxu0
        %v3602 = vadd.f32 %v3034, %v3601
        %v3603 = vpop.f32.mrf.mxu0
        %3604 = vmatprep.mubr.bf16.mxu0 %v2851
        %3605 = vmatmul.mubr.bf16.gmra.mxu0 %v2850
        %v3606 = vpop.f32.mrf.mxu0
        %v3607 = vadd.f32 %v3034, %v3606
        %v3608 = vpop.f32.mrf.mxu0
        %v3609 = vpop.f32.mrf.mxu0
        %v3610 = vadd.f32 %v3034, %v3609
        %v3611 = vpop.f32.mrf.mxu0
        %3612 = vmatprep.mubr.bf16.mxu0 %v2858
        %3613 = vmatmul.mubr.bf16.gmra.mxu0 %v2857
        %v3614 = vpop.f32.mrf.mxu0
        %v3615 = vadd.f32 %v3034, %v3614
        %v3616 = vpop.f32.mrf.mxu0
        %v3617 = vpop.f32.mrf.mxu0
        %v3618 = vadd.f32 %v3034, %v3617
        %v3619 = vpop.f32.mrf.mxu0
        %3620 = vmatprep.mubr.bf16.mxu0 %v2865
        %3621 = vmatmul.mubr.bf16.gmra.mxu0 %v2864
        %v3622 = vpop.f32.mrf.mxu0
        %v3623 = vadd.f32 %v3034, %v3622
        %v3624 = vpop.f32.mrf.mxu0
        %v3625 = vpop.f32.mrf.mxu0
        %v3626 = vadd.f32 %v3034, %v3625
        %v3627 = vpop.f32.mrf.mxu0
        %3628 = vmatprep.mubr.bf16.mxu0 %v2872
        %3629 = vmatmul.mubr.bf16.gmra.mxu0 %v2871
        %v3630 = vpop.f32.mrf.mxu0
        %v3631 = vadd.f32 %v3034, %v3630
        %v3632 = vpop.f32.mrf.mxu0
        %v3633 = vpop.f32.mrf.mxu0
        %v3634 = vadd.f32 %v3034, %v3633
        %v3635 = vpop.f32.mrf.mxu0
        %3636 = vmatprep.mubr.bf16.mxu0 %v2879
        %3637 = vmatmul.mubr.bf16.gmra.mxu0 %v2878
        %v3638 = vpop.f32.mrf.mxu0
        %v3639 = vadd.f32 %v3034, %v3638
        %v3640 = vpop.f32.mrf.mxu0
        %v3641 = vpop.f32.mrf.mxu0
        %v3642 = vadd.f32 %v3034, %v3641
        %v3643 = vpop.f32.mrf.mxu0
        %3644 = vdwg.mxu0
        %3645 = vmatprep.subr.bf16.mxu0 0
        %3646 = vmatpush1.bf16.msra.mxu0 %v3347
        %3647 = vmatprep.subr.bf16.mxu0 0
        %3648 = vmatpush1.bf16.msra.mxu0 %v3346
        %3649 = vmatprep.subr.bf16.mxu0 0
        %3650 = vmatpush1.bf16.msra.mxu0 %v3345
        %3651 = vmatprep.subr.bf16.mxu0 0
        %3652 = vmatpush1.bf16.msra.mxu0 %v3344
        %3653 = vmatprep.subr.bf16.mxu0 0
        %3654 = vmatpush1.bf16.msra.mxu0 %v3343
        %3655 = vmatprep.subr.bf16.mxu0 0
        %3656 = vmatpush1.bf16.msra.mxu0 %v3342
        %3657 = vmatprep.subr.bf16.mxu0 0
        %3658 = vmatpush1.bf16.msra.mxu0 %v3341
        %3659 = vmatprep.subr.bf16.mxu0 0
        %3660 = vmatpush1.bf16.msra.mxu0 %v3340
        %3661 = vmatprep.subr.bf16.mxu0 0
        %3662 = vmatpush2.bf16.msra.mxu0 %v3355
        %3663 = vmatprep.subr.bf16.mxu0 0
        %3664 = vmatpush2.bf16.msra.mxu0 %v3354
        %3665 = vmatprep.subr.bf16.mxu0 0
        %3666 = vmatpush2.bf16.msra.mxu0 %v3353
        %3667 = vmatprep.subr.bf16.mxu0 0
        %3668 = vmatpush2.bf16.msra.mxu0 %v3352
        %3669 = vmatprep.subr.bf16.mxu0 0
        %3670 = vmatpush2.bf16.msra.mxu0 %v3351
        %3671 = vmatprep.subr.bf16.mxu0 0
        %3672 = vmatpush2.bf16.msra.mxu0 %v3350
        %3673 = vmatprep.subr.bf16.mxu0 0
        %3674 = vmatpush2.bf16.msra.mxu0 %v3349
        %3675 = vmatprep.subr.bf16.mxu0 0
        %3676 = vmatpush2.bf16.msra.mxu0 %v3348
        %3677 = vmatprep.mubr.bf16.mxu0 %v2760
        %3678 = vmatmul.mubr.bf16.gmra.mxu0 %v2759
        %v3679 = vpop.f32.mrf.mxu0
        %v3680 = vadd.f32 %v3503, %v3679
        %v3681 = vpop.f32.mrf.mxu0
        %v3682 = vpop.f32.mrf.mxu0
        %v3683 = vadd.f32 %v3506, %v3682
        %v3684 = vpop.f32.mrf.mxu0
        %3685 = vmatprep.mubr.bf16.mxu0 %v2768
        %3686 = vmatmul.mubr.bf16.gmra.mxu0 %v2760
        %v3687 = vpop.f32.mrf.mxu0
        %v3688 = vadd.f32 %v3511, %v3687
        %v3689 = vpop.f32.mrf.mxu0
        %v3690 = vpop.f32.mrf.mxu0
        %v3691 = vadd.f32 %v3514, %v3690
        %v3692 = vpop.f32.mrf.mxu0
        %3693 = vmatprep.mubr.bf16.mxu0 %v2775
        %3694 = vmatmul.mubr.bf16.gmra.mxu0 %v2768
        %v3695 = vpop.f32.mrf.mxu0
        %v3696 = vadd.f32 %v3519, %v3695
        %v3697 = vpop.f32.mrf.mxu0
        %v3698 = vpop.f32.mrf.mxu0
        %v3699 = vadd.f32 %v3522, %v3698
        %v3700 = vpop.f32.mrf.mxu0
        %3701 = vmatprep.mubr.bf16.mxu0 %v2782
        %3702 = vmatmul.mubr.bf16.gmra.mxu0 %v2775
        %v3703 = vpop.f32.mrf.mxu0
        %v3704 = vadd.f32 %v3527, %v3703
        %v3705 = vpop.f32.mrf.mxu0
        %v3706 = vpop.f32.mrf.mxu0
        %v3707 = vadd.f32 %v3530, %v3706
        %v3708 = vpop.f32.mrf.mxu0
        %3709 = vmatprep.mubr.bf16.mxu0 %v2789
        %3710 = vmatmul.mubr.bf16.gmra.mxu0 %v2782
        %v3711 = vpop.f32.mrf.mxu0
        %v3712 = vadd.f32 %v3535, %v3711
        %v3713 = vpop.f32.mrf.mxu0
        %v3714 = vpop.f32.mrf.mxu0
        %v3715 = vadd.f32 %v3538, %v3714
        %v3716 = vpop.f32.mrf.mxu0
        %3717 = vmatprep.mubr.bf16.mxu0 %v2796
        %3718 = vmatmul.mubr.bf16.gmra.mxu0 %v2789
        %v3719 = vpop.f32.mrf.mxu0
        %v3720 = vadd.f32 %v3543, %v3719
        %v3721 = vpop.f32.mrf.mxu0
        %v3722 = vpop.f32.mrf.mxu0
        %v3723 = vadd.f32 %v3546, %v3722
        %v3724 = vpop.f32.mrf.mxu0
        %3725 = vmatprep.mubr.bf16.mxu0 %v2803
        %3726 = vmatmul.mubr.bf16.gmra.mxu0 %v2796
        %v3727 = vpop.f32.mrf.mxu0
        %v3728 = vadd.f32 %v3551, %v3727
        %v3729 = vpop.f32.mrf.mxu0
        %v3730 = vpop.f32.mrf.mxu0
        %v3731 = vadd.f32 %v3554, %v3730
        %v3732 = vpop.f32.mrf.mxu0
        %3733 = vmatprep.mubr.bf16.mxu0 %v2810
        %3734 = vmatmul.mubr.bf16.gmra.mxu0 %v2803
        %v3735 = vpop.f32.mrf.mxu0
        %v3736 = vadd.f32 %v3559, %v3735
        %v3737 = vpop.f32.mrf.mxu0
        %v3738 = vpop.f32.mrf.mxu0
        %v3739 = vadd.f32 %v3562, %v3738
        %v3740 = vpop.f32.mrf.mxu0
        %3741 = vmatprep.mubr.bf16.mxu0 %v2817
        %3742 = vmatmul.mubr.bf16.gmra.mxu0 %v2810
        %v3743 = vpop.f32.mrf.mxu0
        %v3744 = vadd.f32 %v3567, %v3743
        %v3745 = vpop.f32.mrf.mxu0
        %v3746 = vpop.f32.mrf.mxu0
        %v3747 = vadd.f32 %v3570, %v3746
        %v3748 = vpop.f32.mrf.mxu0
        %3749 = vmatprep.mubr.bf16.mxu0 %v2824
        %3750 = vmatmul.mubr.bf16.gmra.mxu0 %v2817
        %v3751 = vpop.f32.mrf.mxu0
        %v3752 = vadd.f32 %v3575, %v3751
        %v3753 = vpop.f32.mrf.mxu0
        %v3754 = vpop.f32.mrf.mxu0
        %v3755 = vadd.f32 %v3578, %v3754
        %v3756 = vpop.f32.mrf.mxu0
        %3757 = vmatprep.mubr.bf16.mxu0 %v2831
        %3758 = vmatmul.mubr.bf16.gmra.mxu0 %v2824
        %v3759 = vpop.f32.mrf.mxu0
        %v3760 = vadd.f32 %v3583, %v3759
        %v3761 = vpop.f32.mrf.mxu0
        %v3762 = vpop.f32.mrf.mxu0
        %v3763 = vadd.f32 %v3586, %v3762
        %v3764 = vpop.f32.mrf.mxu0
        %3765 = vmatprep.mubr.bf16.mxu0 %v2838
        %3766 = vmatmul.mubr.bf16.gmra.mxu0 %v2831
        %v3767 = vpop.f32.mrf.mxu0
        %v3768 = vadd.f32 %v3591, %v3767
        %v3769 = vpop.f32.mrf.mxu0
        %v3770 = vpop.f32.mrf.mxu0
        %v3771 = vadd.f32 %v3594, %v3770
        %v3772 = vpop.f32.mrf.mxu0
        %3773 = vmatprep.mubr.bf16.mxu0 %v2845
        %3774 = vmatmul.mubr.bf16.gmra.mxu0 %v2838
        %v3775 = vpop.f32.mrf.mxu0
        %v3776 = vadd.f32 %v3599, %v3775
        %v3777 = vpop.f32.mrf.mxu0
        %v3778 = vpop.f32.mrf.mxu0
        %v3779 = vadd.f32 %v3602, %v3778
        %v3780 = vpop.f32.mrf.mxu0
        %3781 = vmatprep.mubr.bf16.mxu0 %v2852
        %3782 = vmatmul.mubr.bf16.gmra.mxu0 %v2845
        %v3783 = vpop.f32.mrf.mxu0
        %v3784 = vadd.f32 %v3607, %v3783
        %v3785 = vpop.f32.mrf.mxu0
        %v3786 = vpop.f32.mrf.mxu0
        %v3787 = vadd.f32 %v3610, %v3786
        %v3788 = vpop.f32.mrf.mxu0
        %3789 = vmatprep.mubr.bf16.mxu0 %v2859
        %3790 = vmatmul.mubr.bf16.gmra.mxu0 %v2852
        %v3791 = vpop.f32.mrf.mxu0
        %v3792 = vadd.f32 %v3615, %v3791
        %v3793 = vpop.f32.mrf.mxu0
        %v3794 = vpop.f32.mrf.mxu0
        %v3795 = vadd.f32 %v3618, %v3794
        %v3796 = vpop.f32.mrf.mxu0
        %3797 = vmatprep.mubr.bf16.mxu0 %v2866
        %3798 = vmatmul.mubr.bf16.gmra.mxu0 %v2859
        %v3799 = vpop.f32.mrf.mxu0
        %v3800 = vadd.f32 %v3623, %v3799
        %v3801 = vpop.f32.mrf.mxu0
        %v3802 = vpop.f32.mrf.mxu0
        %v3803 = vadd.f32 %v3626, %v3802
        %v3804 = vpop.f32.mrf.mxu0
        %3805 = vmatprep.mubr.bf16.mxu0 %v2873
        %3806 = vmatmul.mubr.bf16.gmra.mxu0 %v2866
        %v3807 = vpop.f32.mrf.mxu0
        %v3808 = vadd.f32 %v3631, %v3807
        %v3809 = vpop.f32.mrf.mxu0
        %v3810 = vpop.f32.mrf.mxu0
        %v3811 = vadd.f32 %v3634, %v3810
        %v3812 = vpop.f32.mrf.mxu0
        %3813 = vmatprep.mubr.bf16.mxu0 %v2880
        %3814 = vmatmul.mubr.bf16.gmra.mxu0 %v2873
        %v3815 = vpop.f32.mrf.mxu0
        %v3816 = vadd.f32 %v3639, %v3815
        %v3817 = vpop.f32.mrf.mxu0
        %v3818 = vpop.f32.mrf.mxu0
        %v3819 = vadd.f32 %v3642, %v3818
        %v3820 = vpop.f32.mrf.mxu0
        %3821 = vdwg.mxu0
        %3822 = vmatprep.subr.bf16.mxu0 0
        %3823 = vmatpush1.bf16.msra.mxu0 %v3363
        %3824 = vmatprep.subr.bf16.mxu0 0
        %3825 = vmatpush1.bf16.msra.mxu0 %v3362
        %3826 = vmatprep.subr.bf16.mxu0 0
        %3827 = vmatpush1.bf16.msra.mxu0 %v3361
        %3828 = vmatprep.subr.bf16.mxu0 0
        %3829 = vmatpush1.bf16.msra.mxu0 %v3360
        %3830 = vmatprep.subr.bf16.mxu0 0
        %3831 = vmatpush1.bf16.msra.mxu0 %v3359
        %3832 = vmatprep.subr.bf16.mxu0 0
        %3833 = vmatpush1.bf16.msra.mxu0 %v3358
        %3834 = vmatprep.subr.bf16.mxu0 0
        %3835 = vmatpush1.bf16.msra.mxu0 %v3357
        %3836 = vmatprep.subr.bf16.mxu0 0
        %3837 = vmatpush1.bf16.msra.mxu0 %v3356
        %3838 = vmatprep.subr.bf16.mxu0 0
        %3839 = vmatpush2.bf16.msra.mxu0 %v3371
        %3840 = vmatprep.subr.bf16.mxu0 0
        %3841 = vmatpush2.bf16.msra.mxu0 %v3370
        %3842 = vmatprep.subr.bf16.mxu0 0
        %3843 = vmatpush2.bf16.msra.mxu0 %v3369
        %3844 = vmatprep.subr.bf16.mxu0 0
        %3845 = vmatpush2.bf16.msra.mxu0 %v3368
        %3846 = vmatprep.subr.bf16.mxu0 0
        %3847 = vmatpush2.bf16.msra.mxu0 %v3367
        %3848 = vmatprep.subr.bf16.mxu0 0
        %3849 = vmatpush2.bf16.msra.mxu0 %v3366
        %3850 = vmatprep.subr.bf16.mxu0 0
        %3851 = vmatpush2.bf16.msra.mxu0 %v3365
        %3852 = vmatprep.subr.bf16.mxu0 0
        %3853 = vmatpush2.bf16.msra.mxu0 %v3364
        %3854 = vmatprep.mubr.bf16.mxu0 %v2762
        %3855 = vmatmul.mubr.bf16.gmra.mxu0 %v2761
        %v3856 = vpop.f32.mrf.mxu0
        %v3857 = vadd.f32 %v3680, %v3856
        %v3858 = vpop.f32.mrf.mxu0
        %v3859 = vpop.f32.mrf.mxu0
        %v3860 = vadd.f32 %v3683, %v3859
        %v3861 = vpop.f32.mrf.mxu0
        %3862 = vmatprep.mubr.bf16.mxu0 %v2763
        %3863 = vmatmul.mubr.bf16.gmra.mxu0 %v2769
        %v3864 = vpop.f32.mrf.mxu0
        %v3865 = vadd.f32 %v3688, %v3864
        %v3866 = vpop.f32.mrf.mxu0
        %v3867 = vpop.f32.mrf.mxu0
        %v3868 = vadd.f32 %v3691, %v3867
        %v3869 = vpop.f32.mrf.mxu0
        %3870 = vmatprep.mubr.bf16.mxu0 %v2770
        %3871 = vmatmul.mubr.bf16.gmra.mxu0 %v2776
        %v3872 = vpop.f32.mrf.mxu0
        %v3873 = vadd.f32 %v3696, %v3872
        %v3874 = vpop.f32.mrf.mxu0
        %v3875 = vpop.f32.mrf.mxu0
        %v3876 = vadd.f32 %v3699, %v3875
        %v3877 = vpop.f32.mrf.mxu0
        %3878 = vmatprep.mubr.bf16.mxu0 %v2777
        %3879 = vmatmul.mubr.bf16.gmra.mxu0 %v2783
        %v3880 = vpop.f32.mrf.mxu0
        %v3881 = vadd.f32 %v3704, %v3880
        %v3882 = vpop.f32.mrf.mxu0
        %v3883 = vpop.f32.mrf.mxu0
        %v3884 = vadd.f32 %v3707, %v3883
        %v3885 = vpop.f32.mrf.mxu0
        %3886 = vmatprep.mubr.bf16.mxu0 %v2784
        %3887 = vmatmul.mubr.bf16.gmra.mxu0 %v2790
        %v3888 = vpop.f32.mrf.mxu0
        %v3889 = vadd.f32 %v3712, %v3888
        %v3890 = vpop.f32.mrf.mxu0
        %v3891 = vpop.f32.mrf.mxu0
        %v3892 = vadd.f32 %v3715, %v3891
        %v3893 = vpop.f32.mrf.mxu0
        %3894 = vmatprep.mubr.bf16.mxu0 %v2791
        %3895 = vmatmul.mubr.bf16.gmra.mxu0 %v2797
        %v3896 = vpop.f32.mrf.mxu0
        %v3897 = vadd.f32 %v3720, %v3896
        %v3898 = vpop.f32.mrf.mxu0
        %v3899 = vpop.f32.mrf.mxu0
        %v3900 = vadd.f32 %v3723, %v3899
        %v3901 = vpop.f32.mrf.mxu0
        %3902 = vmatprep.mubr.bf16.mxu0 %v2798
        %3903 = vmatmul.mubr.bf16.gmra.mxu0 %v2804
        %v3904 = vpop.f32.mrf.mxu0
        %v3905 = vadd.f32 %v3728, %v3904
        %v3906 = vpop.f32.mrf.mxu0
        %v3907 = vpop.f32.mrf.mxu0
        %v3908 = vadd.f32 %v3731, %v3907
        %v3909 = vpop.f32.mrf.mxu0
        %3910 = vmatprep.mubr.bf16.mxu0 %v2805
        %3911 = vmatmul.mubr.bf16.gmra.mxu0 %v2811
        %v3912 = vpop.f32.mrf.mxu0
        %v3913 = vadd.f32 %v3736, %v3912
        %v3914 = vpop.f32.mrf.mxu0
        %v3915 = vpop.f32.mrf.mxu0
        %v3916 = vadd.f32 %v3739, %v3915
        %v3917 = vpop.f32.mrf.mxu0
        %3918 = vmatprep.mubr.bf16.mxu0 %v2812
        %3919 = vmatmul.mubr.bf16.gmra.mxu0 %v2818
        %v3920 = vpop.f32.mrf.mxu0
        %v3921 = vadd.f32 %v3744, %v3920
        %v3922 = vpop.f32.mrf.mxu0
        %v3923 = vpop.f32.mrf.mxu0
        %v3924 = vadd.f32 %v3747, %v3923
        %v3925 = vpop.f32.mrf.mxu0
        %3926 = vmatprep.mubr.bf16.mxu0 %v2819
        %3927 = vmatmul.mubr.bf16.gmra.mxu0 %v2825
        %v3928 = vpop.f32.mrf.mxu0
        %v3929 = vadd.f32 %v3752, %v3928
        %v3930 = vpop.f32.mrf.mxu0
        %v3931 = vpop.f32.mrf.mxu0
        %v3932 = vadd.f32 %v3755, %v3931
        %v3933 = vpop.f32.mrf.mxu0
        %3934 = vmatprep.mubr.bf16.mxu0 %v2826
        %3935 = vmatmul.mubr.bf16.gmra.mxu0 %v2832
        %v3936 = vpop.f32.mrf.mxu0
        %v3937 = vadd.f32 %v3760, %v3936
        %v3938 = vpop.f32.mrf.mxu0
        %v3939 = vpop.f32.mrf.mxu0
        %v3940 = vadd.f32 %v3763, %v3939
        %v3941 = vpop.f32.mrf.mxu0
        %3942 = vmatprep.mubr.bf16.mxu0 %v2833
        %3943 = vmatmul.mubr.bf16.gmra.mxu0 %v2839
        %v3944 = vpop.f32.mrf.mxu0
        %v3945 = vadd.f32 %v3768, %v3944
        %v3946 = vpop.f32.mrf.mxu0
        %v3947 = vpop.f32.mrf.mxu0
        %v3948 = vadd.f32 %v3771, %v3947
        %v3949 = vpop.f32.mrf.mxu0
        %3950 = vmatprep.mubr.bf16.mxu0 %v2840
        %3951 = vmatmul.mubr.bf16.gmra.mxu0 %v2846
        %v3952 = vpop.f32.mrf.mxu0
        %v3953 = vadd.f32 %v3776, %v3952
        %v3954 = vpop.f32.mrf.mxu0
        %v3955 = vpop.f32.mrf.mxu0
        %v3956 = vadd.f32 %v3779, %v3955
        %v3957 = vpop.f32.mrf.mxu0
        %3958 = vmatprep.mubr.bf16.mxu0 %v2847
        %3959 = vmatmul.mubr.bf16.gmra.mxu0 %v2853
        %v3960 = vpop.f32.mrf.mxu0
        %v3961 = vadd.f32 %v3784, %v3960
        %v3962 = vpop.f32.mrf.mxu0
        %v3963 = vpop.f32.mrf.mxu0
        %v3964 = vadd.f32 %v3787, %v3963
        %v3965 = vpop.f32.mrf.mxu0
        %3966 = vmatprep.mubr.bf16.mxu0 %v2854
        %3967 = vmatmul.mubr.bf16.gmra.mxu0 %v2860
        %v3968 = vpop.f32.mrf.mxu0
        %v3969 = vadd.f32 %v3792, %v3968
        %v3970 = vpop.f32.mrf.mxu0
        %v3971 = vpop.f32.mrf.mxu0
        %v3972 = vadd.f32 %v3795, %v3971
        %v3973 = vpop.f32.mrf.mxu0
        %3974 = vmatprep.mubr.bf16.mxu0 %v2861
        %3975 = vmatmul.mubr.bf16.gmra.mxu0 %v2867
        %v3976 = vpop.f32.mrf.mxu0
        %v3977 = vadd.f32 %v3800, %v3976
        %v3978 = vpop.f32.mrf.mxu0
        %v3979 = vpop.f32.mrf.mxu0
        %v3980 = vadd.f32 %v3803, %v3979
        %v3981 = vpop.f32.mrf.mxu0
        %3982 = vmatprep.mubr.bf16.mxu0 %v2868
        %3983 = vmatmul.mubr.bf16.gmra.mxu0 %v2874
        %v3984 = vpop.f32.mrf.mxu0
        %v3985 = vadd.f32 %v3808, %v3984
        %v3986 = vpop.f32.mrf.mxu0
        %v3987 = vpop.f32.mrf.mxu0
        %v3988 = vadd.f32 %v3811, %v3987
        %v3989 = vpop.f32.mrf.mxu0
        %3990 = vmatprep.mubr.bf16.mxu0 %v2875
        %3991 = vmatmul.mubr.bf16.gmra.mxu0 %v2881
        %v3992 = vpop.f32.mrf.mxu0
        %v3993 = vadd.f32 %v3816, %v3992
        %v3994 = vpop.f32.mrf.mxu0
        %v3995 = vpop.f32.mrf.mxu0
        %v3996 = vadd.f32 %v3819, %v3995
        %v3997 = vpop.f32.mrf.mxu0
        %3998 = vdwg.mxu0
        %3999 = vmatprep.subr.bf16.mxu0 0
        %4000 = vmatpush1.bf16.msra.mxu0 %v3379
        %4001 = vmatprep.subr.bf16.mxu0 0
        %4002 = vmatpush1.bf16.msra.mxu0 %v3378
        %4003 = vmatprep.subr.bf16.mxu0 0
        %4004 = vmatpush1.bf16.msra.mxu0 %v3377
        %4005 = vmatprep.subr.bf16.mxu0 0
        %4006 = vmatpush1.bf16.msra.mxu0 %v3376
        %4007 = vmatprep.subr.bf16.mxu0 0
        %4008 = vmatpush1.bf16.msra.mxu0 %v3375
        %4009 = vmatprep.subr.bf16.mxu0 0
        %4010 = vmatpush1.bf16.msra.mxu0 %v3374
        %4011 = vmatprep.subr.bf16.mxu0 0
        %4012 = vmatpush1.bf16.msra.mxu0 %v3373
        %4013 = vmatprep.subr.bf16.mxu0 0
        %4014 = vmatpush1.bf16.msra.mxu0 %v3372
        %4015 = vmatprep.subr.bf16.mxu0 0
        %4016 = vmatpush2.bf16.msra.mxu0 %v3387
        %4017 = vmatprep.subr.bf16.mxu0 0
        %4018 = vmatpush2.bf16.msra.mxu0 %v3386
        %4019 = vmatprep.subr.bf16.mxu0 0
        %4020 = vmatpush2.bf16.msra.mxu0 %v3385
        %4021 = vmatprep.subr.bf16.mxu0 0
        %4022 = vmatpush2.bf16.msra.mxu0 %v3384
        %4023 = vmatprep.subr.bf16.mxu0 0
        %4024 = vmatpush2.bf16.msra.mxu0 %v3383
        %4025 = vmatprep.subr.bf16.mxu0 0
        %4026 = vmatpush2.bf16.msra.mxu0 %v3382
        %4027 = vmatprep.subr.bf16.mxu0 0
        %4028 = vmatpush2.bf16.msra.mxu0 %v3381
        %4029 = vmatprep.subr.bf16.mxu0 0
        %4030 = vmatpush2.bf16.msra.mxu0 %v3380
        %4031 = vmatprep.mubr.bf16.mxu0 %v2764
        %4032 = vmatmul.mubr.bf16.gmra.mxu0 %v2763
        %v4033 = vpop.f32.mrf.mxu0
        %v4034 = vadd.f32 %v3857, %v4033
        %v4035 = vpop.f32.mrf.mxu0
        %v4036 = vpop.f32.mrf.mxu0
        %v4037 = vadd.f32 %v3860, %v4036
        %v4038 = vpop.f32.mrf.mxu0
        %4039 = vmatprep.mubr.bf16.mxu0 %v2771
        %4040 = vmatmul.mubr.bf16.gmra.mxu0 %v2770
        %v4041 = vpop.f32.mrf.mxu0
        %v4042 = vadd.f32 %v3865, %v4041
        %v4043 = vpop.f32.mrf.mxu0
        %v4044 = vpop.f32.mrf.mxu0
        %v4045 = vadd.f32 %v3868, %v4044
        %v4046 = vpop.f32.mrf.mxu0
        %4047 = vmatprep.mubr.bf16.mxu0 %v2778
        %4048 = vmatmul.mubr.bf16.gmra.mxu0 %v2777
        %v4049 = vpop.f32.mrf.mxu0
        %v4050 = vadd.f32 %v3873, %v4049
        %v4051 = vpop.f32.mrf.mxu0
        %v4052 = vpop.f32.mrf.mxu0
        %v4053 = vadd.f32 %v3876, %v4052
        %v4054 = vpop.f32.mrf.mxu0
        %4055 = vmatprep.mubr.bf16.mxu0 %v2785
        %4056 = vmatmul.mubr.bf16.gmra.mxu0 %v2784
        %v4057 = vpop.f32.mrf.mxu0
        %v4058 = vadd.f32 %v3881, %v4057
        %v4059 = vpop.f32.mrf.mxu0
        %v4060 = vpop.f32.mrf.mxu0
        %v4061 = vadd.f32 %v3884, %v4060
        %v4062 = vpop.f32.mrf.mxu0
        %4063 = vmatprep.mubr.bf16.mxu0 %v2792
        %4064 = vmatmul.mubr.bf16.gmra.mxu0 %v2791
        %v4065 = vpop.f32.mrf.mxu0
        %v4066 = vadd.f32 %v3889, %v4065
        %v4067 = vpop.f32.mrf.mxu0
        %v4068 = vpop.f32.mrf.mxu0
        %v4069 = vadd.f32 %v3892, %v4068
        %v4070 = vpop.f32.mrf.mxu0
        %4071 = vmatprep.mubr.bf16.mxu0 %v2799
        %4072 = vmatmul.mubr.bf16.gmra.mxu0 %v2798
        %v4073 = vpop.f32.mrf.mxu0
        %v4074 = vadd.f32 %v3897, %v4073
        %v4075 = vpop.f32.mrf.mxu0
        %v4076 = vpop.f32.mrf.mxu0
        %v4077 = vadd.f32 %v3900, %v4076
        %v4078 = vpop.f32.mrf.mxu0
        %4079 = vmatprep.mubr.bf16.mxu0 %v2806
        %4080 = vmatmul.mubr.bf16.gmra.mxu0 %v2805
        %v4081 = vpop.f32.mrf.mxu0
        %v4082 = vadd.f32 %v3905, %v4081
        %v4083 = vpop.f32.mrf.mxu0
        %v4084 = vpop.f32.mrf.mxu0
        %v4085 = vadd.f32 %v3908, %v4084
        %v4086 = vpop.f32.mrf.mxu0
        %4087 = vmatprep.mubr.bf16.mxu0 %v2813
        %4088 = vmatmul.mubr.bf16.gmra.mxu0 %v2812
        %v4089 = vpop.f32.mrf.mxu0
        %v4090 = vadd.f32 %v3913, %v4089
        %v4091 = vpop.f32.mrf.mxu0
        %v4092 = vpop.f32.mrf.mxu0
        %v4093 = vadd.f32 %v3916, %v4092
        %v4094 = vpop.f32.mrf.mxu0
        %4095 = vmatprep.mubr.bf16.mxu0 %v2820
        %4096 = vmatmul.mubr.bf16.gmra.mxu0 %v2819
        %v4097 = vpop.f32.mrf.mxu0
        %v4098 = vadd.f32 %v3921, %v4097
        %v4099 = vpop.f32.mrf.mxu0
        %v4100 = vpop.f32.mrf.mxu0
        %v4101 = vadd.f32 %v3924, %v4100
        %v4102 = vpop.f32.mrf.mxu0
        %4103 = vmatprep.mubr.bf16.mxu0 %v2827
        %4104 = vmatmul.mubr.bf16.gmra.mxu0 %v2826
        %v4105 = vpop.f32.mrf.mxu0
        %v4106 = vadd.f32 %v3929, %v4105
        %v4107 = vpop.f32.mrf.mxu0
        %v4108 = vpop.f32.mrf.mxu0
        %v4109 = vadd.f32 %v3932, %v4108
        %v4110 = vpop.f32.mrf.mxu0
        %4111 = vmatprep.mubr.bf16.mxu0 %v2834
        %4112 = vmatmul.mubr.bf16.gmra.mxu0 %v2833
        %v4113 = vpop.f32.mrf.mxu0
        %v4114 = vadd.f32 %v3937, %v4113
        %v4115 = vpop.f32.mrf.mxu0
        %v4116 = vpop.f32.mrf.mxu0
        %v4117 = vadd.f32 %v3940, %v4116
        %v4118 = vpop.f32.mrf.mxu0
        %4119 = vmatprep.mubr.bf16.mxu0 %v2841
        %4120 = vmatmul.mubr.bf16.gmra.mxu0 %v2840
        %v4121 = vpop.f32.mrf.mxu0
        %v4122 = vadd.f32 %v3945, %v4121
        %v4123 = vpop.f32.mrf.mxu0
        %v4124 = vpop.f32.mrf.mxu0
        %v4125 = vadd.f32 %v3948, %v4124
        %v4126 = vpop.f32.mrf.mxu0
        %4127 = vmatprep.mubr.bf16.mxu0 %v2848
        %4128 = vmatmul.mubr.bf16.gmra.mxu0 %v2847
        %v4129 = vpop.f32.mrf.mxu0
        %v4130 = vadd.f32 %v3953, %v4129
        %v4131 = vpop.f32.mrf.mxu0
        %v4132 = vpop.f32.mrf.mxu0
        %v4133 = vadd.f32 %v3956, %v4132
        %v4134 = vpop.f32.mrf.mxu0
        %4135 = vmatprep.mubr.bf16.mxu0 %v2855
        %4136 = vmatmul.mubr.bf16.gmra.mxu0 %v2854
        %v4137 = vpop.f32.mrf.mxu0
        %v4138 = vadd.f32 %v3961, %v4137
        %v4139 = vpop.f32.mrf.mxu0
        %v4140 = vpop.f32.mrf.mxu0
        %v4141 = vadd.f32 %v3964, %v4140
        %v4142 = vpop.f32.mrf.mxu0
        %4143 = vmatprep.mubr.bf16.mxu0 %v2862
        %4144 = vmatmul.mubr.bf16.gmra.mxu0 %v2861
        %v4145 = vpop.f32.mrf.mxu0
        %v4146 = vadd.f32 %v3969, %v4145
        %v4147 = vpop.f32.mrf.mxu0
        %v4148 = vpop.f32.mrf.mxu0
        %v4149 = vadd.f32 %v3972, %v4148
        %v4150 = vpop.f32.mrf.mxu0
        %4151 = vmatprep.mubr.bf16.mxu0 %v2869
        %4152 = vmatmul.mubr.bf16.gmra.mxu0 %v2868
        %v4153 = vpop.f32.mrf.mxu0
        %v4154 = vadd.f32 %v3977, %v4153
        %v4155 = vpop.f32.mrf.mxu0
        %v4156 = vpop.f32.mrf.mxu0
        %v4157 = vadd.f32 %v3980, %v4156
        %v4158 = vpop.f32.mrf.mxu0
        %4159 = vmatprep.mubr.bf16.mxu0 %v2876
        %4160 = vmatmul.mubr.bf16.gmra.mxu0 %v2875
        %v4161 = vpop.f32.mrf.mxu0
        %v4162 = vadd.f32 %v3985, %v4161
        %v4163 = vpop.f32.mrf.mxu0
        %v4164 = vpop.f32.mrf.mxu0
        %v4165 = vadd.f32 %v3988, %v4164
        %v4166 = vpop.f32.mrf.mxu0
        %4167 = vmatprep.mubr.bf16.mxu0 %v2883
        %4168 = vmatmul.mubr.bf16.gmra.mxu0 %v2882
        %v4169 = vpop.f32.mrf.mxu0
        %v4170 = vadd.f32 %v3993, %v4169
        %v4171 = vpop.f32.mrf.mxu0
        %v4172 = vpop.f32.mrf.mxu0
        %v4173 = vadd.f32 %v3996, %v4172
        %v4174 = vpop.f32.mrf.mxu0
        %4175 = vdwg.mxu0
        %4176 = vmatprep.subr.bf16.mxu0 0
        %4177 = vmatpush1.bf16.msra.mxu0 %v3395
        %4178 = vmatprep.subr.bf16.mxu0 0
        %4179 = vmatpush1.bf16.msra.mxu0 %v3394
        %4180 = vmatprep.subr.bf16.mxu0 0
        %4181 = vmatpush1.bf16.msra.mxu0 %v3393
        %4182 = vmatprep.subr.bf16.mxu0 0
        %4183 = vmatpush1.bf16.msra.mxu0 %v3392
        %4184 = vmatprep.subr.bf16.mxu0 0
        %4185 = vmatpush1.bf16.msra.mxu0 %v3391
        %4186 = vmatprep.subr.bf16.mxu0 0
        %4187 = vmatpush1.bf16.msra.mxu0 %v3390
        %4188 = vmatprep.subr.bf16.mxu0 0
        %4189 = vmatpush1.bf16.msra.mxu0 %v3389
        %4190 = vmatprep.subr.bf16.mxu0 0
        %4191 = vmatpush1.bf16.msra.mxu0 %v3388
        %4192 = vmatprep.subr.bf16.mxu0 0
        %4193 = vmatpush2.bf16.msra.mxu0 0
        %4194 = vmatprep.subr.bf16.mxu0 0
        %4195 = vmatpush2.bf16.msra.mxu0 0
        %4196 = vmatprep.subr.bf16.mxu0 0
        %4197 = vmatpush2.bf16.msra.mxu0 0
        %4198 = vmatprep.subr.bf16.mxu0 0
        %4199 = vmatpush2.bf16.msra.mxu0 0
        %4200 = vmatprep.subr.bf16.mxu0 0
        %4201 = vmatpush2.bf16.msra.mxu0 0
        %4202 = vmatprep.subr.bf16.mxu0 0
        %4203 = vmatpush2.bf16.msra.mxu0 0
        %4204 = vmatprep.subr.bf16.mxu0 0
        %4205 = vmatpush2.bf16.msra.mxu0 0
        %4206 = vmatprep.subr.bf16.mxu0 0
        %4207 = vmatpush2.bf16.msra.mxu0 0
        %4208 = vmatprep.mubr.bf16.mxu0 0
        %4209 = vmatmul.mubr.bf16.gmra.mxu0 %v2765
        %v4210 = vpop.f32.mrf.mxu0
        %v4211 = vadd.f32 %v4034, %v4210
        %v4212 = vpop.f32.mrf.mxu0
        %v4213 = vpop.f32.mrf.mxu0
        %v4214 = vadd.f32 %v4037, %v4213
        %v4215 = vpop.f32.mrf.mxu0
        %4216 = vmatprep.mubr.bf16.mxu0 0
        %4217 = vmatmul.mubr.bf16.gmra.mxu0 %v2772
        %v4218 = vpop.f32.mrf.mxu0
        %v4219 = vadd.f32 %v4042, %v4218
        %v4220 = vpop.f32.mrf.mxu0
        %v4221 = vpop.f32.mrf.mxu0
        %v4222 = vadd.f32 %v4045, %v4221
        %v4223 = vpop.f32.mrf.mxu0
        %4224 = vmatprep.mubr.bf16.mxu0 0
        %4225 = vmatmul.mubr.bf16.gmra.mxu0 %v2779
        %v4226 = vpop.f32.mrf.mxu0
        %v4227 = vadd.f32 %v4050, %v4226
        %v4228 = vpop.f32.mrf.mxu0
        %v4229 = vpop.f32.mrf.mxu0
        %v4230 = vadd.f32 %v4053, %v4229
        %v4231 = vpop.f32.mrf.mxu0
        %4232 = vmatprep.mubr.bf16.mxu0 0
        %4233 = vmatmul.mubr.bf16.gmra.mxu0 %v2786
        %v4234 = vpop.f32.mrf.mxu0
        %v4235 = vadd.f32 %v4058, %v4234
        %v4236 = vpop.f32.mrf.mxu0
        %v4237 = vpop.f32.mrf.mxu0
        %v4238 = vadd.f32 %v4061, %v4237
        %v4239 = vpop.f32.mrf.mxu0
        %4240 = vmatprep.mubr.bf16.mxu0 0
        %4241 = vmatmul.mubr.bf16.gmra.mxu0 %v2793
        %v4242 = vpop.f32.mrf.mxu0
        %v4243 = vadd.f32 %v4066, %v4242
        %v4244 = vpop.f32.mrf.mxu0
        %v4245 = vpop.f32.mrf.mxu0
        %v4246 = vadd.f32 %v4069, %v4245
        %v4247 = vpop.f32.mrf.mxu0
        %4248 = vmatprep.mubr.bf16.mxu0 0
        %4249 = vmatmul.mubr.bf16.gmra.mxu0 %v2800
        %v4250 = vpop.f32.mrf.mxu0
        %v4251 = vadd.f32 %v4074, %v4250
        %v4252 = vpop.f32.mrf.mxu0
        %v4253 = vpop.f32.mrf.mxu0
        %v4254 = vadd.f32 %v4077, %v4253
        %v4255 = vpop.f32.mrf.mxu0
        %4256 = vmatprep.mubr.bf16.mxu0 0
        %4257 = vmatmul.mubr.bf16.gmra.mxu0 %v2807
        %v4258 = vpop.f32.mrf.mxu0
        %v4259 = vadd.f32 %v4082, %v4258
        %v4260 = vpop.f32.mrf.mxu0
        %v4261 = vpop.f32.mrf.mxu0
        %v4262 = vadd.f32 %v4085, %v4261
        %v4263 = vpop.f32.mrf.mxu0
        %4264 = vmatprep.mubr.bf16.mxu0 0
        %4265 = vmatmul.mubr.bf16.gmra.mxu0 %v2814
        %v4266 = vpop.f32.mrf.mxu0
        %v4267 = vadd.f32 %v4090, %v4266
        %v4268 = vpop.f32.mrf.mxu0
        %v4269 = vpop.f32.mrf.mxu0
        %v4270 = vadd.f32 %v4093, %v4269
        %v4271 = vpop.f32.mrf.mxu0
        %4272 = vmatprep.mubr.bf16.mxu0 0
        %4273 = vmatmul.mubr.bf16.gmra.mxu0 %v2821
        %v4274 = vpop.f32.mrf.mxu0
        %v4275 = vadd.f32 %v4098, %v4274
        %v4276 = vpop.f32.mrf.mxu0
        %v4277 = vpop.f32.mrf.mxu0
        %v4278 = vadd.f32 %v4101, %v4277
        %v4279 = vpop.f32.mrf.mxu0
        %4280 = vmatprep.mubr.bf16.mxu0 0
        %4281 = vmatmul.mubr.bf16.gmra.mxu0 %v2828
        %v4282 = vpop.f32.mrf.mxu0
        %v4283 = vadd.f32 %v4106, %v4282
        %v4284 = vpop.f32.mrf.mxu0
        %v4285 = vpop.f32.mrf.mxu0
        %v4286 = vadd.f32 %v4109, %v4285
        %v4287 = vpop.f32.mrf.mxu0
        %4288 = vmatprep.mubr.bf16.mxu0 0
        %4289 = vmatmul.mubr.bf16.gmra.mxu0 %v2835
        %v4290 = vpop.f32.mrf.mxu0
        %v4291 = vadd.f32 %v4114, %v4290
        %v4292 = vpop.f32.mrf.mxu0
        %v4293 = vpop.f32.mrf.mxu0
        %v4294 = vadd.f32 %v4117, %v4293
        %v4295 = vpop.f32.mrf.mxu0
        %4296 = vmatprep.mubr.bf16.mxu0 0
        %4297 = vmatmul.mubr.bf16.gmra.mxu0 %v2842
        %v4298 = vpop.f32.mrf.mxu0
        %v4299 = vadd.f32 %v4122, %v4298
        %v4300 = vpop.f32.mrf.mxu0
        %v4301 = vpop.f32.mrf.mxu0
        %v4302 = vadd.f32 %v4125, %v4301
        %v4303 = vpop.f32.mrf.mxu0
        %4304 = vmatprep.mubr.bf16.mxu0 0
        %4305 = vmatmul.mubr.bf16.gmra.mxu0 %v2849
        %v4306 = vpop.f32.mrf.mxu0
        %v4307 = vadd.f32 %v4130, %v4306
        %v4308 = vpop.f32.mrf.mxu0
        %v4309 = vpop.f32.mrf.mxu0
        %v4310 = vadd.f32 %v4133, %v4309
        %v4311 = vpop.f32.mrf.mxu0
        %4312 = vmatprep.mubr.bf16.mxu0 0
        %4313 = vmatmul.mubr.bf16.gmra.mxu0 %v2856
        %v4314 = vpop.f32.mrf.mxu0
        %v4315 = vadd.f32 %v4138, %v4314
        %v4316 = vpop.f32.mrf.mxu0
        %v4317 = vpop.f32.mrf.mxu0
        %v4318 = vadd.f32 %v4141, %v4317
        %v4319 = vpop.f32.mrf.mxu0
        %4320 = vmatprep.mubr.bf16.mxu0 0
        %4321 = vmatmul.mubr.bf16.gmra.mxu0 %v2863
        %v4322 = vpop.f32.mrf.mxu0
        %v4323 = vadd.f32 %v4146, %v4322
        %v4324 = vpop.f32.mrf.mxu0
        %v4325 = vpop.f32.mrf.mxu0
        %v4326 = vadd.f32 %v4149, %v4325
        %v4327 = vpop.f32.mrf.mxu0
        %4328 = vmatprep.mubr.bf16.mxu0 0
        %4329 = vmatmul.mubr.bf16.gmra.mxu0 %v2870
        %v4330 = vpop.f32.mrf.mxu0
        %v4331 = vadd.f32 %v4154, %v4330
        %v4332 = vpop.f32.mrf.mxu0
        %v4333 = vpop.f32.mrf.mxu0
        %v4334 = vadd.f32 %v4157, %v4333
        %v4335 = vpop.f32.mrf.mxu0
        %4336 = vmatprep.mubr.bf16.mxu0 0
        %4337 = vmatmul.mubr.bf16.gmra.mxu0 %v2877
        %v4338 = vpop.f32.mrf.mxu0
        %v4339 = vadd.f32 %v4162, %v4338
        %v4340 = vpop.f32.mrf.mxu0
        %v4341 = vpop.f32.mrf.mxu0
        %v4342 = vadd.f32 %v4165, %v4341
        %v4343 = vpop.f32.mrf.mxu0
        %4344 = vmatprep.mubr.bf16.mxu0 0
        %4345 = vmatmul.mubr.bf16.gmra.mxu0 %v2884
        %v4346 = vpop.f32.mrf.mxu0
        %v4347 = vadd.f32 %v4170, %v4346
        %v4348 = vpop.f32.mrf.mxu0
        %v4349 = vpop.f32.mrf.mxu0
        %v4350 = vadd.f32 %v4173, %v4349
        %v4351 = vpop.f32.mrf.mxu0
        %4352 = vdwg.mxu0
        %v4353 = vmax.f32 %v4211, 0.0
        %v4354 = vmax.f32 %v4214, 0.0
        %v4355 = vmax.f32 %v4219, 0.0
        %v4356 = vmax.f32 %v4222, 0.0
        %v4357 = vmax.f32 %v4227, 0.0
        %v4358 = vmax.f32 %v4230, 0.0
        %v4359 = vmax.f32 %v4235, 0.0
        %v4360 = vmax.f32 %v4238, 0.0
        %v4361 = vmax.f32 %v4243, 0.0
        %v4362 = vmax.f32 %v4246, 0.0
        %v4363 = vmax.f32 %v4251, 0.0
        %v4364 = vmax.f32 %v4254, 0.0
        %v4365 = vmax.f32 %v4259, 0.0
        %v4366 = vmax.f32 %v4262, 0.0
        %v4367 = vmax.f32 %v4267, 0.0
        %v4368 = vmax.f32 %v4270, 0.0
        %v4369 = vmax.f32 %v4275, 0.0
        %v4370 = vmax.f32 %v4278, 0.0
        %v4371 = vmax.f32 %v4283, 0.0
        %v4372 = vmax.f32 %v4286, 0.0
        %v4373 = vmax.f32 %v4291, 0.0
        %v4374 = vmax.f32 %v4294, 0.0
        %v4375 = vmax.f32 %v4299, 0.0
        %v4376 = vmax.f32 %v4302, 0.0
        %v4377 = vmax.f32 %v4307, 0.0
        %v4378 = vmax.f32 %v4310, 0.0
        %v4379 = vmax.f32 %v4315, 0.0
        %v4380 = vmax.f32 %v4318, 0.0
        %v4381 = vmax.f32 %v4323, 0.0
        %v4382 = vmax.f32 %v4326, 0.0
        %v4383 = vmax.f32 %v4331, 0.0
        %v4384 = vmax.f32 %v4334, 0.0
        %v4385 = vmax.f32 %v4339, 0.0
        %v4386 = vmax.f32 %v4342, 0.0
        %v4387 = vmax.f32 %v4347, 0.0
        %v4388 = vmax.f32 %v4350, 0.0
        %4389 = vst [vmem:[#allocation4] sm:$0xff] %v4353
        %4390 = vst [vmem:[#allocation4 + $0x8] sm:$0xff] %v4354
        %4391 = vst [vmem:[#allocation4 + $0x10] sm:$0xff] %v4355
        %4392 = vst [vmem:[#allocation4 + $0x18] sm:$0xff] %v4356
        %4393 = vst [vmem:[#allocation4 + $0x20] sm:$0xff] %v4357
        %4394 = vst [vmem:[#allocation4 + $0x28] sm:$0xff] %v4358
        %4395 = vst [vmem:[#allocation4 + $0x30] sm:$0xff] %v4359
        %4396 = vst [vmem:[#allocation4 + $0x38] sm:$0xff] %v4360
        %4397 = vst [vmem:[#allocation4 + $0x40] sm:$0xff] %v4361
        %4398 = vst [vmem:[#allocation4 + $0x48] sm:$0xff] %v4362
        %4399 = vst [vmem:[#allocation4 + $0x50] sm:$0xff] %v4363
        %4400 = vst [vmem:[#allocation4 + $0x58] sm:$0xff] %v4364
        %4401 = vst [vmem:[#allocation4 + $0x60] sm:$0xff] %v4365
        %4402 = vst [vmem:[#allocation4 + $0x68] sm:$0xff] %v4366
        %4403 = vst [vmem:[#allocation4 + $0x70] sm:$0xff] %v4367
        %4404 = vst [vmem:[#allocation4 + $0x78] sm:$0xff] %v4368
        %4405 = vst [vmem:[#allocation4 + $0x80] sm:$0xff] %v4369
        %4406 = vst [vmem:[#allocation4 + $0x88] sm:$0xff] %v4370
        %4407 = vst [vmem:[#allocation4 + $0x90] sm:$0xff] %v4371
        %4408 = vst [vmem:[#allocation4 + $0x98] sm:$0xff] %v4372
        %4409 = vst [vmem:[#allocation4 + $0xa0] sm:$0xff] %v4373
        %4410 = vst [vmem:[#allocation4 + $0xa8] sm:$0xff] %v4374
        %4411 = vst [vmem:[#allocation4 + $0xb0] sm:$0xff] %v4375
        %4412 = vst [vmem:[#allocation4 + $0xb8] sm:$0xff] %v4376
        %4413 = vst [vmem:[#allocation4 + $0xc0] sm:$0xff] %v4377
        %4414 = vst [vmem:[#allocation4 + $0xc8] sm:$0xff] %v4378
        %4415 = vst [vmem:[#allocation4 + $0xd0] sm:$0xff] %v4379
        %4416 = vst [vmem:[#allocation4 + $0xd8] sm:$0xff] %v4380
        %4417 = vst [vmem:[#allocation4 + $0xe0] sm:$0xff] %v4381
        %4418 = vst [vmem:[#allocation4 + $0xe8] sm:$0xff] %v4382
        %4419 = vst [vmem:[#allocation4 + $0xf0] sm:$0xff] %v4383
        %4420 = vst [vmem:[#allocation4 + $0xf8] sm:$0xff] %v4384
        %4421 = vst [vmem:[#allocation4 + $0x100] sm:$0xff] %v4385
        %4422 = vst [vmem:[#allocation4 + $0x108] sm:$0xff] %v4386
        %4423 = vst [vmem:[#allocation4 + $0x110] sm:$0xff] %v4387
        %4424 = vst [vmem:[#allocation4 + $0x118] sm:$0xff] %v4388
        %v4425 = vld [vmem:[#allocation4] ss:$2 sm:$0xff]
        %s4426 = scalar_lea.vmem [#allocation4], 1
        %v4427 = vld [vmem:[%s4426] ss:$2 sm:$0xff]
        %v4428 = vmax.f32 %v4425, %v4427
        %s4429 = scalar_lea.vmem [#allocation4], 18
        %v4430 = vld [vmem:[%s4429] ss:$2 sm:$0xff]
        %s4431 = scalar_lea.vmem [#allocation4], 19
        %v4432 = vld [vmem:[%s4431] ss:$2 sm:$0xff]
        %v4433 = vmax.f32 %v4430, %v4432
        %v4434 = vmax.f32 %v4428, %v4433
        %4435 = vst [vmem:[#allocation5 + $0xb] sm:$0xff] %v4434
        %s4436 = scalar_lea.vmem [#allocation4], 36
        %v4437 = vld [vmem:[%s4436] ss:$2 sm:$0xff]
        %s4438 = scalar_lea.vmem [#allocation4], 37
        %v4439 = vld [vmem:[%s4438] ss:$2 sm:$0xff]
        %v4440 = vmax.f32 %v4437, %v4439
        %s4441 = scalar_lea.vmem [#allocation4], 54
        %v4442 = vld [vmem:[%s4441] ss:$2 sm:$0xff]
        %s4443 = scalar_lea.vmem [#allocation4], 55
        %v4444 = vld [vmem:[%s4443] ss:$2 sm:$0xff]
        %v4445 = vmax.f32 %v4442, %v4444
        %v4446 = vmax.f32 %v4440, %v4445
        %4447 = vst [vmem:[#allocation5 + $0x15] sm:$0xff] %v4446
        %s4448 = scalar_lea.vmem [#allocation4], 72
        %v4449 = vld [vmem:[%s4448] ss:$2 sm:$0xff]
        %s4450 = scalar_lea.vmem [#allocation4], 73
        %v4451 = vld [vmem:[%s4450] ss:$2 sm:$0xff]
        %v4452 = vmax.f32 %v4449, %v4451
        %s4453 = scalar_lea.vmem [#allocation4], 90
        %v4454 = vld [vmem:[%s4453] ss:$2 sm:$0xff]
        %s4455 = scalar_lea.vmem [#allocation4], 91
        %v4456 = vld [vmem:[%s4455] ss:$2 sm:$0xff]
        %v4457 = vmax.f32 %v4454, %v4456
        %v4458 = vmax.f32 %v4452, %v4457
        %4459 = vst [vmem:[#allocation5 + $0x1f] sm:$0xff] %v4458
        %s4460 = scalar_lea.vmem [#allocation4], 108
        %v4461 = vld [vmem:[%s4460] ss:$2 sm:$0xff]
        %s4462 = scalar_lea.vmem [#allocation4], 109
        %v4463 = vld [vmem:[%s4462] ss:$2 sm:$0xff]
        %v4464 = vmax.f32 %v4461, %v4463
        %s4465 = scalar_lea.vmem [#allocation4], 126
        %v4466 = vld [vmem:[%s4465] ss:$2 sm:$0xff]
        %s4467 = scalar_lea.vmem [#allocation4], 127
        %v4468 = vld [vmem:[%s4467] ss:$2 sm:$0xff]
        %v4469 = vmax.f32 %v4466, %v4468
        %v4470 = vmax.f32 %v4464, %v4469
        %4471 = vst [vmem:[#allocation5 + $0x29] sm:$0xff] %v4470
        %s4472 = scalar_lea.vmem [#allocation4], 144
        %v4473 = vld [vmem:[%s4472] ss:$2 sm:$0xff]
        %s4474 = scalar_lea.vmem [#allocation4], 145
        %v4475 = vld [vmem:[%s4474] ss:$2 sm:$0xff]
        %v4476 = vmax.f32 %v4473, %v4475
        %s4477 = scalar_lea.vmem [#allocation4], 162
        %v4478 = vld [vmem:[%s4477] ss:$2 sm:$0xff]
        %s4479 = scalar_lea.vmem [#allocation4], 163
        %v4480 = vld [vmem:[%s4479] ss:$2 sm:$0xff]
        %v4481 = vmax.f32 %v4478, %v4480
        %v4482 = vmax.f32 %v4476, %v4481
        %4483 = vst [vmem:[#allocation5 + $0x33] sm:$0xff] %v4482
        %s4484 = scalar_lea.vmem [#allocation4], 180
        %v4485 = vld [vmem:[%s4484] ss:$2 sm:$0xff]
        %s4486 = scalar_lea.vmem [#allocation4], 181
        %v4487 = vld [vmem:[%s4486] ss:$2 sm:$0xff]
        %v4488 = vmax.f32 %v4485, %v4487
        %s4489 = scalar_lea.vmem [#allocation4], 198
        %v4490 = vld [vmem:[%s4489] ss:$2 sm:$0xff]
        %s4491 = scalar_lea.vmem [#allocation4], 199
        %v4492 = vld [vmem:[%s4491] ss:$2 sm:$0xff]
        %v4493 = vmax.f32 %v4490, %v4492
        %v4494 = vmax.f32 %v4488, %v4493
        %4495 = vst [vmem:[#allocation5 + $0x3d] sm:$0xff] %v4494
        %s4496 = scalar_lea.vmem [#allocation4], 216
        %v4497 = vld [vmem:[%s4496] ss:$2 sm:$0xff]
        %s4498 = scalar_lea.vmem [#allocation4], 217
        %v4499 = vld [vmem:[%s4498] ss:$2 sm:$0xff]
        %v4500 = vmax.f32 %v4497, %v4499
        %s4501 = scalar_lea.vmem [#allocation4], 234
        %v4502 = vld [vmem:[%s4501] ss:$2 sm:$0xff]
        %s4503 = scalar_lea.vmem [#allocation4], 235
        %v4504 = vld [vmem:[%s4503] ss:$2 sm:$0xff]
        %v4505 = vmax.f32 %v4502, %v4504
        %v4506 = vmax.f32 %v4500, %v4505
        %4507 = vst [vmem:[#allocation5 + $0x47] sm:$0xff] %v4506
        %s4508 = scalar_lea.vmem [#allocation4], 252
        %v4509 = vld [vmem:[%s4508] ss:$2 sm:$0xff]
        %s4510 = scalar_lea.vmem [#allocation4], 253
        %v4511 = vld [vmem:[%s4510] ss:$2 sm:$0xff]
        %v4512 = vmax.f32 %v4509, %v4511
        %s4513 = scalar_lea.vmem [#allocation4], 270
        %v4514 = vld [vmem:[%s4513] ss:$2 sm:$0xff]
        %s4515 = scalar_lea.vmem [#allocation4], 271
        %v4516 = vld [vmem:[%s4515] ss:$2 sm:$0xff]
        %v4517 = vmax.f32 %v4514, %v4516
        %v4518 = vmax.f32 %v4512, %v4517
        %4519 = vst [vmem:[#allocation5 + $0x51] sm:$0xff] %v4518
        %v4520 = vld [vmem:[#allocation5] sm:$0xff]
        %v4521 = vld [vmem:[#allocation5 + $0x8] sm:$0xff]
        %v4522 = vld [vmem:[#allocation5 + $0x10] sm:$0xff]
        %v4523 = vld [vmem:[#allocation5 + $0x18] sm:$0xff]
        %v4524 = vld [vmem:[#allocation5 + $0x20] sm:$0xff]
        %v4525 = vld [vmem:[#allocation5 + $0x28] sm:$0xff]
        %v4526 = vld [vmem:[#allocation5 + $0x30] sm:$0xff]
        %v4527 = vld [vmem:[#allocation5 + $0x38] sm:$0xff]
        %v4528 = vld [vmem:[#allocation5 + $0x40] sm:$0xff]
        %v4529 = vld [vmem:[#allocation5 + $0x48] sm:$0xff]
        %v4530 = vld [vmem:[#allocation5 + $0x1] sm:$0xff]
        %v4531 = vld [vmem:[#allocation5 + $0x9] sm:$0xff]
        %v4532 = vld [vmem:[#allocation5 + $0x11] sm:$0xff]
        %v4533 = vld [vmem:[#allocation5 + $0x19] sm:$0xff]
        %v4534 = vld [vmem:[#allocation5 + $0x21] sm:$0xff]
        %v4535 = vld [vmem:[#allocation5 + $0x29] sm:$0xff]
        %v4536 = vld [vmem:[#allocation5 + $0x31] sm:$0xff]
        %v4537 = vld [vmem:[#allocation5 + $0x39] sm:$0xff]
        %v4538 = vld [vmem:[#allocation5 + $0x41] sm:$0xff]
        %v4539 = vld [vmem:[#allocation5 + $0x49] sm:$0xff]
        %v4540 = vld [vmem:[#allocation5 + $0x2] sm:$0xff]
        %v4541 = vld [vmem:[#allocation5 + $0xa] sm:$0xff]
        %v4542 = vld [vmem:[#allocation5 + $0x12] sm:$0xff]
        %v4543 = vld [vmem:[#allocation5 + $0x1a] sm:$0xff]
        %v4544 = vld [vmem:[#allocation5 + $0x22] sm:$0xff]
        %v4545 = vld [vmem:[#allocation5 + $0x2a] sm:$0xff]
        %v4546 = vld [vmem:[#allocation5 + $0x32] sm:$0xff]
        %v4547 = vld [vmem:[#allocation5 + $0x3a] sm:$0xff]
        %v4548 = vld [vmem:[#allocation5 + $0x42] sm:$0xff]
        %v4549 = vld [vmem:[#allocation5 + $0x4a] sm:$0xff]
        %v4550 = vld [vmem:[#allocation5 + $0x52] sm:$0xff]
        %v4551 = vld [vmem:[#allocation5 + $0xb] sm:$0xff]
        %v4552 = vld [vmem:[#allocation5 + $0x13] sm:$0xff]
        %v4553 = vld [vmem:[#allocation5 + $0x1b] sm:$0xff]
        %v4554 = vld [vmem:[#allocation5 + $0x23] sm:$0xff]
        %v4555 = vld [vmem:[#allocation5 + $0x2b] sm:$0xff]
        %v4556 = vld [vmem:[#allocation5 + $0x33] sm:$0xff]
        %v4557 = vld [vmem:[#allocation5 + $0x3b] sm:$0xff]
        %v4558 = vld [vmem:[#allocation5 + $0x43] sm:$0xff]
        %v4559 = vld [vmem:[#allocation5 + $0x4b] sm:$0xff]
        %v4560 = vld [vmem:[#allocation5 + $0x53] sm:$0xff]
        %v4561 = vld [vmem:[#allocation5 + $0xc] sm:$0xff]
        %v4562 = vld [vmem:[#allocation5 + $0x14] sm:$0xff]
        %v4563 = vld [vmem:[#allocation5 + $0x1c] sm:$0xff]
        %v4564 = vld [vmem:[#allocation5 + $0x24] sm:$0xff]
        %v4565 = vld [vmem:[#allocation5 + $0x2c] sm:$0xff]
        %v4566 = vld [vmem:[#allocation5 + $0x34] sm:$0xff]
        %v4567 = vld [vmem:[#allocation5 + $0x3c] sm:$0xff]
        %v4568 = vld [vmem:[#allocation5 + $0x44] sm:$0xff]
        %v4569 = vld [vmem:[#allocation5 + $0x4c] sm:$0xff]
        %v4570 = vld [vmem:[#allocation5 + $0x54] sm:$0xff]
        %v4571 = vld [vmem:[#allocation5 + $0x5c] sm:$0xff]
        %v4572 = vld [vmem:[#allocation5 + $0x15] sm:$0xff]
        %v4573 = vld [vmem:[#allocation5 + $0x1d] sm:$0xff]
        %v4574 = vld [vmem:[#allocation5 + $0x25] sm:$0xff]
        %v4575 = vld [vmem:[#allocation5 + $0x2d] sm:$0xff]
        %v4576 = vld [vmem:[#allocation5 + $0x35] sm:$0xff]
        %v4577 = vld [vmem:[#allocation5 + $0x3d] sm:$0xff]
        %v4578 = vld [vmem:[#allocation5 + $0x45] sm:$0xff]
        %v4579 = vld [vmem:[#allocation5 + $0x4d] sm:$0xff]
        %v4580 = vld [vmem:[#allocation5 + $0x55] sm:$0xff]
        %v4581 = vld [vmem:[#allocation5 + $0x5d] sm:$0xff]
        %v4582 = vld [vmem:[#allocation5 + $0x16] sm:$0xff]
        %v4583 = vld [vmem:[#allocation5 + $0x1e] sm:$0xff]
        %v4584 = vld [vmem:[#allocation5 + $0x26] sm:$0xff]
        %v4585 = vld [vmem:[#allocation5 + $0x2e] sm:$0xff]
        %v4586 = vld [vmem:[#allocation5 + $0x36] sm:$0xff]
        %v4587 = vld [vmem:[#allocation5 + $0x3e] sm:$0xff]
        %v4588 = vld [vmem:[#allocation5 + $0x46] sm:$0xff]
        %v4589 = vld [vmem:[#allocation5 + $0x4e] sm:$0xff]
        %v4590 = vld [vmem:[#allocation5 + $0x56] sm:$0xff]
        %v4591 = vld [vmem:[#allocation5 + $0x5e] sm:$0xff]
        %v4592 = vpack.c.bf16 %v4521, %v4520
        %v4593 = vpack.c.bf16 %v4531, %v4530
        %v4594 = vpack.c.bf16 %v4541, %v4540
        %v4595 = vpack.c.bf16 %v4542, %v4541
        %v4596 = vpack.c.bf16 %v4552, %v4551
        %v4597 = vpack.c.bf16 %v4562, %v4561
        %v4598 = vpack.c.bf16 %v4563, %v4562
        %v4599 = vpack.c.bf16 %v4573, %v4572
        %v4600 = vpack.c.bf16 %v4583, %v4582
        %v4601 = vpack.c.bf16 %v4523, %v4522
        %v4602 = vpack.c.bf16 %v4533, %v4532
        %v4603 = vpack.c.bf16 %v4543, %v4542
        %v4604 = vpack.c.bf16 %v4544, %v4543
        %v4605 = vpack.c.bf16 %v4554, %v4553
        %v4606 = vpack.c.bf16 %v4564, %v4563
        %v4607 = vpack.c.bf16 %v4565, %v4564
        %v4608 = vpack.c.bf16 %v4575, %v4574
        %v4609 = vpack.c.bf16 %v4585, %v4584
        %v4610 = vpack.c.bf16 %v4525, %v4524
        %v4611 = vpack.c.bf16 %v4535, %v4534
        %v4612 = vpack.c.bf16 %v4545, %v4544
        %v4613 = vpack.c.bf16 %v4546, %v4545
        %v4614 = vpack.c.bf16 %v4556, %v4555
        %v4615 = vpack.c.bf16 %v4566, %v4565
        %v4616 = vpack.c.bf16 %v4567, %v4566
        %v4617 = vpack.c.bf16 %v4577, %v4576
        %v4618 = vpack.c.bf16 %v4587, %v4586
        %v4619 = vpack.c.bf16 %v4527, %v4526
        %v4620 = vpack.c.bf16 %v4537, %v4536
        %v4621 = vpack.c.bf16 %v4547, %v4546
        %v4622 = vpack.c.bf16 %v4548, %v4547
        %v4623 = vpack.c.bf16 %v4558, %v4557
        %v4624 = vpack.c.bf16 %v4568, %v4567
        %v4625 = vpack.c.bf16 %v4569, %v4568
        %v4626 = vpack.c.bf16 %v4579, %v4578
        %v4627 = vpack.c.bf16 %v4589, %v4588
        %v4628 = vpack.c.bf16 %v4529, %v4528
        %v4629 = vpack.c.bf16 %v4539, %v4538
        %v4630 = vpack.c.bf16 %v4549, %v4548
        %v4631 = vpack.c.bf16 %v4550, %v4549
        %v4632 = vpack.c.bf16 %v4560, %v4559
        %v4633 = vpack.c.bf16 %v4570, %v4569
        %v4634 = vpack.c.bf16 %v4571, %v4570
        %v4635 = vpack.c.bf16 %v4581, %v4580
        %v4636 = vpack.c.bf16 %v4591, %v4590
        %v4637 = vld [vmem:[%s5] sm:$0xf]
        %v4638 = vld [vmem:[%s5 + $0x4] sm:$0xf]
        %v4639 = vld [vmem:[%s5 + $0x8] sm:$0xf]
        %v4640 = vld [vmem:[%s5 + $0xc] sm:$0xf]
        %v4641 = vld [vmem:[%s5 + $0x10] sm:$0xf]
        %v4642 = vld [vmem:[%s5 + $0x14] sm:$0xf]
        %v4643 = vld [vmem:[%s5 + $0x18] sm:$0xf]
        %v4644 = vld [vmem:[%s5 + $0x1c] sm:$0xf]
        %v4645 = vld [vmem:[%s5 + $0x20] sm:$0xf]
        %v4646 = vld [vmem:[%s5 + $0x24] sm:$0xf]
        %v4647 = vld [vmem:[%s5 + $0x28] sm:$0xf]
        %v4648 = vld [vmem:[%s5 + $0x2c] sm:$0xf]
        %v4649 = vld [vmem:[%s5 + $0x30] sm:$0xf]
        %v4650 = vld [vmem:[%s5 + $0x34] sm:$0xf]
        %v4651 = vld [vmem:[%s5 + $0x38] sm:$0xf]
        %v4652 = vld [vmem:[%s5 + $0x3c] sm:$0xf]
        %v4653 = vld [vmem:[%s5 + $0x40] sm:$0xf]
        %v4654 = vld [vmem:[%s5 + $0x44] sm:$0xf]
        %v4655 = vld [vmem:[%s5 + $0x48] sm:$0xf]
        %v4656 = vld [vmem:[%s5 + $0x4c] sm:$0xf]
        %v4657 = vld [vmem:[%s5 + $0x50] sm:$0xf]
        %v4658 = vld [vmem:[%s5 + $0x54] sm:$0xf]
        %v4659 = vld [vmem:[%s5 + $0x58] sm:$0xf]
        %v4660 = vld [vmem:[%s5 + $0x5c] sm:$0xf]
        %v4661 = vld [vmem:[%s5 + $0x60] sm:$0xf]
        %v4662 = vld [vmem:[%s5 + $0x64] sm:$0xf]
        %v4663 = vld [vmem:[%s5 + $0x68] sm:$0xf]
        %v4664 = vld [vmem:[%s5 + $0x6c] sm:$0xf]
        %v4665 = vld [vmem:[%s5 + $0x70] sm:$0xf]
        %v4666 = vld [vmem:[%s5 + $0x74] sm:$0xf]
        %v4667 = vld [vmem:[%s5 + $0x78] sm:$0xf]
        %v4668 = vld [vmem:[%s5 + $0x7c] sm:$0xf]
        %v4669 = vld [vmem:[%s5 + $0x80] sm:$0xf]
        %v4670 = vld [vmem:[%s5 + $0x84] sm:$0xf]
        %v4671 = vld [vmem:[%s5 + $0x88] sm:$0xf]
        %v4672 = vld [vmem:[%s5 + $0x8c] sm:$0xf]
        %v4673 = vld [vmem:[%s5 + $0x90] sm:$0xf]
        %v4674 = vld [vmem:[%s5 + $0x94] sm:$0xf]
        %v4675 = vld [vmem:[%s5 + $0x98] sm:$0xf]
        %v4676 = vld [vmem:[%s5 + $0x9c] sm:$0xf]
        %v4677 = vld [vmem:[%s5 + $0xa0] sm:$0xf]
        %v4678 = vld [vmem:[%s5 + $0xa4] sm:$0xf]
        %v4679 = vld [vmem:[%s5 + $0xa8] sm:$0xf]
        %v4680 = vld [vmem:[%s5 + $0xac] sm:$0xf]
        %v4681 = vld [vmem:[%s5 + $0xb0] sm:$0xf]
        %v4682 = vld [vmem:[%s5 + $0xb4] sm:$0xf]
        %v4683 = vld [vmem:[%s5 + $0xb8] sm:$0xf]
        %v4684 = vld [vmem:[%s5 + $0xbc] sm:$0xf]
        %v4685 = vld [vmem:[%s5 + $0xc0] sm:$0xf]
        %v4686 = vld [vmem:[%s5 + $0xc4] sm:$0xf]
        %v4687 = vld [vmem:[%s5 + $0xc8] sm:$0xf]
        %v4688 = vld [vmem:[%s5 + $0xcc] sm:$0xf]
        %v4689 = vld [vmem:[%s5 + $0xd0] sm:$0xf]
        %v4690 = vld [vmem:[%s5 + $0xd4] sm:$0xf]
        %v4691 = vld [vmem:[%s5 + $0xd8] sm:$0xf]
        %v4692 = vld [vmem:[%s5 + $0xdc] sm:$0xf]
        %v4693 = vld [vmem:[%s5 + $0xe0] sm:$0xf]
        %v4694 = vld [vmem:[%s5 + $0xe4] sm:$0xf]
        %v4695 = vld [vmem:[%s5 + $0xe8] sm:$0xf]
        %v4696 = vld [vmem:[%s5 + $0xec] sm:$0xf]
        %v4697 = vld [vmem:[%s5 + $0xf0] sm:$0xf]
        %v4698 = vld [vmem:[%s5 + $0xf4] sm:$0xf]
        %v4699 = vld [vmem:[%s5 + $0xf8] sm:$0xf]
        %v4700 = vld [vmem:[%s5 + $0xfc] sm:$0xf]
        %v4701 = vld [vmem:[%s5 + $0x100] sm:$0xf]
        %v4702 = vld [vmem:[%s5 + $0x104] sm:$0xf]
        %v4703 = vld [vmem:[%s5 + $0x108] sm:$0xf]
        %v4704 = vld [vmem:[%s5 + $0x10c] sm:$0xf]
        %v4705 = vld [vmem:[%s5 + $0x110] sm:$0xf]
        %v4706 = vld [vmem:[%s5 + $0x114] sm:$0xf]
        %v4707 = vld [vmem:[%s5 + $0x118] sm:$0xf]
        %v4708 = vld [vmem:[%s5 + $0x11c] sm:$0xf]
        %v4709 = vld [vmem:[%s5 + $0x120] sm:$0xf]
        %v4710 = vld [vmem:[%s5 + $0x124] sm:$0xf]
        %v4711 = vld [vmem:[%s5 + $0x128] sm:$0xf]
        %v4712 = vld [vmem:[%s5 + $0x12c] sm:$0xf]
        %v4713 = vld [vmem:[%s5 + $0x130] sm:$0xf]
        %v4714 = vld [vmem:[%s5 + $0x134] sm:$0xf]
        %v4715 = vld [vmem:[%s5 + $0x138] sm:$0xf]
        %v4716 = vld [vmem:[%s5 + $0x13c] sm:$0xf]
        %v4717 = vld [vmem:[%s5 + $0x140] sm:$0xf]
        %v4718 = vld [vmem:[%s5 + $0x144] sm:$0xf]
        %v4719 = vld [vmem:[%s5 + $0x148] sm:$0xf]
        %v4720 = vld [vmem:[%s5 + $0x14c] sm:$0xf]
        %v4721 = vld [vmem:[%s5 + $0x150] sm:$0xf]
        %v4722 = vld [vmem:[%s5 + $0x154] sm:$0xf]
        %v4723 = vld [vmem:[%s5 + $0x158] sm:$0xf]
        %v4724 = vld [vmem:[%s5 + $0x15c] sm:$0xf]
        %v4725 = vld [vmem:[%s5 + $0x160] sm:$0xf]
        %v4726 = vld [vmem:[%s5 + $0x164] sm:$0xf]
        %v4727 = vld [vmem:[%s5 + $0x168] sm:$0xf]
        %v4728 = vld [vmem:[%s5 + $0x16c] sm:$0xf]
        %v4729 = vld [vmem:[%s5 + $0x170] sm:$0xf]
        %v4730 = vld [vmem:[%s5 + $0x174] sm:$0xf]
        %v4731 = vld [vmem:[%s5 + $0x178] sm:$0xf]
        %v4732 = vld [vmem:[%s5 + $0x17c] sm:$0xf]
        %v4733 = vld [vmem:[%s5 + $0x180] sm:$0xf]
        %v4734 = vld [vmem:[%s5 + $0x184] sm:$0xf]
        %v4735 = vld [vmem:[%s5 + $0x188] sm:$0xf]
        %v4736 = vld [vmem:[%s5 + $0x18c] sm:$0xf]
        %v4737 = vld [vmem:[%s5 + $0x190] sm:$0xf]
        %v4738 = vld [vmem:[%s5 + $0x194] sm:$0xf]
        %v4739 = vld [vmem:[%s5 + $0x198] sm:$0xf]
        %v4740 = vld [vmem:[%s5 + $0x19c] sm:$0xf]
        %v4741 = vld [vmem:[%s5 + $0x1a0] sm:$0xf]
        %v4742 = vld [vmem:[%s5 + $0x1a4] sm:$0xf]
        %v4743 = vld [vmem:[%s5 + $0x1a8] sm:$0xf]
        %v4744 = vld [vmem:[%s5 + $0x1ac] sm:$0xf]
        %v4745 = vld [vmem:[%s5 + $0x1b0] sm:$0xf]
        %v4746 = vld [vmem:[%s5 + $0x1b4] sm:$0xf]
        %v4747 = vld [vmem:[%s5 + $0x1b8] sm:$0xf]
        %v4748 = vld [vmem:[%s5 + $0x1bc] sm:$0xf]
        %v4749 = vld [vmem:[%s5 + $0x1c0] sm:$0xf]
        %v4750 = vld [vmem:[%s5 + $0x1c4] sm:$0xf]
        %v4751 = vld [vmem:[%s5 + $0x1c8] sm:$0xf]
        %v4752 = vld [vmem:[%s5 + $0x1cc] sm:$0xf]
        %v4753 = vld [vmem:[%s5 + $0x1d0] sm:$0xf]
        %v4754 = vld [vmem:[%s5 + $0x1d4] sm:$0xf]
        %v4755 = vld [vmem:[%s5 + $0x1d8] sm:$0xf]
        %v4756 = vld [vmem:[%s5 + $0x1dc] sm:$0xf]
        %v4757 = vld [vmem:[%s5 + $0x1e0] sm:$0xf]
        %v4758 = vld [vmem:[%s5 + $0x1e4] sm:$0xf]
        %v4759 = vld [vmem:[%s5 + $0x1e8] sm:$0xf]
        %v4760 = vld [vmem:[%s5 + $0x1ec] sm:$0xf]
        %v4761 = vld [vmem:[%s5 + $0x1f0] sm:$0xf]
        %v4762 = vld [vmem:[%s5 + $0x1f4] sm:$0xf]
        %v4763 = vld [vmem:[%s5 + $0x1f8] sm:$0xf]
        %v4764 = vld [vmem:[%s5 + $0x1fc] sm:$0xf]
        %v4765 = vld [vmem:[%s5 + $0x200] sm:$0xf]
        %v4766 = vld [vmem:[%s5 + $0x204] sm:$0xf]
        %v4767 = vld [vmem:[%s5 + $0x208] sm:$0xf]
        %v4768 = vld [vmem:[%s5 + $0x20c] sm:$0xf]
        %v4769 = vld [vmem:[%s5 + $0x210] sm:$0xf]
        %v4770 = vld [vmem:[%s5 + $0x214] sm:$0xf]
        %v4771 = vld [vmem:[%s5 + $0x218] sm:$0xf]
        %v4772 = vld [vmem:[%s5 + $0x21c] sm:$0xf]
        %v4773 = vld [vmem:[%s5 + $0x220] sm:$0xf]
        %v4774 = vld [vmem:[%s5 + $0x224] sm:$0xf]
        %v4775 = vld [vmem:[%s5 + $0x228] sm:$0xf]
        %v4776 = vld [vmem:[%s5 + $0x22c] sm:$0xf]
        %v4777 = vld [vmem:[%s5 + $0x230] sm:$0xf]
        %v4778 = vld [vmem:[%s5 + $0x234] sm:$0xf]
        %v4779 = vld [vmem:[%s5 + $0x238] sm:$0xf]
        %v4780 = vld [vmem:[%s5 + $0x23c] sm:$0xf]
        %v4781 = vld [vmem:[%s6] sm:$0x1]
        %v4783 = vlaneseq
        %v4784 = vshrl.u32 %v4783, 7
        %v4785 = vsub.s32 0, %v4784
        %v4786 = vrot.slane %v4781, %v4785
        %v4932 = vunpack.c.l.b16 %v4637
        %v4933 = vunpack.c.l.b16 %v4638
        %v4934 = vunpack.c.l.b16 %v4639
        %v4935 = vunpack.c.l.b16 %v4640
        %v4936 = vunpack.c.l.b16 %v4641
        %v4937 = vunpack.c.l.b16 %v4642
        %v4938 = vunpack.c.l.b16 %v4643
        %v4939 = vunpack.c.l.b16 %v4644
        %v4940 = vunpack.c.l.b16 %v4645
        %v4941 = vunpack.c.l.b16 %v4646
        %v4942 = vunpack.c.l.b16 %v4647
        %v4943 = vunpack.c.l.b16 %v4648
        %v4944 = vunpack.c.l.b16 %v4649
        %v4945 = vunpack.c.l.b16 %v4650
        %v4946 = vunpack.c.l.b16 %v4651
        %v4947 = vunpack.c.l.b16 %v4652
        %v4948 = vunpack.c.l.b16 %v4653
        %v4949 = vunpack.c.l.b16 %v4654
        %v4950 = vunpack.c.l.b16 %v4655
        %v4951 = vunpack.c.l.b16 %v4656
        %v4952 = vunpack.c.l.b16 %v4657
        %v4953 = vunpack.c.l.b16 %v4658
        %v4954 = vunpack.c.l.b16 %v4659
        %v4955 = vunpack.c.l.b16 %v4660
        %v4956 = vunpack.c.l.b16 %v4661
        %v4957 = vunpack.c.l.b16 %v4662
        %v4958 = vunpack.c.l.b16 %v4663
        %v4959 = vunpack.c.l.b16 %v4664
        %v4960 = vunpack.c.l.b16 %v4665
        %v4961 = vunpack.c.l.b16 %v4666
        %v4962 = vunpack.c.l.b16 %v4667
        %v4963 = vunpack.c.l.b16 %v4668
        %v4964 = vunpack.c.l.b16 %v4669
        %v4965 = vunpack.c.l.b16 %v4670
        %v4966 = vunpack.c.l.b16 %v4671
        %v4967 = vunpack.c.l.b16 %v4672
        %v4968 = vunpack.c.l.b16 %v4673
        %v4969 = vunpack.c.l.b16 %v4674
        %v4970 = vunpack.c.l.b16 %v4675
        %v4971 = vunpack.c.l.b16 %v4676
        %v4972 = vunpack.c.l.b16 %v4677
        %v4973 = vunpack.c.l.b16 %v4678
        %v4974 = vunpack.c.l.b16 %v4679
        %v4975 = vunpack.c.l.b16 %v4680
        %v4976 = vunpack.c.l.b16 %v4681
        %v4977 = vunpack.c.l.b16 %v4682
        %v4978 = vunpack.c.l.b16 %v4683
        %v4979 = vunpack.c.l.b16 %v4684
        %v4980 = vunpack.c.l.b16 %v4685
        %v4981 = vunpack.c.l.b16 %v4686
        %v4982 = vunpack.c.l.b16 %v4687
        %v4983 = vunpack.c.l.b16 %v4688
        %v4984 = vunpack.c.l.b16 %v4689
        %v4985 = vunpack.c.l.b16 %v4690
        %v4986 = vunpack.c.l.b16 %v4691
        %v4987 = vunpack.c.l.b16 %v4692
        %v4988 = vunpack.c.l.b16 %v4693
        %v4989 = vunpack.c.l.b16 %v4694
        %v4990 = vunpack.c.l.b16 %v4695
        %v4991 = vunpack.c.l.b16 %v4696
        %v4992 = vunpack.c.l.b16 %v4697
        %v4993 = vunpack.c.l.b16 %v4698
        %v4994 = vunpack.c.l.b16 %v4699
        %v4995 = vunpack.c.l.b16 %v4700
        %v4996 = vunpack.c.l.b16 %v4701
        %v4997 = vunpack.c.l.b16 %v4702
        %v4998 = vunpack.c.l.b16 %v4703
        %v4999 = vunpack.c.l.b16 %v4704
        %v5000 = vunpack.c.l.b16 %v4705
        %v5001 = vunpack.c.l.b16 %v4706
        %v5002 = vunpack.c.l.b16 %v4707
        %v5003 = vunpack.c.l.b16 %v4708
        %v5004 = vunpack.c.l.b16 %v4709
        %v5005 = vunpack.c.l.b16 %v4710
        %v5006 = vunpack.c.l.b16 %v4711
        %v5007 = vunpack.c.l.b16 %v4712
        %v5008 = vunpack.c.l.b16 %v4713
        %v5009 = vunpack.c.l.b16 %v4714
        %v5010 = vunpack.c.l.b16 %v4715
        %v5011 = vunpack.c.l.b16 %v4716
        %v5012 = vunpack.c.l.b16 %v4717
        %v5013 = vunpack.c.l.b16 %v4718
        %v5014 = vunpack.c.l.b16 %v4719
        %v5015 = vunpack.c.l.b16 %v4720
        %v5016 = vunpack.c.l.b16 %v4721
        %v5017 = vunpack.c.l.b16 %v4722
        %v5018 = vunpack.c.l.b16 %v4723
        %v5019 = vunpack.c.l.b16 %v4724
        %v5020 = vunpack.c.l.b16 %v4725
        %v5021 = vunpack.c.l.b16 %v4726
        %v5022 = vunpack.c.l.b16 %v4727
        %v5023 = vunpack.c.l.b16 %v4728
        %v5024 = vunpack.c.l.b16 %v4729
        %v5025 = vunpack.c.l.b16 %v4730
        %v5026 = vunpack.c.l.b16 %v4731
        %v5027 = vunpack.c.l.b16 %v4732
        %v5028 = vunpack.c.l.b16 %v4733
        %v5029 = vunpack.c.l.b16 %v4734
        %v5030 = vunpack.c.l.b16 %v4735
        %v5031 = vunpack.c.l.b16 %v4736
        %v5032 = vunpack.c.l.b16 %v4737
        %v5033 = vunpack.c.l.b16 %v4738
        %v5034 = vunpack.c.l.b16 %v4739
        %v5035 = vunpack.c.l.b16 %v4740
        %v5036 = vunpack.c.l.b16 %v4741
        %v5037 = vunpack.c.l.b16 %v4742
        %v5038 = vunpack.c.l.b16 %v4743
        %v5039 = vunpack.c.l.b16 %v4744
        %v5040 = vunpack.c.l.b16 %v4745
        %v5041 = vunpack.c.l.b16 %v4746
        %v5042 = vunpack.c.l.b16 %v4747
        %v5043 = vunpack.c.l.b16 %v4748
        %v5044 = vunpack.c.l.b16 %v4749
        %v5045 = vunpack.c.l.b16 %v4750
        %v5046 = vunpack.c.l.b16 %v4751
        %v5047 = vunpack.c.l.b16 %v4752
        %v5048 = vunpack.c.l.b16 %v4753
        %v5049 = vunpack.c.l.b16 %v4754
        %v5050 = vunpack.c.l.b16 %v4755
        %v5051 = vunpack.c.l.b16 %v4756
        %v5052 = vunpack.c.l.b16 %v4757
        %v5053 = vunpack.c.l.b16 %v4758
        %v5054 = vunpack.c.l.b16 %v4759
        %v5055 = vunpack.c.l.b16 %v4760
        %v5056 = vunpack.c.l.b16 %v4761
        %v5057 = vunpack.c.l.b16 %v4762
        %v5058 = vunpack.c.l.b16 %v4763
        %v5059 = vunpack.c.l.b16 %v4764
        %v5060 = vunpack.c.l.b16 %v4765
        %v5061 = vunpack.c.l.b16 %v4766
        %v5062 = vunpack.c.l.b16 %v4767
        %v5063 = vunpack.c.l.b16 %v4768
        %v5064 = vunpack.c.l.b16 %v4769
        %v5065 = vunpack.c.l.b16 %v4770
        %v5066 = vunpack.c.l.b16 %v4771
        %v5067 = vunpack.c.l.b16 %v4772
        %v5068 = vunpack.c.l.b16 %v4773
        %v5069 = vunpack.c.l.b16 %v4774
        %v5070 = vunpack.c.l.b16 %v4775
        %v5071 = vunpack.c.l.b16 %v4776
        %v5072 = vunpack.c.l.b16 %v4777
        %v5073 = vunpack.c.l.b16 %v4778
        %v5074 = vunpack.c.l.b16 %v4779
        %v5075 = vunpack.c.l.b16 %v4780
        %v5076 = vpack.c.b16 %v4933, %v4932
        %v5077 = vpack.c.b16 %v4935, %v4934
        %v5078 = vpack.c.b16 %v4937, %v4936
        %v5079 = vpack.c.b16 %v4939, %v4938
        %v5080 = vpack.c.b16 %v4941, %v4940
        %v5081 = vpack.c.b16 %v4943, %v4942
        %v5082 = vpack.c.b16 %v4945, %v4944
        %v5083 = vpack.c.b16 %v4947, %v4946
        %v5084 = vpack.c.b16 %v4949, %v4948
        %v5085 = vpack.c.b16 %v4951, %v4950
        %v5086 = vpack.c.b16 %v4953, %v4952
        %v5087 = vpack.c.b16 %v4955, %v4954
        %v5088 = vpack.c.b16 %v4957, %v4956
        %v5089 = vpack.c.b16 %v4959, %v4958
        %v5090 = vpack.c.b16 %v4961, %v4960
        %v5091 = vpack.c.b16 %v4963, %v4962
        %v5092 = vpack.c.b16 %v4965, %v4964
        %v5093 = vpack.c.b16 %v4967, %v4966
        %v5094 = vpack.c.b16 %v4969, %v4968
        %v5095 = vpack.c.b16 %v4971, %v4970
        %v5096 = vpack.c.b16 %v4973, %v4972
        %v5097 = vpack.c.b16 %v4975, %v4974
        %v5098 = vpack.c.b16 %v4977, %v4976
        %v5099 = vpack.c.b16 %v4979, %v4978
        %v5100 = vpack.c.b16 %v4981, %v4980
        %v5101 = vpack.c.b16 %v4983, %v4982
        %v5102 = vpack.c.b16 %v4985, %v4984
        %v5103 = vpack.c.b16 %v4987, %v4986
        %v5104 = vpack.c.b16 %v4989, %v4988
        %v5105 = vpack.c.b16 %v4991, %v4990
        %v5106 = vpack.c.b16 %v4993, %v4992
        %v5107 = vpack.c.b16 %v4995, %v4994
        %v5108 = vpack.c.b16 %v4997, %v4996
        %v5109 = vpack.c.b16 %v4999, %v4998
        %v5110 = vpack.c.b16 %v5001, %v5000
        %v5111 = vpack.c.b16 %v5003, %v5002
        %v5112 = vpack.c.b16 %v5005, %v5004
        %v5113 = vpack.c.b16 %v5007, %v5006
        %v5114 = vpack.c.b16 %v5009, %v5008
        %v5115 = vpack.c.b16 %v5011, %v5010
        %v5116 = vpack.c.b16 %v5013, %v5012
        %v5117 = vpack.c.b16 %v5015, %v5014
        %v5118 = vpack.c.b16 %v5017, %v5016
        %v5119 = vpack.c.b16 %v5019, %v5018
        %v5120 = vpack.c.b16 %v5021, %v5020
        %v5121 = vpack.c.b16 %v5023, %v5022
        %v5122 = vpack.c.b16 %v5025, %v5024
        %v5123 = vpack.c.b16 %v5027, %v5026
        %v5124 = vpack.c.b16 %v5029, %v5028
        %v5125 = vpack.c.b16 %v5031, %v5030
        %v5126 = vpack.c.b16 %v5033, %v5032
        %v5127 = vpack.c.b16 %v5035, %v5034
        %v5128 = vpack.c.b16 %v5037, %v5036
        %v5129 = vpack.c.b16 %v5039, %v5038
        %v5130 = vpack.c.b16 %v5041, %v5040
        %v5131 = vpack.c.b16 %v5043, %v5042
        %v5132 = vpack.c.b16 %v5045, %v5044
        %v5133 = vpack.c.b16 %v5047, %v5046
        %v5134 = vpack.c.b16 %v5049, %v5048
        %v5135 = vpack.c.b16 %v5051, %v5050
        %v5136 = vpack.c.b16 %v5053, %v5052
        %v5137 = vpack.c.b16 %v5055, %v5054
        %v5138 = vpack.c.b16 %v5057, %v5056
        %v5139 = vpack.c.b16 %v5059, %v5058
        %v5140 = vpack.c.b16 %v5061, %v5060
        %v5141 = vpack.c.b16 %v5063, %v5062
        %v5142 = vpack.c.b16 %v5065, %v5064
        %v5143 = vpack.c.b16 %v5067, %v5066
        %v5144 = vpack.c.b16 %v5069, %v5068
        %v5145 = vpack.c.b16 %v5071, %v5070
        %v5146 = vpack.c.b16 %v5073, %v5072
        %v5147 = vpack.c.b16 %v5075, %v5074
        %5220 = vmatprep.subr.bf16.mxu0 0
        %5221 = vmatpush1.bf16.msra.mxu0 %v5083
        %5222 = vmatprep.subr.bf16.mxu0 0
        %5223 = vmatpush1.bf16.msra.mxu0 %v5082
        %5224 = vmatprep.subr.bf16.mxu0 0
        %5225 = vmatpush1.bf16.msra.mxu0 %v5081
        %5226 = vmatprep.subr.bf16.mxu0 0
        %5227 = vmatpush1.bf16.msra.mxu0 %v5080
        %5228 = vmatprep.subr.bf16.mxu0 0
        %5229 = vmatpush1.bf16.msra.mxu0 %v5079
        %5230 = vmatprep.subr.bf16.mxu0 0
        %5231 = vmatpush1.bf16.msra.mxu0 %v5078
        %5232 = vmatprep.subr.bf16.mxu0 0
        %5233 = vmatpush1.bf16.msra.mxu0 %v5077
        %5234 = vmatprep.subr.bf16.mxu0 0
        %5235 = vmatpush1.bf16.msra.mxu0 %v5076
        %5236 = vmatprep.subr.bf16.mxu0 0
        %5237 = vmatpush2.bf16.msra.mxu0 %v5091
        %5238 = vmatprep.subr.bf16.mxu0 0
        %5239 = vmatpush2.bf16.msra.mxu0 %v5090
        %5240 = vmatprep.subr.bf16.mxu0 0
        %5241 = vmatpush2.bf16.msra.mxu0 %v5089
        %5242 = vmatprep.subr.bf16.mxu0 0
        %5243 = vmatpush2.bf16.msra.mxu0 %v5088
        %5244 = vmatprep.subr.bf16.mxu0 0
        %5245 = vmatpush2.bf16.msra.mxu0 %v5087
        %5246 = vmatprep.subr.bf16.mxu0 0
        %5247 = vmatpush2.bf16.msra.mxu0 %v5086
        %5248 = vmatprep.subr.bf16.mxu0 0
        %5249 = vmatpush2.bf16.msra.mxu0 %v5085
        %5250 = vmatprep.subr.bf16.mxu0 0
        %5251 = vmatpush2.bf16.msra.mxu0 %v5084
        %5252 = vmatprep.mubr.bf16.mxu0 %v4593
        %5253 = vmatmul.mubr.bf16.gmra.mxu0 %v4592
        %v5254 = vpop.f32.mrf.mxu0
        %v5255 = vadd.f32 %v4786, %v5254
        %v5256 = vpop.f32.mrf.mxu0
        %v5257 = vpop.f32.mrf.mxu0
        %v5258 = vadd.f32 %v4786, %v5257
        %v5259 = vpop.f32.mrf.mxu0
        %5260 = vmatprep.mubr.bf16.mxu0 %v4602
        %5261 = vmatmul.mubr.bf16.gmra.mxu0 %v4601
        %v5262 = vpop.f32.mrf.mxu0
        %v5263 = vadd.f32 %v4786, %v5262
        %v5264 = vpop.f32.mrf.mxu0
        %v5265 = vpop.f32.mrf.mxu0
        %v5266 = vadd.f32 %v4786, %v5265
        %v5267 = vpop.f32.mrf.mxu0
        %5268 = vmatprep.mubr.bf16.mxu0 %v4611
        %5269 = vmatmul.mubr.bf16.gmra.mxu0 %v4610
        %v5270 = vpop.f32.mrf.mxu0
        %v5271 = vadd.f32 %v4786, %v5270
        %v5272 = vpop.f32.mrf.mxu0
        %v5273 = vpop.f32.mrf.mxu0
        %v5274 = vadd.f32 %v4786, %v5273
        %v5275 = vpop.f32.mrf.mxu0
        %5276 = vmatprep.mubr.bf16.mxu0 %v4620
        %5277 = vmatmul.mubr.bf16.gmra.mxu0 %v4619
        %v5278 = vpop.f32.mrf.mxu0
        %v5279 = vadd.f32 %v4786, %v5278
        %v5280 = vpop.f32.mrf.mxu0
        %v5281 = vpop.f32.mrf.mxu0
        %v5282 = vadd.f32 %v4786, %v5281
        %v5283 = vpop.f32.mrf.mxu0
        %5284 = vmatprep.mubr.bf16.mxu0 %v4629
        %5285 = vmatmul.mubr.bf16.gmra.mxu0 %v4628
        %v5286 = vpop.f32.mrf.mxu0
        %v5287 = vadd.f32 %v4786, %v5286
        %v5288 = vpop.f32.mrf.mxu0
        %v5289 = vpop.f32.mrf.mxu0
        %v5290 = vadd.f32 %v4786, %v5289
        %v5291 = vpop.f32.mrf.mxu0
        %5292 = vdwg.mxu0
        %5293 = vmatprep.subr.bf16.mxu0 0
        %5294 = vmatpush1.bf16.msra.mxu0 %v5099
        %5295 = vmatprep.subr.bf16.mxu0 0
        %5296 = vmatpush1.bf16.msra.mxu0 %v5098
        %5297 = vmatprep.subr.bf16.mxu0 0
        %5298 = vmatpush1.bf16.msra.mxu0 %v5097
        %5299 = vmatprep.subr.bf16.mxu0 0
        %5300 = vmatpush1.bf16.msra.mxu0 %v5096
        %5301 = vmatprep.subr.bf16.mxu0 0
        %5302 = vmatpush1.bf16.msra.mxu0 %v5095
        %5303 = vmatprep.subr.bf16.mxu0 0
        %5304 = vmatpush1.bf16.msra.mxu0 %v5094
        %5305 = vmatprep.subr.bf16.mxu0 0
        %5306 = vmatpush1.bf16.msra.mxu0 %v5093
        %5307 = vmatprep.subr.bf16.mxu0 0
        %5308 = vmatpush1.bf16.msra.mxu0 %v5092
        %5309 = vmatprep.subr.bf16.mxu0 0
        %5310 = vmatpush2.bf16.msra.mxu0 %v5107
        %5311 = vmatprep.subr.bf16.mxu0 0
        %5312 = vmatpush2.bf16.msra.mxu0 %v5106
        %5313 = vmatprep.subr.bf16.mxu0 0
        %5314 = vmatpush2.bf16.msra.mxu0 %v5105
        %5315 = vmatprep.subr.bf16.mxu0 0
        %5316 = vmatpush2.bf16.msra.mxu0 %v5104
        %5317 = vmatprep.subr.bf16.mxu0 0
        %5318 = vmatpush2.bf16.msra.mxu0 %v5103
        %5319 = vmatprep.subr.bf16.mxu0 0
        %5320 = vmatpush2.bf16.msra.mxu0 %v5102
        %5321 = vmatprep.subr.bf16.mxu0 0
        %5322 = vmatpush2.bf16.msra.mxu0 %v5101
        %5323 = vmatprep.subr.bf16.mxu0 0
        %5324 = vmatpush2.bf16.msra.mxu0 %v5100
        %5325 = vmatprep.mubr.bf16.mxu0 %v4595
        %5326 = vmatmul.mubr.bf16.gmra.mxu0 %v4594
        %v5327 = vpop.f32.mrf.mxu0
        %v5328 = vadd.f32 %v5255, %v5327
        %v5329 = vpop.f32.mrf.mxu0
        %v5330 = vpop.f32.mrf.mxu0
        %v5331 = vadd.f32 %v5258, %v5330
        %v5332 = vpop.f32.mrf.mxu0
        %5333 = vmatprep.mubr.bf16.mxu0 %v4604
        %5334 = vmatmul.mubr.bf16.gmra.mxu0 %v4603
        %v5335 = vpop.f32.mrf.mxu0
        %v5336 = vadd.f32 %v5263, %v5335
        %v5337 = vpop.f32.mrf.mxu0
        %v5338 = vpop.f32.mrf.mxu0
        %v5339 = vadd.f32 %v5266, %v5338
        %v5340 = vpop.f32.mrf.mxu0
        %5341 = vmatprep.mubr.bf16.mxu0 %v4613
        %5342 = vmatmul.mubr.bf16.gmra.mxu0 %v4612
        %v5343 = vpop.f32.mrf.mxu0
        %v5344 = vadd.f32 %v5271, %v5343
        %v5345 = vpop.f32.mrf.mxu0
        %v5346 = vpop.f32.mrf.mxu0
        %v5347 = vadd.f32 %v5274, %v5346
        %v5348 = vpop.f32.mrf.mxu0
        %5349 = vmatprep.mubr.bf16.mxu0 %v4622
        %5350 = vmatmul.mubr.bf16.gmra.mxu0 %v4621
        %v5351 = vpop.f32.mrf.mxu0
        %v5352 = vadd.f32 %v5279, %v5351
        %v5353 = vpop.f32.mrf.mxu0
        %v5354 = vpop.f32.mrf.mxu0
        %v5355 = vadd.f32 %v5282, %v5354
        %v5356 = vpop.f32.mrf.mxu0
        %5357 = vmatprep.mubr.bf16.mxu0 %v4631
        %5358 = vmatmul.mubr.bf16.gmra.mxu0 %v4630
        %v5359 = vpop.f32.mrf.mxu0
        %v5360 = vadd.f32 %v5287, %v5359
        %v5361 = vpop.f32.mrf.mxu0
        %v5362 = vpop.f32.mrf.mxu0
        %v5363 = vadd.f32 %v5290, %v5362
        %v5364 = vpop.f32.mrf.mxu0
        %5365 = vdwg.mxu0
        %5366 = vmatprep.subr.bf16.mxu0 0
        %5367 = vmatpush1.bf16.msra.mxu0 %v5115
        %5368 = vmatprep.subr.bf16.mxu0 0
        %5369 = vmatpush1.bf16.msra.mxu0 %v5114
        %5370 = vmatprep.subr.bf16.mxu0 0
        %5371 = vmatpush1.bf16.msra.mxu0 %v5113
        %5372 = vmatprep.subr.bf16.mxu0 0
        %5373 = vmatpush1.bf16.msra.mxu0 %v5112
        %5374 = vmatprep.subr.bf16.mxu0 0
        %5375 = vmatpush1.bf16.msra.mxu0 %v5111
        %5376 = vmatprep.subr.bf16.mxu0 0
        %5377 = vmatpush1.bf16.msra.mxu0 %v5110
        %5378 = vmatprep.subr.bf16.mxu0 0
        %5379 = vmatpush1.bf16.msra.mxu0 %v5109
        %5380 = vmatprep.subr.bf16.mxu0 0
        %5381 = vmatpush1.bf16.msra.mxu0 %v5108
        %5382 = vmatprep.subr.bf16.mxu0 0
        %5383 = vmatpush2.bf16.msra.mxu0 %v5123
        %5384 = vmatprep.subr.bf16.mxu0 0
        %5385 = vmatpush2.bf16.msra.mxu0 %v5122
        %5386 = vmatprep.subr.bf16.mxu0 0
        %5387 = vmatpush2.bf16.msra.mxu0 %v5121
        %5388 = vmatprep.subr.bf16.mxu0 0
        %5389 = vmatpush2.bf16.msra.mxu0 %v5120
        %5390 = vmatprep.subr.bf16.mxu0 0
        %5391 = vmatpush2.bf16.msra.mxu0 %v5119
        %5392 = vmatprep.subr.bf16.mxu0 0
        %5393 = vmatpush2.bf16.msra.mxu0 %v5118
        %5394 = vmatprep.subr.bf16.mxu0 0
        %5395 = vmatpush2.bf16.msra.mxu0 %v5117
        %5396 = vmatprep.subr.bf16.mxu0 0
        %5397 = vmatpush2.bf16.msra.mxu0 %v5116
        %5398 = vmatprep.mubr.bf16.mxu0 %v4597
        %5399 = vmatmul.mubr.bf16.gmra.mxu0 %v4596
        %v5400 = vpop.f32.mrf.mxu0
        %v5401 = vadd.f32 %v5328, %v5400
        %v5402 = vpop.f32.mrf.mxu0
        %v5403 = vpop.f32.mrf.mxu0
        %v5404 = vadd.f32 %v5331, %v5403
        %v5405 = vpop.f32.mrf.mxu0
        %5406 = vmatprep.mubr.bf16.mxu0 %v4606
        %5407 = vmatmul.mubr.bf16.gmra.mxu0 %v4605
        %v5408 = vpop.f32.mrf.mxu0
        %v5409 = vadd.f32 %v5336, %v5408
        %v5410 = vpop.f32.mrf.mxu0
        %v5411 = vpop.f32.mrf.mxu0
        %v5412 = vadd.f32 %v5339, %v5411
        %v5413 = vpop.f32.mrf.mxu0
        %5414 = vmatprep.mubr.bf16.mxu0 %v4615
        %5415 = vmatmul.mubr.bf16.gmra.mxu0 %v4614
        %v5416 = vpop.f32.mrf.mxu0
        %v5417 = vadd.f32 %v5344, %v5416
        %v5418 = vpop.f32.mrf.mxu0
        %v5419 = vpop.f32.mrf.mxu0
        %v5420 = vadd.f32 %v5347, %v5419
        %v5421 = vpop.f32.mrf.mxu0
        %5422 = vmatprep.mubr.bf16.mxu0 %v4624
        %5423 = vmatmul.mubr.bf16.gmra.mxu0 %v4623
        %v5424 = vpop.f32.mrf.mxu0
        %v5425 = vadd.f32 %v5352, %v5424
        %v5426 = vpop.f32.mrf.mxu0
        %v5427 = vpop.f32.mrf.mxu0
        %v5428 = vadd.f32 %v5355, %v5427
        %v5429 = vpop.f32.mrf.mxu0
        %5430 = vmatprep.mubr.bf16.mxu0 %v4633
        %5431 = vmatmul.mubr.bf16.gmra.mxu0 %v4632
        %v5432 = vpop.f32.mrf.mxu0
        %v5433 = vadd.f32 %v5360, %v5432
        %v5434 = vpop.f32.mrf.mxu0
        %v5435 = vpop.f32.mrf.mxu0
        %v5436 = vadd.f32 %v5363, %v5435
        %v5437 = vpop.f32.mrf.mxu0
        %5438 = vdwg.mxu0
        %5439 = vmatprep.subr.bf16.mxu0 0
        %5440 = vmatpush1.bf16.msra.mxu0 %v5131
        %5441 = vmatprep.subr.bf16.mxu0 0
        %5442 = vmatpush1.bf16.msra.mxu0 %v5130
        %5443 = vmatprep.subr.bf16.mxu0 0
        %5444 = vmatpush1.bf16.msra.mxu0 %v5129
        %5445 = vmatprep.subr.bf16.mxu0 0
        %5446 = vmatpush1.bf16.msra.mxu0 %v5128
        %5447 = vmatprep.subr.bf16.mxu0 0
        %5448 = vmatpush1.bf16.msra.mxu0 %v5127
        %5449 = vmatprep.subr.bf16.mxu0 0
        %5450 = vmatpush1.bf16.msra.mxu0 %v5126
        %5451 = vmatprep.subr.bf16.mxu0 0
        %5452 = vmatpush1.bf16.msra.mxu0 %v5125
        %5453 = vmatprep.subr.bf16.mxu0 0
        %5454 = vmatpush1.bf16.msra.mxu0 %v5124
        %5455 = vmatprep.subr.bf16.mxu0 0
        %5456 = vmatpush2.bf16.msra.mxu0 %v5139
        %5457 = vmatprep.subr.bf16.mxu0 0
        %5458 = vmatpush2.bf16.msra.mxu0 %v5138
        %5459 = vmatprep.subr.bf16.mxu0 0
        %5460 = vmatpush2.bf16.msra.mxu0 %v5137
        %5461 = vmatprep.subr.bf16.mxu0 0
        %5462 = vmatpush2.bf16.msra.mxu0 %v5136
        %5463 = vmatprep.subr.bf16.mxu0 0
        %5464 = vmatpush2.bf16.msra.mxu0 %v5135
        %5465 = vmatprep.subr.bf16.mxu0 0
        %5466 = vmatpush2.bf16.msra.mxu0 %v5134
        %5467 = vmatprep.subr.bf16.mxu0 0
        %5468 = vmatpush2.bf16.msra.mxu0 %v5133
        %5469 = vmatprep.subr.bf16.mxu0 0
        %5470 = vmatpush2.bf16.msra.mxu0 %v5132
        %5471 = vmatprep.mubr.bf16.mxu0 %v4599
        %5472 = vmatmul.mubr.bf16.gmra.mxu0 %v4598
        %v5473 = vpop.f32.mrf.mxu0
        %v5474 = vadd.f32 %v5401, %v5473
        %v5475 = vpop.f32.mrf.mxu0
        %v5476 = vpop.f32.mrf.mxu0
        %v5477 = vadd.f32 %v5404, %v5476
        %v5478 = vpop.f32.mrf.mxu0
        %5479 = vmatprep.mubr.bf16.mxu0 %v4608
        %5480 = vmatmul.mubr.bf16.gmra.mxu0 %v4607
        %v5481 = vpop.f32.mrf.mxu0
        %v5482 = vadd.f32 %v5409, %v5481
        %v5483 = vpop.f32.mrf.mxu0
        %v5484 = vpop.f32.mrf.mxu0
        %v5485 = vadd.f32 %v5412, %v5484
        %v5486 = vpop.f32.mrf.mxu0
        %5487 = vmatprep.mubr.bf16.mxu0 %v4617
        %5488 = vmatmul.mubr.bf16.gmra.mxu0 %v4616
        %v5489 = vpop.f32.mrf.mxu0
        %v5490 = vadd.f32 %v5417, %v5489
        %v5491 = vpop.f32.mrf.mxu0
        %v5492 = vpop.f32.mrf.mxu0
        %v5493 = vadd.f32 %v5420, %v5492
        %v5494 = vpop.f32.mrf.mxu0
        %5495 = vmatprep.mubr.bf16.mxu0 %v4626
        %5496 = vmatmul.mubr.bf16.gmra.mxu0 %v4625
        %v5497 = vpop.f32.mrf.mxu0
        %v5498 = vadd.f32 %v5425, %v5497
        %v5499 = vpop.f32.mrf.mxu0
        %v5500 = vpop.f32.mrf.mxu0
        %v5501 = vadd.f32 %v5428, %v5500
        %v5502 = vpop.f32.mrf.mxu0
        %5503 = vmatprep.mubr.bf16.mxu0 %v4635
        %5504 = vmatmul.mubr.bf16.gmra.mxu0 %v4634
        %v5505 = vpop.f32.mrf.mxu0
        %v5506 = vadd.f32 %v5433, %v5505
        %v5507 = vpop.f32.mrf.mxu0
        %v5508 = vpop.f32.mrf.mxu0
        %v5509 = vadd.f32 %v5436, %v5508
        %v5510 = vpop.f32.mrf.mxu0
        %5511 = vdwg.mxu0
        %5512 = vmatprep.subr.bf16.mxu0 0
        %5513 = vmatpush1.bf16.msra.mxu0 %v5147
        %5514 = vmatprep.subr.bf16.mxu0 0
        %5515 = vmatpush1.bf16.msra.mxu0 %v5146
        %5516 = vmatprep.subr.bf16.mxu0 0
        %5517 = vmatpush1.bf16.msra.mxu0 %v5145
        %5518 = vmatprep.subr.bf16.mxu0 0
        %5519 = vmatpush1.bf16.msra.mxu0 %v5144
        %5520 = vmatprep.subr.bf16.mxu0 0
        %5521 = vmatpush1.bf16.msra.mxu0 %v5143
        %5522 = vmatprep.subr.bf16.mxu0 0
        %5523 = vmatpush1.bf16.msra.mxu0 %v5142
        %5524 = vmatprep.subr.bf16.mxu0 0
        %5525 = vmatpush1.bf16.msra.mxu0 %v5141
        %5526 = vmatprep.subr.bf16.mxu0 0
        %5527 = vmatpush1.bf16.msra.mxu0 %v5140
        %5528 = vmatprep.subr.bf16.mxu0 0
        %5529 = vmatpush2.bf16.msra.mxu0 0
        %5530 = vmatprep.subr.bf16.mxu0 0
        %5531 = vmatpush2.bf16.msra.mxu0 0
        %5532 = vmatprep.subr.bf16.mxu0 0
        %5533 = vmatpush2.bf16.msra.mxu0 0
        %5534 = vmatprep.subr.bf16.mxu0 0
        %5535 = vmatpush2.bf16.msra.mxu0 0
        %5536 = vmatprep.subr.bf16.mxu0 0
        %5537 = vmatpush2.bf16.msra.mxu0 0
        %5538 = vmatprep.subr.bf16.mxu0 0
        %5539 = vmatpush2.bf16.msra.mxu0 0
        %5540 = vmatprep.subr.bf16.mxu0 0
        %5541 = vmatpush2.bf16.msra.mxu0 0
        %5542 = vmatprep.subr.bf16.mxu0 0
        %5543 = vmatpush2.bf16.msra.mxu0 0
        %5544 = vmatprep.mubr.bf16.mxu0 0
        %5545 = vmatmul.mubr.bf16.gmra.mxu0 %v4600
        %v5546 = vpop.f32.mrf.mxu0
        %v5547 = vadd.f32 %v5474, %v5546
        %v5548 = vpop.f32.mrf.mxu0
        %v5549 = vpop.f32.mrf.mxu0
        %v5550 = vadd.f32 %v5477, %v5549
        %v5551 = vpop.f32.mrf.mxu0
        %5552 = vmatprep.mubr.bf16.mxu0 0
        %5553 = vmatmul.mubr.bf16.gmra.mxu0 %v4609
        %v5554 = vpop.f32.mrf.mxu0
        %v5555 = vadd.f32 %v5482, %v5554
        %v5556 = vpop.f32.mrf.mxu0
        %v5557 = vpop.f32.mrf.mxu0
        %v5558 = vadd.f32 %v5485, %v5557
        %v5559 = vpop.f32.mrf.mxu0
        %5560 = vmatprep.mubr.bf16.mxu0 0
        %5561 = vmatmul.mubr.bf16.gmra.mxu0 %v4618
        %v5562 = vpop.f32.mrf.mxu0
        %v5563 = vadd.f32 %v5490, %v5562
        %v5564 = vpop.f32.mrf.mxu0
        %v5565 = vpop.f32.mrf.mxu0
        %v5566 = vadd.f32 %v5493, %v5565
        %v5567 = vpop.f32.mrf.mxu0
        %5568 = vmatprep.mubr.bf16.mxu0 0
        %5569 = vmatmul.mubr.bf16.gmra.mxu0 %v4627
        %v5570 = vpop.f32.mrf.mxu0
        %v5571 = vadd.f32 %v5498, %v5570
        %v5572 = vpop.f32.mrf.mxu0
        %v5573 = vpop.f32.mrf.mxu0
        %v5574 = vadd.f32 %v5501, %v5573
        %v5575 = vpop.f32.mrf.mxu0
        %5576 = vmatprep.mubr.bf16.mxu0 0
        %5577 = vmatmul.mubr.bf16.gmra.mxu0 %v4636
        %v5578 = vpop.f32.mrf.mxu0
        %v5579 = vadd.f32 %v5506, %v5578
        %v5580 = vpop.f32.mrf.mxu0
        %v5581 = vpop.f32.mrf.mxu0
        %v5582 = vadd.f32 %v5509, %v5581
        %v5583 = vpop.f32.mrf.mxu0
        %5584 = vdwg.mxu0
        %v5585 = vmax.f32 %v5547, 0.0
        %v5586 = vmax.f32 %v5550, 0.0
        %v5587 = vmax.f32 %v5555, 0.0
        %v5588 = vmax.f32 %v5558, 0.0
        %v5589 = vmax.f32 %v5563, 0.0
        %v5590 = vmax.f32 %v5566, 0.0
        %v5591 = vmax.f32 %v5571, 0.0
        %v5592 = vmax.f32 %v5574, 0.0
        %v5593 = vmax.f32 %v5579, 0.0
        %v5594 = vmax.f32 %v5582, 0.0
        %5595 = vst [vmem:[#allocation6] sm:$0xff] %v5585
        %5596 = vst [vmem:[#allocation6 + $0x8] sm:$0xff] %v5586
        %5597 = vst [vmem:[#allocation6 + $0x10] sm:$0xff] %v5587
        %5598 = vst [vmem:[#allocation6 + $0x18] sm:$0xff] %v5588
        %5599 = vst [vmem:[#allocation6 + $0x20] sm:$0xff] %v5589
        %5600 = vst [vmem:[#allocation6 + $0x28] sm:$0xff] %v5590
        %5601 = vst [vmem:[#allocation6 + $0x30] sm:$0xff] %v5591
        %5602 = vst [vmem:[#allocation6 + $0x38] sm:$0xff] %v5592
        %5603 = vst [vmem:[#allocation6 + $0x40] sm:$0xff] %v5593
        %5604 = vst [vmem:[#allocation6 + $0x48] sm:$0xff] %v5594
        %v5605 = vld [vmem:[#allocation6] ss:$2 sm:$0xf]
        %s5606 = scalar_lea.vmem [#allocation6], 1
        %v5607 = vld [vmem:[%s5606] ss:$2 sm:$0xf]
        %v5608 = vmax.f32 %v5605, %v5607
        %s5609 = scalar_lea.vmem [#allocation6], 10
        %v5610 = vld [vmem:[%s5609] ss:$2 sm:$0xf]
        %s5611 = scalar_lea.vmem [#allocation6], 11
        %v5612 = vld [vmem:[%s5611] ss:$2 sm:$0xf]
        %v5613 = vmax.f32 %v5610, %v5612
        %v5614 = vmax.f32 %v5608, %v5613
        %s5615 = scalar_lea.vmem [#allocation6], 20
        %v5616 = vld [vmem:[%s5615] ss:$2 sm:$0xf]
        %s5617 = scalar_lea.vmem [#allocation6], 21
        %v5618 = vld [vmem:[%s5617] ss:$2 sm:$0xf]
        %v5619 = vmax.f32 %v5616, %v5618
        %s5620 = scalar_lea.vmem [#allocation6], 30
        %v5621 = vld [vmem:[%s5620] ss:$2 sm:$0xf]
        %s5622 = scalar_lea.vmem [#allocation6], 31
        %v5623 = vld [vmem:[%s5622] ss:$2 sm:$0xf]
        %v5624 = vmax.f32 %v5621, %v5623
        %v5625 = vmax.f32 %v5619, %v5624
        %s5626 = scalar_lea.vmem [#allocation6], 40
        %v5627 = vld [vmem:[%s5626] ss:$2 sm:$0xf]
        %s5628 = scalar_lea.vmem [#allocation6], 41
        %v5629 = vld [vmem:[%s5628] ss:$2 sm:$0xf]
        %v5630 = vmax.f32 %v5627, %v5629
        %s5631 = scalar_lea.vmem [#allocation6], 50
        %v5632 = vld [vmem:[%s5631] ss:$2 sm:$0xf]
        %s5633 = scalar_lea.vmem [#allocation6], 51
        %v5634 = vld [vmem:[%s5633] ss:$2 sm:$0xf]
        %v5635 = vmax.f32 %v5632, %v5634
        %v5636 = vmax.f32 %v5630, %v5635
        %s5637 = scalar_lea.vmem [#allocation6], 60
        %v5638 = vld [vmem:[%s5637] ss:$2 sm:$0xf]
        %s5639 = scalar_lea.vmem [#allocation6], 61
        %v5640 = vld [vmem:[%s5639] ss:$2 sm:$0xf]
        %v5641 = vmax.f32 %v5638, %v5640
        %s5642 = scalar_lea.vmem [#allocation6], 70
        %v5643 = vld [vmem:[%s5642] ss:$2 sm:$0xf]
        %s5644 = scalar_lea.vmem [#allocation6], 71
        %v5645 = vld [vmem:[%s5644] ss:$2 sm:$0xf]
        %v5646 = vmax.f32 %v5643, %v5645
        %v5647 = vmax.f32 %v5641, %v5646
        %v5649 = vrot.slane %v5614, 1
        %v5651 = vrot.slane %v5614, 2
        %v5653 = vrot.slane %v5614, 3
        %v5656 = vrot.slane %v5625, 1
        %v5658 = vrot.slane %v5625, 2
        %v5660 = vrot.slane %v5625, 3
        %v5663 = vrot.slane %v5636, 1
        %v5665 = vrot.slane %v5636, 2
        %v5667 = vrot.slane %v5636, 3
        %v5670 = vrot.slane %v5647, 1
        %v5672 = vrot.slane %v5647, 2
        %v5674 = vrot.slane %v5647, 3
        %v5676 = vpack.c.bf16 %v5614, %v5614
        %v5677 = vpack.c.bf16 %v5649, %v5649
        %v5678 = vpack.c.bf16 %v5651, %v5651
        %v5679 = vpack.c.bf16 %v5653, %v5653
        %v5680 = vpack.c.bf16 %v5625, %v5625
        %v5681 = vpack.c.bf16 %v5656, %v5656
        %v5682 = vpack.c.bf16 %v5658, %v5658
        %v5683 = vpack.c.bf16 %v5660, %v5660
        %v5684 = vpack.c.bf16 %v5636, %v5636
        %v5685 = vpack.c.bf16 %v5663, %v5663
        %v5686 = vpack.c.bf16 %v5665, %v5665
        %v5687 = vpack.c.bf16 %v5667, %v5667
        %v5688 = vpack.c.bf16 %v5647, %v5647
        %v5689 = vpack.c.bf16 %v5670, %v5670
        %v5690 = vpack.c.bf16 %v5672, %v5672
        %v5691 = vpack.c.bf16 %v5674, %v5674
        %v5692 = vld [vmem:[%s8] sm:$0x1]
        %v5693 = vld [vmem:[%s7] sm:$0xf]
        %v5694 = vld [vmem:[%s7 + $0x4] sm:$0xf]
        %v5695 = vld [vmem:[%s7 + $0x8] sm:$0xf]
        %v5696 = vld [vmem:[%s7 + $0xc] sm:$0xf]
        %v5697 = vld [vmem:[%s7 + $0x10] sm:$0xf]
        %v5698 = vld [vmem:[%s7 + $0x14] sm:$0xf]
        %v5699 = vld [vmem:[%s7 + $0x18] sm:$0xf]
        %v5700 = vld [vmem:[%s7 + $0x1c] sm:$0xf]
        %v5701 = vld [vmem:[%s7 + $0x20] sm:$0xf]
        %v5702 = vld [vmem:[%s7 + $0x24] sm:$0xf]
        %v5703 = vld [vmem:[%s7 + $0x28] sm:$0xf]
        %v5704 = vld [vmem:[%s7 + $0x2c] sm:$0xf]
        %v5705 = vld [vmem:[%s7 + $0x30] sm:$0xf]
        %v5706 = vld [vmem:[%s7 + $0x34] sm:$0xf]
        %v5707 = vld [vmem:[%s7 + $0x38] sm:$0xf]
        %v5708 = vld [vmem:[%s7 + $0x3c] sm:$0xf]
        %v5709 = vld [vmem:[%s7 + $0x40] sm:$0xf]
        %v5710 = vld [vmem:[%s7 + $0x44] sm:$0xf]
        %v5711 = vld [vmem:[%s7 + $0x48] sm:$0xf]
        %v5712 = vld [vmem:[%s7 + $0x4c] sm:$0xf]
        %v5713 = vld [vmem:[%s7 + $0x50] sm:$0xf]
        %v5714 = vld [vmem:[%s7 + $0x54] sm:$0xf]
        %v5715 = vld [vmem:[%s7 + $0x58] sm:$0xf]
        %v5716 = vld [vmem:[%s7 + $0x5c] sm:$0xf]
        %v5717 = vld [vmem:[%s7 + $0x60] sm:$0xf]
        %v5718 = vld [vmem:[%s7 + $0x64] sm:$0xf]
        %v5719 = vld [vmem:[%s7 + $0x68] sm:$0xf]
        %v5720 = vld [vmem:[%s7 + $0x6c] sm:$0xf]
        %v5721 = vld [vmem:[%s7 + $0x70] sm:$0xf]
        %v5722 = vld [vmem:[%s7 + $0x74] sm:$0xf]
        %v5723 = vld [vmem:[%s7 + $0x78] sm:$0xf]
        %v5724 = vld [vmem:[%s7 + $0x7c] sm:$0xf]
        %v5725 = vld [vmem:[%s7 + $0x80] sm:$0xf]
        %v5726 = vld [vmem:[%s7 + $0x84] sm:$0xf]
        %v5727 = vld [vmem:[%s7 + $0x88] sm:$0xf]
        %v5728 = vld [vmem:[%s7 + $0x8c] sm:$0xf]
        %v5729 = vld [vmem:[%s7 + $0x90] sm:$0xf]
        %v5730 = vld [vmem:[%s7 + $0x94] sm:$0xf]
        %v5731 = vld [vmem:[%s7 + $0x98] sm:$0xf]
        %v5732 = vld [vmem:[%s7 + $0x9c] sm:$0xf]
        %v5733 = vld [vmem:[%s7 + $0xa0] sm:$0xf]
        %v5734 = vld [vmem:[%s7 + $0xa4] sm:$0xf]
        %v5735 = vld [vmem:[%s7 + $0xa8] sm:$0xf]
        %v5736 = vld [vmem:[%s7 + $0xac] sm:$0xf]
        %v5737 = vld [vmem:[%s7 + $0xb0] sm:$0xf]
        %v5738 = vld [vmem:[%s7 + $0xb4] sm:$0xf]
        %v5739 = vld [vmem:[%s7 + $0xb8] sm:$0xf]
        %v5740 = vld [vmem:[%s7 + $0xbc] sm:$0xf]
        %v5741 = vld [vmem:[%s7 + $0xc0] sm:$0xf]
        %v5742 = vld [vmem:[%s7 + $0xc4] sm:$0xf]
        %v5743 = vld [vmem:[%s7 + $0xc8] sm:$0xf]
        %v5744 = vld [vmem:[%s7 + $0xcc] sm:$0xf]
        %v5745 = vld [vmem:[%s7 + $0xd0] sm:$0xf]
        %v5746 = vld [vmem:[%s7 + $0xd4] sm:$0xf]
        %v5747 = vld [vmem:[%s7 + $0xd8] sm:$0xf]
        %v5748 = vld [vmem:[%s7 + $0xdc] sm:$0xf]
        %v5749 = vld [vmem:[%s7 + $0xe0] sm:$0xf]
        %v5750 = vld [vmem:[%s7 + $0xe4] sm:$0xf]
        %v5751 = vld [vmem:[%s7 + $0xe8] sm:$0xf]
        %v5752 = vld [vmem:[%s7 + $0xec] sm:$0xf]
        %v5753 = vld [vmem:[%s7 + $0xf0] sm:$0xf]
        %v5754 = vld [vmem:[%s7 + $0xf4] sm:$0xf]
        %v5755 = vld [vmem:[%s7 + $0xf8] sm:$0xf]
        %v5756 = vld [vmem:[%s7 + $0xfc] sm:$0xf]
        %v5757 = vld [vmem:[%s7 + $0x100] sm:$0xf]
        %v5758 = vld [vmem:[%s7 + $0x104] sm:$0xf]
        %v5759 = vld [vmem:[%s7 + $0x108] sm:$0xf]
        %v5760 = vld [vmem:[%s7 + $0x10c] sm:$0xf]
        %v5761 = vld [vmem:[%s7 + $0x110] sm:$0xf]
        %v5762 = vld [vmem:[%s7 + $0x114] sm:$0xf]
        %v5763 = vld [vmem:[%s7 + $0x118] sm:$0xf]
        %v5764 = vld [vmem:[%s7 + $0x11c] sm:$0xf]
        %v5765 = vld [vmem:[%s7 + $0x120] sm:$0xf]
        %v5766 = vld [vmem:[%s7 + $0x124] sm:$0xf]
        %v5767 = vld [vmem:[%s7 + $0x128] sm:$0xf]
        %v5768 = vld [vmem:[%s7 + $0x12c] sm:$0xf]
        %v5769 = vld [vmem:[%s7 + $0x130] sm:$0xf]
        %v5770 = vld [vmem:[%s7 + $0x134] sm:$0xf]
        %v5771 = vld [vmem:[%s7 + $0x138] sm:$0xf]
        %v5772 = vld [vmem:[%s7 + $0x13c] sm:$0xf]
        %v5773 = vld [vmem:[%s7 + $0x140] sm:$0xf]
        %v5774 = vld [vmem:[%s7 + $0x144] sm:$0xf]
        %v5775 = vld [vmem:[%s7 + $0x148] sm:$0xf]
        %v5776 = vld [vmem:[%s7 + $0x14c] sm:$0xf]
        %v5777 = vld [vmem:[%s7 + $0x150] sm:$0xf]
        %v5778 = vld [vmem:[%s7 + $0x154] sm:$0xf]
        %v5779 = vld [vmem:[%s7 + $0x158] sm:$0xf]
        %v5780 = vld [vmem:[%s7 + $0x15c] sm:$0xf]
        %v5781 = vld [vmem:[%s7 + $0x160] sm:$0xf]
        %v5782 = vld [vmem:[%s7 + $0x164] sm:$0xf]
        %v5783 = vld [vmem:[%s7 + $0x168] sm:$0xf]
        %v5784 = vld [vmem:[%s7 + $0x16c] sm:$0xf]
        %v5785 = vld [vmem:[%s7 + $0x170] sm:$0xf]
        %v5786 = vld [vmem:[%s7 + $0x174] sm:$0xf]
        %v5787 = vld [vmem:[%s7 + $0x178] sm:$0xf]
        %v5788 = vld [vmem:[%s7 + $0x17c] sm:$0xf]
        %v5789 = vld [vmem:[%s7 + $0x180] sm:$0xf]
        %v5790 = vld [vmem:[%s7 + $0x184] sm:$0xf]
        %v5791 = vld [vmem:[%s7 + $0x188] sm:$0xf]
        %v5792 = vld [vmem:[%s7 + $0x18c] sm:$0xf]
        %v5793 = vld [vmem:[%s7 + $0x190] sm:$0xf]
        %v5794 = vld [vmem:[%s7 + $0x194] sm:$0xf]
        %v5795 = vld [vmem:[%s7 + $0x198] sm:$0xf]
        %v5796 = vld [vmem:[%s7 + $0x19c] sm:$0xf]
        %v5797 = vld [vmem:[%s7 + $0x1a0] sm:$0xf]
        %v5798 = vld [vmem:[%s7 + $0x1a4] sm:$0xf]
        %v5799 = vld [vmem:[%s7 + $0x1a8] sm:$0xf]
        %v5800 = vld [vmem:[%s7 + $0x1ac] sm:$0xf]
        %v5801 = vld [vmem:[%s7 + $0x1b0] sm:$0xf]
        %v5802 = vld [vmem:[%s7 + $0x1b4] sm:$0xf]
        %v5803 = vld [vmem:[%s7 + $0x1b8] sm:$0xf]
        %v5804 = vld [vmem:[%s7 + $0x1bc] sm:$0xf]
        %v5805 = vld [vmem:[%s7 + $0x1c0] sm:$0xf]
        %v5806 = vld [vmem:[%s7 + $0x1c4] sm:$0xf]
        %v5807 = vld [vmem:[%s7 + $0x1c8] sm:$0xf]
        %v5808 = vld [vmem:[%s7 + $0x1cc] sm:$0xf]
        %v5809 = vld [vmem:[%s7 + $0x1d0] sm:$0xf]
        %v5810 = vld [vmem:[%s7 + $0x1d4] sm:$0xf]
        %v5811 = vld [vmem:[%s7 + $0x1d8] sm:$0xf]
        %v5812 = vld [vmem:[%s7 + $0x1dc] sm:$0xf]
        %v5813 = vld [vmem:[%s7 + $0x1e0] sm:$0xf]
        %v5814 = vld [vmem:[%s7 + $0x1e4] sm:$0xf]
        %v5815 = vld [vmem:[%s7 + $0x1e8] sm:$0xf]
        %v5816 = vld [vmem:[%s7 + $0x1ec] sm:$0xf]
        %v5817 = vld [vmem:[%s7 + $0x1f0] sm:$0xf]
        %v5818 = vld [vmem:[%s7 + $0x1f4] sm:$0xf]
        %v5819 = vld [vmem:[%s7 + $0x1f8] sm:$0xf]
        %v5820 = vld [vmem:[%s7 + $0x1fc] sm:$0xf]
        %v5821 = vld [vmem:[%s7 + $0x200] sm:$0xf]
        %v5822 = vld [vmem:[%s7 + $0x204] sm:$0xf]
        %v5823 = vld [vmem:[%s7 + $0x208] sm:$0xf]
        %v5824 = vld [vmem:[%s7 + $0x20c] sm:$0xf]
        %v5825 = vld [vmem:[%s7 + $0x210] sm:$0xf]
        %v5826 = vld [vmem:[%s7 + $0x214] sm:$0xf]
        %v5827 = vld [vmem:[%s7 + $0x218] sm:$0xf]
        %v5828 = vld [vmem:[%s7 + $0x21c] sm:$0xf]
        %v5829 = vld [vmem:[%s7 + $0x220] sm:$0xf]
        %v5830 = vld [vmem:[%s7 + $0x224] sm:$0xf]
        %v5831 = vld [vmem:[%s7 + $0x228] sm:$0xf]
        %v5832 = vld [vmem:[%s7 + $0x22c] sm:$0xf]
        %v5833 = vld [vmem:[%s7 + $0x230] sm:$0xf]
        %v5834 = vld [vmem:[%s7 + $0x234] sm:$0xf]
        %v5835 = vld [vmem:[%s7 + $0x238] sm:$0xf]
        %v5836 = vld [vmem:[%s7 + $0x23c] sm:$0xf]
        %v5837 = vld [vmem:[%s7 + $0x240] sm:$0xf]
        %v5838 = vld [vmem:[%s7 + $0x244] sm:$0xf]
        %v5839 = vld [vmem:[%s7 + $0x248] sm:$0xf]
        %v5840 = vld [vmem:[%s7 + $0x24c] sm:$0xf]
        %v5841 = vld [vmem:[%s7 + $0x250] sm:$0xf]
        %v5842 = vld [vmem:[%s7 + $0x254] sm:$0xf]
        %v5843 = vld [vmem:[%s7 + $0x258] sm:$0xf]
        %v5844 = vld [vmem:[%s7 + $0x25c] sm:$0xf]
        %v5845 = vld [vmem:[%s7 + $0x260] sm:$0xf]
        %v5846 = vld [vmem:[%s7 + $0x264] sm:$0xf]
        %v5847 = vld [vmem:[%s7 + $0x268] sm:$0xf]
        %v5848 = vld [vmem:[%s7 + $0x26c] sm:$0xf]
        %v5849 = vld [vmem:[%s7 + $0x270] sm:$0xf]
        %v5850 = vld [vmem:[%s7 + $0x274] sm:$0xf]
        %v5851 = vld [vmem:[%s7 + $0x278] sm:$0xf]
        %v5852 = vld [vmem:[%s7 + $0x27c] sm:$0xf]
        %v5853 = vld [vmem:[%s7 + $0x280] sm:$0xf]
        %v5854 = vld [vmem:[%s7 + $0x284] sm:$0xf]
        %v5855 = vld [vmem:[%s7 + $0x288] sm:$0xf]
        %v5856 = vld [vmem:[%s7 + $0x28c] sm:$0xf]
        %v5857 = vld [vmem:[%s7 + $0x290] sm:$0xf]
        %v5858 = vld [vmem:[%s7 + $0x294] sm:$0xf]
        %v5859 = vld [vmem:[%s7 + $0x298] sm:$0xf]
        %v5860 = vld [vmem:[%s7 + $0x29c] sm:$0xf]
        %v5861 = vld [vmem:[%s7 + $0x2a0] sm:$0xf]
        %v5862 = vld [vmem:[%s7 + $0x2a4] sm:$0xf]
        %v5863 = vld [vmem:[%s7 + $0x2a8] sm:$0xf]
        %v5864 = vld [vmem:[%s7 + $0x2ac] sm:$0xf]
        %v5865 = vld [vmem:[%s7 + $0x2b0] sm:$0xf]
        %v5866 = vld [vmem:[%s7 + $0x2b4] sm:$0xf]
        %v5867 = vld [vmem:[%s7 + $0x2b8] sm:$0xf]
        %v5868 = vld [vmem:[%s7 + $0x2bc] sm:$0xf]
        %v5869 = vld [vmem:[%s7 + $0x2c0] sm:$0xf]
        %v5870 = vld [vmem:[%s7 + $0x2c4] sm:$0xf]
        %v5871 = vld [vmem:[%s7 + $0x2c8] sm:$0xf]
        %v5872 = vld [vmem:[%s7 + $0x2cc] sm:$0xf]
        %v5873 = vld [vmem:[%s7 + $0x2d0] sm:$0xf]
        %v5874 = vld [vmem:[%s7 + $0x2d4] sm:$0xf]
        %v5875 = vld [vmem:[%s7 + $0x2d8] sm:$0xf]
        %v5876 = vld [vmem:[%s7 + $0x2dc] sm:$0xf]
        %v5877 = vld [vmem:[%s7 + $0x2e0] sm:$0xf]
        %v5878 = vld [vmem:[%s7 + $0x2e4] sm:$0xf]
        %v5879 = vld [vmem:[%s7 + $0x2e8] sm:$0xf]
        %v5880 = vld [vmem:[%s7 + $0x2ec] sm:$0xf]
        %v5881 = vld [vmem:[%s7 + $0x2f0] sm:$0xf]
        %v5882 = vld [vmem:[%s7 + $0x2f4] sm:$0xf]
        %v5883 = vld [vmem:[%s7 + $0x2f8] sm:$0xf]
        %v5884 = vld [vmem:[%s7 + $0x2fc] sm:$0xf]
        %v5885 = vld [vmem:[%s7 + $0x300] sm:$0xf]
        %v5886 = vld [vmem:[%s7 + $0x304] sm:$0xf]
        %v5887 = vld [vmem:[%s7 + $0x308] sm:$0xf]
        %v5888 = vld [vmem:[%s7 + $0x30c] sm:$0xf]
        %v5889 = vld [vmem:[%s7 + $0x310] sm:$0xf]
        %v5890 = vld [vmem:[%s7 + $0x314] sm:$0xf]
        %v5891 = vld [vmem:[%s7 + $0x318] sm:$0xf]
        %v5892 = vld [vmem:[%s7 + $0x31c] sm:$0xf]
        %v5893 = vld [vmem:[%s7 + $0x320] sm:$0xf]
        %v5894 = vld [vmem:[%s7 + $0x324] sm:$0xf]
        %v5895 = vld [vmem:[%s7 + $0x328] sm:$0xf]
        %v5896 = vld [vmem:[%s7 + $0x32c] sm:$0xf]
        %v5897 = vld [vmem:[%s7 + $0x330] sm:$0xf]
        %v5898 = vld [vmem:[%s7 + $0x334] sm:$0xf]
        %v5899 = vld [vmem:[%s7 + $0x338] sm:$0xf]
        %v5900 = vld [vmem:[%s7 + $0x33c] sm:$0xf]
        %v5901 = vld [vmem:[%s7 + $0x340] sm:$0xf]
        %v5902 = vld [vmem:[%s7 + $0x344] sm:$0xf]
        %v5903 = vld [vmem:[%s7 + $0x348] sm:$0xf]
        %v5904 = vld [vmem:[%s7 + $0x34c] sm:$0xf]
        %v5905 = vld [vmem:[%s7 + $0x350] sm:$0xf]
        %v5906 = vld [vmem:[%s7 + $0x354] sm:$0xf]
        %v5907 = vld [vmem:[%s7 + $0x358] sm:$0xf]
        %v5908 = vld [vmem:[%s7 + $0x35c] sm:$0xf]
        %v5909 = vld [vmem:[%s7 + $0x360] sm:$0xf]
        %v5910 = vld [vmem:[%s7 + $0x364] sm:$0xf]
        %v5911 = vld [vmem:[%s7 + $0x368] sm:$0xf]
        %v5912 = vld [vmem:[%s7 + $0x36c] sm:$0xf]
        %v5913 = vld [vmem:[%s7 + $0x370] sm:$0xf]
        %v5914 = vld [vmem:[%s7 + $0x374] sm:$0xf]
        %v5915 = vld [vmem:[%s7 + $0x378] sm:$0xf]
        %v5916 = vld [vmem:[%s7 + $0x37c] sm:$0xf]
        %v5917 = vld [vmem:[%s7 + $0x380] sm:$0xf]
        %v5918 = vld [vmem:[%s7 + $0x384] sm:$0xf]
        %v5919 = vld [vmem:[%s7 + $0x388] sm:$0xf]
        %v5920 = vld [vmem:[%s7 + $0x38c] sm:$0xf]
        %v5921 = vld [vmem:[%s7 + $0x390] sm:$0xf]
        %v5922 = vld [vmem:[%s7 + $0x394] sm:$0xf]
        %v5923 = vld [vmem:[%s7 + $0x398] sm:$0xf]
        %v5924 = vld [vmem:[%s7 + $0x39c] sm:$0xf]
        %v5925 = vld [vmem:[%s7 + $0x3a0] sm:$0xf]
        %v5926 = vld [vmem:[%s7 + $0x3a4] sm:$0xf]
        %v5927 = vld [vmem:[%s7 + $0x3a8] sm:$0xf]
        %v5928 = vld [vmem:[%s7 + $0x3ac] sm:$0xf]
        %v5929 = vld [vmem:[%s7 + $0x3b0] sm:$0xf]
        %v5930 = vld [vmem:[%s7 + $0x3b4] sm:$0xf]
        %v5931 = vld [vmem:[%s7 + $0x3b8] sm:$0xf]
        %v5932 = vld [vmem:[%s7 + $0x3bc] sm:$0xf]
        %v5933 = vld [vmem:[%s7 + $0x3c0] sm:$0xf]
        %v5934 = vld [vmem:[%s7 + $0x3c4] sm:$0xf]
        %v5935 = vld [vmem:[%s7 + $0x3c8] sm:$0xf]
        %v5936 = vld [vmem:[%s7 + $0x3cc] sm:$0xf]
        %v5937 = vld [vmem:[%s7 + $0x3d0] sm:$0xf]
        %v5938 = vld [vmem:[%s7 + $0x3d4] sm:$0xf]
        %v5939 = vld [vmem:[%s7 + $0x3d8] sm:$0xf]
        %v5940 = vld [vmem:[%s7 + $0x3dc] sm:$0xf]
        %v5941 = vld [vmem:[%s7 + $0x3e0] sm:$0xf]
        %v5942 = vld [vmem:[%s7 + $0x3e4] sm:$0xf]
        %v5943 = vld [vmem:[%s7 + $0x3e8] sm:$0xf]
        %v5944 = vld [vmem:[%s7 + $0x3ec] sm:$0xf]
        %v5945 = vld [vmem:[%s7 + $0x3f0] sm:$0xf]
        %v5946 = vld [vmem:[%s7 + $0x3f4] sm:$0xf]
        %v5947 = vld [vmem:[%s7 + $0x3f8] sm:$0xf]
        %v5948 = vld [vmem:[%s7 + $0x3fc] sm:$0xf]
        %v6205 = vunpack.c.l.b16 %v5693
        %v6206 = vunpack.c.l.b16 %v5694
        %v6207 = vunpack.c.l.b16 %v5695
        %v6208 = vunpack.c.l.b16 %v5696
        %v6209 = vunpack.c.l.b16 %v5697
        %v6210 = vunpack.c.l.b16 %v5698
        %v6211 = vunpack.c.l.b16 %v5699
        %v6212 = vunpack.c.l.b16 %v5700
        %v6213 = vunpack.c.l.b16 %v5701
        %v6214 = vunpack.c.l.b16 %v5702
        %v6215 = vunpack.c.l.b16 %v5703
        %v6216 = vunpack.c.l.b16 %v5704
        %v6217 = vunpack.c.l.b16 %v5705
        %v6218 = vunpack.c.l.b16 %v5706
        %v6219 = vunpack.c.l.b16 %v5707
        %v6220 = vunpack.c.l.b16 %v5708
        %v6221 = vunpack.c.l.b16 %v5709
        %v6222 = vunpack.c.l.b16 %v5710
        %v6223 = vunpack.c.l.b16 %v5711
        %v6224 = vunpack.c.l.b16 %v5712
        %v6225 = vunpack.c.l.b16 %v5713
        %v6226 = vunpack.c.l.b16 %v5714
        %v6227 = vunpack.c.l.b16 %v5715
        %v6228 = vunpack.c.l.b16 %v5716
        %v6229 = vunpack.c.l.b16 %v5717
        %v6230 = vunpack.c.l.b16 %v5718
        %v6231 = vunpack.c.l.b16 %v5719
        %v6232 = vunpack.c.l.b16 %v5720
        %v6233 = vunpack.c.l.b16 %v5721
        %v6234 = vunpack.c.l.b16 %v5722
        %v6235 = vunpack.c.l.b16 %v5723
        %v6236 = vunpack.c.l.b16 %v5724
        %v6237 = vunpack.c.l.b16 %v5725
        %v6238 = vunpack.c.l.b16 %v5726
        %v6239 = vunpack.c.l.b16 %v5727
        %v6240 = vunpack.c.l.b16 %v5728
        %v6241 = vunpack.c.l.b16 %v5729
        %v6242 = vunpack.c.l.b16 %v5730
        %v6243 = vunpack.c.l.b16 %v5731
        %v6244 = vunpack.c.l.b16 %v5732
        %v6245 = vunpack.c.l.b16 %v5733
        %v6246 = vunpack.c.l.b16 %v5734
        %v6247 = vunpack.c.l.b16 %v5735
        %v6248 = vunpack.c.l.b16 %v5736
        %v6249 = vunpack.c.l.b16 %v5737
        %v6250 = vunpack.c.l.b16 %v5738
        %v6251 = vunpack.c.l.b16 %v5739
        %v6252 = vunpack.c.l.b16 %v5740
        %v6253 = vunpack.c.l.b16 %v5741
        %v6254 = vunpack.c.l.b16 %v5742
        %v6255 = vunpack.c.l.b16 %v5743
        %v6256 = vunpack.c.l.b16 %v5744
        %v6257 = vunpack.c.l.b16 %v5745
        %v6258 = vunpack.c.l.b16 %v5746
        %v6259 = vunpack.c.l.b16 %v5747
        %v6260 = vunpack.c.l.b16 %v5748
        %v6261 = vunpack.c.l.b16 %v5749
        %v6262 = vunpack.c.l.b16 %v5750
        %v6263 = vunpack.c.l.b16 %v5751
        %v6264 = vunpack.c.l.b16 %v5752
        %v6265 = vunpack.c.l.b16 %v5753
        %v6266 = vunpack.c.l.b16 %v5754
        %v6267 = vunpack.c.l.b16 %v5755
        %v6268 = vunpack.c.l.b16 %v5756
        %v6269 = vunpack.c.l.b16 %v5757
        %v6270 = vunpack.c.l.b16 %v5758
        %v6271 = vunpack.c.l.b16 %v5759
        %v6272 = vunpack.c.l.b16 %v5760
        %v6273 = vunpack.c.l.b16 %v5761
        %v6274 = vunpack.c.l.b16 %v5762
        %v6275 = vunpack.c.l.b16 %v5763
        %v6276 = vunpack.c.l.b16 %v5764
        %v6277 = vunpack.c.l.b16 %v5765
        %v6278 = vunpack.c.l.b16 %v5766
        %v6279 = vunpack.c.l.b16 %v5767
        %v6280 = vunpack.c.l.b16 %v5768
        %v6281 = vunpack.c.l.b16 %v5769
        %v6282 = vunpack.c.l.b16 %v5770
        %v6283 = vunpack.c.l.b16 %v5771
        %v6284 = vunpack.c.l.b16 %v5772
        %v6285 = vunpack.c.l.b16 %v5773
        %v6286 = vunpack.c.l.b16 %v5774
        %v6287 = vunpack.c.l.b16 %v5775
        %v6288 = vunpack.c.l.b16 %v5776
        %v6289 = vunpack.c.l.b16 %v5777
        %v6290 = vunpack.c.l.b16 %v5778
        %v6291 = vunpack.c.l.b16 %v5779
        %v6292 = vunpack.c.l.b16 %v5780
        %v6293 = vunpack.c.l.b16 %v5781
        %v6294 = vunpack.c.l.b16 %v5782
        %v6295 = vunpack.c.l.b16 %v5783
        %v6296 = vunpack.c.l.b16 %v5784
        %v6297 = vunpack.c.l.b16 %v5785
        %v6298 = vunpack.c.l.b16 %v5786
        %v6299 = vunpack.c.l.b16 %v5787
        %v6300 = vunpack.c.l.b16 %v5788
        %v6301 = vunpack.c.l.b16 %v5789
        %v6302 = vunpack.c.l.b16 %v5790
        %v6303 = vunpack.c.l.b16 %v5791
        %v6304 = vunpack.c.l.b16 %v5792
        %v6305 = vunpack.c.l.b16 %v5793
        %v6306 = vunpack.c.l.b16 %v5794
        %v6307 = vunpack.c.l.b16 %v5795
        %v6308 = vunpack.c.l.b16 %v5796
        %v6309 = vunpack.c.l.b16 %v5797
        %v6310 = vunpack.c.l.b16 %v5798
        %v6311 = vunpack.c.l.b16 %v5799
        %v6312 = vunpack.c.l.b16 %v5800
        %v6313 = vunpack.c.l.b16 %v5801
        %v6314 = vunpack.c.l.b16 %v5802
        %v6315 = vunpack.c.l.b16 %v5803
        %v6316 = vunpack.c.l.b16 %v5804
        %v6317 = vunpack.c.l.b16 %v5805
        %v6318 = vunpack.c.l.b16 %v5806
        %v6319 = vunpack.c.l.b16 %v5807
        %v6320 = vunpack.c.l.b16 %v5808
        %v6321 = vunpack.c.l.b16 %v5809
        %v6322 = vunpack.c.l.b16 %v5810
        %v6323 = vunpack.c.l.b16 %v5811
        %v6324 = vunpack.c.l.b16 %v5812
        %v6325 = vunpack.c.l.b16 %v5813
        %v6326 = vunpack.c.l.b16 %v5814
        %v6327 = vunpack.c.l.b16 %v5815
        %v6328 = vunpack.c.l.b16 %v5816
        %v6329 = vunpack.c.l.b16 %v5817
        %v6330 = vunpack.c.l.b16 %v5818
        %v6331 = vunpack.c.l.b16 %v5819
        %v6332 = vunpack.c.l.b16 %v5820
        %v6333 = vunpack.c.l.b16 %v5821
        %v6334 = vunpack.c.l.b16 %v5822
        %v6335 = vunpack.c.l.b16 %v5823
        %v6336 = vunpack.c.l.b16 %v5824
        %v6337 = vunpack.c.l.b16 %v5825
        %v6338 = vunpack.c.l.b16 %v5826
        %v6339 = vunpack.c.l.b16 %v5827
        %v6340 = vunpack.c.l.b16 %v5828
        %v6341 = vunpack.c.l.b16 %v5829
        %v6342 = vunpack.c.l.b16 %v5830
        %v6343 = vunpack.c.l.b16 %v5831
        %v6344 = vunpack.c.l.b16 %v5832
        %v6345 = vunpack.c.l.b16 %v5833
        %v6346 = vunpack.c.l.b16 %v5834
        %v6347 = vunpack.c.l.b16 %v5835
        %v6348 = vunpack.c.l.b16 %v5836
        %v6349 = vunpack.c.l.b16 %v5837
        %v6350 = vunpack.c.l.b16 %v5838
        %v6351 = vunpack.c.l.b16 %v5839
        %v6352 = vunpack.c.l.b16 %v5840
        %v6353 = vunpack.c.l.b16 %v5841
        %v6354 = vunpack.c.l.b16 %v5842
        %v6355 = vunpack.c.l.b16 %v5843
        %v6356 = vunpack.c.l.b16 %v5844
        %v6357 = vunpack.c.l.b16 %v5845
        %v6358 = vunpack.c.l.b16 %v5846
        %v6359 = vunpack.c.l.b16 %v5847
        %v6360 = vunpack.c.l.b16 %v5848
        %v6361 = vunpack.c.l.b16 %v5849
        %v6362 = vunpack.c.l.b16 %v5850
        %v6363 = vunpack.c.l.b16 %v5851
        %v6364 = vunpack.c.l.b16 %v5852
        %v6365 = vunpack.c.l.b16 %v5853
        %v6366 = vunpack.c.l.b16 %v5854
        %v6367 = vunpack.c.l.b16 %v5855
        %v6368 = vunpack.c.l.b16 %v5856
        %v6369 = vunpack.c.l.b16 %v5857
        %v6370 = vunpack.c.l.b16 %v5858
        %v6371 = vunpack.c.l.b16 %v5859
        %v6372 = vunpack.c.l.b16 %v5860
        %v6373 = vunpack.c.l.b16 %v5861
        %v6374 = vunpack.c.l.b16 %v5862
        %v6375 = vunpack.c.l.b16 %v5863
        %v6376 = vunpack.c.l.b16 %v5864
        %v6377 = vunpack.c.l.b16 %v5865
        %v6378 = vunpack.c.l.b16 %v5866
        %v6379 = vunpack.c.l.b16 %v5867
        %v6380 = vunpack.c.l.b16 %v5868
        %v6381 = vunpack.c.l.b16 %v5869
        %v6382 = vunpack.c.l.b16 %v5870
        %v6383 = vunpack.c.l.b16 %v5871
        %v6384 = vunpack.c.l.b16 %v5872
        %v6385 = vunpack.c.l.b16 %v5873
        %v6386 = vunpack.c.l.b16 %v5874
        %v6387 = vunpack.c.l.b16 %v5875
        %v6388 = vunpack.c.l.b16 %v5876
        %v6389 = vunpack.c.l.b16 %v5877
        %v6390 = vunpack.c.l.b16 %v5878
        %v6391 = vunpack.c.l.b16 %v5879
        %v6392 = vunpack.c.l.b16 %v5880
        %v6393 = vunpack.c.l.b16 %v5881
        %v6394 = vunpack.c.l.b16 %v5882
        %v6395 = vunpack.c.l.b16 %v5883
        %v6396 = vunpack.c.l.b16 %v5884
        %v6397 = vunpack.c.l.b16 %v5885
        %v6398 = vunpack.c.l.b16 %v5886
        %v6399 = vunpack.c.l.b16 %v5887
        %v6400 = vunpack.c.l.b16 %v5888
        %v6401 = vunpack.c.l.b16 %v5889
        %v6402 = vunpack.c.l.b16 %v5890
        %v6403 = vunpack.c.l.b16 %v5891
        %v6404 = vunpack.c.l.b16 %v5892
        %v6405 = vunpack.c.l.b16 %v5893
        %v6406 = vunpack.c.l.b16 %v5894
        %v6407 = vunpack.c.l.b16 %v5895
        %v6408 = vunpack.c.l.b16 %v5896
        %v6409 = vunpack.c.l.b16 %v5897
        %v6410 = vunpack.c.l.b16 %v5898
        %v6411 = vunpack.c.l.b16 %v5899
        %v6412 = vunpack.c.l.b16 %v5900
        %v6413 = vunpack.c.l.b16 %v5901
        %v6414 = vunpack.c.l.b16 %v5902
        %v6415 = vunpack.c.l.b16 %v5903
        %v6416 = vunpack.c.l.b16 %v5904
        %v6417 = vunpack.c.l.b16 %v5905
        %v6418 = vunpack.c.l.b16 %v5906
        %v6419 = vunpack.c.l.b16 %v5907
        %v6420 = vunpack.c.l.b16 %v5908
        %v6421 = vunpack.c.l.b16 %v5909
        %v6422 = vunpack.c.l.b16 %v5910
        %v6423 = vunpack.c.l.b16 %v5911
        %v6424 = vunpack.c.l.b16 %v5912
        %v6425 = vunpack.c.l.b16 %v5913
        %v6426 = vunpack.c.l.b16 %v5914
        %v6427 = vunpack.c.l.b16 %v5915
        %v6428 = vunpack.c.l.b16 %v5916
        %v6429 = vunpack.c.l.b16 %v5917
        %v6430 = vunpack.c.l.b16 %v5918
        %v6431 = vunpack.c.l.b16 %v5919
        %v6432 = vunpack.c.l.b16 %v5920
        %v6433 = vunpack.c.l.b16 %v5921
        %v6434 = vunpack.c.l.b16 %v5922
        %v6435 = vunpack.c.l.b16 %v5923
        %v6436 = vunpack.c.l.b16 %v5924
        %v6437 = vunpack.c.l.b16 %v5925
        %v6438 = vunpack.c.l.b16 %v5926
        %v6439 = vunpack.c.l.b16 %v5927
        %v6440 = vunpack.c.l.b16 %v5928
        %v6441 = vunpack.c.l.b16 %v5929
        %v6442 = vunpack.c.l.b16 %v5930
        %v6443 = vunpack.c.l.b16 %v5931
        %v6444 = vunpack.c.l.b16 %v5932
        %v6445 = vunpack.c.l.b16 %v5933
        %v6446 = vunpack.c.l.b16 %v5934
        %v6447 = vunpack.c.l.b16 %v5935
        %v6448 = vunpack.c.l.b16 %v5936
        %v6449 = vunpack.c.l.b16 %v5937
        %v6450 = vunpack.c.l.b16 %v5938
        %v6451 = vunpack.c.l.b16 %v5939
        %v6452 = vunpack.c.l.b16 %v5940
        %v6453 = vunpack.c.l.b16 %v5941
        %v6454 = vunpack.c.l.b16 %v5942
        %v6455 = vunpack.c.l.b16 %v5943
        %v6456 = vunpack.c.l.b16 %v5944
        %v6457 = vunpack.c.l.b16 %v5945
        %v6458 = vunpack.c.l.b16 %v5946
        %v6459 = vunpack.c.l.b16 %v5947
        %v6460 = vunpack.c.l.b16 %v5948
        %v6461 = vpack.c.b16 %v6206, %v6205
        %v6462 = vpack.c.b16 %v6208, %v6207
        %v6463 = vpack.c.b16 %v6210, %v6209
        %v6464 = vpack.c.b16 %v6212, %v6211
        %v6465 = vpack.c.b16 %v6214, %v6213
        %v6466 = vpack.c.b16 %v6216, %v6215
        %v6467 = vpack.c.b16 %v6218, %v6217
        %v6468 = vpack.c.b16 %v6220, %v6219
        %v6469 = vpack.c.b16 %v6222, %v6221
        %v6470 = vpack.c.b16 %v6224, %v6223
        %v6471 = vpack.c.b16 %v6226, %v6225
        %v6472 = vpack.c.b16 %v6228, %v6227
        %v6473 = vpack.c.b16 %v6230, %v6229
        %v6474 = vpack.c.b16 %v6232, %v6231
        %v6475 = vpack.c.b16 %v6234, %v6233
        %v6476 = vpack.c.b16 %v6236, %v6235
        %v6477 = vpack.c.b16 %v6238, %v6237
        %v6478 = vpack.c.b16 %v6240, %v6239
        %v6479 = vpack.c.b16 %v6242, %v6241
        %v6480 = vpack.c.b16 %v6244, %v6243
        %v6481 = vpack.c.b16 %v6246, %v6245
        %v6482 = vpack.c.b16 %v6248, %v6247
        %v6483 = vpack.c.b16 %v6250, %v6249
        %v6484 = vpack.c.b16 %v6252, %v6251
        %v6485 = vpack.c.b16 %v6254, %v6253
        %v6486 = vpack.c.b16 %v6256, %v6255
        %v6487 = vpack.c.b16 %v6258, %v6257
        %v6488 = vpack.c.b16 %v6260, %v6259
        %v6489 = vpack.c.b16 %v6262, %v6261
        %v6490 = vpack.c.b16 %v6264, %v6263
        %v6491 = vpack.c.b16 %v6266, %v6265
        %v6492 = vpack.c.b16 %v6268, %v6267
        %v6493 = vpack.c.b16 %v6270, %v6269
        %v6494 = vpack.c.b16 %v6272, %v6271
        %v6495 = vpack.c.b16 %v6274, %v6273
        %v6496 = vpack.c.b16 %v6276, %v6275
        %v6497 = vpack.c.b16 %v6278, %v6277
        %v6498 = vpack.c.b16 %v6280, %v6279
        %v6499 = vpack.c.b16 %v6282, %v6281
        %v6500 = vpack.c.b16 %v6284, %v6283
        %v6501 = vpack.c.b16 %v6286, %v6285
        %v6502 = vpack.c.b16 %v6288, %v6287
        %v6503 = vpack.c.b16 %v6290, %v6289
        %v6504 = vpack.c.b16 %v6292, %v6291
        %v6505 = vpack.c.b16 %v6294, %v6293
        %v6506 = vpack.c.b16 %v6296, %v6295
        %v6507 = vpack.c.b16 %v6298, %v6297
        %v6508 = vpack.c.b16 %v6300, %v6299
        %v6509 = vpack.c.b16 %v6302, %v6301
        %v6510 = vpack.c.b16 %v6304, %v6303
        %v6511 = vpack.c.b16 %v6306, %v6305
        %v6512 = vpack.c.b16 %v6308, %v6307
        %v6513 = vpack.c.b16 %v6310, %v6309
        %v6514 = vpack.c.b16 %v6312, %v6311
        %v6515 = vpack.c.b16 %v6314, %v6313
        %v6516 = vpack.c.b16 %v6316, %v6315
        %v6517 = vpack.c.b16 %v6318, %v6317
        %v6518 = vpack.c.b16 %v6320, %v6319
        %v6519 = vpack.c.b16 %v6322, %v6321
        %v6520 = vpack.c.b16 %v6324, %v6323
        %v6521 = vpack.c.b16 %v6326, %v6325
        %v6522 = vpack.c.b16 %v6328, %v6327
        %v6523 = vpack.c.b16 %v6330, %v6329
        %v6524 = vpack.c.b16 %v6332, %v6331
        %v6525 = vpack.c.b16 %v6334, %v6333
        %v6526 = vpack.c.b16 %v6336, %v6335
        %v6527 = vpack.c.b16 %v6338, %v6337
        %v6528 = vpack.c.b16 %v6340, %v6339
        %v6529 = vpack.c.b16 %v6342, %v6341
        %v6530 = vpack.c.b16 %v6344, %v6343
        %v6531 = vpack.c.b16 %v6346, %v6345
        %v6532 = vpack.c.b16 %v6348, %v6347
        %v6533 = vpack.c.b16 %v6350, %v6349
        %v6534 = vpack.c.b16 %v6352, %v6351
        %v6535 = vpack.c.b16 %v6354, %v6353
        %v6536 = vpack.c.b16 %v6356, %v6355
        %v6537 = vpack.c.b16 %v6358, %v6357
        %v6538 = vpack.c.b16 %v6360, %v6359
        %v6539 = vpack.c.b16 %v6362, %v6361
        %v6540 = vpack.c.b16 %v6364, %v6363
        %v6541 = vpack.c.b16 %v6366, %v6365
        %v6542 = vpack.c.b16 %v6368, %v6367
        %v6543 = vpack.c.b16 %v6370, %v6369
        %v6544 = vpack.c.b16 %v6372, %v6371
        %v6545 = vpack.c.b16 %v6374, %v6373
        %v6546 = vpack.c.b16 %v6376, %v6375
        %v6547 = vpack.c.b16 %v6378, %v6377
        %v6548 = vpack.c.b16 %v6380, %v6379
        %v6549 = vpack.c.b16 %v6382, %v6381
        %v6550 = vpack.c.b16 %v6384, %v6383
        %v6551 = vpack.c.b16 %v6386, %v6385
        %v6552 = vpack.c.b16 %v6388, %v6387
        %v6553 = vpack.c.b16 %v6390, %v6389
        %v6554 = vpack.c.b16 %v6392, %v6391
        %v6555 = vpack.c.b16 %v6394, %v6393
        %v6556 = vpack.c.b16 %v6396, %v6395
        %v6557 = vpack.c.b16 %v6398, %v6397
        %v6558 = vpack.c.b16 %v6400, %v6399
        %v6559 = vpack.c.b16 %v6402, %v6401
        %v6560 = vpack.c.b16 %v6404, %v6403
        %v6561 = vpack.c.b16 %v6406, %v6405
        %v6562 = vpack.c.b16 %v6408, %v6407
        %v6563 = vpack.c.b16 %v6410, %v6409
        %v6564 = vpack.c.b16 %v6412, %v6411
        %v6565 = vpack.c.b16 %v6414, %v6413
        %v6566 = vpack.c.b16 %v6416, %v6415
        %v6567 = vpack.c.b16 %v6418, %v6417
        %v6568 = vpack.c.b16 %v6420, %v6419
        %v6569 = vpack.c.b16 %v6422, %v6421
        %v6570 = vpack.c.b16 %v6424, %v6423
        %v6571 = vpack.c.b16 %v6426, %v6425
        %v6572 = vpack.c.b16 %v6428, %v6427
        %v6573 = vpack.c.b16 %v6430, %v6429
        %v6574 = vpack.c.b16 %v6432, %v6431
        %v6575 = vpack.c.b16 %v6434, %v6433
        %v6576 = vpack.c.b16 %v6436, %v6435
        %v6577 = vpack.c.b16 %v6438, %v6437
        %v6578 = vpack.c.b16 %v6440, %v6439
        %v6579 = vpack.c.b16 %v6442, %v6441
        %v6580 = vpack.c.b16 %v6444, %v6443
        %v6581 = vpack.c.b16 %v6446, %v6445
        %v6582 = vpack.c.b16 %v6448, %v6447
        %v6583 = vpack.c.b16 %v6450, %v6449
        %v6584 = vpack.c.b16 %v6452, %v6451
        %v6585 = vpack.c.b16 %v6454, %v6453
        %v6586 = vpack.c.b16 %v6456, %v6455
        %v6587 = vpack.c.b16 %v6458, %v6457
        %v6588 = vpack.c.b16 %v6460, %v6459
        %6717 = vmatprep.subr.bf16.mxu0 0
        %6718 = vmatpush1.bf16.msra.mxu0 %v6468
        %6719 = vmatprep.subr.bf16.mxu0 0
        %6720 = vmatpush1.bf16.msra.mxu0 %v6467
        %6721 = vmatprep.subr.bf16.mxu0 0
        %6722 = vmatpush1.bf16.msra.mxu0 %v6466
        %6723 = vmatprep.subr.bf16.mxu0 0
        %6724 = vmatpush1.bf16.msra.mxu0 %v6465
        %6725 = vmatprep.subr.bf16.mxu0 0
        %6726 = vmatpush1.bf16.msra.mxu0 %v6464
        %6727 = vmatprep.subr.bf16.mxu0 0
        %6728 = vmatpush1.bf16.msra.mxu0 %v6463
        %6729 = vmatprep.subr.bf16.mxu0 0
        %6730 = vmatpush1.bf16.msra.mxu0 %v6462
        %6731 = vmatprep.subr.bf16.mxu0 0
        %6732 = vmatpush1.bf16.msra.mxu0 %v6461
        %6733 = vmatprep.subr.bf16.mxu0 0
        %6734 = vmatpush2.bf16.msra.mxu0 %v6476
        %6735 = vmatprep.subr.bf16.mxu0 0
        %6736 = vmatpush2.bf16.msra.mxu0 %v6475
        %6737 = vmatprep.subr.bf16.mxu0 0
        %6738 = vmatpush2.bf16.msra.mxu0 %v6474
        %6739 = vmatprep.subr.bf16.mxu0 0
        %6740 = vmatpush2.bf16.msra.mxu0 %v6473
        %6741 = vmatprep.subr.bf16.mxu0 0
        %6742 = vmatpush2.bf16.msra.mxu0 %v6472
        %6743 = vmatprep.subr.bf16.mxu0 0
        %6744 = vmatpush2.bf16.msra.mxu0 %v6471
        %6745 = vmatprep.subr.bf16.mxu0 0
        %6746 = vmatpush2.bf16.msra.mxu0 %v6470
        %6747 = vmatprep.subr.bf16.mxu0 0
        %6748 = vmatpush2.bf16.msra.mxu0 %v6469
        %6749 = vmatprep.mubr.bf16.mxu0 %v5677
        %6750 = vmatmul.mubr.bf16.gmra.mxu0 %v5676
        %v6751 = vpop.f32.mrf.mxu0
        %v6752 = vadd.f32 0.0, %v6751
        %v6753 = vpop.f32.mrf.mxu0
        %v6754 = vpop.f32.mrf.mxu0
        %v6755 = vpop.f32.mrf.mxu0
        %6756 = vdwg.mxu0
        %6757 = vmatprep.subr.bf16.mxu0 0
        %6758 = vmatpush1.bf16.msra.mxu0 %v6484
        %6759 = vmatprep.subr.bf16.mxu0 0
        %6760 = vmatpush1.bf16.msra.mxu0 %v6483
        %6761 = vmatprep.subr.bf16.mxu0 0
        %6762 = vmatpush1.bf16.msra.mxu0 %v6482
        %6763 = vmatprep.subr.bf16.mxu0 0
        %6764 = vmatpush1.bf16.msra.mxu0 %v6481
        %6765 = vmatprep.subr.bf16.mxu0 0
        %6766 = vmatpush1.bf16.msra.mxu0 %v6480
        %6767 = vmatprep.subr.bf16.mxu0 0
        %6768 = vmatpush1.bf16.msra.mxu0 %v6479
        %6769 = vmatprep.subr.bf16.mxu0 0
        %6770 = vmatpush1.bf16.msra.mxu0 %v6478
        %6771 = vmatprep.subr.bf16.mxu0 0
        %6772 = vmatpush1.bf16.msra.mxu0 %v6477
        %6773 = vmatprep.subr.bf16.mxu0 0
        %6774 = vmatpush2.bf16.msra.mxu0 %v6492
        %6775 = vmatprep.subr.bf16.mxu0 0
        %6776 = vmatpush2.bf16.msra.mxu0 %v6491
        %6777 = vmatprep.subr.bf16.mxu0 0
        %6778 = vmatpush2.bf16.msra.mxu0 %v6490
        %6779 = vmatprep.subr.bf16.mxu0 0
        %6780 = vmatpush2.bf16.msra.mxu0 %v6489
        %6781 = vmatprep.subr.bf16.mxu0 0
        %6782 = vmatpush2.bf16.msra.mxu0 %v6488
        %6783 = vmatprep.subr.bf16.mxu0 0
        %6784 = vmatpush2.bf16.msra.mxu0 %v6487
        %6785 = vmatprep.subr.bf16.mxu0 0
        %6786 = vmatpush2.bf16.msra.mxu0 %v6486
        %6787 = vmatprep.subr.bf16.mxu0 0
        %6788 = vmatpush2.bf16.msra.mxu0 %v6485
        %6789 = vmatprep.mubr.bf16.mxu0 %v5679
        %6790 = vmatmul.mubr.bf16.gmra.mxu0 %v5678
        %v6791 = vpop.f32.mrf.mxu0
        %v6792 = vadd.f32 %v6752, %v6791
        %v6793 = vpop.f32.mrf.mxu0
        %v6794 = vpop.f32.mrf.mxu0
        %v6795 = vpop.f32.mrf.mxu0
        %6796 = vdwg.mxu0
        %6797 = vmatprep.subr.bf16.mxu0 0
        %6798 = vmatpush1.bf16.msra.mxu0 %v6500
        %6799 = vmatprep.subr.bf16.mxu0 0
        %6800 = vmatpush1.bf16.msra.mxu0 %v6499
        %6801 = vmatprep.subr.bf16.mxu0 0
        %6802 = vmatpush1.bf16.msra.mxu0 %v6498
        %6803 = vmatprep.subr.bf16.mxu0 0
        %6804 = vmatpush1.bf16.msra.mxu0 %v6497
        %6805 = vmatprep.subr.bf16.mxu0 0
        %6806 = vmatpush1.bf16.msra.mxu0 %v6496
        %6807 = vmatprep.subr.bf16.mxu0 0
        %6808 = vmatpush1.bf16.msra.mxu0 %v6495
        %6809 = vmatprep.subr.bf16.mxu0 0
        %6810 = vmatpush1.bf16.msra.mxu0 %v6494
        %6811 = vmatprep.subr.bf16.mxu0 0
        %6812 = vmatpush1.bf16.msra.mxu0 %v6493
        %6813 = vmatprep.subr.bf16.mxu0 0
        %6814 = vmatpush2.bf16.msra.mxu0 %v6508
        %6815 = vmatprep.subr.bf16.mxu0 0
        %6816 = vmatpush2.bf16.msra.mxu0 %v6507
        %6817 = vmatprep.subr.bf16.mxu0 0
        %6818 = vmatpush2.bf16.msra.mxu0 %v6506
        %6819 = vmatprep.subr.bf16.mxu0 0
        %6820 = vmatpush2.bf16.msra.mxu0 %v6505
        %6821 = vmatprep.subr.bf16.mxu0 0
        %6822 = vmatpush2.bf16.msra.mxu0 %v6504
        %6823 = vmatprep.subr.bf16.mxu0 0
        %6824 = vmatpush2.bf16.msra.mxu0 %v6503
        %6825 = vmatprep.subr.bf16.mxu0 0
        %6826 = vmatpush2.bf16.msra.mxu0 %v6502
        %6827 = vmatprep.subr.bf16.mxu0 0
        %6828 = vmatpush2.bf16.msra.mxu0 %v6501
        %6829 = vmatprep.mubr.bf16.mxu0 %v5681
        %6830 = vmatmul.mubr.bf16.gmra.mxu0 %v5680
        %v6831 = vpop.f32.mrf.mxu0
        %v6832 = vadd.f32 %v6792, %v6831
        %v6833 = vpop.f32.mrf.mxu0
        %v6834 = vpop.f32.mrf.mxu0
        %v6835 = vpop.f32.mrf.mxu0
        %6836 = vdwg.mxu0
        %6837 = vmatprep.subr.bf16.mxu0 0
        %6838 = vmatpush1.bf16.msra.mxu0 %v6516
        %6839 = vmatprep.subr.bf16.mxu0 0
        %6840 = vmatpush1.bf16.msra.mxu0 %v6515
        %6841 = vmatprep.subr.bf16.mxu0 0
        %6842 = vmatpush1.bf16.msra.mxu0 %v6514
        %6843 = vmatprep.subr.bf16.mxu0 0
        %6844 = vmatpush1.bf16.msra.mxu0 %v6513
        %6845 = vmatprep.subr.bf16.mxu0 0
        %6846 = vmatpush1.bf16.msra.mxu0 %v6512
        %6847 = vmatprep.subr.bf16.mxu0 0
        %6848 = vmatpush1.bf16.msra.mxu0 %v6511
        %6849 = vmatprep.subr.bf16.mxu0 0
        %6850 = vmatpush1.bf16.msra.mxu0 %v6510
        %6851 = vmatprep.subr.bf16.mxu0 0
        %6852 = vmatpush1.bf16.msra.mxu0 %v6509
        %6853 = vmatprep.subr.bf16.mxu0 0
        %6854 = vmatpush2.bf16.msra.mxu0 %v6524
        %6855 = vmatprep.subr.bf16.mxu0 0
        %6856 = vmatpush2.bf16.msra.mxu0 %v6523
        %6857 = vmatprep.subr.bf16.mxu0 0
        %6858 = vmatpush2.bf16.msra.mxu0 %v6522
        %6859 = vmatprep.subr.bf16.mxu0 0
        %6860 = vmatpush2.bf16.msra.mxu0 %v6521
        %6861 = vmatprep.subr.bf16.mxu0 0
        %6862 = vmatpush2.bf16.msra.mxu0 %v6520
        %6863 = vmatprep.subr.bf16.mxu0 0
        %6864 = vmatpush2.bf16.msra.mxu0 %v6519
        %6865 = vmatprep.subr.bf16.mxu0 0
        %6866 = vmatpush2.bf16.msra.mxu0 %v6518
        %6867 = vmatprep.subr.bf16.mxu0 0
        %6868 = vmatpush2.bf16.msra.mxu0 %v6517
        %6869 = vmatprep.mubr.bf16.mxu0 %v5683
        %6870 = vmatmul.mubr.bf16.gmra.mxu0 %v5682
        %v6871 = vpop.f32.mrf.mxu0
        %v6872 = vadd.f32 %v6832, %v6871
        %v6873 = vpop.f32.mrf.mxu0
        %v6874 = vpop.f32.mrf.mxu0
        %v6875 = vpop.f32.mrf.mxu0
        %6876 = vdwg.mxu0
        %6877 = vmatprep.subr.bf16.mxu0 0
        %6878 = vmatpush1.bf16.msra.mxu0 %v6532
        %6879 = vmatprep.subr.bf16.mxu0 0
        %6880 = vmatpush1.bf16.msra.mxu0 %v6531
        %6881 = vmatprep.subr.bf16.mxu0 0
        %6882 = vmatpush1.bf16.msra.mxu0 %v6530
        %6883 = vmatprep.subr.bf16.mxu0 0
        %6884 = vmatpush1.bf16.msra.mxu0 %v6529
        %6885 = vmatprep.subr.bf16.mxu0 0
        %6886 = vmatpush1.bf16.msra.mxu0 %v6528
        %6887 = vmatprep.subr.bf16.mxu0 0
        %6888 = vmatpush1.bf16.msra.mxu0 %v6527
        %6889 = vmatprep.subr.bf16.mxu0 0
        %6890 = vmatpush1.bf16.msra.mxu0 %v6526
        %6891 = vmatprep.subr.bf16.mxu0 0
        %6892 = vmatpush1.bf16.msra.mxu0 %v6525
        %6893 = vmatprep.subr.bf16.mxu0 0
        %6894 = vmatpush2.bf16.msra.mxu0 %v6540
        %6895 = vmatprep.subr.bf16.mxu0 0
        %6896 = vmatpush2.bf16.msra.mxu0 %v6539
        %6897 = vmatprep.subr.bf16.mxu0 0
        %6898 = vmatpush2.bf16.msra.mxu0 %v6538
        %6899 = vmatprep.subr.bf16.mxu0 0
        %6900 = vmatpush2.bf16.msra.mxu0 %v6537
        %6901 = vmatprep.subr.bf16.mxu0 0
        %6902 = vmatpush2.bf16.msra.mxu0 %v6536
        %6903 = vmatprep.subr.bf16.mxu0 0
        %6904 = vmatpush2.bf16.msra.mxu0 %v6535
        %6905 = vmatprep.subr.bf16.mxu0 0
        %6906 = vmatpush2.bf16.msra.mxu0 %v6534
        %6907 = vmatprep.subr.bf16.mxu0 0
        %6908 = vmatpush2.bf16.msra.mxu0 %v6533
        %6909 = vmatprep.mubr.bf16.mxu0 %v5685
        %6910 = vmatmul.mubr.bf16.gmra.mxu0 %v5684
        %v6911 = vpop.f32.mrf.mxu0
        %v6912 = vadd.f32 %v6872, %v6911
        %v6913 = vpop.f32.mrf.mxu0
        %v6914 = vpop.f32.mrf.mxu0
        %v6915 = vpop.f32.mrf.mxu0
        %6916 = vdwg.mxu0
        %6917 = vmatprep.subr.bf16.mxu0 0
        %6918 = vmatpush1.bf16.msra.mxu0 %v6548
        %6919 = vmatprep.subr.bf16.mxu0 0
        %6920 = vmatpush1.bf16.msra.mxu0 %v6547
        %6921 = vmatprep.subr.bf16.mxu0 0
        %6922 = vmatpush1.bf16.msra.mxu0 %v6546
        %6923 = vmatprep.subr.bf16.mxu0 0
        %6924 = vmatpush1.bf16.msra.mxu0 %v6545
        %6925 = vmatprep.subr.bf16.mxu0 0
        %6926 = vmatpush1.bf16.msra.mxu0 %v6544
        %6927 = vmatprep.subr.bf16.mxu0 0
        %6928 = vmatpush1.bf16.msra.mxu0 %v6543
        %6929 = vmatprep.subr.bf16.mxu0 0
        %6930 = vmatpush1.bf16.msra.mxu0 %v6542
        %6931 = vmatprep.subr.bf16.mxu0 0
        %6932 = vmatpush1.bf16.msra.mxu0 %v6541
        %6933 = vmatprep.subr.bf16.mxu0 0
        %6934 = vmatpush2.bf16.msra.mxu0 %v6556
        %6935 = vmatprep.subr.bf16.mxu0 0
        %6936 = vmatpush2.bf16.msra.mxu0 %v6555
        %6937 = vmatprep.subr.bf16.mxu0 0
        %6938 = vmatpush2.bf16.msra.mxu0 %v6554
        %6939 = vmatprep.subr.bf16.mxu0 0
        %6940 = vmatpush2.bf16.msra.mxu0 %v6553
        %6941 = vmatprep.subr.bf16.mxu0 0
        %6942 = vmatpush2.bf16.msra.mxu0 %v6552
        %6943 = vmatprep.subr.bf16.mxu0 0
        %6944 = vmatpush2.bf16.msra.mxu0 %v6551
        %6945 = vmatprep.subr.bf16.mxu0 0
        %6946 = vmatpush2.bf16.msra.mxu0 %v6550
        %6947 = vmatprep.subr.bf16.mxu0 0
        %6948 = vmatpush2.bf16.msra.mxu0 %v6549
        %6949 = vmatprep.mubr.bf16.mxu0 %v5687
        %6950 = vmatmul.mubr.bf16.gmra.mxu0 %v5686
        %v6951 = vpop.f32.mrf.mxu0
        %v6952 = vadd.f32 %v6912, %v6951
        %v6953 = vpop.f32.mrf.mxu0
        %v6954 = vpop.f32.mrf.mxu0
        %v6955 = vpop.f32.mrf.mxu0
        %6956 = vdwg.mxu0
        %6957 = vmatprep.subr.bf16.mxu0 0
        %6958 = vmatpush1.bf16.msra.mxu0 %v6564
        %6959 = vmatprep.subr.bf16.mxu0 0
        %6960 = vmatpush1.bf16.msra.mxu0 %v6563
        %6961 = vmatprep.subr.bf16.mxu0 0
        %6962 = vmatpush1.bf16.msra.mxu0 %v6562
        %6963 = vmatprep.subr.bf16.mxu0 0
        %6964 = vmatpush1.bf16.msra.mxu0 %v6561
        %6965 = vmatprep.subr.bf16.mxu0 0
        %6966 = vmatpush1.bf16.msra.mxu0 %v6560
        %6967 = vmatprep.subr.bf16.mxu0 0
        %6968 = vmatpush1.bf16.msra.mxu0 %v6559
        %6969 = vmatprep.subr.bf16.mxu0 0
        %6970 = vmatpush1.bf16.msra.mxu0 %v6558
        %6971 = vmatprep.subr.bf16.mxu0 0
        %6972 = vmatpush1.bf16.msra.mxu0 %v6557
        %6973 = vmatprep.subr.bf16.mxu0 0
        %6974 = vmatpush2.bf16.msra.mxu0 %v6572
        %6975 = vmatprep.subr.bf16.mxu0 0
        %6976 = vmatpush2.bf16.msra.mxu0 %v6571
        %6977 = vmatprep.subr.bf16.mxu0 0
        %6978 = vmatpush2.bf16.msra.mxu0 %v6570
        %6979 = vmatprep.subr.bf16.mxu0 0
        %6980 = vmatpush2.bf16.msra.mxu0 %v6569
        %6981 = vmatprep.subr.bf16.mxu0 0
        %6982 = vmatpush2.bf16.msra.mxu0 %v6568
        %6983 = vmatprep.subr.bf16.mxu0 0
        %6984 = vmatpush2.bf16.msra.mxu0 %v6567
        %6985 = vmatprep.subr.bf16.mxu0 0
        %6986 = vmatpush2.bf16.msra.mxu0 %v6566
        %6987 = vmatprep.subr.bf16.mxu0 0
        %6988 = vmatpush2.bf16.msra.mxu0 %v6565
        %6989 = vmatprep.mubr.bf16.mxu0 %v5689
        %6990 = vmatmul.mubr.bf16.gmra.mxu0 %v5688
        %v6991 = vpop.f32.mrf.mxu0
        %v6992 = vadd.f32 %v6952, %v6991
        %v6993 = vpop.f32.mrf.mxu0
        %v6994 = vpop.f32.mrf.mxu0
        %v6995 = vpop.f32.mrf.mxu0
        %6996 = vdwg.mxu0
        %6997 = vmatprep.subr.bf16.mxu0 0
        %6998 = vmatpush1.bf16.msra.mxu0 %v6580
        %6999 = vmatprep.subr.bf16.mxu0 0
        %7000 = vmatpush1.bf16.msra.mxu0 %v6579
        %7001 = vmatprep.subr.bf16.mxu0 0
        %7002 = vmatpush1.bf16.msra.mxu0 %v6578
        %7003 = vmatprep.subr.bf16.mxu0 0
        %7004 = vmatpush1.bf16.msra.mxu0 %v6577
        %7005 = vmatprep.subr.bf16.mxu0 0
        %7006 = vmatpush1.bf16.msra.mxu0 %v6576
        %7007 = vmatprep.subr.bf16.mxu0 0
        %7008 = vmatpush1.bf16.msra.mxu0 %v6575
        %7009 = vmatprep.subr.bf16.mxu0 0
        %7010 = vmatpush1.bf16.msra.mxu0 %v6574
        %7011 = vmatprep.subr.bf16.mxu0 0
        %7012 = vmatpush1.bf16.msra.mxu0 %v6573
        %7013 = vmatprep.subr.bf16.mxu0 0
        %7014 = vmatpush2.bf16.msra.mxu0 %v6588
        %7015 = vmatprep.subr.bf16.mxu0 0
        %7016 = vmatpush2.bf16.msra.mxu0 %v6587
        %7017 = vmatprep.subr.bf16.mxu0 0
        %7018 = vmatpush2.bf16.msra.mxu0 %v6586
        %7019 = vmatprep.subr.bf16.mxu0 0
        %7020 = vmatpush2.bf16.msra.mxu0 %v6585
        %7021 = vmatprep.subr.bf16.mxu0 0
        %7022 = vmatpush2.bf16.msra.mxu0 %v6584
        %7023 = vmatprep.subr.bf16.mxu0 0
        %7024 = vmatpush2.bf16.msra.mxu0 %v6583
        %7025 = vmatprep.subr.bf16.mxu0 0
        %7026 = vmatpush2.bf16.msra.mxu0 %v6582
        %7027 = vmatprep.subr.bf16.mxu0 0
        %7028 = vmatpush2.bf16.msra.mxu0 %v6581
        %7029 = vmatprep.mubr.bf16.mxu0 %v5691
        %7030 = vmatmul.mubr.bf16.gmra.mxu0 %v5690
        %v7031 = vpop.f32.mrf.mxu0
        %v7032 = vadd.f32 %v6992, %v7031
        %v7033 = vpop.f32.mrf.mxu0
        %v7034 = vpop.f32.mrf.mxu0
        %v7035 = vpop.f32.mrf.mxu0
        %7036 = vdwg.mxu0
        %v7037 = vadd.f32 %v5692, %v7032
        %7038 = vst [vmem:[%s324] sm:$0x1] %v7037
        %s7039 = sand.u32 %s225, 1
        %s7040 = scalar_lea.sflag [#allocation8], %s7039
        %s7041 = sand.u32 %s225, 1
        %s7042 = scalar_lea.vmem [#allocation7], %s7041
        // Predicated region
        $region57: #{small_cnn_forward.1} parent=55 // pred_check
          %p7043 = pneg %p235
        $region58: #{small_cnn_forward.1} parent=55 // pred_check_branch
          %7045 = sbr.rel (%p7043) target = $region60
        $region59: #{small_cnn_forward.1} parent=55 // pred_region
          %s7047 = ssub.s32 16, 16
          %7048 = vsyncadd %s7040, %s7047
          %s7049 = smul.addr %s23, 16
          %s7050 = scalar_lea.hbm %s9, %s7049
          %s7052 = sshll.u32 %s7042, 4
          %s7053 = int_to_ptr.vmem [resolvable:$true] %s7052
          %7055 = dma.vmem_to_hbm [thread:$0]  %s7053, 16, %s7050, %s7040
        $region60: #{small_cnn_forward.1} parent=55 // pred_fallthru
          _
      $region56: #{small_cnn_forward.1} parent=5 // pred_fallthru
        _
      %p7056 = scmp.le.s32.totalorder 2, %s18
      // Predicated region
      $region61: #{small_cnn_forward.1} parent=5 // pred_check
        %p7057 = pneg %p7056
      $region62: #{small_cnn_forward.1} parent=5 // pred_check_branch
        %7059 = sbr.rel (%p7057) target = $region64
      $region63: #{small_cnn_forward.1} parent=5 // pred_region
        %s7060 = ssub.s32 %s18, 2
        // Predicated region
        $region65: #{small_cnn_forward.1} parent=63 // pred_check
          %p7061 = pneg %p241
        $region66: #{small_cnn_forward.1} parent=63 // pred_check_branch
          %7063 = sbr.rel (%p7061) target = $region68
        $region67: #{small_cnn_forward.1} parent=63 // pred_region
          %s7064 = sand.u32 %s226, 1
          %s7065 = scalar_lea.sflag [#allocation8], %s7064
          %s7066 = sand.u32 %s226, 1
          %s7067 = scalar_lea.vmem [#allocation7], %s7066
          %7068 = dma.done %s7065, 16
        $region68: #{small_cnn_forward.1} parent=63 // pred_fallthru
          _
      $region64: #{small_cnn_forward.1} parent=5 // pred_fallthru
        _
    $region6: #{small_cnn_forward.1} parent=1 // loop_footer
      %s22 = sadd.s32 1, %s18
    $region7: #{small_cnn_forward.1} parent=1 // loop_footer_branch
      %17 = sbr.rel target = $region3
    $region8: #{small_cnn_forward.1} parent=1 // loop_exit
      _
    %7069 = vsyncpa [#allocation8], 1
    %s7070 = scalar_lea.sflag [#allocation8], 1
    %7071 = vsyncpa %s7070, 1

</llo_original>
